<compile_context>
chip_gen: v5e
topology: v5e:2x2
jax: 0.10.0
libtpu: 0.0.40
codegen_flags: <defaults>
</compile_context>

<pallas_src>
import math

import jax
import jax.numpy as jnp
from jax import lax
from jax.experimental import pallas as pl
from jax.experimental.pallas import tpu as pltpu

_EPS = 1e-5                      # nn.GroupNorm default eps
_INV_SQRT2 = 1.0 / math.sqrt(2.0)


def _erf_approx(x):
    """Abramowitz & Stegun 7.1.26 erf (|error| < 1.5e-7); exp/mul/where only."""
    a1, a2, a3, a4, a5 = (0.254829592, -0.284496736, 1.421413741,
                          -1.453152027, 1.061405429)
    p = 0.3275911
    z = jnp.where(x >= 0.0, x, -x)
    t = 1.0 / (1.0 + p * z)
    poly = ((((a5 * t + a4) * t + a3) * t + a2) * t + a1) * t
    y = 1.0 - poly * jnp.exp(-z * z)
    return jnp.where(x >= 0.0, y, -y)


def _gelu(x, approximate):
    if approximate:
        # tanh approximation (EUP slot); deviates from PyTorch's exact GELU by <~1e-3.
        c = 0.7978845608028654   # sqrt(2/pi)
        return 0.5 * x * (1.0 + jnp.tanh(c * (x + 0.044715 * x * x * x)))
    return 0.5 * x * (1.0 + _erf_approx(x * _INV_SQRT2))


# ------------------------------ fused kernel ------------------------------- #

def _make_downblock_kernel(Bt, H2, W2, Cin, Cout, approx_gelu):
    HW = H2 * W2
    M = Bt * HW
    WL = 8   # data region starts at sublane-aligned W-offset 8 inside the halo

    def zero_border(pad_ref, c):
        # Only the 1-px frame the convs read; interior is overwritten each step.
        zrow = jnp.zeros((Bt, 1, W2 + 2, c), pad_ref.dtype)
        pad_ref[:, 0:1, WL - 1:WL + W2 + 1, :] = zrow
        pad_ref[:, H2 + 1:H2 + 2, WL - 1:WL + W2 + 1, :] = zrow
        zcol = jnp.zeros((Bt, H2 + 2, 1, c), pad_ref.dtype)
        pad_ref[:, :, WL - 1:WL, :] = zcol
        pad_ref[:, :, WL + W2:WL + W2 + 1, :] = zcol

    def write_interior(pad_ref, val4d):
        # Sublane-aligned interior store (W offset 8, width W2).
        pad_ref[:, 1:H2 + 1, WL:WL + W2, :] = val4d.astype(pad_ref.dtype)

    def conv3x3_gn(pad_ref, col_ref, w_ref, g_ref, b_ref, cin, cout):
        """3x3 conv (zero halo already in pad_ref) + GroupNorm(1, cout)."""
        # im2col -> one (M, 9*cin) patch matrix -> a single MXU matmul.
        for ky in range(3):
            for kx in range(3):
                tap = ky * 3 + kx
                col_ref[:, :, :, tap * cin:(tap + 1) * cin] = (
                    pad_ref[:, ky:ky + H2, WL - 1 + kx:WL - 1 + kx + W2, :])
        patch = col_ref[...].reshape(M, 9 * cin)
        acc = jnp.dot(patch, w_ref[...],
                      preferred_element_type=jnp.float32)          # (M, cout) f32
        a3 = acc.reshape(Bt, HW, cout)
        # Centered two-pass GroupNorm(num_groups=1) statistics, per sample.
        mean = jnp.mean(a3, axis=(1, 2), keepdims=True)
        cen = a3 - mean
        var = jnp.mean(cen * cen, axis=(1, 2), keepdims=True)
        y = cen * lax.rsqrt(var + _EPS)
        return y * g_ref[...] + b_ref[...]                          # (Bt, HW, cout)

    def gelu(x):
        return _gelu(x, approx_gelu)

    def kernel(x_ref,
               w1_ref, g1_ref, b1_ref, w2_ref, g2_ref, b2_ref,
               w3_ref, g3_ref, b3_ref, w4_ref, g4_ref, b4_ref,
               t_ref, ew_ref, eb_ref,
               o_ref,
               pad_a, pad_b, col_a, col_b):
        zero_border(pad_a, Cin)
        zero_border(pad_b, Cout)

        # ---- MaxPool2d(2): input view (Bt, 4, H2, W2, Cin); dim1 = 2*dh + dw.
        p00 = x_ref[:, 0].astype(jnp.float32)
        p01 = x_ref[:, 1].astype(jnp.float32)
        p10 = x_ref[:, 2].astype(jnp.float32)
        p11 = x_ref[:, 3].astype(jnp.float32)
        pooled = jnp.maximum(jnp.maximum(p00, p01),
                             jnp.maximum(p10, p11))                 # (Bt,H2,W2,Cin)

        # ---- DoubleConv(Cin, Cin, residual=True)
        write_interior(pad_a, pooled)
        h1 = gelu(conv3x3_gn(pad_a, col_a, w1_ref, g1_ref, b1_ref, Cin, Cin))
        write_interior(pad_a, h1.reshape(Bt, H2, W2, Cin))
        y2 = conv3x3_gn(pad_a, col_a, w2_ref, g2_ref, b2_ref, Cin, Cin)
        r = gelu(pooled.reshape(Bt, HW, Cin) + y2)

        # ---- DoubleConv(Cin, Cout)
        write_interior(pad_a, r.reshape(Bt, H2, W2, Cin))
        h3 = gelu(conv3x3_gn(pad_a, col_a, w3_ref, g3_ref, b3_ref, Cin, Cout))
        write_interior(pad_b, h3.reshape(Bt, H2, W2, Cout))
        y4 = conv3x3_gn(pad_b, col_b, w4_ref, g4_ref, b4_ref, Cout, Cout)

        # ---- time embedding: Linear(SiLU(t)), one small matmul per block.
        tb = t_ref[:, 0, :].astype(jnp.float32)                     # (Bt, emb_dim)
        silu = tb * (1.0 / (1.0 + jnp.exp(-tb)))
        emb = jnp.dot(silu, ew_ref[...],
                      preferred_element_type=jnp.float32) + eb_ref[...]

        out = y4 + emb[:, None, :]                                  # (Bt, HW, Cout)
        o_ref[...] = out.reshape(Bt, H2, W2, Cout).astype(o_ref.dtype)

    return kernel


# -------------------------------- wrapper ---------------------------------- #

def downblock_forward(x_nchw, t, params, *, batch_tile=None, use_bf16=True,
                      approx_gelu=False, vmem_limit_bytes=None):
    """DownBlock forward. x_nchw: (B, Cin, H, W); t: (B, emb_dim)."""
    B, Cin, H, W = x_nchw.shape
    assert H % 2 == 0 and W % 2 == 0, "MaxPool2d(2) requires even H and W"
    H2, W2 = H // 2, W // 2
    Cout = params["w3"].shape[-1]
    emb_dim = params["ew"].shape[0]
    cdt = jnp.bfloat16 if use_bf16 else jnp.float32
    csz = jnp.dtype(cdt).itemsize

    # ---- generation-aware VMEM budget (v7x: 64 MiB/TC; v5e/v6e: 128 MiB).
    try:
        vmem_cap = int(pltpu.get_tpu_info().vmem_capacity_bytes)
    except Exception:
        vmem_cap = 64 << 20                      # conservative fallback
    if vmem_limit_bytes is None:
        vmem_limit_bytes = int(min(vmem_cap * 3 // 4, 100 << 20))

    per_elem = (
        2 * (4 * H2 * W2 * Cin) * 4              # input block (f32), double-buffered
        + 2 * (H2 * W2 * Cout) * 4               # output block (f32), double-buffered
        + (H2 + 2) * (W2 + 9) * (Cin + Cout) * csz   # halo scratches
        + 9 * H2 * W2 * (Cin + Cout) * csz           # im2col scratches
        + 3 * H2 * W2 * (Cin + Cout) * 4             # live f32 intermediates
    )
    fixed = (
        2 * 9 * (2 * Cin * Cin + Cin * Cout + Cout * Cout) * csz   # conv weights x2 bufs
        + 2 * 4 * (4 * (Cin + Cout) + emb_dim * Cout + Cout)       # gn/emb params x2 bufs
        + (2 << 20)                                                # headroom
    )
    if batch_tile is None:
        budget = max(vmem_limit_bytes - fixed, per_elem)
        bt = max(1, budget // per_elem)
        # Keep >=2 grid steps so a v7x chip can split the batch over its 2 TCs.
        bt = int(min(bt, max(1, (B + 1) // 2)))
    else:
        bt = int(max(1, min(batch_tile, B)))
    steps = -(-B // bt)
    Bp = steps * bt                              # pad batch instead of shrinking bt

    # ---- single wrapper transpose: NCHW -> (B, 2x2 pool window, H2, W2, C).
    x5 = (x_nchw.astype(jnp.float32)
          .reshape(B, Cin, H2, 2, W2, 2)
          .transpose(0, 3, 5, 2, 4, 1)
          .reshape(B, 4, H2, W2, Cin))
    t3 = t.astype(jnp.float32).reshape(B, 1, emb_dim)
    if Bp != B:
        x5 = jnp.pad(x5, ((0, Bp - B),) + ((0, 0),) * 4)
        t3 = jnp.pad(t3, ((0, Bp - B), (0, 0), (0, 0)))

    # ---- conv weights as (9*Cin, Cout) matmul operands in the compute dtype.
    def wmat(w):          # (3,3,ci,co) -> (9*ci, co); row order (ky,kx,ci) matches im2col
        return w.reshape(9 * w.shape[2], w.shape[3]).astype(cdt)

    def vec(v, c):
        return v.reshape(1, c).astype(jnp.float32)

    def const(shape):
        nd = len(shape)
        return pl.BlockSpec(shape, lambda i, nd=nd: (0,) * nd)

    in_specs = [
        pl.BlockSpec((bt, 4, H2, W2, Cin), lambda i: (i, 0, 0, 0, 0)),
        const((9 * Cin, Cin)), const((1, Cin)), const((1, Cin)),
        const((9 * Cin, Cin)), const((1, Cin)), const((1, Cin)),
        const((9 * Cin, Cout)), const((1, Cout)), const((1, Cout)),
        const((9 * Cout, Cout)), const((1, Cout)), const((1, Cout)),
        pl.BlockSpec((bt, 1, emb_dim), lambda i: (i, 0, 0)),
        const((emb_dim, Cout)), const((1, Cout)),
    ]
    # TODO(synk): weight/scale specs could use pipeline_mode=pl.Buffered(1) to drop
    # their second VMEM buffer (helps v7x); left at the default for portability.
    out_specs = pl.BlockSpec((bt, H2, W2, Cout), lambda i: (i, 0, 0, 0))
    # TODO(synk): for Cout < 128 a lane-dense flattened output view would avoid
    # masked vst; deployed DownBlock channels are >=128 so it is left as-is.

    out_nhwc = pl.pallas_call(
        _make_downblock_kernel(bt, H2, W2, Cin, Cout, approx_gelu),
        grid=(steps,),
        in_specs=in_specs,
        out_specs=out_specs,
        out_shape=jax.ShapeDtypeStruct((Bp, H2, W2, Cout), jnp.float32),
        scratch_shapes=[
            pltpu.VMEM((bt, H2 + 2, W2 + 9, Cin), cdt),    # halo (Cin activations)
            pltpu.VMEM((bt, H2 + 2, W2 + 9, Cout), cdt),   # halo (Cout activations)
            pltpu.VMEM((bt, H2, W2, 9 * Cin), cdt),        # im2col, K = 9*Cin
            pltpu.VMEM((bt, H2, W2, 9 * Cout), cdt),       # im2col, K = 9*Cout
        ],
        compiler_params=pltpu.CompilerParams(
            dimension_semantics=("parallel",),
            vmem_limit_bytes=int(vmem_limit_bytes),
        ),
    )(x5,
      wmat(params["w1"]), vec(params["g1"], Cin), vec(params["b1"], Cin),
      wmat(params["w2"]), vec(params["g2"], Cin), vec(params["b2"], Cin),
      wmat(params["w3"]), vec(params["g3"], Cout), vec(params["b3"], Cout),
      wmat(params["w4"]), vec(params["g4"], Cout), vec(params["b4"], Cout),
      t3, params["ew"].astype(jnp.float32), vec(params["eb"], Cout))

    return jnp.transpose(out_nhwc[:B], (0, 3, 1, 2))     # back to NCHW


# ----------------------------- params & reference --------------------------- #

def init_params(key, cin, cout, emb_dim):
    ks = jax.random.split(key, 6)

    def conv_w(k, ci, co):
        bound = 1.0 / math.sqrt(ci * 9)        # PyTorch Conv2d default init range
        return jax.random.uniform(k, (3, 3, ci, co), jnp.float32, -bound, bound)

    lb = 1.0 / math.sqrt(emb_dim)              # PyTorch Linear default init range
    return dict(
        w1=conv_w(ks[0], cin, cin),   g1=jnp.ones((cin,)),  b1=jnp.zeros((cin,)),
        w2=conv_w(ks[1], cin, cin),   g2=jnp.ones((cin,)),  b2=jnp.zeros((cin,)),
        w3=conv_w(ks[2], cin, cout),  g3=jnp.ones((cout,)), b3=jnp.zeros((cout,)),
        w4=conv_w(ks[3], cout, cout), g4=jnp.ones((cout,)), b4=jnp.zeros((cout,)),
        ew=jax.random.uniform(ks[4], (emb_dim, cout), jnp.float32, -lb, lb),
        eb=jax.random.uniform(ks[5], (cout,), jnp.float32, -lb, lb),
    )


def _ref_downblock(x_nchw, t, params):
    """Pure-JAX (XLA, HIGHEST precision, exact GELU) reference of the forward."""
    x = x_nchw.astype(jnp.float32)
    neg_inf = jnp.array(-jnp.inf, dtype=jnp.float32)
    p = lax.reduce_window(x, neg_inf, lax.max, (1, 1, 2, 2), (1, 1, 2, 2), "VALID")

    def conv(z, w):
        return lax.conv_general_dilated(
            z, w, window_strides=(1, 1), padding=((1, 1), (1, 1)),
            dimension_numbers=("NCHW", "HWIO", "NCHW"),
            precision=lax.Precision.HIGHEST)

    def gn(z, g, b):
        m = jnp.mean(z, axis=(1, 2, 3), keepdims=True)
        v = jnp.mean(jnp.square(z - m), axis=(1, 2, 3), keepdims=True)
        zn = (z - m) * lax.rsqrt(v + _EPS)
        return zn * g.reshape(1, -1, 1, 1) + b.reshape(1, -1, 1, 1)

    def gelu(z):
        return 0.5 * z * (1.0 + lax.erf(z * _INV_SQRT2))

    h1 = gelu(gn(conv(p, params["w1"]), params["g1"], params["b1"]))
    r = gelu(p + gn(conv(h1, params["w2"]), params["g2"], params["b2"]))
    h3 = gelu(gn(conv(r, params["w3"]), params["g3"], params["b3"]))
    y = gn(conv(h3, params["w4"]), params["g4"], params["b4"])

    tt = t.astype(jnp.float32)
    emb = jnp.dot(tt * jax.nn.sigmoid(tt), params["ew"],
                  precision=lax.Precision.HIGHEST) + params["eb"]   # (B, Cout)
    return y + emb[:, :, None, None]


if __name__ == "__main__":
    key = jax.random.PRNGKey(0)
    kx, kt, kp = jax.random.split(key, 3)

    B, Cin, H, W = 2, 4, 16, 16
    Cout, emb_dim = 8, 32

    x = jax.random.normal(kx, (B, Cin, H, W), jnp.float32)
    t = jax.random.normal(kt, (B, emb_dim), jnp.float32)
    params = init_params(kp, Cin, Cout, emb_dim)

    ref = _ref_downblock(x, t, params)

    # Default path: bf16 matmul operands, f32 accumulation / GroupNorm.
    out_bf16 = jax.jit(
        lambda a, b, p: downblock_forward(a, b, p, use_bf16=True))(x, t, params)
    jax.block_until_ready(out_bf16)
    assert out_bf16.shape == (B, Cout, H // 2, W // 2), out_bf16.shape
    assert bool(jnp.all(jnp.isfinite(out_bf16)))
    assert float(jnp.max(jnp.abs(out_bf16 - ref))) < 1e-1   # bf16-operand rounding

    # f32 path: bit-closer to PyTorch. Tolerance is bounded by the MXU f32
    # precision mode (not pinned here), not by a true f32-ULP bound; it is still
    # tight enough to catch any structural bug (swapped taps, scale errors).
    out_f32 = jax.jit(
        lambda a, b, p: downblock_forward(a, b, p, use_bf16=False))(x, t, params)
    jax.block_until_ready(out_f32)
    assert bool(jnp.all(jnp.isfinite(out_f32)))
    assert float(jnp.max(jnp.abs(out_f32 - ref))) < 5e-2

    print("KERNEL_OK")
</pallas_src>

<mosaic_0001>
module attributes {stable_mosaic.version = 11 : i64} {
  func.func @kernel(%arg0: i32, %arg1: memref<1x4x8x8x4xf32, #tpu.memory_space<vmem>>, %arg2: memref<36x4xbf16, #tpu.memory_space<vmem>>, %arg3: memref<1x4xf32, #tpu.memory_space<vmem>>, %arg4: memref<1x4xf32, #tpu.memory_space<vmem>>, %arg5: memref<36x4xbf16, #tpu.memory_space<vmem>>, %arg6: memref<1x4xf32, #tpu.memory_space<vmem>>, %arg7: memref<1x4xf32, #tpu.memory_space<vmem>>, %arg8: memref<36x8xbf16, #tpu.memory_space<vmem>>, %arg9: memref<1x8xf32, #tpu.memory_space<vmem>>, %arg10: memref<1x8xf32, #tpu.memory_space<vmem>>, %arg11: memref<72x8xbf16, #tpu.memory_space<vmem>>, %arg12: memref<1x8xf32, #tpu.memory_space<vmem>>, %arg13: memref<1x8xf32, #tpu.memory_space<vmem>>, %arg14: memref<1x1x32xf32, #tpu.memory_space<vmem>>, %arg15: memref<32x8xf32, #tpu.memory_space<vmem>>, %arg16: memref<1x8xf32, #tpu.memory_space<vmem>>, %arg17: memref<1x8x8x8xf32, #tpu.memory_space<vmem>>, %arg18: memref<1x10x17x4xbf16, #tpu.memory_space<vmem>>, %arg19: memref<1x10x17x8xbf16, #tpu.memory_space<vmem>>, %arg20: memref<1x8x8x36xbf16, #tpu.memory_space<vmem>>, %arg21: memref<1x8x8x72xbf16, #tpu.memory_space<vmem>>) attributes {dimension_semantics = [#tpu.dimension_semantics<parallel>], iteration_bounds = array<i64: 2>, scalar_prefetch = 0 : i64, scratch_operands = 4 : i64, tpu.core_type = #tpu.core_type<tc>, window_params = [{transform_indices = @transform_0, window_bounds = array<i64: 1, 4, 8, 8, 4>}, {pipeline_mode = #tpu.pipeline_mode<synchronous>, transform_indices = @transform_1, window_bounds = array<i64: 36, 4>}, {pipeline_mode = #tpu.pipeline_mode<synchronous>, transform_indices = @transform_2, window_bounds = array<i64: 1, 4>}, {pipeline_mode = #tpu.pipeline_mode<synchronous>, transform_indices = @transform_3, window_bounds = array<i64: 1, 4>}, {pipeline_mode = #tpu.pipeline_mode<synchronous>, transform_indices = @transform_4, window_bounds = array<i64: 36, 4>}, {pipeline_mode = #tpu.pipeline_mode<synchronous>, transform_indices = @transform_5, window_bounds = array<i64: 1, 4>}, {pipeline_mode = #tpu.pipeline_mode<synchronous>, transform_indices = @transform_6, window_bounds = array<i64: 1, 4>}, {pipeline_mode = #tpu.pipeline_mode<synchronous>, transform_indices = @transform_7, window_bounds = array<i64: 36, 8>}, {pipeline_mode = #tpu.pipeline_mode<synchronous>, transform_indices = @transform_8, window_bounds = array<i64: 1, 8>}, {pipeline_mode = #tpu.pipeline_mode<synchronous>, transform_indices = @transform_9, window_bounds = array<i64: 1, 8>}, {pipeline_mode = #tpu.pipeline_mode<synchronous>, transform_indices = @transform_10, window_bounds = array<i64: 72, 8>}, {pipeline_mode = #tpu.pipeline_mode<synchronous>, transform_indices = @transform_11, window_bounds = array<i64: 1, 8>}, {pipeline_mode = #tpu.pipeline_mode<synchronous>, transform_indices = @transform_12, window_bounds = array<i64: 1, 8>}, {transform_indices = @transform_13, window_bounds = array<i64: 1, 1, 32>}, {pipeline_mode = #tpu.pipeline_mode<synchronous>, transform_indices = @transform_14, window_bounds = array<i64: 32, 8>}, {pipeline_mode = #tpu.pipeline_mode<synchronous>, transform_indices = @transform_15, window_bounds = array<i64: 1, 8>}, {transform_indices = @transform_16, window_bounds = array<i64: 1, 8, 8, 8>}]} {
    %cst = arith.constant 0.000000e+00 : bf16
    %0 = vector.broadcast %cst : bf16 to vector<1x1x10x4xbf16>
    %c0 = arith.constant 0 : index
    %c0_0 = arith.constant 0 : index
    %c7 = arith.constant 7 : index
    %c0_1 = arith.constant 0 : index
    %1 = vector.load %arg18[%c0, %c0_0, %c7, %c0_1] : memref<1x10x17x4xbf16, #tpu.memory_space<vmem>>, vector<1x1x10x4xbf16>
    tpu.vector_store %arg18[%c0, %c0_0, %c7, %c0_1], %0 {strides = array<i32>} : memref<1x10x17x4xbf16, #tpu.memory_space<vmem>>, vector<1x1x10x4xbf16>,
    %c0_2 = arith.constant 0 : index
    %c9 = arith.constant 9 : index
    %c7_3 = arith.constant 7 : index
    %c0_4 = arith.constant 0 : index
    %2 = vector.load %arg18[%c0_2, %c9, %c7_3, %c0_4] : memref<1x10x17x4xbf16, #tpu.memory_space<vmem>>, vector<1x1x10x4xbf16>
    tpu.vector_store %arg18[%c0_2, %c9, %c7_3, %c0_4], %0 {strides = array<i32>} : memref<1x10x17x4xbf16, #tpu.memory_space<vmem>>, vector<1x1x10x4xbf16>,
    %cst_5 = arith.constant 0.000000e+00 : bf16
    %3 = vector.broadcast %cst_5 : bf16 to vector<1x10x1x4xbf16>
    %c0_6 = arith.constant 0 : index
    %c0_7 = arith.constant 0 : index
    %c7_8 = arith.constant 7 : index
    %c0_9 = arith.constant 0 : index
    %4 = vector.load %arg18[%c0_6, %c0_7, %c7_8, %c0_9] : memref<1x10x17x4xbf16, #tpu.memory_space<vmem>>, vector<1x10x1x4xbf16>
    tpu.vector_store %arg18[%c0_6, %c0_7, %c7_8, %c0_9], %3 {strides = array<i32>} : memref<1x10x17x4xbf16, #tpu.memory_space<vmem>>, vector<1x10x1x4xbf16>,
    %c0_10 = arith.constant 0 : index
    %c0_11 = arith.constant 0 : index
    %c16 = arith.constant 16 : index
    %c0_12 = arith.constant 0 : index
    %5 = vector.load %arg18[%c0_10, %c0_11, %c16, %c0_12] : memref<1x10x17x4xbf16, #tpu.memory_space<vmem>>, vector<1x10x1x4xbf16>
    tpu.vector_store %arg18[%c0_10, %c0_11, %c16, %c0_12], %3 {strides = array<i32>} : memref<1x10x17x4xbf16, #tpu.memory_space<vmem>>, vector<1x10x1x4xbf16>,
    %cst_13 = arith.constant 0.000000e+00 : bf16
    %6 = vector.broadcast %cst_13 : bf16 to vector<1x1x10x8xbf16>
    %c0_14 = arith.constant 0 : index
    %c0_15 = arith.constant 0 : index
    %c7_16 = arith.constant 7 : index
    %c0_17 = arith.constant 0 : index
    %7 = vector.load %arg19[%c0_14, %c0_15, %c7_16, %c0_17] : memref<1x10x17x8xbf16, #tpu.memory_space<vmem>>, vector<1x1x10x8xbf16>
    tpu.vector_store %arg19[%c0_14, %c0_15, %c7_16, %c0_17], %6 {strides = array<i32>} : memref<1x10x17x8xbf16, #tpu.memory_space<vmem>>, vector<1x1x10x8xbf16>,
    %c0_18 = arith.constant 0 : index
    %c9_19 = arith.constant 9 : index
    %c7_20 = arith.constant 7 : index
    %c0_21 = arith.constant 0 : index
    %8 = vector.load %arg19[%c0_18, %c9_19, %c7_20, %c0_21] : memref<1x10x17x8xbf16, #tpu.memory_space<vmem>>, vector<1x1x10x8xbf16>
    tpu.vector_store %arg19[%c0_18, %c9_19, %c7_20, %c0_21], %6 {strides = array<i32>} : memref<1x10x17x8xbf16, #tpu.memory_space<vmem>>, vector<1x1x10x8xbf16>,
    %cst_22 = arith.constant 0.000000e+00 : bf16
    %9 = vector.broadcast %cst_22 : bf16 to vector<1x10x1x8xbf16>
    %c0_23 = arith.constant 0 : index
    %c0_24 = arith.constant 0 : index
    %c7_25 = arith.constant 7 : index
    %c0_26 = arith.constant 0 : index
    %10 = vector.load %arg19[%c0_23, %c0_24, %c7_25, %c0_26] : memref<1x10x17x8xbf16, #tpu.memory_space<vmem>>, vector<1x10x1x8xbf16>
    tpu.vector_store %arg19[%c0_23, %c0_24, %c7_25, %c0_26], %9 {strides = array<i32>} : memref<1x10x17x8xbf16, #tpu.memory_space<vmem>>, vector<1x10x1x8xbf16>,
    %c0_27 = arith.constant 0 : index
    %c0_28 = arith.constant 0 : index
    %c16_29 = arith.constant 16 : index
    %c0_30 = arith.constant 0 : index
    %11 = vector.load %arg19[%c0_27, %c0_28, %c16_29, %c0_30] : memref<1x10x17x8xbf16, #tpu.memory_space<vmem>>, vector<1x10x1x8xbf16>
    tpu.vector_store %arg19[%c0_27, %c0_28, %c16_29, %c0_30], %9 {strides = array<i32>} : memref<1x10x17x8xbf16, #tpu.memory_space<vmem>>, vector<1x10x1x8xbf16>,
    %c0_31 = arith.constant 0 : index
    %c0_32 = arith.constant 0 : index
    %c0_33 = arith.constant 0 : index
    %c0_34 = arith.constant 0 : index
    %c0_35 = arith.constant 0 : index
    %12 = vector.load %arg1[%c0_31, %c0_32, %c0_33, %c0_34, %c0_35] : memref<1x4x8x8x4xf32, #tpu.memory_space<vmem>>, vector<1x1x8x8x4xf32>
    %13 = vector.shape_cast %12 : vector<1x1x8x8x4xf32> to vector<1x8x8x4xf32>
    %c0_36 = arith.constant 0 : index
    %c1 = arith.constant 1 : index
    %c0_37 = arith.constant 0 : index
    %c0_38 = arith.constant 0 : index
    %c0_39 = arith.constant 0 : index
    %14 = vector.load %arg1[%c0_36, %c1, %c0_37, %c0_38, %c0_39] : memref<1x4x8x8x4xf32, #tpu.memory_space<vmem>>, vector<1x1x8x8x4xf32>
    %15 = vector.shape_cast %14 : vector<1x1x8x8x4xf32> to vector<1x8x8x4xf32>
    %c0_40 = arith.constant 0 : index
    %c2 = arith.constant 2 : index
    %c0_41 = arith.constant 0 : index
    %c0_42 = arith.constant 0 : index
    %c0_43 = arith.constant 0 : index
    %16 = vector.load %arg1[%c0_40, %c2, %c0_41, %c0_42, %c0_43] : memref<1x4x8x8x4xf32, #tpu.memory_space<vmem>>, vector<1x1x8x8x4xf32>
    %17 = vector.shape_cast %16 : vector<1x1x8x8x4xf32> to vector<1x8x8x4xf32>
    %c0_44 = arith.constant 0 : index
    %c3 = arith.constant 3 : index
    %c0_45 = arith.constant 0 : index
    %c0_46 = arith.constant 0 : index
    %c0_47 = arith.constant 0 : index
    %18 = vector.load %arg1[%c0_44, %c3, %c0_45, %c0_46, %c0_47] : memref<1x4x8x8x4xf32, #tpu.memory_space<vmem>>, vector<1x1x8x8x4xf32>
    %19 = vector.shape_cast %18 : vector<1x1x8x8x4xf32> to vector<1x8x8x4xf32>
    %20 = arith.maximumf %13, %15 : vector<1x8x8x4xf32>
    %21 = arith.maximumf %17, %19 : vector<1x8x8x4xf32>
    %22 = arith.maximumf %20, %21 : vector<1x8x8x4xf32>
    %23 = arith.truncf %22 : vector<1x8x8x4xf32> to vector<1x8x8x4xbf16>
    %c0_48 = arith.constant 0 : index
    %c1_49 = arith.constant 1 : index
    %c8 = arith.constant 8 : index
    %c0_50 = arith.constant 0 : index
    %24 = vector.load %arg18[%c0_48, %c1_49, %c8, %c0_50] : memref<1x10x17x4xbf16, #tpu.memory_space<vmem>>, vector<1x8x8x4xbf16>
    tpu.vector_store %arg18[%c0_48, %c1_49, %c8, %c0_50], %23 {strides = array<i32>} : memref<1x10x17x4xbf16, #tpu.memory_space<vmem>>, vector<1x8x8x4xbf16>,
    %c0_51 = arith.constant 0 : index
    %c0_52 = arith.constant 0 : index
    %c7_53 = arith.constant 7 : index
    %c0_54 = arith.constant 0 : index
    %25 = vector.load %arg18[%c0_51, %c0_52, %c7_53, %c0_54] : memref<1x10x17x4xbf16, #tpu.memory_space<vmem>>, vector<1x8x8x4xbf16>
    %c0_55 = arith.constant 0 : index
    %c0_56 = arith.constant 0 : index
    %c0_57 = arith.constant 0 : index
    %c0_58 = arith.constant 0 : index
    %26 = vector.load %arg20[%c0_55, %c0_56, %c0_57, %c0_58] : memref<1x8x8x36xbf16, #tpu.memory_space<vmem>>, vector<1x8x8x4xbf16>
    tpu.vector_store %arg20[%c0_55, %c0_56, %c0_57, %c0_58], %25 {strides = array<i32>} : memref<1x8x8x36xbf16, #tpu.memory_space<vmem>>, vector<1x8x8x4xbf16>,
    %c0_59 = arith.constant 0 : index
    %c0_60 = arith.constant 0 : index
    %c8_61 = arith.constant 8 : index
    %c0_62 = arith.constant 0 : index
    %27 = vector.load %arg18[%c0_59, %c0_60, %c8_61, %c0_62] : memref<1x10x17x4xbf16, #tpu.memory_space<vmem>>, vector<1x8x8x4xbf16>
    %c0_63 = arith.constant 0 : index
    %c0_64 = arith.constant 0 : index
    %c0_65 = arith.constant 0 : index
    %c4 = arith.constant 4 : index
    %28 = vector.load %arg20[%c0_63, %c0_64, %c0_65, %c4] : memref<1x8x8x36xbf16, #tpu.memory_space<vmem>>, vector<1x8x8x4xbf16>
    tpu.vector_store %arg20[%c0_63, %c0_64, %c0_65, %c4], %27 {strides = array<i32>} : memref<1x8x8x36xbf16, #tpu.memory_space<vmem>>, vector<1x8x8x4xbf16>,
    %c0_66 = arith.constant 0 : index
    %c0_67 = arith.constant 0 : index
    %c9_68 = arith.constant 9 : index
    %c0_69 = arith.constant 0 : index
    %29 = vector.load %arg18[%c0_66, %c0_67, %c9_68, %c0_69] : memref<1x10x17x4xbf16, #tpu.memory_space<vmem>>, vector<1x8x8x4xbf16>
    %c0_70 = arith.constant 0 : index
    %c0_71 = arith.constant 0 : index
    %c0_72 = arith.constant 0 : index
    %c8_73 = arith.constant 8 : index
    %30 = vector.load %arg20[%c0_70, %c0_71, %c0_72, %c8_73] : memref<1x8x8x36xbf16, #tpu.memory_space<vmem>>, vector<1x8x8x4xbf16>
    tpu.vector_store %arg20[%c0_70, %c0_71, %c0_72, %c8_73], %29 {strides = array<i32>} : memref<1x8x8x36xbf16, #tpu.memory_space<vmem>>, vector<1x8x8x4xbf16>,
    %c0_74 = arith.constant 0 : index
    %c1_75 = arith.constant 1 : index
    %c7_76 = arith.constant 7 : index
    %c0_77 = arith.constant 0 : index
    %31 = vector.load %arg18[%c0_74, %c1_75, %c7_76, %c0_77] : memref<1x10x17x4xbf16, #tpu.memory_space<vmem>>, vector<1x8x8x4xbf16>
    %c0_78 = arith.constant 0 : index
    %c0_79 = arith.constant 0 : index
    %c0_80 = arith.constant 0 : index
    %c12 = arith.constant 12 : index
    %32 = vector.load %arg20[%c0_78, %c0_79, %c0_80, %c12] : memref<1x8x8x36xbf16, #tpu.memory_space<vmem>>, vector<1x8x8x4xbf16>
    tpu.vector_store %arg20[%c0_78, %c0_79, %c0_80, %c12], %31 {strides = array<i32>} : memref<1x8x8x36xbf16, #tpu.memory_space<vmem>>, vector<1x8x8x4xbf16>,
    %c0_81 = arith.constant 0 : index
    %c1_82 = arith.constant 1 : index
    %c8_83 = arith.constant 8 : index
    %c0_84 = arith.constant 0 : index
    %33 = vector.load %arg18[%c0_81, %c1_82, %c8_83, %c0_84] : memref<1x10x17x4xbf16, #tpu.memory_space<vmem>>, vector<1x8x8x4xbf16>
    %c0_85 = arith.constant 0 : index
    %c0_86 = arith.constant 0 : index
    %c0_87 = arith.constant 0 : index
    %c16_88 = arith.constant 16 : index
    %34 = vector.load %arg20[%c0_85, %c0_86, %c0_87, %c16_88] : memref<1x8x8x36xbf16, #tpu.memory_space<vmem>>, vector<1x8x8x4xbf16>
    tpu.vector_store %arg20[%c0_85, %c0_86, %c0_87, %c16_88], %33 {strides = array<i32>} : memref<1x8x8x36xbf16, #tpu.memory_space<vmem>>, vector<1x8x8x4xbf16>,
    %c0_89 = arith.constant 0 : index
    %c1_90 = arith.constant 1 : index
    %c9_91 = arith.constant 9 : index
    %c0_92 = arith.constant 0 : index
    %35 = vector.load %arg18[%c0_89, %c1_90, %c9_91, %c0_92] : memref<1x10x17x4xbf16, #tpu.memory_space<vmem>>, vector<1x8x8x4xbf16>
    %c0_93 = arith.constant 0 : index
    %c0_94 = arith.constant 0 : index
    %c0_95 = arith.constant 0 : index
    %c20 = arith.constant 20 : index
    %36 = vector.load %arg20[%c0_93, %c0_94, %c0_95, %c20] : memref<1x8x8x36xbf16, #tpu.memory_space<vmem>>, vector<1x8x8x4xbf16>
    tpu.vector_store %arg20[%c0_93, %c0_94, %c0_95, %c20], %35 {strides = array<i32>} : memref<1x8x8x36xbf16, #tpu.memory_space<vmem>>, vector<1x8x8x4xbf16>,
    %c0_96 = arith.constant 0 : index
    %c2_97 = arith.constant 2 : index
    %c7_98 = arith.constant 7 : index
    %c0_99 = arith.constant 0 : index
    %37 = vector.load %arg18[%c0_96, %c2_97, %c7_98, %c0_99] : memref<1x10x17x4xbf16, #tpu.memory_space<vmem>>, vector<1x8x8x4xbf16>
    %c0_100 = arith.constant 0 : index
    %c0_101 = arith.constant 0 : index
    %c0_102 = arith.constant 0 : index
    %c24 = arith.constant 24 : index
    %38 = vector.load %arg20[%c0_100, %c0_101, %c0_102, %c24] : memref<1x8x8x36xbf16, #tpu.memory_space<vmem>>, vector<1x8x8x4xbf16>
    tpu.vector_store %arg20[%c0_100, %c0_101, %c0_102, %c24], %37 {strides = array<i32>} : memref<1x8x8x36xbf16, #tpu.memory_space<vmem>>, vector<1x8x8x4xbf16>,
    %c0_103 = arith.constant 0 : index
    %c2_104 = arith.constant 2 : index
    %c8_105 = arith.constant 8 : index
    %c0_106 = arith.constant 0 : index
    %39 = vector.load %arg18[%c0_103, %c2_104, %c8_105, %c0_106] : memref<1x10x17x4xbf16, #tpu.memory_space<vmem>>, vector<1x8x8x4xbf16>
    %c0_107 = arith.constant 0 : index
    %c0_108 = arith.constant 0 : index
    %c0_109 = arith.constant 0 : index
    %c28 = arith.constant 28 : index
    %40 = vector.load %arg20[%c0_107, %c0_108, %c0_109, %c28] : memref<1x8x8x36xbf16, #tpu.memory_space<vmem>>, vector<1x8x8x4xbf16>
    tpu.vector_store %arg20[%c0_107, %c0_108, %c0_109, %c28], %39 {strides = array<i32>} : memref<1x8x8x36xbf16, #tpu.memory_space<vmem>>, vector<1x8x8x4xbf16>,
    %c0_110 = arith.constant 0 : index
    %c2_111 = arith.constant 2 : index
    %c9_112 = arith.constant 9 : index
    %c0_113 = arith.constant 0 : index
    %41 = vector.load %arg18[%c0_110, %c2_111, %c9_112, %c0_113] : memref<1x10x17x4xbf16, #tpu.memory_space<vmem>>, vector<1x8x8x4xbf16>
    %c0_114 = arith.constant 0 : index
    %c0_115 = arith.constant 0 : index
    %c0_116 = arith.constant 0 : index
    %c32 = arith.constant 32 : index
    %42 = vector.load %arg20[%c0_114, %c0_115, %c0_116, %c32] : memref<1x8x8x36xbf16, #tpu.memory_space<vmem>>, vector<1x8x8x4xbf16>
    tpu.vector_store %arg20[%c0_114, %c0_115, %c0_116, %c32], %41 {strides = array<i32>} : memref<1x8x8x36xbf16, #tpu.memory_space<vmem>>, vector<1x8x8x4xbf16>,
    %c0_117 = arith.constant 0 : index
    %c0_118 = arith.constant 0 : index
    %c0_119 = arith.constant 0 : index
    %c0_120 = arith.constant 0 : index
    %43 = vector.load %arg20[%c0_117, %c0_118, %c0_119, %c0_120] : memref<1x8x8x36xbf16, #tpu.memory_space<vmem>>, vector<1x8x8x36xbf16>
    %44 = vector.shape_cast %43 : vector<1x8x8x36xbf16> to vector<64x36xbf16>
    %c0_121 = arith.constant 0 : index
    %c0_122 = arith.constant 0 : index
    %45 = vector.load %arg2[%c0_121, %c0_122] : memref<36x4xbf16, #tpu.memory_space<vmem>>, vector<36x4xbf16>
    %cst_123 = arith.constant dense<0.000000e+00> : vector<64x4xf32>
    %46 = tpu.matmul %44, %45, %cst_123 {dimension_numbers = #tpu.dot_dimension_numbers<[1], [0], [0], [1], [0, 0, 1, 1], [], []>} : vector<64x36xbf16>, vector<36x4xbf16>, vector<64x4xf32> -> vector<64x4xf32>
    %47 = vector.shape_cast %46 : vector<64x4xf32> to vector<1x64x4xf32>
    %cst_124 = arith.constant dense<0.000000e+00> : vector<1xf32>
    %48 = vector.multi_reduction <add>, %47, %cst_124 [1, 2] : vector<1x64x4xf32> to vector<1xf32>
    %49 = vector.shape_cast %48 : vector<1xf32> to vector<1x1x1xf32>
    %cst_125 = arith.constant 2.560000e+02 : f32
    %50 = vector.broadcast %cst_125 : f32 to vector<1x1x1xf32>
    %51 = arith.divf %49, %50 : vector<1x1x1xf32>
    %52 = vector.broadcast %51 : vector<1x1x1xf32> to vector<1x64x4xf32>
    %53 = arith.subf %47, %52 : vector<1x64x4xf32>
    %54 = arith.mulf %53, %53 : vector<1x64x4xf32>
    %cst_126 = arith.constant dense<0.000000e+00> : vector<1xf32>
    %55 = vector.multi_reduction <add>, %54, %cst_126 [1, 2] : vector<1x64x4xf32> to vector<1xf32>
    %56 = vector.shape_cast %55 : vector<1xf32> to vector<1x1x1xf32>
    %cst_127 = arith.constant 2.560000e+02 : f32
    %57 = vector.broadcast %cst_127 : f32 to vector<1x1x1xf32>
    %58 = arith.divf %56, %57 : vector<1x1x1xf32>
    %cst_128 = arith.constant 9.99999974E-6 : f32
    %59 = vector.broadcast %cst_128 : f32 to vector<1x1x1xf32>
    %60 = arith.addf %58, %59 : vector<1x1x1xf32>
    %61 = math.rsqrt %60 : vector<1x1x1xf32>
    %62 = vector.broadcast %61 : vector<1x1x1xf32> to vector<1x64x4xf32>
    %63 = arith.mulf %53, %62 : vector<1x64x4xf32>
    %c0_129 = arith.constant 0 : index
    %c0_130 = arith.constant 0 : index
    %64 = vector.load %arg3[%c0_129, %c0_130] : memref<1x4xf32, #tpu.memory_space<vmem>>, vector<1x4xf32>
    %65 = vector.shape_cast %64 : vector<1x4xf32> to vector<1x1x4xf32>
    %66 = vector.broadcast %65 : vector<1x1x4xf32> to vector<1x64x4xf32>
    %67 = arith.mulf %63, %66 : vector<1x64x4xf32>
    %c0_131 = arith.constant 0 : index
    %c0_132 = arith.constant 0 : index
    %68 = vector.load %arg4[%c0_131, %c0_132] : memref<1x4xf32, #tpu.memory_space<vmem>>, vector<1x4xf32>
    %69 = vector.shape_cast %68 : vector<1x4xf32> to vector<1x1x4xf32>
    %70 = vector.broadcast %69 : vector<1x1x4xf32> to vector<1x64x4xf32>
    %71 = arith.addf %67, %70 : vector<1x64x4xf32>
    %cst_133 = arith.constant 5.000000e-01 : f32
    %72 = vector.broadcast %cst_133 : f32 to vector<1x64x4xf32>
    %73 = arith.mulf %72, %71 : vector<1x64x4xf32>
    %cst_134 = arith.constant 0.707106769 : f32
    %74 = vector.broadcast %cst_134 : f32 to vector<1x64x4xf32>
    %75 = arith.mulf %71, %74 : vector<1x64x4xf32>
    %cst_135 = arith.constant 0.000000e+00 : f32
    %76 = vector.broadcast %cst_135 : f32 to vector<1x64x4xf32>
    %77 = arith.cmpf oge, %75, %76 : vector<1x64x4xf32>
    %cst_136 = arith.constant 0.000000e+00 : f32
    %78 = vector.broadcast %cst_136 : f32 to vector<1x64x4xf32>
    %79 = arith.subf %78, %75 : vector<1x64x4xf32>
    %80 = arith.select %77, %75, %79 : vector<1x64x4xi1>, vector<1x64x4xf32>
    %cst_137 = arith.constant 0.327591091 : f32
    %81 = vector.broadcast %cst_137 : f32 to vector<1x64x4xf32>
    %82 = arith.mulf %81, %80 : vector<1x64x4xf32>
    %cst_138 = arith.constant 1.000000e+00 : f32
    %83 = vector.broadcast %cst_138 : f32 to vector<1x64x4xf32>
    %84 = arith.addf %83, %82 : vector<1x64x4xf32>
    %cst_139 = arith.constant 1.000000e+00 : f32
    %85 = vector.broadcast %cst_139 : f32 to vector<1x64x4xf32>
    %86 = arith.divf %85, %84 : vector<1x64x4xf32>
    %cst_140 = arith.constant 1.06140542 : f32
    %87 = vector.broadcast %cst_140 : f32 to vector<1x64x4xf32>
    %88 = arith.mulf %87, %86 : vector<1x64x4xf32>
    %cst_141 = arith.constant -1.45315206 : f32
    %89 = vector.broadcast %cst_141 : f32 to vector<1x64x4xf32>
    %90 = arith.addf %88, %89 : vector<1x64x4xf32>
    %91 = arith.mulf %90, %86 : vector<1x64x4xf32>
    %cst_142 = arith.constant 1.42141378 : f32
    %92 = vector.broadcast %cst_142 : f32 to vector<1x64x4xf32>
    %93 = arith.addf %91, %92 : vector<1x64x4xf32>
    %94 = arith.mulf %93, %86 : vector<1x64x4xf32>
    %cst_143 = arith.constant -0.284496725 : f32
    %95 = vector.broadcast %cst_143 : f32 to vector<1x64x4xf32>
    %96 = arith.addf %94, %95 : vector<1x64x4xf32>
    %97 = arith.mulf %96, %86 : vector<1x64x4xf32>
    %cst_144 = arith.constant 0.254829586 : f32
    %98 = vector.broadcast %cst_144 : f32 to vector<1x64x4xf32>
    %99 = arith.addf %97, %98 : vector<1x64x4xf32>
    %100 = arith.mulf %99, %86 : vector<1x64x4xf32>
    %cst_145 = arith.constant 0.000000e+00 : f32
    %101 = vector.broadcast %cst_145 : f32 to vector<1x64x4xf32>
    %102 = arith.subf %101, %80 : vector<1x64x4xf32>
    %103 = arith.mulf %102, %80 : vector<1x64x4xf32>
    %104 = math.exp %103 : vector<1x64x4xf32>
    %105 = arith.mulf %100, %104 : vector<1x64x4xf32>
    %cst_146 = arith.constant 1.000000e+00 : f32
    %106 = vector.broadcast %cst_146 : f32 to vector<1x64x4xf32>
    %107 = arith.subf %106, %105 : vector<1x64x4xf32>
    %cst_147 = arith.constant 0.000000e+00 : f32
    %108 = vector.broadcast %cst_147 : f32 to vector<1x64x4xf32>
    %109 = arith.cmpf oge, %75, %108 : vector<1x64x4xf32>
    %cst_148 = arith.constant 0.000000e+00 : f32
    %110 = vector.broadcast %cst_148 : f32 to vector<1x64x4xf32>
    %111 = arith.subf %110, %107 : vector<1x64x4xf32>
    %112 = arith.select %109, %107, %111 : vector<1x64x4xi1>, vector<1x64x4xf32>
    %cst_149 = arith.constant 1.000000e+00 : f32
    %113 = vector.broadcast %cst_149 : f32 to vector<1x64x4xf32>
    %114 = arith.addf %113, %112 : vector<1x64x4xf32>
    %115 = arith.mulf %73, %114 : vector<1x64x4xf32>
    %116 = vector.shape_cast %115 : vector<1x64x4xf32> to vector<1x8x8x4xf32>
    %117 = arith.truncf %116 : vector<1x8x8x4xf32> to vector<1x8x8x4xbf16>
    %c0_150 = arith.constant 0 : index
    %c1_151 = arith.constant 1 : index
    %c8_152 = arith.constant 8 : index
    %c0_153 = arith.constant 0 : index
    %118 = vector.load %arg18[%c0_150, %c1_151, %c8_152, %c0_153] : memref<1x10x17x4xbf16, #tpu.memory_space<vmem>>, vector<1x8x8x4xbf16>
    tpu.vector_store %arg18[%c0_150, %c1_151, %c8_152, %c0_153], %117 {strides = array<i32>} : memref<1x10x17x4xbf16, #tpu.memory_space<vmem>>, vector<1x8x8x4xbf16>,
    %c0_154 = arith.constant 0 : index
    %c0_155 = arith.constant 0 : index
    %c7_156 = arith.constant 7 : index
    %c0_157 = arith.constant 0 : index
    %119 = vector.load %arg18[%c0_154, %c0_155, %c7_156, %c0_157] : memref<1x10x17x4xbf16, #tpu.memory_space<vmem>>, vector<1x8x8x4xbf16>
    %c0_158 = arith.constant 0 : index
    %c0_159 = arith.constant 0 : index
    %c0_160 = arith.constant 0 : index
    %c0_161 = arith.constant 0 : index
    %120 = vector.load %arg20[%c0_158, %c0_159, %c0_160, %c0_161] : memref<1x8x8x36xbf16, #tpu.memory_space<vmem>>, vector<1x8x8x4xbf16>
    tpu.vector_store %arg20[%c0_158, %c0_159, %c0_160, %c0_161], %119 {strides = array<i32>} : memref<1x8x8x36xbf16, #tpu.memory_space<vmem>>, vector<1x8x8x4xbf16>,
    %c0_162 = arith.constant 0 : index
    %c0_163 = arith.constant 0 : index
    %c8_164 = arith.constant 8 : index
    %c0_165 = arith.constant 0 : index
    %121 = vector.load %arg18[%c0_162, %c0_163, %c8_164, %c0_165] : memref<1x10x17x4xbf16, #tpu.memory_space<vmem>>, vector<1x8x8x4xbf16>
    %c0_166 = arith.constant 0 : index
    %c0_167 = arith.constant 0 : index
    %c0_168 = arith.constant 0 : index
    %c4_169 = arith.constant 4 : index
    %122 = vector.load %arg20[%c0_166, %c0_167, %c0_168, %c4_169] : memref<1x8x8x36xbf16, #tpu.memory_space<vmem>>, vector<1x8x8x4xbf16>
    tpu.vector_store %arg20[%c0_166, %c0_167, %c0_168, %c4_169], %121 {strides = array<i32>} : memref<1x8x8x36xbf16, #tpu.memory_space<vmem>>, vector<1x8x8x4xbf16>,
    %c0_170 = arith.constant 0 : index
    %c0_171 = arith.constant 0 : index
    %c9_172 = arith.constant 9 : index
    %c0_173 = arith.constant 0 : index
    %123 = vector.load %arg18[%c0_170, %c0_171, %c9_172, %c0_173] : memref<1x10x17x4xbf16, #tpu.memory_space<vmem>>, vector<1x8x8x4xbf16>
    %c0_174 = arith.constant 0 : index
    %c0_175 = arith.constant 0 : index
    %c0_176 = arith.constant 0 : index
    %c8_177 = arith.constant 8 : index
    %124 = vector.load %arg20[%c0_174, %c0_175, %c0_176, %c8_177] : memref<1x8x8x36xbf16, #tpu.memory_space<vmem>>, vector<1x8x8x4xbf16>
    tpu.vector_store %arg20[%c0_174, %c0_175, %c0_176, %c8_177], %123 {strides = array<i32>} : memref<1x8x8x36xbf16, #tpu.memory_space<vmem>>, vector<1x8x8x4xbf16>,
    %c0_178 = arith.constant 0 : index
    %c1_179 = arith.constant 1 : index
    %c7_180 = arith.constant 7 : index
    %c0_181 = arith.constant 0 : index
    %125 = vector.load %arg18[%c0_178, %c1_179, %c7_180, %c0_181] : memref<1x10x17x4xbf16, #tpu.memory_space<vmem>>, vector<1x8x8x4xbf16>
    %c0_182 = arith.constant 0 : index
    %c0_183 = arith.constant 0 : index
    %c0_184 = arith.constant 0 : index
    %c12_185 = arith.constant 12 : index
    %126 = vector.load %arg20[%c0_182, %c0_183, %c0_184, %c12_185] : memref<1x8x8x36xbf16, #tpu.memory_space<vmem>>, vector<1x8x8x4xbf16>
    tpu.vector_store %arg20[%c0_182, %c0_183, %c0_184, %c12_185], %125 {strides = array<i32>} : memref<1x8x8x36xbf16, #tpu.memory_space<vmem>>, vector<1x8x8x4xbf16>,
    %c0_186 = arith.constant 0 : index
    %c1_187 = arith.constant 1 : index
    %c8_188 = arith.constant 8 : index
    %c0_189 = arith.constant 0 : index
    %127 = vector.load %arg18[%c0_186, %c1_187, %c8_188, %c0_189] : memref<1x10x17x4xbf16, #tpu.memory_space<vmem>>, vector<1x8x8x4xbf16>
    %c0_190 = arith.constant 0 : index
    %c0_191 = arith.constant 0 : index
    %c0_192 = arith.constant 0 : index
    %c16_193 = arith.constant 16 : index
    %128 = vector.load %arg20[%c0_190, %c0_191, %c0_192, %c16_193] : memref<1x8x8x36xbf16, #tpu.memory_space<vmem>>, vector<1x8x8x4xbf16>
    tpu.vector_store %arg20[%c0_190, %c0_191, %c0_192, %c16_193], %127 {strides = array<i32>} : memref<1x8x8x36xbf16, #tpu.memory_space<vmem>>, vector<1x8x8x4xbf16>,
    %c0_194 = arith.constant 0 : index
    %c1_195 = arith.constant 1 : index
    %c9_196 = arith.constant 9 : index
    %c0_197 = arith.constant 0 : index
    %129 = vector.load %arg18[%c0_194, %c1_195, %c9_196, %c0_197] : memref<1x10x17x4xbf16, #tpu.memory_space<vmem>>, vector<1x8x8x4xbf16>
    %c0_198 = arith.constant 0 : index
    %c0_199 = arith.constant 0 : index
    %c0_200 = arith.constant 0 : index
    %c20_201 = arith.constant 20 : index
    %130 = vector.load %arg20[%c0_198, %c0_199, %c0_200, %c20_201] : memref<1x8x8x36xbf16, #tpu.memory_space<vmem>>, vector<1x8x8x4xbf16>
    tpu.vector_store %arg20[%c0_198, %c0_199, %c0_200, %c20_201], %129 {strides = array<i32>} : memref<1x8x8x36xbf16, #tpu.memory_space<vmem>>, vector<1x8x8x4xbf16>,
    %c0_202 = arith.constant 0 : index
    %c2_203 = arith.constant 2 : index
    %c7_204 = arith.constant 7 : index
    %c0_205 = arith.constant 0 : index
    %131 = vector.load %arg18[%c0_202, %c2_203, %c7_204, %c0_205] : memref<1x10x17x4xbf16, #tpu.memory_space<vmem>>, vector<1x8x8x4xbf16>
    %c0_206 = arith.constant 0 : index
    %c0_207 = arith.constant 0 : index
    %c0_208 = arith.constant 0 : index
    %c24_209 = arith.constant 24 : index
    %132 = vector.load %arg20[%c0_206, %c0_207, %c0_208, %c24_209] : memref<1x8x8x36xbf16, #tpu.memory_space<vmem>>, vector<1x8x8x4xbf16>
    tpu.vector_store %arg20[%c0_206, %c0_207, %c0_208, %c24_209], %131 {strides = array<i32>} : memref<1x8x8x36xbf16, #tpu.memory_space<vmem>>, vector<1x8x8x4xbf16>,
    %c0_210 = arith.constant 0 : index
    %c2_211 = arith.constant 2 : index
    %c8_212 = arith.constant 8 : index
    %c0_213 = arith.constant 0 : index
    %133 = vector.load %arg18[%c0_210, %c2_211, %c8_212, %c0_213] : memref<1x10x17x4xbf16, #tpu.memory_space<vmem>>, vector<1x8x8x4xbf16>
    %c0_214 = arith.constant 0 : index
    %c0_215 = arith.constant 0 : index
    %c0_216 = arith.constant 0 : index
    %c28_217 = arith.constant 28 : index
    %134 = vector.load %arg20[%c0_214, %c0_215, %c0_216, %c28_217] : memref<1x8x8x36xbf16, #tpu.memory_space<vmem>>, vector<1x8x8x4xbf16>
    tpu.vector_store %arg20[%c0_214, %c0_215, %c0_216, %c28_217], %133 {strides = array<i32>} : memref<1x8x8x36xbf16, #tpu.memory_space<vmem>>, vector<1x8x8x4xbf16>,
    %c0_218 = arith.constant 0 : index
    %c2_219 = arith.constant 2 : index
    %c9_220 = arith.constant 9 : index
    %c0_221 = arith.constant 0 : index
    %135 = vector.load %arg18[%c0_218, %c2_219, %c9_220, %c0_221] : memref<1x10x17x4xbf16, #tpu.memory_space<vmem>>, vector<1x8x8x4xbf16>
    %c0_222 = arith.constant 0 : index
    %c0_223 = arith.constant 0 : index
    %c0_224 = arith.constant 0 : index
    %c32_225 = arith.constant 32 : index
    %136 = vector.load %arg20[%c0_222, %c0_223, %c0_224, %c32_225] : memref<1x8x8x36xbf16, #tpu.memory_space<vmem>>, vector<1x8x8x4xbf16>
    tpu.vector_store %arg20[%c0_222, %c0_223, %c0_224, %c32_225], %135 {strides = array<i32>} : memref<1x8x8x36xbf16, #tpu.memory_space<vmem>>, vector<1x8x8x4xbf16>,
    %c0_226 = arith.constant 0 : index
    %c0_227 = arith.constant 0 : index
    %c0_228 = arith.constant 0 : index
    %c0_229 = arith.constant 0 : index
    %137 = vector.load %arg20[%c0_226, %c0_227, %c0_228, %c0_229] : memref<1x8x8x36xbf16, #tpu.memory_space<vmem>>, vector<1x8x8x36xbf16>
    %138 = vector.shape_cast %137 : vector<1x8x8x36xbf16> to vector<64x36xbf16>
    %c0_230 = arith.constant 0 : index
    %c0_231 = arith.constant 0 : index
    %139 = vector.load %arg5[%c0_230, %c0_231] : memref<36x4xbf16, #tpu.memory_space<vmem>>, vector<36x4xbf16>
    %cst_232 = arith.constant dense<0.000000e+00> : vector<64x4xf32>
    %140 = tpu.matmul %138, %139, %cst_232 {dimension_numbers = #tpu.dot_dimension_numbers<[1], [0], [0], [1], [0, 0, 1, 1], [], []>} : vector<64x36xbf16>, vector<36x4xbf16>, vector<64x4xf32> -> vector<64x4xf32>
    %141 = vector.shape_cast %140 : vector<64x4xf32> to vector<1x64x4xf32>
    %cst_233 = arith.constant dense<0.000000e+00> : vector<1xf32>
    %142 = vector.multi_reduction <add>, %141, %cst_233 [1, 2] : vector<1x64x4xf32> to vector<1xf32>
    %143 = vector.shape_cast %142 : vector<1xf32> to vector<1x1x1xf32>
    %cst_234 = arith.constant 2.560000e+02 : f32
    %144 = vector.broadcast %cst_234 : f32 to vector<1x1x1xf32>
    %145 = arith.divf %143, %144 : vector<1x1x1xf32>
    %146 = vector.broadcast %145 : vector<1x1x1xf32> to vector<1x64x4xf32>
    %147 = arith.subf %141, %146 : vector<1x64x4xf32>
    %148 = arith.mulf %147, %147 : vector<1x64x4xf32>
    %cst_235 = arith.constant dense<0.000000e+00> : vector<1xf32>
    %149 = vector.multi_reduction <add>, %148, %cst_235 [1, 2] : vector<1x64x4xf32> to vector<1xf32>
    %150 = vector.shape_cast %149 : vector<1xf32> to vector<1x1x1xf32>
    %cst_236 = arith.constant 2.560000e+02 : f32
    %151 = vector.broadcast %cst_236 : f32 to vector<1x1x1xf32>
    %152 = arith.divf %150, %151 : vector<1x1x1xf32>
    %cst_237 = arith.constant 9.99999974E-6 : f32
    %153 = vector.broadcast %cst_237 : f32 to vector<1x1x1xf32>
    %154 = arith.addf %152, %153 : vector<1x1x1xf32>
    %155 = math.rsqrt %154 : vector<1x1x1xf32>
    %156 = vector.broadcast %155 : vector<1x1x1xf32> to vector<1x64x4xf32>
    %157 = arith.mulf %147, %156 : vector<1x64x4xf32>
    %c0_238 = arith.constant 0 : index
    %c0_239 = arith.constant 0 : index
    %158 = vector.load %arg6[%c0_238, %c0_239] : memref<1x4xf32, #tpu.memory_space<vmem>>, vector<1x4xf32>
    %159 = vector.shape_cast %158 : vector<1x4xf32> to vector<1x1x4xf32>
    %160 = vector.broadcast %159 : vector<1x1x4xf32> to vector<1x64x4xf32>
    %161 = arith.mulf %157, %160 : vector<1x64x4xf32>
    %c0_240 = arith.constant 0 : index
    %c0_241 = arith.constant 0 : index
    %162 = vector.load %arg7[%c0_240, %c0_241] : memref<1x4xf32, #tpu.memory_space<vmem>>, vector<1x4xf32>
    %163 = vector.shape_cast %162 : vector<1x4xf32> to vector<1x1x4xf32>
    %164 = vector.broadcast %163 : vector<1x1x4xf32> to vector<1x64x4xf32>
    %165 = arith.addf %161, %164 : vector<1x64x4xf32>
    %166 = vector.shape_cast %22 : vector<1x8x8x4xf32> to vector<1x64x4xf32>
    %167 = arith.addf %166, %165 : vector<1x64x4xf32>
    %cst_242 = arith.constant 5.000000e-01 : f32
    %168 = vector.broadcast %cst_242 : f32 to vector<1x64x4xf32>
    %169 = arith.mulf %168, %167 : vector<1x64x4xf32>
    %cst_243 = arith.constant 0.707106769 : f32
    %170 = vector.broadcast %cst_243 : f32 to vector<1x64x4xf32>
    %171 = arith.mulf %167, %170 : vector<1x64x4xf32>
    %cst_244 = arith.constant 0.000000e+00 : f32
    %172 = vector.broadcast %cst_244 : f32 to vector<1x64x4xf32>
    %173 = arith.cmpf oge, %171, %172 : vector<1x64x4xf32>
    %cst_245 = arith.constant 0.000000e+00 : f32
    %174 = vector.broadcast %cst_245 : f32 to vector<1x64x4xf32>
    %175 = arith.subf %174, %171 : vector<1x64x4xf32>
    %176 = arith.select %173, %171, %175 : vector<1x64x4xi1>, vector<1x64x4xf32>
    %cst_246 = arith.constant 0.327591091 : f32
    %177 = vector.broadcast %cst_246 : f32 to vector<1x64x4xf32>
    %178 = arith.mulf %177, %176 : vector<1x64x4xf32>
    %cst_247 = arith.constant 1.000000e+00 : f32
    %179 = vector.broadcast %cst_247 : f32 to vector<1x64x4xf32>
    %180 = arith.addf %179, %178 : vector<1x64x4xf32>
    %cst_248 = arith.constant 1.000000e+00 : f32
    %181 = vector.broadcast %cst_248 : f32 to vector<1x64x4xf32>
    %182 = arith.divf %181, %180 : vector<1x64x4xf32>
    %cst_249 = arith.constant 1.06140542 : f32
    %183 = vector.broadcast %cst_249 : f32 to vector<1x64x4xf32>
    %184 = arith.mulf %183, %182 : vector<1x64x4xf32>
    %cst_250 = arith.constant -1.45315206 : f32
    %185 = vector.broadcast %cst_250 : f32 to vector<1x64x4xf32>
    %186 = arith.addf %184, %185 : vector<1x64x4xf32>
    %187 = arith.mulf %186, %182 : vector<1x64x4xf32>
    %cst_251 = arith.constant 1.42141378 : f32
    %188 = vector.broadcast %cst_251 : f32 to vector<1x64x4xf32>
    %189 = arith.addf %187, %188 : vector<1x64x4xf32>
    %190 = arith.mulf %189, %182 : vector<1x64x4xf32>
    %cst_252 = arith.constant -0.284496725 : f32
    %191 = vector.broadcast %cst_252 : f32 to vector<1x64x4xf32>
    %192 = arith.addf %190, %191 : vector<1x64x4xf32>
    %193 = arith.mulf %192, %182 : vector<1x64x4xf32>
    %cst_253 = arith.constant 0.254829586 : f32
    %194 = vector.broadcast %cst_253 : f32 to vector<1x64x4xf32>
    %195 = arith.addf %193, %194 : vector<1x64x4xf32>
    %196 = arith.mulf %195, %182 : vector<1x64x4xf32>
    %cst_254 = arith.constant 0.000000e+00 : f32
    %197 = vector.broadcast %cst_254 : f32 to vector<1x64x4xf32>
    %198 = arith.subf %197, %176 : vector<1x64x4xf32>
    %199 = arith.mulf %198, %176 : vector<1x64x4xf32>
    %200 = math.exp %199 : vector<1x64x4xf32>
    %201 = arith.mulf %196, %200 : vector<1x64x4xf32>
    %cst_255 = arith.constant 1.000000e+00 : f32
    %202 = vector.broadcast %cst_255 : f32 to vector<1x64x4xf32>
    %203 = arith.subf %202, %201 : vector<1x64x4xf32>
    %cst_256 = arith.constant 0.000000e+00 : f32
    %204 = vector.broadcast %cst_256 : f32 to vector<1x64x4xf32>
    %205 = arith.cmpf oge, %171, %204 : vector<1x64x4xf32>
    %cst_257 = arith.constant 0.000000e+00 : f32
    %206 = vector.broadcast %cst_257 : f32 to vector<1x64x4xf32>
    %207 = arith.subf %206, %203 : vector<1x64x4xf32>
    %208 = arith.select %205, %203, %207 : vector<1x64x4xi1>, vector<1x64x4xf32>
    %cst_258 = arith.constant 1.000000e+00 : f32
    %209 = vector.broadcast %cst_258 : f32 to vector<1x64x4xf32>
    %210 = arith.addf %209, %208 : vector<1x64x4xf32>
    %211 = arith.mulf %169, %210 : vector<1x64x4xf32>
    %212 = vector.shape_cast %211 : vector<1x64x4xf32> to vector<1x8x8x4xf32>
    %213 = arith.truncf %212 : vector<1x8x8x4xf32> to vector<1x8x8x4xbf16>
    %c0_259 = arith.constant 0 : index
    %c1_260 = arith.constant 1 : index
    %c8_261 = arith.constant 8 : index
    %c0_262 = arith.constant 0 : index
    %214 = vector.load %arg18[%c0_259, %c1_260, %c8_261, %c0_262] : memref<1x10x17x4xbf16, #tpu.memory_space<vmem>>, vector<1x8x8x4xbf16>
    tpu.vector_store %arg18[%c0_259, %c1_260, %c8_261, %c0_262], %213 {strides = array<i32>} : memref<1x10x17x4xbf16, #tpu.memory_space<vmem>>, vector<1x8x8x4xbf16>,
    %c0_263 = arith.constant 0 : index
    %c0_264 = arith.constant 0 : index
    %c7_265 = arith.constant 7 : index
    %c0_266 = arith.constant 0 : index
    %215 = vector.load %arg18[%c0_263, %c0_264, %c7_265, %c0_266] : memref<1x10x17x4xbf16, #tpu.memory_space<vmem>>, vector<1x8x8x4xbf16>
    %c0_267 = arith.constant 0 : index
    %c0_268 = arith.constant 0 : index
    %c0_269 = arith.constant 0 : index
    %c0_270 = arith.constant 0 : index
    %216 = vector.load %arg20[%c0_267, %c0_268, %c0_269, %c0_270] : memref<1x8x8x36xbf16, #tpu.memory_space<vmem>>, vector<1x8x8x4xbf16>
    tpu.vector_store %arg20[%c0_267, %c0_268, %c0_269, %c0_270], %215 {strides = array<i32>} : memref<1x8x8x36xbf16, #tpu.memory_space<vmem>>, vector<1x8x8x4xbf16>,
    %c0_271 = arith.constant 0 : index
    %c0_272 = arith.constant 0 : index
    %c8_273 = arith.constant 8 : index
    %c0_274 = arith.constant 0 : index
    %217 = vector.load %arg18[%c0_271, %c0_272, %c8_273, %c0_274] : memref<1x10x17x4xbf16, #tpu.memory_space<vmem>>, vector<1x8x8x4xbf16>
    %c0_275 = arith.constant 0 : index
    %c0_276 = arith.constant 0 : index
    %c0_277 = arith.constant 0 : index
    %c4_278 = arith.constant 4 : index
    %218 = vector.load %arg20[%c0_275, %c0_276, %c0_277, %c4_278] : memref<1x8x8x36xbf16, #tpu.memory_space<vmem>>, vector<1x8x8x4xbf16>
    tpu.vector_store %arg20[%c0_275, %c0_276, %c0_277, %c4_278], %217 {strides = array<i32>} : memref<1x8x8x36xbf16, #tpu.memory_space<vmem>>, vector<1x8x8x4xbf16>,
    %c0_279 = arith.constant 0 : index
    %c0_280 = arith.constant 0 : index
    %c9_281 = arith.constant 9 : index
    %c0_282 = arith.constant 0 : index
    %219 = vector.load %arg18[%c0_279, %c0_280, %c9_281, %c0_282] : memref<1x10x17x4xbf16, #tpu.memory_space<vmem>>, vector<1x8x8x4xbf16>
    %c0_283 = arith.constant 0 : index
    %c0_284 = arith.constant 0 : index
    %c0_285 = arith.constant 0 : index
    %c8_286 = arith.constant 8 : index
    %220 = vector.load %arg20[%c0_283, %c0_284, %c0_285, %c8_286] : memref<1x8x8x36xbf16, #tpu.memory_space<vmem>>, vector<1x8x8x4xbf16>
    tpu.vector_store %arg20[%c0_283, %c0_284, %c0_285, %c8_286], %219 {strides = array<i32>} : memref<1x8x8x36xbf16, #tpu.memory_space<vmem>>, vector<1x8x8x4xbf16>,
    %c0_287 = arith.constant 0 : index
    %c1_288 = arith.constant 1 : index
    %c7_289 = arith.constant 7 : index
    %c0_290 = arith.constant 0 : index
    %221 = vector.load %arg18[%c0_287, %c1_288, %c7_289, %c0_290] : memref<1x10x17x4xbf16, #tpu.memory_space<vmem>>, vector<1x8x8x4xbf16>
    %c0_291 = arith.constant 0 : index
    %c0_292 = arith.constant 0 : index
    %c0_293 = arith.constant 0 : index
    %c12_294 = arith.constant 12 : index
    %222 = vector.load %arg20[%c0_291, %c0_292, %c0_293, %c12_294] : memref<1x8x8x36xbf16, #tpu.memory_space<vmem>>, vector<1x8x8x4xbf16>
    tpu.vector_store %arg20[%c0_291, %c0_292, %c0_293, %c12_294], %221 {strides = array<i32>} : memref<1x8x8x36xbf16, #tpu.memory_space<vmem>>, vector<1x8x8x4xbf16>,
    %c0_295 = arith.constant 0 : index
    %c1_296 = arith.constant 1 : index
    %c8_297 = arith.constant 8 : index
    %c0_298 = arith.constant 0 : index
    %223 = vector.load %arg18[%c0_295, %c1_296, %c8_297, %c0_298] : memref<1x10x17x4xbf16, #tpu.memory_space<vmem>>, vector<1x8x8x4xbf16>
    %c0_299 = arith.constant 0 : index
    %c0_300 = arith.constant 0 : index
    %c0_301 = arith.constant 0 : index
    %c16_302 = arith.constant 16 : index
    %224 = vector.load %arg20[%c0_299, %c0_300, %c0_301, %c16_302] : memref<1x8x8x36xbf16, #tpu.memory_space<vmem>>, vector<1x8x8x4xbf16>
    tpu.vector_store %arg20[%c0_299, %c0_300, %c0_301, %c16_302], %223 {strides = array<i32>} : memref<1x8x8x36xbf16, #tpu.memory_space<vmem>>, vector<1x8x8x4xbf16>,
    %c0_303 = arith.constant 0 : index
    %c1_304 = arith.constant 1 : index
    %c9_305 = arith.constant 9 : index
    %c0_306 = arith.constant 0 : index
    %225 = vector.load %arg18[%c0_303, %c1_304, %c9_305, %c0_306] : memref<1x10x17x4xbf16, #tpu.memory_space<vmem>>, vector<1x8x8x4xbf16>
    %c0_307 = arith.constant 0 : index
    %c0_308 = arith.constant 0 : index
    %c0_309 = arith.constant 0 : index
    %c20_310 = arith.constant 20 : index
    %226 = vector.load %arg20[%c0_307, %c0_308, %c0_309, %c20_310] : memref<1x8x8x36xbf16, #tpu.memory_space<vmem>>, vector<1x8x8x4xbf16>
    tpu.vector_store %arg20[%c0_307, %c0_308, %c0_309, %c20_310], %225 {strides = array<i32>} : memref<1x8x8x36xbf16, #tpu.memory_space<vmem>>, vector<1x8x8x4xbf16>,
    %c0_311 = arith.constant 0 : index
    %c2_312 = arith.constant 2 : index
    %c7_313 = arith.constant 7 : index
    %c0_314 = arith.constant 0 : index
    %227 = vector.load %arg18[%c0_311, %c2_312, %c7_313, %c0_314] : memref<1x10x17x4xbf16, #tpu.memory_space<vmem>>, vector<1x8x8x4xbf16>
    %c0_315 = arith.constant 0 : index
    %c0_316 = arith.constant 0 : index
    %c0_317 = arith.constant 0 : index
    %c24_318 = arith.constant 24 : index
    %228 = vector.load %arg20[%c0_315, %c0_316, %c0_317, %c24_318] : memref<1x8x8x36xbf16, #tpu.memory_space<vmem>>, vector<1x8x8x4xbf16>
    tpu.vector_store %arg20[%c0_315, %c0_316, %c0_317, %c24_318], %227 {strides = array<i32>} : memref<1x8x8x36xbf16, #tpu.memory_space<vmem>>, vector<1x8x8x4xbf16>,
    %c0_319 = arith.constant 0 : index
    %c2_320 = arith.constant 2 : index
    %c8_321 = arith.constant 8 : index
    %c0_322 = arith.constant 0 : index
    %229 = vector.load %arg18[%c0_319, %c2_320, %c8_321, %c0_322] : memref<1x10x17x4xbf16, #tpu.memory_space<vmem>>, vector<1x8x8x4xbf16>
    %c0_323 = arith.constant 0 : index
    %c0_324 = arith.constant 0 : index
    %c0_325 = arith.constant 0 : index
    %c28_326 = arith.constant 28 : index
    %230 = vector.load %arg20[%c0_323, %c0_324, %c0_325, %c28_326] : memref<1x8x8x36xbf16, #tpu.memory_space<vmem>>, vector<1x8x8x4xbf16>
    tpu.vector_store %arg20[%c0_323, %c0_324, %c0_325, %c28_326], %229 {strides = array<i32>} : memref<1x8x8x36xbf16, #tpu.memory_space<vmem>>, vector<1x8x8x4xbf16>,
    %c0_327 = arith.constant 0 : index
    %c2_328 = arith.constant 2 : index
    %c9_329 = arith.constant 9 : index
    %c0_330 = arith.constant 0 : index
    %231 = vector.load %arg18[%c0_327, %c2_328, %c9_329, %c0_330] : memref<1x10x17x4xbf16, #tpu.memory_space<vmem>>, vector<1x8x8x4xbf16>
    %c0_331 = arith.constant 0 : index
    %c0_332 = arith.constant 0 : index
    %c0_333 = arith.constant 0 : index
    %c32_334 = arith.constant 32 : index
    %232 = vector.load %arg20[%c0_331, %c0_332, %c0_333, %c32_334] : memref<1x8x8x36xbf16, #tpu.memory_space<vmem>>, vector<1x8x8x4xbf16>
    tpu.vector_store %arg20[%c0_331, %c0_332, %c0_333, %c32_334], %231 {strides = array<i32>} : memref<1x8x8x36xbf16, #tpu.memory_space<vmem>>, vector<1x8x8x4xbf16>,
    %c0_335 = arith.constant 0 : index
    %c0_336 = arith.constant 0 : index
    %c0_337 = arith.constant 0 : index
    %c0_338 = arith.constant 0 : index
    %233 = vector.load %arg20[%c0_335, %c0_336, %c0_337, %c0_338] : memref<1x8x8x36xbf16, #tpu.memory_space<vmem>>, vector<1x8x8x36xbf16>
    %234 = vector.shape_cast %233 : vector<1x8x8x36xbf16> to vector<64x36xbf16>
    %c0_339 = arith.constant 0 : index
    %c0_340 = arith.constant 0 : index
    %235 = vector.load %arg8[%c0_339, %c0_340] : memref<36x8xbf16, #tpu.memory_space<vmem>>, vector<36x8xbf16>
    %cst_341 = arith.constant dense<0.000000e+00> : vector<64x8xf32>
    %236 = tpu.matmul %234, %235, %cst_341 {dimension_numbers = #tpu.dot_dimension_numbers<[1], [0], [0], [1], [0, 0, 1, 1], [], []>} : vector<64x36xbf16>, vector<36x8xbf16>, vector<64x8xf32> -> vector<64x8xf32>
    %237 = vector.shape_cast %236 : vector<64x8xf32> to vector<1x64x8xf32>
    %cst_342 = arith.constant dense<0.000000e+00> : vector<1xf32>
    %238 = vector.multi_reduction <add>, %237, %cst_342 [1, 2] : vector<1x64x8xf32> to vector<1xf32>
    %239 = vector.shape_cast %238 : vector<1xf32> to vector<1x1x1xf32>
    %cst_343 = arith.constant 5.120000e+02 : f32
    %240 = vector.broadcast %cst_343 : f32 to vector<1x1x1xf32>
    %241 = arith.divf %239, %240 : vector<1x1x1xf32>
    %242 = vector.broadcast %241 : vector<1x1x1xf32> to vector<1x64x8xf32>
    %243 = arith.subf %237, %242 : vector<1x64x8xf32>
    %244 = arith.mulf %243, %243 : vector<1x64x8xf32>
    %cst_344 = arith.constant dense<0.000000e+00> : vector<1xf32>
    %245 = vector.multi_reduction <add>, %244, %cst_344 [1, 2] : vector<1x64x8xf32> to vector<1xf32>
    %246 = vector.shape_cast %245 : vector<1xf32> to vector<1x1x1xf32>
    %cst_345 = arith.constant 5.120000e+02 : f32
    %247 = vector.broadcast %cst_345 : f32 to vector<1x1x1xf32>
    %248 = arith.divf %246, %247 : vector<1x1x1xf32>
    %cst_346 = arith.constant 9.99999974E-6 : f32
    %249 = vector.broadcast %cst_346 : f32 to vector<1x1x1xf32>
    %250 = arith.addf %248, %249 : vector<1x1x1xf32>
    %251 = math.rsqrt %250 : vector<1x1x1xf32>
    %252 = vector.broadcast %251 : vector<1x1x1xf32> to vector<1x64x8xf32>
    %253 = arith.mulf %243, %252 : vector<1x64x8xf32>
    %c0_347 = arith.constant 0 : index
    %c0_348 = arith.constant 0 : index
    %254 = vector.load %arg9[%c0_347, %c0_348] : memref<1x8xf32, #tpu.memory_space<vmem>>, vector<1x8xf32>
    %255 = vector.shape_cast %254 : vector<1x8xf32> to vector<1x1x8xf32>
    %256 = vector.broadcast %255 : vector<1x1x8xf32> to vector<1x64x8xf32>
    %257 = arith.mulf %253, %256 : vector<1x64x8xf32>
    %c0_349 = arith.constant 0 : index
    %c0_350 = arith.constant 0 : index
    %258 = vector.load %arg10[%c0_349, %c0_350] : memref<1x8xf32, #tpu.memory_space<vmem>>, vector<1x8xf32>
    %259 = vector.shape_cast %258 : vector<1x8xf32> to vector<1x1x8xf32>
    %260 = vector.broadcast %259 : vector<1x1x8xf32> to vector<1x64x8xf32>
    %261 = arith.addf %257, %260 : vector<1x64x8xf32>
    %cst_351 = arith.constant 5.000000e-01 : f32
    %262 = vector.broadcast %cst_351 : f32 to vector<1x64x8xf32>
    %263 = arith.mulf %262, %261 : vector<1x64x8xf32>
    %cst_352 = arith.constant 0.707106769 : f32
    %264 = vector.broadcast %cst_352 : f32 to vector<1x64x8xf32>
    %265 = arith.mulf %261, %264 : vector<1x64x8xf32>
    %cst_353 = arith.constant 0.000000e+00 : f32
    %266 = vector.broadcast %cst_353 : f32 to vector<1x64x8xf32>
    %267 = arith.cmpf oge, %265, %266 : vector<1x64x8xf32>
    %cst_354 = arith.constant 0.000000e+00 : f32
    %268 = vector.broadcast %cst_354 : f32 to vector<1x64x8xf32>
    %269 = arith.subf %268, %265 : vector<1x64x8xf32>
    %270 = arith.select %267, %265, %269 : vector<1x64x8xi1>, vector<1x64x8xf32>
    %cst_355 = arith.constant 0.327591091 : f32
    %271 = vector.broadcast %cst_355 : f32 to vector<1x64x8xf32>
    %272 = arith.mulf %271, %270 : vector<1x64x8xf32>
    %cst_356 = arith.constant 1.000000e+00 : f32
    %273 = vector.broadcast %cst_356 : f32 to vector<1x64x8xf32>
    %274 = arith.addf %273, %272 : vector<1x64x8xf32>
    %cst_357 = arith.constant 1.000000e+00 : f32
    %275 = vector.broadcast %cst_357 : f32 to vector<1x64x8xf32>
    %276 = arith.divf %275, %274 : vector<1x64x8xf32>
    %cst_358 = arith.constant 1.06140542 : f32
    %277 = vector.broadcast %cst_358 : f32 to vector<1x64x8xf32>
    %278 = arith.mulf %277, %276 : vector<1x64x8xf32>
    %cst_359 = arith.constant -1.45315206 : f32
    %279 = vector.broadcast %cst_359 : f32 to vector<1x64x8xf32>
    %280 = arith.addf %278, %279 : vector<1x64x8xf32>
    %281 = arith.mulf %280, %276 : vector<1x64x8xf32>
    %cst_360 = arith.constant 1.42141378 : f32
    %282 = vector.broadcast %cst_360 : f32 to vector<1x64x8xf32>
    %283 = arith.addf %281, %282 : vector<1x64x8xf32>
    %284 = arith.mulf %283, %276 : vector<1x64x8xf32>
    %cst_361 = arith.constant -0.284496725 : f32
    %285 = vector.broadcast %cst_361 : f32 to vector<1x64x8xf32>
    %286 = arith.addf %284, %285 : vector<1x64x8xf32>
    %287 = arith.mulf %286, %276 : vector<1x64x8xf32>
    %cst_362 = arith.constant 0.254829586 : f32
    %288 = vector.broadcast %cst_362 : f32 to vector<1x64x8xf32>
    %289 = arith.addf %287, %288 : vector<1x64x8xf32>
    %290 = arith.mulf %289, %276 : vector<1x64x8xf32>
    %cst_363 = arith.constant 0.000000e+00 : f32
    %291 = vector.broadcast %cst_363 : f32 to vector<1x64x8xf32>
    %292 = arith.subf %291, %270 : vector<1x64x8xf32>
    %293 = arith.mulf %292, %270 : vector<1x64x8xf32>
    %294 = math.exp %293 : vector<1x64x8xf32>
    %295 = arith.mulf %290, %294 : vector<1x64x8xf32>
    %cst_364 = arith.constant 1.000000e+00 : f32
    %296 = vector.broadcast %cst_364 : f32 to vector<1x64x8xf32>
    %297 = arith.subf %296, %295 : vector<1x64x8xf32>
    %cst_365 = arith.constant 0.000000e+00 : f32
    %298 = vector.broadcast %cst_365 : f32 to vector<1x64x8xf32>
    %299 = arith.cmpf oge, %265, %298 : vector<1x64x8xf32>
    %cst_366 = arith.constant 0.000000e+00 : f32
    %300 = vector.broadcast %cst_366 : f32 to vector<1x64x8xf32>
    %301 = arith.subf %300, %297 : vector<1x64x8xf32>
    %302 = arith.select %299, %297, %301 : vector<1x64x8xi1>, vector<1x64x8xf32>
    %cst_367 = arith.constant 1.000000e+00 : f32
    %303 = vector.broadcast %cst_367 : f32 to vector<1x64x8xf32>
    %304 = arith.addf %303, %302 : vector<1x64x8xf32>
    %305 = arith.mulf %263, %304 : vector<1x64x8xf32>
    %306 = vector.shape_cast %305 : vector<1x64x8xf32> to vector<1x8x8x8xf32>
    %307 = arith.truncf %306 : vector<1x8x8x8xf32> to vector<1x8x8x8xbf16>
    %c0_368 = arith.constant 0 : index
    %c1_369 = arith.constant 1 : index
    %c8_370 = arith.constant 8 : index
    %c0_371 = arith.constant 0 : index
    %308 = vector.load %arg19[%c0_368, %c1_369, %c8_370, %c0_371] : memref<1x10x17x8xbf16, #tpu.memory_space<vmem>>, vector<1x8x8x8xbf16>
    tpu.vector_store %arg19[%c0_368, %c1_369, %c8_370, %c0_371], %307 {strides = array<i32>} : memref<1x10x17x8xbf16, #tpu.memory_space<vmem>>, vector<1x8x8x8xbf16>,
    %c0_372 = arith.constant 0 : index
    %c0_373 = arith.constant 0 : index
    %c7_374 = arith.constant 7 : index
    %c0_375 = arith.constant 0 : index
    %309 = vector.load %arg19[%c0_372, %c0_373, %c7_374, %c0_375] : memref<1x10x17x8xbf16, #tpu.memory_space<vmem>>, vector<1x8x8x8xbf16>
    %c0_376 = arith.constant 0 : index
    %c0_377 = arith.constant 0 : index
    %c0_378 = arith.constant 0 : index
    %c0_379 = arith.constant 0 : index
    %310 = vector.load %arg21[%c0_376, %c0_377, %c0_378, %c0_379] : memref<1x8x8x72xbf16, #tpu.memory_space<vmem>>, vector<1x8x8x8xbf16>
    tpu.vector_store %arg21[%c0_376, %c0_377, %c0_378, %c0_379], %309 {strides = array<i32>} : memref<1x8x8x72xbf16, #tpu.memory_space<vmem>>, vector<1x8x8x8xbf16>,
    %c0_380 = arith.constant 0 : index
    %c0_381 = arith.constant 0 : index
    %c8_382 = arith.constant 8 : index
    %c0_383 = arith.constant 0 : index
    %311 = vector.load %arg19[%c0_380, %c0_381, %c8_382, %c0_383] : memref<1x10x17x8xbf16, #tpu.memory_space<vmem>>, vector<1x8x8x8xbf16>
    %c0_384 = arith.constant 0 : index
    %c0_385 = arith.constant 0 : index
    %c0_386 = arith.constant 0 : index
    %c8_387 = arith.constant 8 : index
    %312 = vector.load %arg21[%c0_384, %c0_385, %c0_386, %c8_387] : memref<1x8x8x72xbf16, #tpu.memory_space<vmem>>, vector<1x8x8x8xbf16>
    tpu.vector_store %arg21[%c0_384, %c0_385, %c0_386, %c8_387], %311 {strides = array<i32>} : memref<1x8x8x72xbf16, #tpu.memory_space<vmem>>, vector<1x8x8x8xbf16>,
    %c0_388 = arith.constant 0 : index
    %c0_389 = arith.constant 0 : index
    %c9_390 = arith.constant 9 : index
    %c0_391 = arith.constant 0 : index
    %313 = vector.load %arg19[%c0_388, %c0_389, %c9_390, %c0_391] : memref<1x10x17x8xbf16, #tpu.memory_space<vmem>>, vector<1x8x8x8xbf16>
    %c0_392 = arith.constant 0 : index
    %c0_393 = arith.constant 0 : index
    %c0_394 = arith.constant 0 : index
    %c16_395 = arith.constant 16 : index
    %314 = vector.load %arg21[%c0_392, %c0_393, %c0_394, %c16_395] : memref<1x8x8x72xbf16, #tpu.memory_space<vmem>>, vector<1x8x8x8xbf16>
    tpu.vector_store %arg21[%c0_392, %c0_393, %c0_394, %c16_395], %313 {strides = array<i32>} : memref<1x8x8x72xbf16, #tpu.memory_space<vmem>>, vector<1x8x8x8xbf16>,
    %c0_396 = arith.constant 0 : index
    %c1_397 = arith.constant 1 : index
    %c7_398 = arith.constant 7 : index
    %c0_399 = arith.constant 0 : index
    %315 = vector.load %arg19[%c0_396, %c1_397, %c7_398, %c0_399] : memref<1x10x17x8xbf16, #tpu.memory_space<vmem>>, vector<1x8x8x8xbf16>
    %c0_400 = arith.constant 0 : index
    %c0_401 = arith.constant 0 : index
    %c0_402 = arith.constant 0 : index
    %c24_403 = arith.constant 24 : index
    %316 = vector.load %arg21[%c0_400, %c0_401, %c0_402, %c24_403] : memref<1x8x8x72xbf16, #tpu.memory_space<vmem>>, vector<1x8x8x8xbf16>
    tpu.vector_store %arg21[%c0_400, %c0_401, %c0_402, %c24_403], %315 {strides = array<i32>} : memref<1x8x8x72xbf16, #tpu.memory_space<vmem>>, vector<1x8x8x8xbf16>,
    %c0_404 = arith.constant 0 : index
    %c1_405 = arith.constant 1 : index
    %c8_406 = arith.constant 8 : index
    %c0_407 = arith.constant 0 : index
    %317 = vector.load %arg19[%c0_404, %c1_405, %c8_406, %c0_407] : memref<1x10x17x8xbf16, #tpu.memory_space<vmem>>, vector<1x8x8x8xbf16>
    %c0_408 = arith.constant 0 : index
    %c0_409 = arith.constant 0 : index
    %c0_410 = arith.constant 0 : index
    %c32_411 = arith.constant 32 : index
    %318 = vector.load %arg21[%c0_408, %c0_409, %c0_410, %c32_411] : memref<1x8x8x72xbf16, #tpu.memory_space<vmem>>, vector<1x8x8x8xbf16>
    tpu.vector_store %arg21[%c0_408, %c0_409, %c0_410, %c32_411], %317 {strides = array<i32>} : memref<1x8x8x72xbf16, #tpu.memory_space<vmem>>, vector<1x8x8x8xbf16>,
    %c0_412 = arith.constant 0 : index
    %c1_413 = arith.constant 1 : index
    %c9_414 = arith.constant 9 : index
    %c0_415 = arith.constant 0 : index
    %319 = vector.load %arg19[%c0_412, %c1_413, %c9_414, %c0_415] : memref<1x10x17x8xbf16, #tpu.memory_space<vmem>>, vector<1x8x8x8xbf16>
    %c0_416 = arith.constant 0 : index
    %c0_417 = arith.constant 0 : index
    %c0_418 = arith.constant 0 : index
    %c40 = arith.constant 40 : index
    %320 = vector.load %arg21[%c0_416, %c0_417, %c0_418, %c40] : memref<1x8x8x72xbf16, #tpu.memory_space<vmem>>, vector<1x8x8x8xbf16>
    tpu.vector_store %arg21[%c0_416, %c0_417, %c0_418, %c40], %319 {strides = array<i32>} : memref<1x8x8x72xbf16, #tpu.memory_space<vmem>>, vector<1x8x8x8xbf16>,
    %c0_419 = arith.constant 0 : index
    %c2_420 = arith.constant 2 : index
    %c7_421 = arith.constant 7 : index
    %c0_422 = arith.constant 0 : index
    %321 = vector.load %arg19[%c0_419, %c2_420, %c7_421, %c0_422] : memref<1x10x17x8xbf16, #tpu.memory_space<vmem>>, vector<1x8x8x8xbf16>
    %c0_423 = arith.constant 0 : index
    %c0_424 = arith.constant 0 : index
    %c0_425 = arith.constant 0 : index
    %c48 = arith.constant 48 : index
    %322 = vector.load %arg21[%c0_423, %c0_424, %c0_425, %c48] : memref<1x8x8x72xbf16, #tpu.memory_space<vmem>>, vector<1x8x8x8xbf16>
    tpu.vector_store %arg21[%c0_423, %c0_424, %c0_425, %c48], %321 {strides = array<i32>} : memref<1x8x8x72xbf16, #tpu.memory_space<vmem>>, vector<1x8x8x8xbf16>,
    %c0_426 = arith.constant 0 : index
    %c2_427 = arith.constant 2 : index
    %c8_428 = arith.constant 8 : index
    %c0_429 = arith.constant 0 : index
    %323 = vector.load %arg19[%c0_426, %c2_427, %c8_428, %c0_429] : memref<1x10x17x8xbf16, #tpu.memory_space<vmem>>, vector<1x8x8x8xbf16>
    %c0_430 = arith.constant 0 : index
    %c0_431 = arith.constant 0 : index
    %c0_432 = arith.constant 0 : index
    %c56 = arith.constant 56 : index
    %324 = vector.load %arg21[%c0_430, %c0_431, %c0_432, %c56] : memref<1x8x8x72xbf16, #tpu.memory_space<vmem>>, vector<1x8x8x8xbf16>
    tpu.vector_store %arg21[%c0_430, %c0_431, %c0_432, %c56], %323 {strides = array<i32>} : memref<1x8x8x72xbf16, #tpu.memory_space<vmem>>, vector<1x8x8x8xbf16>,
    %c0_433 = arith.constant 0 : index
    %c2_434 = arith.constant 2 : index
    %c9_435 = arith.constant 9 : index
    %c0_436 = arith.constant 0 : index
    %325 = vector.load %arg19[%c0_433, %c2_434, %c9_435, %c0_436] : memref<1x10x17x8xbf16, #tpu.memory_space<vmem>>, vector<1x8x8x8xbf16>
    %c0_437 = arith.constant 0 : index
    %c0_438 = arith.constant 0 : index
    %c0_439 = arith.constant 0 : index
    %c64 = arith.constant 64 : index
    %326 = vector.load %arg21[%c0_437, %c0_438, %c0_439, %c64] : memref<1x8x8x72xbf16, #tpu.memory_space<vmem>>, vector<1x8x8x8xbf16>
    tpu.vector_store %arg21[%c0_437, %c0_438, %c0_439, %c64], %325 {strides = array<i32>} : memref<1x8x8x72xbf16, #tpu.memory_space<vmem>>, vector<1x8x8x8xbf16>,
    %c0_440 = arith.constant 0 : index
    %c0_441 = arith.constant 0 : index
    %c0_442 = arith.constant 0 : index
    %c0_443 = arith.constant 0 : index
    %327 = vector.load %arg21[%c0_440, %c0_441, %c0_442, %c0_443] : memref<1x8x8x72xbf16, #tpu.memory_space<vmem>>, vector<1x8x8x72xbf16>
    %328 = vector.shape_cast %327 : vector<1x8x8x72xbf16> to vector<64x72xbf16>
    %c0_444 = arith.constant 0 : index
    %c0_445 = arith.constant 0 : index
    %329 = vector.load %arg11[%c0_444, %c0_445] : memref<72x8xbf16, #tpu.memory_space<vmem>>, vector<72x8xbf16>
    %cst_446 = arith.constant dense<0.000000e+00> : vector<64x8xf32>
    %330 = tpu.matmul %328, %329, %cst_446 {dimension_numbers = #tpu.dot_dimension_numbers<[1], [0], [0], [1], [0, 0, 1, 1], [], []>} : vector<64x72xbf16>, vector<72x8xbf16>, vector<64x8xf32> -> vector<64x8xf32>
    %331 = vector.shape_cast %330 : vector<64x8xf32> to vector<1x64x8xf32>
    %cst_447 = arith.constant dense<0.000000e+00> : vector<1xf32>
    %332 = vector.multi_reduction <add>, %331, %cst_447 [1, 2] : vector<1x64x8xf32> to vector<1xf32>
    %333 = vector.shape_cast %332 : vector<1xf32> to vector<1x1x1xf32>
    %cst_448 = arith.constant 5.120000e+02 : f32
    %334 = vector.broadcast %cst_448 : f32 to vector<1x1x1xf32>
    %335 = arith.divf %333, %334 : vector<1x1x1xf32>
    %336 = vector.broadcast %335 : vector<1x1x1xf32> to vector<1x64x8xf32>
    %337 = arith.subf %331, %336 : vector<1x64x8xf32>
    %338 = arith.mulf %337, %337 : vector<1x64x8xf32>
    %cst_449 = arith.constant dense<0.000000e+00> : vector<1xf32>
    %339 = vector.multi_reduction <add>, %338, %cst_449 [1, 2] : vector<1x64x8xf32> to vector<1xf32>
    %340 = vector.shape_cast %339 : vector<1xf32> to vector<1x1x1xf32>
    %cst_450 = arith.constant 5.120000e+02 : f32
    %341 = vector.broadcast %cst_450 : f32 to vector<1x1x1xf32>
    %342 = arith.divf %340, %341 : vector<1x1x1xf32>
    %cst_451 = arith.constant 9.99999974E-6 : f32
    %343 = vector.broadcast %cst_451 : f32 to vector<1x1x1xf32>
    %344 = arith.addf %342, %343 : vector<1x1x1xf32>
    %345 = math.rsqrt %344 : vector<1x1x1xf32>
    %346 = vector.broadcast %345 : vector<1x1x1xf32> to vector<1x64x8xf32>
    %347 = arith.mulf %337, %346 : vector<1x64x8xf32>
    %c0_452 = arith.constant 0 : index
    %c0_453 = arith.constant 0 : index
    %348 = vector.load %arg12[%c0_452, %c0_453] : memref<1x8xf32, #tpu.memory_space<vmem>>, vector<1x8xf32>
    %349 = vector.shape_cast %348 : vector<1x8xf32> to vector<1x1x8xf32>
    %350 = vector.broadcast %349 : vector<1x1x8xf32> to vector<1x64x8xf32>
    %351 = arith.mulf %347, %350 : vector<1x64x8xf32>
    %c0_454 = arith.constant 0 : index
    %c0_455 = arith.constant 0 : index
    %352 = vector.load %arg13[%c0_454, %c0_455] : memref<1x8xf32, #tpu.memory_space<vmem>>, vector<1x8xf32>
    %353 = vector.shape_cast %352 : vector<1x8xf32> to vector<1x1x8xf32>
    %354 = vector.broadcast %353 : vector<1x1x8xf32> to vector<1x64x8xf32>
    %355 = arith.addf %351, %354 : vector<1x64x8xf32>
    %c0_456 = arith.constant 0 : index
    %c0_457 = arith.constant 0 : index
    %c0_458 = arith.constant 0 : index
    %356 = vector.load %arg14[%c0_456, %c0_457, %c0_458] : memref<1x1x32xf32, #tpu.memory_space<vmem>>, vector<1x1x32xf32>
    %357 = vector.shape_cast %356 : vector<1x1x32xf32> to vector<1x32xf32>
    %cst_459 = arith.constant 0.000000e+00 : f32
    %358 = vector.broadcast %cst_459 : f32 to vector<1x32xf32>
    %359 = arith.subf %358, %357 : vector<1x32xf32>
    %360 = math.exp %359 : vector<1x32xf32>
    %cst_460 = arith.constant 1.000000e+00 : f32
    %361 = vector.broadcast %cst_460 : f32 to vector<1x32xf32>
    %362 = arith.addf %361, %360 : vector<1x32xf32>
    %cst_461 = arith.constant 1.000000e+00 : f32
    %363 = vector.broadcast %cst_461 : f32 to vector<1x32xf32>
    %364 = arith.divf %363, %362 : vector<1x32xf32>
    %365 = arith.mulf %357, %364 : vector<1x32xf32>
    %c0_462 = arith.constant 0 : index
    %c0_463 = arith.constant 0 : index
    %366 = vector.load %arg15[%c0_462, %c0_463] : memref<32x8xf32, #tpu.memory_space<vmem>>, vector<32x8xf32>
    %cst_464 = arith.constant dense<0.000000e+00> : vector<1x8xf32>
    %367 = tpu.matmul %365, %366, %cst_464 {dimension_numbers = #tpu.dot_dimension_numbers<[1], [0], [0], [1], [0, 0, 1, 1], [], []>} : vector<1x32xf32>, vector<32x8xf32>, vector<1x8xf32> -> vector<1x8xf32>
    %c0_465 = arith.constant 0 : index
    %c0_466 = arith.constant 0 : index
    %368 = vector.load %arg16[%c0_465, %c0_466] : memref<1x8xf32, #tpu.memory_space<vmem>>, vector<1x8xf32>
    %369 = arith.addf %367, %368 : vector<1x8xf32>
    %370 = vector.shape_cast %369 : vector<1x8xf32> to vector<1x1x8xf32>
    %371 = vector.broadcast %370 : vector<1x1x8xf32> to vector<1x64x8xf32>
    %372 = arith.addf %355, %371 : vector<1x64x8xf32>
    %373 = vector.shape_cast %372 : vector<1x64x8xf32> to vector<1x8x8x8xf32>
    %c0_467 = arith.constant 0 : index
    %c0_468 = arith.constant 0 : index
    %c0_469 = arith.constant 0 : index
    %c0_470 = arith.constant 0 : index
    %374 = vector.load %arg17[%c0_467, %c0_468, %c0_469, %c0_470] : memref<1x8x8x8xf32, #tpu.memory_space<vmem>>, vector<1x8x8x8xf32>
    tpu.vector_store %arg17[%c0_467, %c0_468, %c0_469, %c0_470], %373 {strides = array<i32>} : memref<1x8x8x8xf32, #tpu.memory_space<vmem>>, vector<1x8x8x8xf32>,
    return
  }
  func.func @transform_0(%arg0: i32) -> (i32, i32, i32, i32, i32) {
    %c0_i32 = arith.constant 0 : i32
    %c0_i32_0 = arith.constant 0 : i32
    %c0_i32_1 = arith.constant 0 : i32
    %c0_i32_2 = arith.constant 0 : i32
    %c0_i32_3 = arith.constant 0 : i32
    return %arg0, %c0_i32, %c0_i32_0, %c0_i32_1, %c0_i32_2 : i32, i32, i32, i32, i32
  }
  func.func @transform_1(%arg0: i32) -> (i32, i32) {
    %c0_i32 = arith.constant 0 : i32
    %c0_i32_0 = arith.constant 0 : i32
    %c0_i32_1 = arith.constant 0 : i32
    return %c0_i32, %c0_i32_0 : i32, i32
  }
  func.func @transform_2(%arg0: i32) -> (i32, i32) {
    %c0_i32 = arith.constant 0 : i32
    %c0_i32_0 = arith.constant 0 : i32
    %c0_i32_1 = arith.constant 0 : i32
    return %c0_i32, %c0_i32_0 : i32, i32
  }
  func.func @transform_3(%arg0: i32) -> (i32, i32) {
    %c0_i32 = arith.constant 0 : i32
    %c0_i32_0 = arith.constant 0 : i32
    %c0_i32_1 = arith.constant 0 : i32
    return %c0_i32, %c0_i32_0 : i32, i32
  }
  func.func @transform_4(%arg0: i32) -> (i32, i32) {
    %c0_i32 = arith.constant 0 : i32
    %c0_i32_0 = arith.constant 0 : i32
    %c0_i32_1 = arith.constant 0 : i32
    return %c0_i32, %c0_i32_0 : i32, i32
  }
  func.func @transform_5(%arg0: i32) -> (i32, i32) {
    %c0_i32 = arith.constant 0 : i32
    %c0_i32_0 = arith.constant 0 : i32
    %c0_i32_1 = arith.constant 0 : i32
    return %c0_i32, %c0_i32_0 : i32, i32
  }
  func.func @transform_6(%arg0: i32) -> (i32, i32) {
    %c0_i32 = arith.constant 0 : i32
    %c0_i32_0 = arith.constant 0 : i32
    %c0_i32_1 = arith.constant 0 : i32
    return %c0_i32, %c0_i32_0 : i32, i32
  }
  func.func @transform_7(%arg0: i32) -> (i32, i32) {
    %c0_i32 = arith.constant 0 : i32
    %c0_i32_0 = arith.constant 0 : i32
    %c0_i32_1 = arith.constant 0 : i32
    return %c0_i32, %c0_i32_0 : i32, i32
  }
  func.func @transform_8(%arg0: i32) -> (i32, i32) {
    %c0_i32 = arith.constant 0 : i32
    %c0_i32_0 = arith.constant 0 : i32
    %c0_i32_1 = arith.constant 0 : i32
    return %c0_i32, %c0_i32_0 : i32, i32
  }
  func.func @transform_9(%arg0: i32) -> (i32, i32) {
    %c0_i32 = arith.constant 0 : i32
    %c0_i32_0 = arith.constant 0 : i32
    %c0_i32_1 = arith.constant 0 : i32
    return %c0_i32, %c0_i32_0 : i32, i32
  }
  func.func @transform_10(%arg0: i32) -> (i32, i32) {
    %c0_i32 = arith.constant 0 : i32
    %c0_i32_0 = arith.constant 0 : i32
    %c0_i32_1 = arith.constant 0 : i32
    return %c0_i32, %c0_i32_0 : i32, i32
  }
  func.func @transform_11(%arg0: i32) -> (i32, i32) {
    %c0_i32 = arith.constant 0 : i32
    %c0_i32_0 = arith.constant 0 : i32
    %c0_i32_1 = arith.constant 0 : i32
    return %c0_i32, %c0_i32_0 : i32, i32
  }
  func.func @transform_12(%arg0: i32) -> (i32, i32) {
    %c0_i32 = arith.constant 0 : i32
    %c0_i32_0 = arith.constant 0 : i32
    %c0_i32_1 = arith.constant 0 : i32
    return %c0_i32, %c0_i32_0 : i32, i32
  }
  func.func @transform_13(%arg0: i32) -> (i32, i32, i32) {
    %c0_i32 = arith.constant 0 : i32
    %c0_i32_0 = arith.constant 0 : i32
    %c0_i32_1 = arith.constant 0 : i32
    return %arg0, %c0_i32, %c0_i32_0 : i32, i32, i32
  }
  func.func @transform_14(%arg0: i32) -> (i32, i32) {
    %c0_i32 = arith.constant 0 : i32
    %c0_i32_0 = arith.constant 0 : i32
    %c0_i32_1 = arith.constant 0 : i32
    return %c0_i32, %c0_i32_0 : i32, i32
  }
  func.func @transform_15(%arg0: i32) -> (i32, i32) {
    %c0_i32 = arith.constant 0 : i32
    %c0_i32_0 = arith.constant 0 : i32
    %c0_i32_1 = arith.constant 0 : i32
    return %c0_i32, %c0_i32_0 : i32, i32
  }
  func.func @transform_16(%arg0: i32) -> (i32, i32, i32, i32) {
    %c0_i32 = arith.constant 0 : i32
    %c0_i32_0 = arith.constant 0 : i32
    %c0_i32_1 = arith.constant 0 : i32
    %c0_i32_2 = arith.constant 0 : i32
    return %arg0, %c0_i32, %c0_i32_0, %c0_i32_1 : i32, i32, i32, i32
  }
}

</mosaic_0001>

<llo_original>
// kernel: _lambda_.1
$region0: #{_lambda_.1}
  #allocation0 [shape = 'u32[]', space=smem, size = 0x4, offset = 0x4, fixed_abs, tag = 'smem constant byte address 0x4 - core index']
  #allocation1 [shape = 'u32[72,128]{1,0:T(1,128)}', space=vmem, size = 0x9000, scoped, tag = 'internal scratch']
  #allocation2 [shape = 'bf16[1,10,17,4]{3,2,1,0:T(8,128)(2,1)}', space=vmem, size = 0xf000, scoped, tag = 'scratch operand']
  #allocation3 [shape = 'bf16[1,10,17,8]{3,2,1,0:T(8,128)(2,1)}', space=vmem, size = 0xf000, scoped, tag = 'scratch operand']
  #allocation4 [shape = 'bf16[1,8,8,36]{3,2,1,0:T(8,128)(2,1)}', space=vmem, size = 0x4000, scoped, tag = 'scratch operand']
  #allocation5 [shape = 'bf16[1,8,8,72]{3,2,1,0:T(8,128)(2,1)}', space=vmem, size = 0x4000, scoped, tag = 'scratch operand']
  %s0 = inlined_call_operand.vmem [shape: f32[2,4,8,8,4], index: 0, kind: input, shape index: {}]
  %s1 = inlined_call_operand.vmem [shape: bf16[36,4], index: 1, kind: input, shape index: {}]
  %s2 = inlined_call_operand.vmem [shape: f32[1,4], index: 2, kind: input, shape index: {}]
  %s3 = inlined_call_operand.vmem [shape: f32[1,4], index: 3, kind: input, shape index: {}]
  %s4 = inlined_call_operand.vmem [shape: bf16[36,4], index: 4, kind: input, shape index: {}]
  %s5 = inlined_call_operand.vmem [shape: f32[1,4], index: 5, kind: input, shape index: {}]
  %s6 = inlined_call_operand.vmem [shape: f32[1,4], index: 6, kind: input, shape index: {}]
  %s7 = inlined_call_operand.vmem [shape: bf16[36,8], index: 7, kind: input, shape index: {}]
  %s8 = inlined_call_operand.vmem [shape: f32[1,8], index: 8, kind: input, shape index: {}]
  %s9 = inlined_call_operand.vmem [shape: f32[1,8], index: 9, kind: input, shape index: {}]
  %s10 = inlined_call_operand.vmem [shape: bf16[72,8], index: 10, kind: input, shape index: {}]
  %s11 = inlined_call_operand.vmem [shape: f32[1,8], index: 11, kind: input, shape index: {}]
  %s12 = inlined_call_operand.vmem [shape: f32[1,8], index: 12, kind: input, shape index: {}]
  %s13 = inlined_call_operand.vmem [shape: f32[2,1,32], index: 13, kind: input, shape index: {}]
  %s14 = inlined_call_operand.vmem [shape: f32[32,8], index: 14, kind: input, shape index: {}]
  %s15 = inlined_call_operand.vmem [shape: f32[1,8], index: 15, kind: input, shape index: {}]
  %s16 = inlined_call_operand.vmem [shape: f32[2,8,8,8], index: 16, kind: output, shape index: {}]
  %s17 = sld [smem:[#allocation0]]
  $region97: #{_lambda_.1} parent=0
    _
  %s19 = ssub.s32 1, %s17
  %s20 = scalar_select 0, %s19, %s17
  loop: start=0, step=1, limit=4
  $region2: #{_lambda_.1} parent=0 // loop_pre_header
    _
  $region3: #{_lambda_.1} parent=0 // loop_header
    %s22 = sphi 0, %s26
    %p23 = scmp.ge.s32.totalorder %s22, 4
    %s32 = sphi 0, %s34
    %s35 = sphi 0, %s32
    %s36 = sphi 0, %s35
    %s52 = sphi 0, %s36
    %s56 = sphi 0, %s56
    %s58 = sphi 0, %s56
    %s59 = sphi 0, %s58
    %s73 = sphi 0, %s59
    %s77 = sphi 0, %s77
    %s79 = sphi 0, %s77
    %s80 = sphi 0, %s79
    %s94 = sphi 0, %s80
    %s98 = sphi 0, %s98
    %s100 = sphi 0, %s98
    %s101 = sphi 0, %s100
    %s115 = sphi 0, %s101
    %s119 = sphi 0, %s119
    %s121 = sphi 0, %s119
    %s122 = sphi 0, %s121
    %s136 = sphi 0, %s122
    %s140 = sphi 0, %s140
    %s142 = sphi 0, %s140
    %s143 = sphi 0, %s142
    %s157 = sphi 0, %s143
    %s161 = sphi 0, %s161
    %s163 = sphi 0, %s161
    %s164 = sphi 0, %s163
    %s178 = sphi 0, %s164
    %s182 = sphi 0, %s182
    %s184 = sphi 0, %s182
    %s185 = sphi 0, %s184
    %s199 = sphi 0, %s185
    %s203 = sphi 0, %s203
    %s205 = sphi 0, %s203
    %s206 = sphi 0, %s205
    %s220 = sphi 0, %s206
    %s224 = sphi 0, %s224
    %s226 = sphi 0, %s224
    %s227 = sphi 0, %s226
    %s241 = sphi 0, %s227
    %s245 = sphi 0, %s245
    %s247 = sphi 0, %s245
    %s248 = sphi 0, %s247
    %s262 = sphi 0, %s248
    %s266 = sphi 0, %s266
    %s268 = sphi 0, %s266
    %s269 = sphi 0, %s268
    %s283 = sphi 0, %s269
    %s287 = sphi 0, %s287
    %s289 = sphi 0, %s287
    %s290 = sphi 0, %s289
    %s304 = sphi 0, %s290
    %s310 = sphi 0, %s312
    %s313 = sphi 0, %s310
    %s314 = sphi 0, %s313
    %s330 = sphi 0, %s314
    %s334 = sphi 0, %s334
    %s336 = sphi 0, %s334
    %s337 = sphi 0, %s336
    %s351 = sphi 0, %s337
    %s355 = sphi 0, %s355
    %s357 = sphi 0, %s355
    %s358 = sphi 0, %s357
    %s372 = sphi 0, %s358
    %s378 = sphi 0, %s380
    %s381 = sphi 0, %s378
    %s382 = sphi 0, %s381
    %s398 = sphi 0, %s382
  $region4: #{_lambda_.1} parent=0 // loop_header_branch
    %25 = sbr.rel (%p23) target = $region8
  $region5: #{_lambda_.1} parent=0 // loop_body
    %s27 = ssub.s32 %s22, 1
    %s28 = ssub.s32 %s22, 2
    %s29 = sadd.s32 %s22, 1
    %s30 = ssub.s32 %s22, %s29
    %p31 = scmp.eq.s32.totalorder %s30, 0
    %s33 = sadd.s32 %s32, 1
    %s34 = scalar_select %p31, %s32, %s33
    %p37 = pneg %p31
    %p38 = scmp.eq.s32.totalorder %s22, 1
    %p39 = por %p37, %p38
    %p40 = scmp.ne.s32.totalorder %s32, %s35
    %p41 = scmp.eq.s32.totalorder %s22, 0
    %p42 = por %p40, %p41
    %p43 = scmp.ne.s32.totalorder %s32, %s35
    %p44 = scmp.eq.s32.totalorder %s27, 1
    %p45 = por %p43, %p44
    %p46 = scmp.ne.s32.totalorder %s35, %s36
    %p47 = scmp.eq.s32.totalorder %s27, 0
    %p48 = por %p46, %p47
    %p49 = scmp.ne.s32.totalorder %s35, %s36
    %p50 = scmp.eq.s32.totalorder %s28, 1
    %p51 = por %p49, %p50
    %p53 = scmp.ne.s32.totalorder %s36, %s52
    %p54 = scmp.eq.s32.totalorder %s28, 0
    %p55 = por %p53, %p54
    %s57 = sadd.s32 %s56, 1
    %p60 = scmp.eq.s32.totalorder %s22, 1
    %p61 = scmp.ne.s32.totalorder %s56, %s58
    %p62 = scmp.eq.s32.totalorder %s22, 0
    %p63 = por %p61, %p62
    %p64 = scmp.ne.s32.totalorder %s56, %s58
    %p65 = scmp.eq.s32.totalorder %s27, 1
    %p66 = por %p64, %p65
    %p67 = scmp.ne.s32.totalorder %s58, %s59
    %p68 = scmp.eq.s32.totalorder %s27, 0
    %p69 = por %p67, %p68
    %p70 = scmp.ne.s32.totalorder %s58, %s59
    %p71 = scmp.eq.s32.totalorder %s28, 1
    %p72 = por %p70, %p71
    %p74 = scmp.ne.s32.totalorder %s59, %s73
    %p75 = scmp.eq.s32.totalorder %s28, 0
    %p76 = por %p74, %p75
    %s78 = sadd.s32 %s77, 1
    %p81 = scmp.eq.s32.totalorder %s22, 1
    %p82 = scmp.ne.s32.totalorder %s77, %s79
    %p83 = scmp.eq.s32.totalorder %s22, 0
    %p84 = por %p82, %p83
    %p85 = scmp.ne.s32.totalorder %s77, %s79
    %p86 = scmp.eq.s32.totalorder %s27, 1
    %p87 = por %p85, %p86
    %p88 = scmp.ne.s32.totalorder %s79, %s80
    %p89 = scmp.eq.s32.totalorder %s27, 0
    %p90 = por %p88, %p89
    %p91 = scmp.ne.s32.totalorder %s79, %s80
    %p92 = scmp.eq.s32.totalorder %s28, 1
    %p93 = por %p91, %p92
    %p95 = scmp.ne.s32.totalorder %s80, %s94
    %p96 = scmp.eq.s32.totalorder %s28, 0
    %p97 = por %p95, %p96
    %s99 = sadd.s32 %s98, 1
    %p102 = scmp.eq.s32.totalorder %s22, 1
    %p103 = scmp.ne.s32.totalorder %s98, %s100
    %p104 = scmp.eq.s32.totalorder %s22, 0
    %p105 = por %p103, %p104
    %p106 = scmp.ne.s32.totalorder %s98, %s100
    %p107 = scmp.eq.s32.totalorder %s27, 1
    %p108 = por %p106, %p107
    %p109 = scmp.ne.s32.totalorder %s100, %s101
    %p110 = scmp.eq.s32.totalorder %s27, 0
    %p111 = por %p109, %p110
    %p112 = scmp.ne.s32.totalorder %s100, %s101
    %p113 = scmp.eq.s32.totalorder %s28, 1
    %p114 = por %p112, %p113
    %p116 = scmp.ne.s32.totalorder %s101, %s115
    %p117 = scmp.eq.s32.totalorder %s28, 0
    %p118 = por %p116, %p117
    %s120 = sadd.s32 %s119, 1
    %p123 = scmp.eq.s32.totalorder %s22, 1
    %p124 = scmp.ne.s32.totalorder %s119, %s121
    %p125 = scmp.eq.s32.totalorder %s22, 0
    %p126 = por %p124, %p125
    %p127 = scmp.ne.s32.totalorder %s119, %s121
    %p128 = scmp.eq.s32.totalorder %s27, 1
    %p129 = por %p127, %p128
    %p130 = scmp.ne.s32.totalorder %s121, %s122
    %p131 = scmp.eq.s32.totalorder %s27, 0
    %p132 = por %p130, %p131
    %p133 = scmp.ne.s32.totalorder %s121, %s122
    %p134 = scmp.eq.s32.totalorder %s28, 1
    %p135 = por %p133, %p134
    %p137 = scmp.ne.s32.totalorder %s122, %s136
    %p138 = scmp.eq.s32.totalorder %s28, 0
    %p139 = por %p137, %p138
    %s141 = sadd.s32 %s140, 1
    %p144 = scmp.eq.s32.totalorder %s22, 1
    %p145 = scmp.ne.s32.totalorder %s140, %s142
    %p146 = scmp.eq.s32.totalorder %s22, 0
    %p147 = por %p145, %p146
    %p148 = scmp.ne.s32.totalorder %s140, %s142
    %p149 = scmp.eq.s32.totalorder %s27, 1
    %p150 = por %p148, %p149
    %p151 = scmp.ne.s32.totalorder %s142, %s143
    %p152 = scmp.eq.s32.totalorder %s27, 0
    %p153 = por %p151, %p152
    %p154 = scmp.ne.s32.totalorder %s142, %s143
    %p155 = scmp.eq.s32.totalorder %s28, 1
    %p156 = por %p154, %p155
    %p158 = scmp.ne.s32.totalorder %s143, %s157
    %p159 = scmp.eq.s32.totalorder %s28, 0
    %p160 = por %p158, %p159
    %s162 = sadd.s32 %s161, 1
    %p165 = scmp.eq.s32.totalorder %s22, 1
    %p166 = scmp.ne.s32.totalorder %s161, %s163
    %p167 = scmp.eq.s32.totalorder %s22, 0
    %p168 = por %p166, %p167
    %p169 = scmp.ne.s32.totalorder %s161, %s163
    %p170 = scmp.eq.s32.totalorder %s27, 1
    %p171 = por %p169, %p170
    %p172 = scmp.ne.s32.totalorder %s163, %s164
    %p173 = scmp.eq.s32.totalorder %s27, 0
    %p174 = por %p172, %p173
    %p175 = scmp.ne.s32.totalorder %s163, %s164
    %p176 = scmp.eq.s32.totalorder %s28, 1
    %p177 = por %p175, %p176
    %p179 = scmp.ne.s32.totalorder %s164, %s178
    %p180 = scmp.eq.s32.totalorder %s28, 0
    %p181 = por %p179, %p180
    %s183 = sadd.s32 %s182, 1
    %p186 = scmp.eq.s32.totalorder %s22, 1
    %p187 = scmp.ne.s32.totalorder %s182, %s184
    %p188 = scmp.eq.s32.totalorder %s22, 0
    %p189 = por %p187, %p188
    %p190 = scmp.ne.s32.totalorder %s182, %s184
    %p191 = scmp.eq.s32.totalorder %s27, 1
    %p192 = por %p190, %p191
    %p193 = scmp.ne.s32.totalorder %s184, %s185
    %p194 = scmp.eq.s32.totalorder %s27, 0
    %p195 = por %p193, %p194
    %p196 = scmp.ne.s32.totalorder %s184, %s185
    %p197 = scmp.eq.s32.totalorder %s28, 1
    %p198 = por %p196, %p197
    %p200 = scmp.ne.s32.totalorder %s185, %s199
    %p201 = scmp.eq.s32.totalorder %s28, 0
    %p202 = por %p200, %p201
    %s204 = sadd.s32 %s203, 1
    %p207 = scmp.eq.s32.totalorder %s22, 1
    %p208 = scmp.ne.s32.totalorder %s203, %s205
    %p209 = scmp.eq.s32.totalorder %s22, 0
    %p210 = por %p208, %p209
    %p211 = scmp.ne.s32.totalorder %s203, %s205
    %p212 = scmp.eq.s32.totalorder %s27, 1
    %p213 = por %p211, %p212
    %p214 = scmp.ne.s32.totalorder %s205, %s206
    %p215 = scmp.eq.s32.totalorder %s27, 0
    %p216 = por %p214, %p215
    %p217 = scmp.ne.s32.totalorder %s205, %s206
    %p218 = scmp.eq.s32.totalorder %s28, 1
    %p219 = por %p217, %p218
    %p221 = scmp.ne.s32.totalorder %s206, %s220
    %p222 = scmp.eq.s32.totalorder %s28, 0
    %p223 = por %p221, %p222
    %s225 = sadd.s32 %s224, 1
    %p228 = scmp.eq.s32.totalorder %s22, 1
    %p229 = scmp.ne.s32.totalorder %s224, %s226
    %p230 = scmp.eq.s32.totalorder %s22, 0
    %p231 = por %p229, %p230
    %p232 = scmp.ne.s32.totalorder %s224, %s226
    %p233 = scmp.eq.s32.totalorder %s27, 1
    %p234 = por %p232, %p233
    %p235 = scmp.ne.s32.totalorder %s226, %s227
    %p236 = scmp.eq.s32.totalorder %s27, 0
    %p237 = por %p235, %p236
    %p238 = scmp.ne.s32.totalorder %s226, %s227
    %p239 = scmp.eq.s32.totalorder %s28, 1
    %p240 = por %p238, %p239
    %p242 = scmp.ne.s32.totalorder %s227, %s241
    %p243 = scmp.eq.s32.totalorder %s28, 0
    %p244 = por %p242, %p243
    %s246 = sadd.s32 %s245, 1
    %p249 = scmp.eq.s32.totalorder %s22, 1
    %p250 = scmp.ne.s32.totalorder %s245, %s247
    %p251 = scmp.eq.s32.totalorder %s22, 0
    %p252 = por %p250, %p251
    %p253 = scmp.ne.s32.totalorder %s245, %s247
    %p254 = scmp.eq.s32.totalorder %s27, 1
    %p255 = por %p253, %p254
    %p256 = scmp.ne.s32.totalorder %s247, %s248
    %p257 = scmp.eq.s32.totalorder %s27, 0
    %p258 = por %p256, %p257
    %p259 = scmp.ne.s32.totalorder %s247, %s248
    %p260 = scmp.eq.s32.totalorder %s28, 1
    %p261 = por %p259, %p260
    %p263 = scmp.ne.s32.totalorder %s248, %s262
    %p264 = scmp.eq.s32.totalorder %s28, 0
    %p265 = por %p263, %p264
    %s267 = sadd.s32 %s266, 1
    %p270 = scmp.eq.s32.totalorder %s22, 1
    %p271 = scmp.ne.s32.totalorder %s266, %s268
    %p272 = scmp.eq.s32.totalorder %s22, 0
    %p273 = por %p271, %p272
    %p274 = scmp.ne.s32.totalorder %s266, %s268
    %p275 = scmp.eq.s32.totalorder %s27, 1
    %p276 = por %p274, %p275
    %p277 = scmp.ne.s32.totalorder %s268, %s269
    %p278 = scmp.eq.s32.totalorder %s27, 0
    %p279 = por %p277, %p278
    %p280 = scmp.ne.s32.totalorder %s268, %s269
    %p281 = scmp.eq.s32.totalorder %s28, 1
    %p282 = por %p280, %p281
    %p284 = scmp.ne.s32.totalorder %s269, %s283
    %p285 = scmp.eq.s32.totalorder %s28, 0
    %p286 = por %p284, %p285
    %s288 = sadd.s32 %s287, 1
    %p291 = scmp.eq.s32.totalorder %s22, 1
    %p292 = scmp.ne.s32.totalorder %s287, %s289
    %p293 = scmp.eq.s32.totalorder %s22, 0
    %p294 = por %p292, %p293
    %p295 = scmp.ne.s32.totalorder %s287, %s289
    %p296 = scmp.eq.s32.totalorder %s27, 1
    %p297 = por %p295, %p296
    %p298 = scmp.ne.s32.totalorder %s289, %s290
    %p299 = scmp.eq.s32.totalorder %s27, 0
    %p300 = por %p298, %p299
    %p301 = scmp.ne.s32.totalorder %s289, %s290
    %p302 = scmp.eq.s32.totalorder %s28, 1
    %p303 = por %p301, %p302
    %p305 = scmp.ne.s32.totalorder %s290, %s304
    %p306 = scmp.eq.s32.totalorder %s28, 0
    %p307 = por %p305, %p306
    %s308 = ssub.s32 %s22, %s29
    %p309 = scmp.eq.s32.totalorder %s308, 0
    %s311 = sadd.s32 %s310, 1
    %s312 = scalar_select %p309, %s310, %s311
    %p315 = pneg %p309
    %p316 = scmp.eq.s32.totalorder %s22, 1
    %p317 = por %p315, %p316
    %p318 = scmp.ne.s32.totalorder %s310, %s313
    %p319 = scmp.eq.s32.totalorder %s22, 0
    %p320 = por %p318, %p319
    %p321 = scmp.ne.s32.totalorder %s310, %s313
    %p322 = scmp.eq.s32.totalorder %s27, 1
    %p323 = por %p321, %p322
    %p324 = scmp.ne.s32.totalorder %s313, %s314
    %p325 = scmp.eq.s32.totalorder %s27, 0
    %p326 = por %p324, %p325
    %p327 = scmp.ne.s32.totalorder %s313, %s314
    %p328 = scmp.eq.s32.totalorder %s28, 1
    %p329 = por %p327, %p328
    %p331 = scmp.ne.s32.totalorder %s314, %s330
    %p332 = scmp.eq.s32.totalorder %s28, 0
    %p333 = por %p331, %p332
    %s335 = sadd.s32 %s334, 1
    %p338 = scmp.eq.s32.totalorder %s22, 1
    %p339 = scmp.ne.s32.totalorder %s334, %s336
    %p340 = scmp.eq.s32.totalorder %s22, 0
    %p341 = por %p339, %p340
    %p342 = scmp.ne.s32.totalorder %s334, %s336
    %p343 = scmp.eq.s32.totalorder %s27, 1
    %p344 = por %p342, %p343
    %p345 = scmp.ne.s32.totalorder %s336, %s337
    %p346 = scmp.eq.s32.totalorder %s27, 0
    %p347 = por %p345, %p346
    %p348 = scmp.ne.s32.totalorder %s336, %s337
    %p349 = scmp.eq.s32.totalorder %s28, 1
    %p350 = por %p348, %p349
    %p352 = scmp.ne.s32.totalorder %s337, %s351
    %p353 = scmp.eq.s32.totalorder %s28, 0
    %p354 = por %p352, %p353
    %s356 = sadd.s32 %s355, 1
    %p359 = scmp.eq.s32.totalorder %s22, 1
    %p360 = scmp.ne.s32.totalorder %s355, %s357
    %p361 = scmp.eq.s32.totalorder %s22, 0
    %p362 = por %p360, %p361
    %p363 = scmp.ne.s32.totalorder %s355, %s357
    %p364 = scmp.eq.s32.totalorder %s27, 1
    %p365 = por %p363, %p364
    %p366 = scmp.ne.s32.totalorder %s357, %s358
    %p367 = scmp.eq.s32.totalorder %s27, 0
    %p368 = por %p366, %p367
    %p369 = scmp.ne.s32.totalorder %s357, %s358
    %p370 = scmp.eq.s32.totalorder %s28, 1
    %p371 = por %p369, %p370
    %p373 = scmp.ne.s32.totalorder %s358, %s372
    %p374 = scmp.eq.s32.totalorder %s28, 0
    %p375 = por %p373, %p374
    %s376 = ssub.s32 %s22, %s29
    %p377 = scmp.eq.s32.totalorder %s376, 0
    %s379 = sadd.s32 %s378, 1
    %s380 = scalar_select %p377, %s378, %s379
    %p383 = pneg %p377
    %p384 = scmp.eq.s32.totalorder %s22, 1
    %p385 = por %p383, %p384
    %p386 = scmp.ne.s32.totalorder %s378, %s381
    %p387 = scmp.eq.s32.totalorder %s22, 0
    %p388 = por %p386, %p387
    %p389 = scmp.ne.s32.totalorder %s378, %s381
    %p390 = scmp.eq.s32.totalorder %s27, 1
    %p391 = por %p389, %p390
    %p392 = scmp.ne.s32.totalorder %s381, %s382
    %p393 = scmp.eq.s32.totalorder %s27, 0
    %p394 = por %p392, %p393
    %p395 = scmp.ne.s32.totalorder %s381, %s382
    %p396 = scmp.eq.s32.totalorder %s28, 1
    %p397 = por %p395, %p396
    %p399 = scmp.ne.s32.totalorder %s382, %s398
    %p400 = scmp.eq.s32.totalorder %s28, 0
    %p401 = por %p399, %p400
    %p402 = scmp.le.s32.totalorder 1, %s22
    %p403 = scmp.lt.s32.totalorder %s22, 3
    %p404 = pnand %p402, %p403
    %p405 = pneg %p404
    // Predicated region
    $region9: #{_lambda_.1} parent=5 // pred_check
      _
    $region10: #{_lambda_.1} parent=5 // pred_check_branch
      %407 = sbr.rel (%p404) target = $region12
    $region11: #{_lambda_.1} parent=5 // pred_region
      %s408 = ssub.s32 %s22, 1
      // Predicated region
      $region13: #{_lambda_.1} parent=11 // pred_check
        %p409 = pneg %p69
      $region14: #{_lambda_.1} parent=11 // pred_check_branch
        %411 = sbr.rel (%p409) target = $region16
      $region15: #{_lambda_.1} parent=11 // pred_region
        _
      $region16: #{_lambda_.1} parent=11 // pred_fallthru
        _
      // Predicated region
      $region17: #{_lambda_.1} parent=11 // pred_check
        %p412 = pneg %p90
      $region18: #{_lambda_.1} parent=11 // pred_check_branch
        %414 = sbr.rel (%p412) target = $region20
      $region19: #{_lambda_.1} parent=11 // pred_region
        _
      $region20: #{_lambda_.1} parent=11 // pred_fallthru
        _
      // Predicated region
      $region21: #{_lambda_.1} parent=11 // pred_check
        %p415 = pneg %p111
      $region22: #{_lambda_.1} parent=11 // pred_check_branch
        %417 = sbr.rel (%p415) target = $region24
      $region23: #{_lambda_.1} parent=11 // pred_region
        _
      $region24: #{_lambda_.1} parent=11 // pred_fallthru
        _
      // Predicated region
      $region25: #{_lambda_.1} parent=11 // pred_check
        %p418 = pneg %p132
      $region26: #{_lambda_.1} parent=11 // pred_check_branch
        %420 = sbr.rel (%p418) target = $region28
      $region27: #{_lambda_.1} parent=11 // pred_region
        _
      $region28: #{_lambda_.1} parent=11 // pred_fallthru
        _
      // Predicated region
      $region29: #{_lambda_.1} parent=11 // pred_check
        %p421 = pneg %p153
      $region30: #{_lambda_.1} parent=11 // pred_check_branch
        %423 = sbr.rel (%p421) target = $region32
      $region31: #{_lambda_.1} parent=11 // pred_region
        _
      $region32: #{_lambda_.1} parent=11 // pred_fallthru
        _
      // Predicated region
      $region33: #{_lambda_.1} parent=11 // pred_check
        %p424 = pneg %p174
      $region34: #{_lambda_.1} parent=11 // pred_check_branch
        %426 = sbr.rel (%p424) target = $region36
      $region35: #{_lambda_.1} parent=11 // pred_region
        _
      $region36: #{_lambda_.1} parent=11 // pred_fallthru
        _
      // Predicated region
      $region37: #{_lambda_.1} parent=11 // pred_check
        %p427 = pneg %p195
      $region38: #{_lambda_.1} parent=11 // pred_check_branch
        %429 = sbr.rel (%p427) target = $region40
      $region39: #{_lambda_.1} parent=11 // pred_region
        _
      $region40: #{_lambda_.1} parent=11 // pred_fallthru
        _
      // Predicated region
      $region41: #{_lambda_.1} parent=11 // pred_check
        %p430 = pneg %p216
      $region42: #{_lambda_.1} parent=11 // pred_check_branch
        %432 = sbr.rel (%p430) target = $region44
      $region43: #{_lambda_.1} parent=11 // pred_region
        _
      $region44: #{_lambda_.1} parent=11 // pred_fallthru
        _
      // Predicated region
      $region45: #{_lambda_.1} parent=11 // pred_check
        %p433 = pneg %p237
      $region46: #{_lambda_.1} parent=11 // pred_check_branch
        %435 = sbr.rel (%p433) target = $region48
      $region47: #{_lambda_.1} parent=11 // pred_region
        _
      $region48: #{_lambda_.1} parent=11 // pred_fallthru
        _
      // Predicated region
      $region49: #{_lambda_.1} parent=11 // pred_check
        %p436 = pneg %p258
      $region50: #{_lambda_.1} parent=11 // pred_check_branch
        %438 = sbr.rel (%p436) target = $region52
      $region51: #{_lambda_.1} parent=11 // pred_region
        _
      $region52: #{_lambda_.1} parent=11 // pred_fallthru
        _
      // Predicated region
      $region53: #{_lambda_.1} parent=11 // pred_check
        %p439 = pneg %p279
      $region54: #{_lambda_.1} parent=11 // pred_check_branch
        %441 = sbr.rel (%p439) target = $region56
      $region55: #{_lambda_.1} parent=11 // pred_region
        _
      $region56: #{_lambda_.1} parent=11 // pred_fallthru
        _
      // Predicated region
      $region57: #{_lambda_.1} parent=11 // pred_check
        %p442 = pneg %p300
      $region58: #{_lambda_.1} parent=11 // pred_check_branch
        %444 = sbr.rel (%p442) target = $region60
      $region59: #{_lambda_.1} parent=11 // pred_region
        _
      $region60: #{_lambda_.1} parent=11 // pred_fallthru
        _
      // Predicated region
      $region61: #{_lambda_.1} parent=11 // pred_check
        %p445 = pneg %p347
      $region62: #{_lambda_.1} parent=11 // pred_check_branch
        %447 = sbr.rel (%p445) target = $region64
      $region63: #{_lambda_.1} parent=11 // pred_region
        _
      $region64: #{_lambda_.1} parent=11 // pred_fallthru
        _
      // Predicated region
      $region65: #{_lambda_.1} parent=11 // pred_check
        %p448 = pneg %p368
      $region66: #{_lambda_.1} parent=11 // pred_check_branch
        %450 = sbr.rel (%p448) target = $region68
      $region67: #{_lambda_.1} parent=11 // pred_region
        _
      $region68: #{_lambda_.1} parent=11 // pred_fallthru
        _
    $region12: #{_lambda_.1} parent=5 // pred_fallthru
      _
    %p451 = scmp.lt.s32.totalorder %s22, 2
    // Predicated region
    $region69: #{_lambda_.1} parent=5 // pred_check
      %p452 = pneg %p451
    $region70: #{_lambda_.1} parent=5 // pred_check_branch
      %454 = sbr.rel (%p452) target = $region72
    $region71: #{_lambda_.1} parent=5 // pred_region
      // Predicated region
      $region73: #{_lambda_.1} parent=71 // pred_check
        %p455 = pneg %p42
      $region74: #{_lambda_.1} parent=71 // pred_check_branch
        %457 = sbr.rel (%p455) target = $region76
      $region75: #{_lambda_.1} parent=71 // pred_region
        %p458 = scmp.lt.s32.totalorder %s22, 1
        %s459 = scalar_select %p458, %s22, 1
        %s460 = smul.addr %s459, 32
        %s461 = smul.addr %s460, 8
        %s462 = scalar_lea.vmem %s0, %s461
      $region76: #{_lambda_.1} parent=71 // pred_fallthru
        _
      // Predicated region
      $region77: #{_lambda_.1} parent=71 // pred_check
        %p463 = pneg %p320
      $region78: #{_lambda_.1} parent=71 // pred_check_branch
        %465 = sbr.rel (%p463) target = $region80
      $region79: #{_lambda_.1} parent=71 // pred_region
        %p466 = scmp.lt.s32.totalorder %s22, 1
        %s467 = scalar_select %p466, %s22, 1
        %s468 = scalar_lea.vmem %s13, %s467
      $region80: #{_lambda_.1} parent=71 // pred_fallthru
        _
    $region72: #{_lambda_.1} parent=5 // pred_fallthru
      _
    %p469 = scmp.le.s32.totalorder 1, %s22
    %p470 = scmp.lt.s32.totalorder %s22, 3
    %p471 = pnand %p469, %p470
    %p472 = pneg %p471
    // Predicated region
    $region81: #{_lambda_.1} parent=5 // pred_check
      _
    $region82: #{_lambda_.1} parent=5 // pred_check_branch
      %474 = sbr.rel (%p471) target = $region84
    $region83: #{_lambda_.1} parent=5 // pred_region
      %s475 = ssub.s32 %s22, 1
      %p476 = scmp.lt.s32.totalorder %s27, 1
      %s477 = scalar_select %p476, %s27, 1
      %s478 = smul.addr %s477, 32
      %s479 = smul.addr %s478, 8
      %s480 = scalar_lea.vmem %s0, %s479
      %p481 = pneg %p48
      %p482 = pneg %p45
      %p483 = pneg %p69
      %p484 = pneg %p66
      %p485 = pneg %p90
      %p486 = pneg %p87
      %p487 = pneg %p111
      %p488 = pneg %p108
      %p489 = pneg %p132
      %p490 = pneg %p129
      %p491 = pneg %p153
      %p492 = pneg %p150
      %p493 = pneg %p174
      %p494 = pneg %p171
      %p495 = pneg %p195
      %p496 = pneg %p192
      %p497 = pneg %p216
      %p498 = pneg %p213
      %p499 = pneg %p237
      %p500 = pneg %p234
      %p501 = pneg %p258
      %p502 = pneg %p255
      %p503 = pneg %p279
      %p504 = pneg %p276
      %p505 = pneg %p300
      %p506 = pneg %p297
      %p507 = scmp.lt.s32.totalorder %s27, 1
      %s508 = scalar_select %p507, %s27, 1
      %s509 = scalar_lea.vmem %s13, %s508
      %p510 = pneg %p326
      %p511 = pneg %p323
      %p512 = pneg %p347
      %p513 = pneg %p344
      %p514 = pneg %p368
      %p515 = pneg %p365
      %p516 = pneg %p394
      %p517 = pneg %p391
      %p518 = scmp.lt.s32.totalorder %s27, 1
      %s519 = scalar_select %p518, %s27, 1
      %s520 = smul.addr %s519, 8
      %s521 = smul.addr %s520, 8
      %s522 = scalar_lea.vmem %s16, %s521
      %p523 = scmp.lt.s32.totalorder %s27, 1
      %s524 = scalar_select %p523, %s27, 1
      %s525 = smul.addr %s524, 32
      %s526 = smul.addr %s525, 8
      %s527 = scalar_lea.vmem %s0, %s526
      %p528 = scmp.lt.s32.totalorder %s27, 1
      %s529 = scalar_select %p528, %s27, 1
      %s530 = scalar_lea.vmem %s13, %s529
      %p531 = scmp.lt.s32.totalorder %s27, 1
      %s532 = scalar_select %p531, %s27, 1
      %s533 = smul.addr %s532, 8
      %s534 = smul.addr %s533, 8
      %s535 = scalar_lea.vmem %s16, %s534
      %vm537 = vcmask 27651
      %vm538 = vsmask.f32 7950
      %vm539 = vmand %vm537, %vm538
      %v540 = vld [vmem:[#allocation2] sm:$0x8]
      %v541 = vsel %vm539, 0, %v540
      %542 = vst [vmem:[#allocation2] sm:$0x8] %v541
      %vm543 = vcmask 27648
      %544 = vst.msk [vmem:[#allocation2 + $0x4] sm:$0xf] %vm543, 0
      %vm545 = vcmask 24576
      %vm546 = vsmask.f32 256
      %vm547 = vmand %vm545, %vm546
      %v548 = vld [vmem:[#allocation2 + $0x8] sm:$0x1]
      %v549 = vsel %vm547, 0, %v548
      %550 = vst [vmem:[#allocation2 + $0x8] sm:$0x1] %v549
      %s551 = scalar_lea.vmem [#allocation2], 108
      %v552 = vld [vmem:[%s551] sm:$0x8]
      %v553 = vsel %vm539, 0, %v552
      %554 = vst [vmem:[%s551] sm:$0x8] %v553
      %555 = vst.msk [vmem:[%s551 + $0x4] sm:$0xf] %vm543, 0
      %v556 = vld [vmem:[%s551 + $0x8] sm:$0x1]
      %v557 = vsel %vm547, 0, %v556
      %558 = vst [vmem:[%s551 + $0x8] sm:$0x1] %v557
      %v559 = vld [vmem:[#allocation2] sm:$0x8]
      %v560 = vsel %vm539, 0, %v559
      %561 = vst [vmem:[#allocation2] sm:$0x8] %v560
      %v562 = vld [vmem:[#allocation2 + $0xc] sm:$0x8]
      %v563 = vsel %vm539, 0, %v562
      %564 = vst [vmem:[#allocation2 + $0xc] sm:$0x8] %v563
      %v565 = vld [vmem:[#allocation2 + $0x18] sm:$0x8]
      %v566 = vsel %vm539, 0, %v565
      %567 = vst [vmem:[#allocation2 + $0x18] sm:$0x8] %v566
      %v568 = vld [vmem:[#allocation2 + $0x24] sm:$0x8]
      %v569 = vsel %vm539, 0, %v568
      %570 = vst [vmem:[#allocation2 + $0x24] sm:$0x8] %v569
      %v571 = vld [vmem:[#allocation2 + $0x30] sm:$0x8]
      %v572 = vsel %vm539, 0, %v571
      %573 = vst [vmem:[#allocation2 + $0x30] sm:$0x8] %v572
      %v574 = vld [vmem:[#allocation2 + $0x3c] sm:$0x8]
      %v575 = vsel %vm539, 0, %v574
      %576 = vst [vmem:[#allocation2 + $0x3c] sm:$0x8] %v575
      %v577 = vld [vmem:[#allocation2 + $0x48] sm:$0x8]
      %v578 = vsel %vm539, 0, %v577
      %579 = vst [vmem:[#allocation2 + $0x48] sm:$0x8] %v578
      %v580 = vld [vmem:[#allocation2 + $0x54] sm:$0x8]
      %v581 = vsel %vm539, 0, %v580
      %582 = vst [vmem:[#allocation2 + $0x54] sm:$0x8] %v581
      %v583 = vld [vmem:[#allocation2 + $0x60] sm:$0x8]
      %v584 = vsel %vm539, 0, %v583
      %585 = vst [vmem:[#allocation2 + $0x60] sm:$0x8] %v584
      %v586 = vld [vmem:[#allocation2 + $0x6c] sm:$0x8]
      %v587 = vsel %vm539, 0, %v586
      %588 = vst [vmem:[#allocation2 + $0x6c] sm:$0x8] %v587
      %v589 = vld [vmem:[#allocation2 + $0x8] sm:$0x1]
      %v590 = vsel %vm547, 0, %v589
      %591 = vst [vmem:[#allocation2 + $0x8] sm:$0x1] %v590
      %v592 = vld [vmem:[#allocation2 + $0x14] sm:$0x1]
      %v593 = vsel %vm547, 0, %v592
      %594 = vst [vmem:[#allocation2 + $0x14] sm:$0x1] %v593
      %v595 = vld [vmem:[#allocation2 + $0x20] sm:$0x1]
      %v596 = vsel %vm547, 0, %v595
      %597 = vst [vmem:[#allocation2 + $0x20] sm:$0x1] %v596
      %v598 = vld [vmem:[#allocation2 + $0x2c] sm:$0x1]
      %v599 = vsel %vm547, 0, %v598
      %600 = vst [vmem:[#allocation2 + $0x2c] sm:$0x1] %v599
      %v601 = vld [vmem:[#allocation2 + $0x38] sm:$0x1]
      %v602 = vsel %vm547, 0, %v601
      %603 = vst [vmem:[#allocation2 + $0x38] sm:$0x1] %v602
      %v604 = vld [vmem:[#allocation2 + $0x44] sm:$0x1]
      %v605 = vsel %vm547, 0, %v604
      %606 = vst [vmem:[#allocation2 + $0x44] sm:$0x1] %v605
      %v607 = vld [vmem:[#allocation2 + $0x50] sm:$0x1]
      %v608 = vsel %vm547, 0, %v607
      %609 = vst [vmem:[#allocation2 + $0x50] sm:$0x1] %v608
      %v610 = vld [vmem:[#allocation2 + $0x5c] sm:$0x1]
      %v611 = vsel %vm547, 0, %v610
      %612 = vst [vmem:[#allocation2 + $0x5c] sm:$0x1] %v611
      %v613 = vld [vmem:[#allocation2 + $0x68] sm:$0x1]
      %v614 = vsel %vm547, 0, %v613
      %615 = vst [vmem:[#allocation2 + $0x68] sm:$0x1] %v614
      %v616 = vld [vmem:[#allocation2 + $0x74] sm:$0x1]
      %v617 = vsel %vm547, 0, %v616
      %618 = vst [vmem:[#allocation2 + $0x74] sm:$0x1] %v617
      %vm619 = vcmask 60419
      %vm620 = vmand %vm619, %vm538
      %v621 = vld [vmem:[#allocation3] sm:$0x8]
      %v622 = vsel %vm620, 0, %v621
      %623 = vst [vmem:[#allocation3] sm:$0x8] %v622
      %vm624 = vcmask 60416
      %625 = vst.msk [vmem:[#allocation3 + $0x4] sm:$0xf] %vm624, 0
      %vm626 = vcmask 57344
      %vm627 = vmand %vm626, %vm546
      %v628 = vld [vmem:[#allocation3 + $0x8] sm:$0x1]
      %v629 = vsel %vm627, 0, %v628
      %630 = vst [vmem:[#allocation3 + $0x8] sm:$0x1] %v629
      %s631 = scalar_lea.vmem [#allocation3], 108
      %v632 = vld [vmem:[%s631] sm:$0x8]
      %v633 = vsel %vm620, 0, %v632
      %634 = vst [vmem:[%s631] sm:$0x8] %v633
      %635 = vst.msk [vmem:[%s631 + $0x4] sm:$0xf] %vm624, 0
      %v636 = vld [vmem:[%s631 + $0x8] sm:$0x1]
      %v637 = vsel %vm627, 0, %v636
      %638 = vst [vmem:[%s631 + $0x8] sm:$0x1] %v637
      %v639 = vld [vmem:[#allocation3] sm:$0x8]
      %v640 = vsel %vm620, 0, %v639
      %641 = vst [vmem:[#allocation3] sm:$0x8] %v640
      %v642 = vld [vmem:[#allocation3 + $0xc] sm:$0x8]
      %v643 = vsel %vm620, 0, %v642
      %644 = vst [vmem:[#allocation3 + $0xc] sm:$0x8] %v643
      %v645 = vld [vmem:[#allocation3 + $0x18] sm:$0x8]
      %v646 = vsel %vm620, 0, %v645
      %647 = vst [vmem:[#allocation3 + $0x18] sm:$0x8] %v646
      %v648 = vld [vmem:[#allocation3 + $0x24] sm:$0x8]
      %v649 = vsel %vm620, 0, %v648
      %650 = vst [vmem:[#allocation3 + $0x24] sm:$0x8] %v649
      %v651 = vld [vmem:[#allocation3 + $0x30] sm:$0x8]
      %v652 = vsel %vm620, 0, %v651
      %653 = vst [vmem:[#allocation3 + $0x30] sm:$0x8] %v652
      %v654 = vld [vmem:[#allocation3 + $0x3c] sm:$0x8]
      %v655 = vsel %vm620, 0, %v654
      %656 = vst [vmem:[#allocation3 + $0x3c] sm:$0x8] %v655
      %v657 = vld [vmem:[#allocation3 + $0x48] sm:$0x8]
      %v658 = vsel %vm620, 0, %v657
      %659 = vst [vmem:[#allocation3 + $0x48] sm:$0x8] %v658
      %v660 = vld [vmem:[#allocation3 + $0x54] sm:$0x8]
      %v661 = vsel %vm620, 0, %v660
      %662 = vst [vmem:[#allocation3 + $0x54] sm:$0x8] %v661
      %v663 = vld [vmem:[#allocation3 + $0x60] sm:$0x8]
      %v664 = vsel %vm620, 0, %v663
      %665 = vst [vmem:[#allocation3 + $0x60] sm:$0x8] %v664
      %v666 = vld [vmem:[#allocation3 + $0x6c] sm:$0x8]
      %v667 = vsel %vm620, 0, %v666
      %668 = vst [vmem:[#allocation3 + $0x6c] sm:$0x8] %v667
      %v669 = vld [vmem:[#allocation3 + $0x8] sm:$0x1]
      %v670 = vsel %vm627, 0, %v669
      %671 = vst [vmem:[#allocation3 + $0x8] sm:$0x1] %v670
      %v672 = vld [vmem:[#allocation3 + $0x14] sm:$0x1]
      %v673 = vsel %vm627, 0, %v672
      %674 = vst [vmem:[#allocation3 + $0x14] sm:$0x1] %v673
      %v675 = vld [vmem:[#allocation3 + $0x20] sm:$0x1]
      %v676 = vsel %vm627, 0, %v675
      %677 = vst [vmem:[#allocation3 + $0x20] sm:$0x1] %v676
      %v678 = vld [vmem:[#allocation3 + $0x2c] sm:$0x1]
      %v679 = vsel %vm627, 0, %v678
      %680 = vst [vmem:[#allocation3 + $0x2c] sm:$0x1] %v679
      %v681 = vld [vmem:[#allocation3 + $0x38] sm:$0x1]
      %v682 = vsel %vm627, 0, %v681
      %683 = vst [vmem:[#allocation3 + $0x38] sm:$0x1] %v682
      %v684 = vld [vmem:[#allocation3 + $0x44] sm:$0x1]
      %v685 = vsel %vm627, 0, %v684
      %686 = vst [vmem:[#allocation3 + $0x44] sm:$0x1] %v685
      %v687 = vld [vmem:[#allocation3 + $0x50] sm:$0x1]
      %v688 = vsel %vm627, 0, %v687
      %689 = vst [vmem:[#allocation3 + $0x50] sm:$0x1] %v688
      %v690 = vld [vmem:[#allocation3 + $0x5c] sm:$0x1]
      %v691 = vsel %vm627, 0, %v690
      %692 = vst [vmem:[#allocation3 + $0x5c] sm:$0x1] %v691
      %v693 = vld [vmem:[#allocation3 + $0x68] sm:$0x1]
      %v694 = vsel %vm627, 0, %v693
      %695 = vst [vmem:[#allocation3 + $0x68] sm:$0x1] %v694
      %v696 = vld [vmem:[#allocation3 + $0x74] sm:$0x1]
      %v697 = vsel %vm627, 0, %v696
      %698 = vst [vmem:[#allocation3 + $0x74] sm:$0x1] %v697
      %v699 = vld [vmem:[%s527] sm:$0xff]
      %v700 = vld [vmem:[%s527 + $0x8] sm:$0xff]
      %v701 = vld [vmem:[%s527 + $0x10] sm:$0xff]
      %v702 = vld [vmem:[%s527 + $0x18] sm:$0xff]
      %v703 = vld [vmem:[%s527 + $0x20] sm:$0xff]
      %v704 = vld [vmem:[%s527 + $0x28] sm:$0xff]
      %v705 = vld [vmem:[%s527 + $0x30] sm:$0xff]
      %v706 = vld [vmem:[%s527 + $0x38] sm:$0xff]
      %s707 = scalar_lea.vmem %s527, 64
      %v708 = vld [vmem:[%s707] sm:$0xff]
      %v709 = vld [vmem:[%s707 + $0x8] sm:$0xff]
      %v710 = vld [vmem:[%s707 + $0x10] sm:$0xff]
      %v711 = vld [vmem:[%s707 + $0x18] sm:$0xff]
      %v712 = vld [vmem:[%s707 + $0x20] sm:$0xff]
      %v713 = vld [vmem:[%s707 + $0x28] sm:$0xff]
      %v714 = vld [vmem:[%s707 + $0x30] sm:$0xff]
      %v715 = vld [vmem:[%s707 + $0x38] sm:$0xff]
      %s716 = scalar_lea.vmem %s527, 128
      %v717 = vld [vmem:[%s716] sm:$0xff]
      %v718 = vld [vmem:[%s716 + $0x8] sm:$0xff]
      %v719 = vld [vmem:[%s716 + $0x10] sm:$0xff]
      %v720 = vld [vmem:[%s716 + $0x18] sm:$0xff]
      %v721 = vld [vmem:[%s716 + $0x20] sm:$0xff]
      %v722 = vld [vmem:[%s716 + $0x28] sm:$0xff]
      %v723 = vld [vmem:[%s716 + $0x30] sm:$0xff]
      %v724 = vld [vmem:[%s716 + $0x38] sm:$0xff]
      %s725 = scalar_lea.vmem %s527, 192
      %v726 = vld [vmem:[%s725] sm:$0xff]
      %v727 = vld [vmem:[%s725 + $0x8] sm:$0xff]
      %v728 = vld [vmem:[%s725 + $0x10] sm:$0xff]
      %v729 = vld [vmem:[%s725 + $0x18] sm:$0xff]
      %v730 = vld [vmem:[%s725 + $0x20] sm:$0xff]
      %v731 = vld [vmem:[%s725 + $0x28] sm:$0xff]
      %v732 = vld [vmem:[%s725 + $0x30] sm:$0xff]
      %v733 = vld [vmem:[%s725 + $0x38] sm:$0xff]
      %v734 = vmax.f32 %v699, %v708
      %v735 = vmax.f32 %v700, %v709
      %v736 = vmax.f32 %v701, %v710
      %v737 = vmax.f32 %v702, %v711
      %v738 = vmax.f32 %v703, %v712
      %v739 = vmax.f32 %v704, %v713
      %v740 = vmax.f32 %v705, %v714
      %v741 = vmax.f32 %v706, %v715
      %v742 = vmax.f32 %v717, %v726
      %v743 = vmax.f32 %v718, %v727
      %v744 = vmax.f32 %v719, %v728
      %v745 = vmax.f32 %v720, %v729
      %v746 = vmax.f32 %v721, %v730
      %v747 = vmax.f32 %v722, %v731
      %v748 = vmax.f32 %v723, %v732
      %v749 = vmax.f32 %v724, %v733
      %v750 = vmax.f32 %v734, %v742
      %v751 = vmax.f32 %v735, %v743
      %v752 = vmax.f32 %v736, %v744
      %v753 = vmax.f32 %v737, %v745
      %v754 = vmax.f32 %v738, %v746
      %v755 = vmax.f32 %v739, %v747
      %v756 = vmax.f32 %v740, %v748
      %v757 = vmax.f32 %v741, %v749
      %v758 = vpack.c.bf16 %v750, %v750
      %v759 = vpack.c.bf16 %v751, %v751
      %v760 = vpack.c.bf16 %v752, %v752
      %v761 = vpack.c.bf16 %v753, %v753
      %v762 = vpack.c.bf16 %v754, %v754
      %v763 = vpack.c.bf16 %v755, %v755
      %v764 = vpack.c.bf16 %v756, %v756
      %v765 = vpack.c.bf16 %v757, %v757
      %s766 = scalar_lea.vmem [#allocation2], 12
      %767 = vst.msk [vmem:[%s766 + $0x4] sm:$0xf] %vm543, %v758
      %768 = vst.msk [vmem:[%s766 + $0x10] sm:$0xf] %vm543, %v759
      %769 = vst.msk [vmem:[%s766 + $0x1c] sm:$0xf] %vm543, %v760
      %770 = vst.msk [vmem:[%s766 + $0x28] sm:$0xf] %vm543, %v761
      %771 = vst.msk [vmem:[%s766 + $0x34] sm:$0xf] %vm543, %v762
      %772 = vst.msk [vmem:[%s766 + $0x40] sm:$0xf] %vm543, %v763
      %773 = vst.msk [vmem:[%s766 + $0x4c] sm:$0xf] %vm543, %v764
      %774 = vst.msk [vmem:[%s766 + $0x58] sm:$0xf] %vm543, %v765
      %v775 = vld [vmem:[#allocation2] sm:$0x8]
      %v776 = vld [vmem:[#allocation2 + $0x4] sm:$0xf]
      %v777 = vld [vmem:[#allocation2 + $0xc] sm:$0x8]
      %v778 = vld [vmem:[#allocation2 + $0x10] sm:$0xf]
      %v779 = vld [vmem:[#allocation2 + $0x18] sm:$0x8]
      %v780 = vld [vmem:[#allocation2 + $0x1c] sm:$0xf]
      %v781 = vld [vmem:[#allocation2 + $0x24] sm:$0x8]
      %v782 = vld [vmem:[#allocation2 + $0x28] sm:$0xf]
      %v783 = vld [vmem:[#allocation2 + $0x30] sm:$0x8]
      %v784 = vld [vmem:[#allocation2 + $0x34] sm:$0xf]
      %v785 = vld [vmem:[#allocation2 + $0x3c] sm:$0x8]
      %v786 = vld [vmem:[#allocation2 + $0x40] sm:$0xf]
      %v787 = vld [vmem:[#allocation2 + $0x48] sm:$0x8]
      %v788 = vld [vmem:[#allocation2 + $0x4c] sm:$0xf]
      %v789 = vld [vmem:[#allocation2 + $0x54] sm:$0x8]
      %v790 = vld [vmem:[#allocation2 + $0x58] sm:$0xf]
      %vm791 = vsmask.f32 4368
      %vm792 = vmor %vm546, %vm791
      %v794 = vshrl.u32 %v775, 16
      %v796 = vrot.slane %v794, 7
      %v797 = vrot.slane %v796, 4
      %v799 = vshrl.u32 %v776, 16
      %v801 = vrot.slane %v799, 7
      %v802 = vshll.u32 %v776, 16
      %v804 = vor.u32 %v801, %v802
      %v805 = vsel %vm792, %v797, %v804
      %v807 = vshrl.u32 %v777, 16
      %v809 = vrot.slane %v807, 7
      %v810 = vrot.slane %v809, 4
      %v812 = vshrl.u32 %v778, 16
      %v814 = vrot.slane %v812, 7
      %v815 = vshll.u32 %v778, 16
      %v817 = vor.u32 %v814, %v815
      %v818 = vsel %vm792, %v810, %v817
      %v820 = vshrl.u32 %v779, 16
      %v822 = vrot.slane %v820, 7
      %v823 = vrot.slane %v822, 4
      %v825 = vshrl.u32 %v780, 16
      %v827 = vrot.slane %v825, 7
      %v828 = vshll.u32 %v780, 16
      %v830 = vor.u32 %v827, %v828
      %v831 = vsel %vm792, %v823, %v830
      %v833 = vshrl.u32 %v781, 16
      %v835 = vrot.slane %v833, 7
      %v836 = vrot.slane %v835, 4
      %v838 = vshrl.u32 %v782, 16
      %v840 = vrot.slane %v838, 7
      %v841 = vshll.u32 %v782, 16
      %v843 = vor.u32 %v840, %v841
      %v844 = vsel %vm792, %v836, %v843
      %v846 = vshrl.u32 %v783, 16
      %v848 = vrot.slane %v846, 7
      %v849 = vrot.slane %v848, 4
      %v851 = vshrl.u32 %v784, 16
      %v853 = vrot.slane %v851, 7
      %v854 = vshll.u32 %v784, 16
      %v856 = vor.u32 %v853, %v854
      %v857 = vsel %vm792, %v849, %v856
      %v859 = vshrl.u32 %v785, 16
      %v861 = vrot.slane %v859, 7
      %v862 = vrot.slane %v861, 4
      %v864 = vshrl.u32 %v786, 16
      %v866 = vrot.slane %v864, 7
      %v867 = vshll.u32 %v786, 16
      %v869 = vor.u32 %v866, %v867
      %v870 = vsel %vm792, %v862, %v869
      %v872 = vshrl.u32 %v787, 16
      %v874 = vrot.slane %v872, 7
      %v875 = vrot.slane %v874, 4
      %v877 = vshrl.u32 %v788, 16
      %v879 = vrot.slane %v877, 7
      %v880 = vshll.u32 %v788, 16
      %v882 = vor.u32 %v879, %v880
      %v883 = vsel %vm792, %v875, %v882
      %v885 = vshrl.u32 %v789, 16
      %v887 = vrot.slane %v885, 7
      %v888 = vrot.slane %v887, 4
      %v890 = vshrl.u32 %v790, 16
      %v892 = vrot.slane %v890, 7
      %v893 = vshll.u32 %v790, 16
      %v895 = vor.u32 %v892, %v893
      %v896 = vsel %vm792, %v888, %v895
      %905 = vst.msk [vmem:[#allocation4] sm:$0xf] %vm543, %v805
      %906 = vst.msk [vmem:[#allocation4 + $0x4] sm:$0xf] %vm543, %v818
      %907 = vst.msk [vmem:[#allocation4 + $0x8] sm:$0xf] %vm543, %v831
      %908 = vst.msk [vmem:[#allocation4 + $0xc] sm:$0xf] %vm543, %v844
      %909 = vst.msk [vmem:[#allocation4 + $0x10] sm:$0xf] %vm543, %v857
      %910 = vst.msk [vmem:[#allocation4 + $0x14] sm:$0xf] %vm543, %v870
      %911 = vst.msk [vmem:[#allocation4 + $0x18] sm:$0xf] %vm543, %v883
      %912 = vst.msk [vmem:[#allocation4 + $0x1c] sm:$0xf] %vm543, %v896
      %v913 = vld [vmem:[#allocation2 + $0x4] sm:$0xf]
      %v914 = vld [vmem:[#allocation2 + $0x10] sm:$0xf]
      %v915 = vld [vmem:[#allocation2 + $0x1c] sm:$0xf]
      %v916 = vld [vmem:[#allocation2 + $0x28] sm:$0xf]
      %v917 = vld [vmem:[#allocation2 + $0x34] sm:$0xf]
      %v918 = vld [vmem:[#allocation2 + $0x40] sm:$0xf]
      %v919 = vld [vmem:[#allocation2 + $0x4c] sm:$0xf]
      %v920 = vld [vmem:[#allocation2 + $0x58] sm:$0xf]
      %929 = vrot.lane.b32.xlu0 %v913, 4
      %v930 = vpop.permute.xlu0 %929
      %931 = vrot.lane.b32.xlu0 %v914, 4
      %v932 = vpop.permute.xlu0 %931
      %933 = vrot.lane.b32.xlu0 %v915, 4
      %v934 = vpop.permute.xlu0 %933
      %935 = vrot.lane.b32.xlu0 %v916, 4
      %v936 = vpop.permute.xlu0 %935
      %937 = vrot.lane.b32.xlu0 %v917, 4
      %v938 = vpop.permute.xlu0 %937
      %939 = vrot.lane.b32.xlu0 %v918, 4
      %v940 = vpop.permute.xlu0 %939
      %941 = vrot.lane.b32.xlu0 %v919, 4
      %v942 = vpop.permute.xlu0 %941
      %943 = vrot.lane.b32.xlu0 %v920, 4
      %v944 = vpop.permute.xlu0 %943
      %vm953 = vcmask 60448
      %954 = vst.msk [vmem:[#allocation4] sm:$0xf] %vm953, %v930
      %955 = vst.msk [vmem:[#allocation4 + $0x4] sm:$0xf] %vm953, %v932
      %956 = vst.msk [vmem:[#allocation4 + $0x8] sm:$0xf] %vm953, %v934
      %957 = vst.msk [vmem:[#allocation4 + $0xc] sm:$0xf] %vm953, %v936
      %958 = vst.msk [vmem:[#allocation4 + $0x10] sm:$0xf] %vm953, %v938
      %959 = vst.msk [vmem:[#allocation4 + $0x14] sm:$0xf] %vm953, %v940
      %960 = vst.msk [vmem:[#allocation4 + $0x18] sm:$0xf] %vm953, %v942
      %961 = vst.msk [vmem:[#allocation4 + $0x1c] sm:$0xf] %vm953, %v944
      %v962 = vld [vmem:[#allocation2 + $0x4] sm:$0xf]
      %v963 = vld [vmem:[#allocation2 + $0x8] sm:$0x1]
      %v964 = vld [vmem:[#allocation2 + $0x10] sm:$0xf]
      %v965 = vld [vmem:[#allocation2 + $0x14] sm:$0x1]
      %v966 = vld [vmem:[#allocation2 + $0x1c] sm:$0xf]
      %v967 = vld [vmem:[#allocation2 + $0x20] sm:$0x1]
      %v968 = vld [vmem:[#allocation2 + $0x28] sm:$0xf]
      %v969 = vld [vmem:[#allocation2 + $0x2c] sm:$0x1]
      %v970 = vld [vmem:[#allocation2 + $0x34] sm:$0xf]
      %v971 = vld [vmem:[#allocation2 + $0x38] sm:$0x1]
      %v972 = vld [vmem:[#allocation2 + $0x40] sm:$0xf]
      %v973 = vld [vmem:[#allocation2 + $0x44] sm:$0x1]
      %v974 = vld [vmem:[#allocation2 + $0x4c] sm:$0xf]
      %v975 = vld [vmem:[#allocation2 + $0x50] sm:$0x1]
      %v976 = vld [vmem:[#allocation2 + $0x58] sm:$0xf]
      %v977 = vld [vmem:[#allocation2 + $0x5c] sm:$0x1]
      %vm978 = vsmask.f32 3328
      %vm979 = vsmask.f32 7440
      %vm980 = vmor %vm978, %vm979
      %v982 = vshrl.u32 %v962, 16
      %v984 = vrot.slane %v982, 4
      %v985 = vshll.u32 %v962, 16
      %v987 = vrot.slane %v985, 5
      %v988 = vor.u32 %v984, %v987
      %v989 = vrot.slane %v988, 4
      %v991 = vshll.u32 %v963, 16
      %v993 = vrot.slane %v991, 5
      %v994 = vsel %vm980, %v989, %v993
      %v996 = vshrl.u32 %v964, 16
      %v998 = vrot.slane %v996, 4
      %v999 = vshll.u32 %v964, 16
      %v1001 = vrot.slane %v999, 5
      %v1002 = vor.u32 %v998, %v1001
      %v1003 = vrot.slane %v1002, 4
      %v1005 = vshll.u32 %v965, 16
      %v1007 = vrot.slane %v1005, 5
      %v1008 = vsel %vm980, %v1003, %v1007
      %v1010 = vshrl.u32 %v966, 16
      %v1012 = vrot.slane %v1010, 4
      %v1013 = vshll.u32 %v966, 16
      %v1015 = vrot.slane %v1013, 5
      %v1016 = vor.u32 %v1012, %v1015
      %v1017 = vrot.slane %v1016, 4
      %v1019 = vshll.u32 %v967, 16
      %v1021 = vrot.slane %v1019, 5
      %v1022 = vsel %vm980, %v1017, %v1021
      %v1024 = vshrl.u32 %v968, 16
      %v1026 = vrot.slane %v1024, 4
      %v1027 = vshll.u32 %v968, 16
      %v1029 = vrot.slane %v1027, 5
      %v1030 = vor.u32 %v1026, %v1029
      %v1031 = vrot.slane %v1030, 4
      %v1033 = vshll.u32 %v969, 16
      %v1035 = vrot.slane %v1033, 5
      %v1036 = vsel %vm980, %v1031, %v1035
      %v1038 = vshrl.u32 %v970, 16
      %v1040 = vrot.slane %v1038, 4
      %v1041 = vshll.u32 %v970, 16
      %v1043 = vrot.slane %v1041, 5
      %v1044 = vor.u32 %v1040, %v1043
      %v1045 = vrot.slane %v1044, 4
      %v1047 = vshll.u32 %v971, 16
      %v1049 = vrot.slane %v1047, 5
      %v1050 = vsel %vm980, %v1045, %v1049
      %v1052 = vshrl.u32 %v972, 16
      %v1054 = vrot.slane %v1052, 4
      %v1055 = vshll.u32 %v972, 16
      %v1057 = vrot.slane %v1055, 5
      %v1058 = vor.u32 %v1054, %v1057
      %v1059 = vrot.slane %v1058, 4
      %v1061 = vshll.u32 %v973, 16
      %v1063 = vrot.slane %v1061, 5
      %v1064 = vsel %vm980, %v1059, %v1063
      %v1066 = vshrl.u32 %v974, 16
      %v1068 = vrot.slane %v1066, 4
      %v1069 = vshll.u32 %v974, 16
      %v1071 = vrot.slane %v1069, 5
      %v1072 = vor.u32 %v1068, %v1071
      %v1073 = vrot.slane %v1072, 4
      %v1075 = vshll.u32 %v975, 16
      %v1077 = vrot.slane %v1075, 5
      %v1078 = vsel %vm980, %v1073, %v1077
      %v1080 = vshrl.u32 %v976, 16
      %v1082 = vrot.slane %v1080, 4
      %v1083 = vshll.u32 %v976, 16
      %v1085 = vrot.slane %v1083, 5
      %v1086 = vor.u32 %v1082, %v1085
      %v1087 = vrot.slane %v1086, 4
      %v1089 = vshll.u32 %v977, 16
      %v1091 = vrot.slane %v1089, 5
      %v1092 = vsel %vm980, %v1087, %v1091
      %1093 = vrot.lane.b32.xlu0 %v994, 8
      %v1094 = vpop.permute.xlu0 %1093
      %1095 = vrot.lane.b32.xlu0 %v1008, 8
      %v1096 = vpop.permute.xlu0 %1095
      %1097 = vrot.lane.b32.xlu0 %v1022, 8
      %v1098 = vpop.permute.xlu0 %1097
      %1099 = vrot.lane.b32.xlu0 %v1036, 8
      %v1100 = vpop.permute.xlu0 %1099
      %1101 = vrot.lane.b32.xlu0 %v1050, 8
      %v1102 = vpop.permute.xlu0 %1101
      %1103 = vrot.lane.b32.xlu0 %v1064, 8
      %v1104 = vpop.permute.xlu0 %1103
      %1105 = vrot.lane.b32.xlu0 %v1078, 8
      %v1106 = vpop.permute.xlu0 %1105
      %1107 = vrot.lane.b32.xlu0 %v1092, 8
      %v1108 = vpop.permute.xlu0 %1107
      %vm1117 = vcmask 93248
      %1118 = vst.msk [vmem:[#allocation4] sm:$0xf] %vm1117, %v1094
      %1119 = vst.msk [vmem:[#allocation4 + $0x4] sm:$0xf] %vm1117, %v1096
      %1120 = vst.msk [vmem:[#allocation4 + $0x8] sm:$0xf] %vm1117, %v1098
      %1121 = vst.msk [vmem:[#allocation4 + $0xc] sm:$0xf] %vm1117, %v1100
      %1122 = vst.msk [vmem:[#allocation4 + $0x10] sm:$0xf] %vm1117, %v1102
      %1123 = vst.msk [vmem:[#allocation4 + $0x14] sm:$0xf] %vm1117, %v1104
      %1124 = vst.msk [vmem:[#allocation4 + $0x18] sm:$0xf] %vm1117, %v1106
      %1125 = vst.msk [vmem:[#allocation4 + $0x1c] sm:$0xf] %vm1117, %v1108
      %v1126 = vld [vmem:[%s766] sm:$0x8]
      %v1127 = vld [vmem:[%s766 + $0x4] sm:$0xf]
      %v1128 = vld [vmem:[%s766 + $0xc] sm:$0x8]
      %v1129 = vld [vmem:[%s766 + $0x10] sm:$0xf]
      %v1130 = vld [vmem:[%s766 + $0x18] sm:$0x8]
      %v1131 = vld [vmem:[%s766 + $0x1c] sm:$0xf]
      %v1132 = vld [vmem:[%s766 + $0x24] sm:$0x8]
      %v1133 = vld [vmem:[%s766 + $0x28] sm:$0xf]
      %v1134 = vld [vmem:[%s766 + $0x30] sm:$0x8]
      %v1135 = vld [vmem:[%s766 + $0x34] sm:$0xf]
      %v1136 = vld [vmem:[%s766 + $0x3c] sm:$0x8]
      %v1137 = vld [vmem:[%s766 + $0x40] sm:$0xf]
      %v1138 = vld [vmem:[%s766 + $0x48] sm:$0x8]
      %v1139 = vld [vmem:[%s766 + $0x4c] sm:$0xf]
      %v1140 = vld [vmem:[%s766 + $0x54] sm:$0x8]
      %v1141 = vld [vmem:[%s766 + $0x58] sm:$0xf]
      %v1143 = vshrl.u32 %v1126, 16
      %v1145 = vrot.slane %v1143, 7
      %v1146 = vrot.slane %v1145, 4
      %v1148 = vshrl.u32 %v1127, 16
      %v1150 = vrot.slane %v1148, 7
      %v1151 = vshll.u32 %v1127, 16
      %v1153 = vor.u32 %v1150, %v1151
      %v1154 = vsel %vm792, %v1146, %v1153
      %v1156 = vshrl.u32 %v1128, 16
      %v1158 = vrot.slane %v1156, 7
      %v1159 = vrot.slane %v1158, 4
      %v1161 = vshrl.u32 %v1129, 16
      %v1163 = vrot.slane %v1161, 7
      %v1164 = vshll.u32 %v1129, 16
      %v1166 = vor.u32 %v1163, %v1164
      %v1167 = vsel %vm792, %v1159, %v1166
      %v1169 = vshrl.u32 %v1130, 16
      %v1171 = vrot.slane %v1169, 7
      %v1172 = vrot.slane %v1171, 4
      %v1174 = vshrl.u32 %v1131, 16
      %v1176 = vrot.slane %v1174, 7
      %v1177 = vshll.u32 %v1131, 16
      %v1179 = vor.u32 %v1176, %v1177
      %v1180 = vsel %vm792, %v1172, %v1179
      %v1182 = vshrl.u32 %v1132, 16
      %v1184 = vrot.slane %v1182, 7
      %v1185 = vrot.slane %v1184, 4
      %v1187 = vshrl.u32 %v1133, 16
      %v1189 = vrot.slane %v1187, 7
      %v1190 = vshll.u32 %v1133, 16
      %v1192 = vor.u32 %v1189, %v1190
      %v1193 = vsel %vm792, %v1185, %v1192
      %v1195 = vshrl.u32 %v1134, 16
      %v1197 = vrot.slane %v1195, 7
      %v1198 = vrot.slane %v1197, 4
      %v1200 = vshrl.u32 %v1135, 16
      %v1202 = vrot.slane %v1200, 7
      %v1203 = vshll.u32 %v1135, 16
      %v1205 = vor.u32 %v1202, %v1203
      %v1206 = vsel %vm792, %v1198, %v1205
      %v1208 = vshrl.u32 %v1136, 16
      %v1210 = vrot.slane %v1208, 7
      %v1211 = vrot.slane %v1210, 4
      %v1213 = vshrl.u32 %v1137, 16
      %v1215 = vrot.slane %v1213, 7
      %v1216 = vshll.u32 %v1137, 16
      %v1218 = vor.u32 %v1215, %v1216
      %v1219 = vsel %vm792, %v1211, %v1218
      %v1221 = vshrl.u32 %v1138, 16
      %v1223 = vrot.slane %v1221, 7
      %v1224 = vrot.slane %v1223, 4
      %v1226 = vshrl.u32 %v1139, 16
      %v1228 = vrot.slane %v1226, 7
      %v1229 = vshll.u32 %v1139, 16
      %v1231 = vor.u32 %v1228, %v1229
      %v1232 = vsel %vm792, %v1224, %v1231
      %v1234 = vshrl.u32 %v1140, 16
      %v1236 = vrot.slane %v1234, 7
      %v1237 = vrot.slane %v1236, 4
      %v1239 = vshrl.u32 %v1141, 16
      %v1241 = vrot.slane %v1239, 7
      %v1242 = vshll.u32 %v1141, 16
      %v1244 = vor.u32 %v1241, %v1242
      %v1245 = vsel %vm792, %v1237, %v1244
      %1246 = vrot.lane.b32.xlu0 %v1154, 12
      %v1247 = vpop.permute.xlu0 %1246
      %1248 = vrot.lane.b32.xlu0 %v1167, 12
      %v1249 = vpop.permute.xlu0 %1248
      %1250 = vrot.lane.b32.xlu0 %v1180, 12
      %v1251 = vpop.permute.xlu0 %1250
      %1252 = vrot.lane.b32.xlu0 %v1193, 12
      %v1253 = vpop.permute.xlu0 %1252
      %1254 = vrot.lane.b32.xlu0 %v1206, 12
      %v1255 = vpop.permute.xlu0 %1254
      %1256 = vrot.lane.b32.xlu0 %v1219, 12
      %v1257 = vpop.permute.xlu0 %1256
      %1258 = vrot.lane.b32.xlu0 %v1232, 12
      %v1259 = vpop.permute.xlu0 %1258
      %1260 = vrot.lane.b32.xlu0 %v1245, 12
      %v1261 = vpop.permute.xlu0 %1260
      %vm1270 = vcmask 126048
      %1271 = vst.msk [vmem:[#allocation4] sm:$0xf] %vm1270, %v1247
      %1272 = vst.msk [vmem:[#allocation4 + $0x4] sm:$0xf] %vm1270, %v1249
      %1273 = vst.msk [vmem:[#allocation4 + $0x8] sm:$0xf] %vm1270, %v1251
      %1274 = vst.msk [vmem:[#allocation4 + $0xc] sm:$0xf] %vm1270, %v1253
      %1275 = vst.msk [vmem:[#allocation4 + $0x10] sm:$0xf] %vm1270, %v1255
      %1276 = vst.msk [vmem:[#allocation4 + $0x14] sm:$0xf] %vm1270, %v1257
      %1277 = vst.msk [vmem:[#allocation4 + $0x18] sm:$0xf] %vm1270, %v1259
      %1278 = vst.msk [vmem:[#allocation4 + $0x1c] sm:$0xf] %vm1270, %v1261
      %v1279 = vld [vmem:[%s766 + $0x4] sm:$0xf]
      %v1280 = vld [vmem:[%s766 + $0x10] sm:$0xf]
      %v1281 = vld [vmem:[%s766 + $0x1c] sm:$0xf]
      %v1282 = vld [vmem:[%s766 + $0x28] sm:$0xf]
      %v1283 = vld [vmem:[%s766 + $0x34] sm:$0xf]
      %v1284 = vld [vmem:[%s766 + $0x40] sm:$0xf]
      %v1285 = vld [vmem:[%s766 + $0x4c] sm:$0xf]
      %v1286 = vld [vmem:[%s766 + $0x58] sm:$0xf]
      %1295 = vrot.lane.b32.xlu0 %v1279, 16
      %v1296 = vpop.permute.xlu0 %1295
      %1297 = vrot.lane.b32.xlu0 %v1280, 16
      %v1298 = vpop.permute.xlu0 %1297
      %1299 = vrot.lane.b32.xlu0 %v1281, 16
      %v1300 = vpop.permute.xlu0 %1299
      %1301 = vrot.lane.b32.xlu0 %v1282, 16
      %v1302 = vpop.permute.xlu0 %1301
      %1303 = vrot.lane.b32.xlu0 %v1283, 16
      %v1304 = vpop.permute.xlu0 %1303
      %1305 = vrot.lane.b32.xlu0 %v1284, 16
      %v1306 = vpop.permute.xlu0 %1305
      %1307 = vrot.lane.b32.xlu0 %v1285, 16
      %v1308 = vpop.permute.xlu0 %1307
      %1309 = vrot.lane.b32.xlu0 %v1286, 16
      %v1310 = vpop.permute.xlu0 %1309
      %vm1319 = vcmask 158848
      %1320 = vst.msk [vmem:[#allocation4] sm:$0xf] %vm1319, %v1296
      %1321 = vst.msk [vmem:[#allocation4 + $0x4] sm:$0xf] %vm1319, %v1298
      %1322 = vst.msk [vmem:[#allocation4 + $0x8] sm:$0xf] %vm1319, %v1300
      %1323 = vst.msk [vmem:[#allocation4 + $0xc] sm:$0xf] %vm1319, %v1302
      %1324 = vst.msk [vmem:[#allocation4 + $0x10] sm:$0xf] %vm1319, %v1304
      %1325 = vst.msk [vmem:[#allocation4 + $0x14] sm:$0xf] %vm1319, %v1306
      %1326 = vst.msk [vmem:[#allocation4 + $0x18] sm:$0xf] %vm1319, %v1308
      %1327 = vst.msk [vmem:[#allocation4 + $0x1c] sm:$0xf] %vm1319, %v1310
      %v1328 = vld [vmem:[%s766 + $0x4] sm:$0xf]
      %v1329 = vld [vmem:[%s766 + $0x8] sm:$0x1]
      %v1330 = vld [vmem:[%s766 + $0x10] sm:$0xf]
      %v1331 = vld [vmem:[%s766 + $0x14] sm:$0x1]
      %v1332 = vld [vmem:[%s766 + $0x1c] sm:$0xf]
      %v1333 = vld [vmem:[%s766 + $0x20] sm:$0x1]
      %v1334 = vld [vmem:[%s766 + $0x28] sm:$0xf]
      %v1335 = vld [vmem:[%s766 + $0x2c] sm:$0x1]
      %v1336 = vld [vmem:[%s766 + $0x34] sm:$0xf]
      %v1337 = vld [vmem:[%s766 + $0x38] sm:$0x1]
      %v1338 = vld [vmem:[%s766 + $0x40] sm:$0xf]
      %v1339 = vld [vmem:[%s766 + $0x44] sm:$0x1]
      %v1340 = vld [vmem:[%s766 + $0x4c] sm:$0xf]
      %v1341 = vld [vmem:[%s766 + $0x50] sm:$0x1]
      %v1342 = vld [vmem:[%s766 + $0x58] sm:$0xf]
      %v1343 = vld [vmem:[%s766 + $0x5c] sm:$0x1]
      %v1345 = vshrl.u32 %v1328, 16
      %v1347 = vrot.slane %v1345, 4
      %v1348 = vshll.u32 %v1328, 16
      %v1350 = vrot.slane %v1348, 5
      %v1351 = vor.u32 %v1347, %v1350
      %v1352 = vrot.slane %v1351, 4
      %v1354 = vshll.u32 %v1329, 16
      %v1356 = vrot.slane %v1354, 5
      %v1357 = vsel %vm980, %v1352, %v1356
      %v1359 = vshrl.u32 %v1330, 16
      %v1361 = vrot.slane %v1359, 4
      %v1362 = vshll.u32 %v1330, 16
      %v1364 = vrot.slane %v1362, 5
      %v1365 = vor.u32 %v1361, %v1364
      %v1366 = vrot.slane %v1365, 4
      %v1368 = vshll.u32 %v1331, 16
      %v1370 = vrot.slane %v1368, 5
      %v1371 = vsel %vm980, %v1366, %v1370
      %v1373 = vshrl.u32 %v1332, 16
      %v1375 = vrot.slane %v1373, 4
      %v1376 = vshll.u32 %v1332, 16
      %v1378 = vrot.slane %v1376, 5
      %v1379 = vor.u32 %v1375, %v1378
      %v1380 = vrot.slane %v1379, 4
      %v1382 = vshll.u32 %v1333, 16
      %v1384 = vrot.slane %v1382, 5
      %v1385 = vsel %vm980, %v1380, %v1384
      %v1387 = vshrl.u32 %v1334, 16
      %v1389 = vrot.slane %v1387, 4
      %v1390 = vshll.u32 %v1334, 16
      %v1392 = vrot.slane %v1390, 5
      %v1393 = vor.u32 %v1389, %v1392
      %v1394 = vrot.slane %v1393, 4
      %v1396 = vshll.u32 %v1335, 16
      %v1398 = vrot.slane %v1396, 5
      %v1399 = vsel %vm980, %v1394, %v1398
      %v1401 = vshrl.u32 %v1336, 16
      %v1403 = vrot.slane %v1401, 4
      %v1404 = vshll.u32 %v1336, 16
      %v1406 = vrot.slane %v1404, 5
      %v1407 = vor.u32 %v1403, %v1406
      %v1408 = vrot.slane %v1407, 4
      %v1410 = vshll.u32 %v1337, 16
      %v1412 = vrot.slane %v1410, 5
      %v1413 = vsel %vm980, %v1408, %v1412
      %v1415 = vshrl.u32 %v1338, 16
      %v1417 = vrot.slane %v1415, 4
      %v1418 = vshll.u32 %v1338, 16
      %v1420 = vrot.slane %v1418, 5
      %v1421 = vor.u32 %v1417, %v1420
      %v1422 = vrot.slane %v1421, 4
      %v1424 = vshll.u32 %v1339, 16
      %v1426 = vrot.slane %v1424, 5
      %v1427 = vsel %vm980, %v1422, %v1426
      %v1429 = vshrl.u32 %v1340, 16
      %v1431 = vrot.slane %v1429, 4
      %v1432 = vshll.u32 %v1340, 16
      %v1434 = vrot.slane %v1432, 5
      %v1435 = vor.u32 %v1431, %v1434
      %v1436 = vrot.slane %v1435, 4
      %v1438 = vshll.u32 %v1341, 16
      %v1440 = vrot.slane %v1438, 5
      %v1441 = vsel %vm980, %v1436, %v1440
      %v1443 = vshrl.u32 %v1342, 16
      %v1445 = vrot.slane %v1443, 4
      %v1446 = vshll.u32 %v1342, 16
      %v1448 = vrot.slane %v1446, 5
      %v1449 = vor.u32 %v1445, %v1448
      %v1450 = vrot.slane %v1449, 4
      %v1452 = vshll.u32 %v1343, 16
      %v1454 = vrot.slane %v1452, 5
      %v1455 = vsel %vm980, %v1450, %v1454
      %1456 = vrot.lane.b32.xlu0 %v1357, 20
      %v1457 = vpop.permute.xlu0 %1456
      %1458 = vrot.lane.b32.xlu0 %v1371, 20
      %v1459 = vpop.permute.xlu0 %1458
      %1460 = vrot.lane.b32.xlu0 %v1385, 20
      %v1461 = vpop.permute.xlu0 %1460
      %1462 = vrot.lane.b32.xlu0 %v1399, 20
      %v1463 = vpop.permute.xlu0 %1462
      %1464 = vrot.lane.b32.xlu0 %v1413, 20
      %v1465 = vpop.permute.xlu0 %1464
      %1466 = vrot.lane.b32.xlu0 %v1427, 20
      %v1467 = vpop.permute.xlu0 %1466
      %1468 = vrot.lane.b32.xlu0 %v1441, 20
      %v1469 = vpop.permute.xlu0 %1468
      %1470 = vrot.lane.b32.xlu0 %v1455, 20
      %v1471 = vpop.permute.xlu0 %1470
      %vm1480 = vcmask 191648
      %1481 = vst.msk [vmem:[#allocation4] sm:$0xf] %vm1480, %v1457
      %1482 = vst.msk [vmem:[#allocation4 + $0x4] sm:$0xf] %vm1480, %v1459
      %1483 = vst.msk [vmem:[#allocation4 + $0x8] sm:$0xf] %vm1480, %v1461
      %1484 = vst.msk [vmem:[#allocation4 + $0xc] sm:$0xf] %vm1480, %v1463
      %1485 = vst.msk [vmem:[#allocation4 + $0x10] sm:$0xf] %vm1480, %v1465
      %1486 = vst.msk [vmem:[#allocation4 + $0x14] sm:$0xf] %vm1480, %v1467
      %1487 = vst.msk [vmem:[#allocation4 + $0x18] sm:$0xf] %vm1480, %v1469
      %1488 = vst.msk [vmem:[#allocation4 + $0x1c] sm:$0xf] %vm1480, %v1471
      %s1489 = scalar_lea.vmem [#allocation2], 24
      %v1490 = vld [vmem:[%s1489] sm:$0x8]
      %v1491 = vld [vmem:[%s1489 + $0x4] sm:$0xf]
      %v1492 = vld [vmem:[%s1489 + $0xc] sm:$0x8]
      %v1493 = vld [vmem:[%s1489 + $0x10] sm:$0xf]
      %v1494 = vld [vmem:[%s1489 + $0x18] sm:$0x8]
      %v1495 = vld [vmem:[%s1489 + $0x1c] sm:$0xf]
      %v1496 = vld [vmem:[%s1489 + $0x24] sm:$0x8]
      %v1497 = vld [vmem:[%s1489 + $0x28] sm:$0xf]
      %v1498 = vld [vmem:[%s1489 + $0x30] sm:$0x8]
      %v1499 = vld [vmem:[%s1489 + $0x34] sm:$0xf]
      %v1500 = vld [vmem:[%s1489 + $0x3c] sm:$0x8]
      %v1501 = vld [vmem:[%s1489 + $0x40] sm:$0xf]
      %v1502 = vld [vmem:[%s1489 + $0x48] sm:$0x8]
      %v1503 = vld [vmem:[%s1489 + $0x4c] sm:$0xf]
      %v1504 = vld [vmem:[%s1489 + $0x54] sm:$0x8]
      %v1505 = vld [vmem:[%s1489 + $0x58] sm:$0xf]
      %v1507 = vshrl.u32 %v1490, 16
      %v1509 = vrot.slane %v1507, 7
      %v1510 = vrot.slane %v1509, 4
      %v1512 = vshrl.u32 %v1491, 16
      %v1514 = vrot.slane %v1512, 7
      %v1515 = vshll.u32 %v1491, 16
      %v1517 = vor.u32 %v1514, %v1515
      %v1518 = vsel %vm792, %v1510, %v1517
      %v1520 = vshrl.u32 %v1492, 16
      %v1522 = vrot.slane %v1520, 7
      %v1523 = vrot.slane %v1522, 4
      %v1525 = vshrl.u32 %v1493, 16
      %v1527 = vrot.slane %v1525, 7
      %v1528 = vshll.u32 %v1493, 16
      %v1530 = vor.u32 %v1527, %v1528
      %v1531 = vsel %vm792, %v1523, %v1530
      %v1533 = vshrl.u32 %v1494, 16
      %v1535 = vrot.slane %v1533, 7
      %v1536 = vrot.slane %v1535, 4
      %v1538 = vshrl.u32 %v1495, 16
      %v1540 = vrot.slane %v1538, 7
      %v1541 = vshll.u32 %v1495, 16
      %v1543 = vor.u32 %v1540, %v1541
      %v1544 = vsel %vm792, %v1536, %v1543
      %v1546 = vshrl.u32 %v1496, 16
      %v1548 = vrot.slane %v1546, 7
      %v1549 = vrot.slane %v1548, 4
      %v1551 = vshrl.u32 %v1497, 16
      %v1553 = vrot.slane %v1551, 7
      %v1554 = vshll.u32 %v1497, 16
      %v1556 = vor.u32 %v1553, %v1554
      %v1557 = vsel %vm792, %v1549, %v1556
      %v1559 = vshrl.u32 %v1498, 16
      %v1561 = vrot.slane %v1559, 7
      %v1562 = vrot.slane %v1561, 4
      %v1564 = vshrl.u32 %v1499, 16
      %v1566 = vrot.slane %v1564, 7
      %v1567 = vshll.u32 %v1499, 16
      %v1569 = vor.u32 %v1566, %v1567
      %v1570 = vsel %vm792, %v1562, %v1569
      %v1572 = vshrl.u32 %v1500, 16
      %v1574 = vrot.slane %v1572, 7
      %v1575 = vrot.slane %v1574, 4
      %v1577 = vshrl.u32 %v1501, 16
      %v1579 = vrot.slane %v1577, 7
      %v1580 = vshll.u32 %v1501, 16
      %v1582 = vor.u32 %v1579, %v1580
      %v1583 = vsel %vm792, %v1575, %v1582
      %v1585 = vshrl.u32 %v1502, 16
      %v1587 = vrot.slane %v1585, 7
      %v1588 = vrot.slane %v1587, 4
      %v1590 = vshrl.u32 %v1503, 16
      %v1592 = vrot.slane %v1590, 7
      %v1593 = vshll.u32 %v1503, 16
      %v1595 = vor.u32 %v1592, %v1593
      %v1596 = vsel %vm792, %v1588, %v1595
      %v1598 = vshrl.u32 %v1504, 16
      %v1600 = vrot.slane %v1598, 7
      %v1601 = vrot.slane %v1600, 4
      %v1603 = vshrl.u32 %v1505, 16
      %v1605 = vrot.slane %v1603, 7
      %v1606 = vshll.u32 %v1505, 16
      %v1608 = vor.u32 %v1605, %v1606
      %v1609 = vsel %vm792, %v1601, %v1608
      %1610 = vrot.lane.b32.xlu0 %v1518, 24
      %v1611 = vpop.permute.xlu0 %1610
      %1612 = vrot.lane.b32.xlu0 %v1531, 24
      %v1613 = vpop.permute.xlu0 %1612
      %1614 = vrot.lane.b32.xlu0 %v1544, 24
      %v1615 = vpop.permute.xlu0 %1614
      %1616 = vrot.lane.b32.xlu0 %v1557, 24
      %v1617 = vpop.permute.xlu0 %1616
      %1618 = vrot.lane.b32.xlu0 %v1570, 24
      %v1619 = vpop.permute.xlu0 %1618
      %1620 = vrot.lane.b32.xlu0 %v1583, 24
      %v1621 = vpop.permute.xlu0 %1620
      %1622 = vrot.lane.b32.xlu0 %v1596, 24
      %v1623 = vpop.permute.xlu0 %1622
      %1624 = vrot.lane.b32.xlu0 %v1609, 24
      %v1625 = vpop.permute.xlu0 %1624
      %vm1634 = vcmask 224448
      %1635 = vst.msk [vmem:[#allocation4] sm:$0xf] %vm1634, %v1611
      %1636 = vst.msk [vmem:[#allocation4 + $0x4] sm:$0xf] %vm1634, %v1613
      %1637 = vst.msk [vmem:[#allocation4 + $0x8] sm:$0xf] %vm1634, %v1615
      %1638 = vst.msk [vmem:[#allocation4 + $0xc] sm:$0xf] %vm1634, %v1617
      %1639 = vst.msk [vmem:[#allocation4 + $0x10] sm:$0xf] %vm1634, %v1619
      %1640 = vst.msk [vmem:[#allocation4 + $0x14] sm:$0xf] %vm1634, %v1621
      %1641 = vst.msk [vmem:[#allocation4 + $0x18] sm:$0xf] %vm1634, %v1623
      %1642 = vst.msk [vmem:[#allocation4 + $0x1c] sm:$0xf] %vm1634, %v1625
      %v1643 = vld [vmem:[%s1489 + $0x4] sm:$0xf]
      %v1644 = vld [vmem:[%s1489 + $0x10] sm:$0xf]
      %v1645 = vld [vmem:[%s1489 + $0x1c] sm:$0xf]
      %v1646 = vld [vmem:[%s1489 + $0x28] sm:$0xf]
      %v1647 = vld [vmem:[%s1489 + $0x34] sm:$0xf]
      %v1648 = vld [vmem:[%s1489 + $0x40] sm:$0xf]
      %v1649 = vld [vmem:[%s1489 + $0x4c] sm:$0xf]
      %v1650 = vld [vmem:[%s1489 + $0x58] sm:$0xf]
      %1659 = vrot.lane.b32.xlu0 %v1643, 28
      %v1660 = vpop.permute.xlu0 %1659
      %1661 = vrot.lane.b32.xlu0 %v1644, 28
      %v1662 = vpop.permute.xlu0 %1661
      %1663 = vrot.lane.b32.xlu0 %v1645, 28
      %v1664 = vpop.permute.xlu0 %1663
      %1665 = vrot.lane.b32.xlu0 %v1646, 28
      %v1666 = vpop.permute.xlu0 %1665
      %1667 = vrot.lane.b32.xlu0 %v1647, 28
      %v1668 = vpop.permute.xlu0 %1667
      %1669 = vrot.lane.b32.xlu0 %v1648, 28
      %v1670 = vpop.permute.xlu0 %1669
      %1671 = vrot.lane.b32.xlu0 %v1649, 28
      %v1672 = vpop.permute.xlu0 %1671
      %1673 = vrot.lane.b32.xlu0 %v1650, 28
      %v1674 = vpop.permute.xlu0 %1673
      %vm1683 = vcmask 257248
      %1684 = vst.msk [vmem:[#allocation4] sm:$0xf] %vm1683, %v1660
      %1685 = vst.msk [vmem:[#allocation4 + $0x4] sm:$0xf] %vm1683, %v1662
      %1686 = vst.msk [vmem:[#allocation4 + $0x8] sm:$0xf] %vm1683, %v1664
      %1687 = vst.msk [vmem:[#allocation4 + $0xc] sm:$0xf] %vm1683, %v1666
      %1688 = vst.msk [vmem:[#allocation4 + $0x10] sm:$0xf] %vm1683, %v1668
      %1689 = vst.msk [vmem:[#allocation4 + $0x14] sm:$0xf] %vm1683, %v1670
      %1690 = vst.msk [vmem:[#allocation4 + $0x18] sm:$0xf] %vm1683, %v1672
      %1691 = vst.msk [vmem:[#allocation4 + $0x1c] sm:$0xf] %vm1683, %v1674
      %v1692 = vld [vmem:[%s1489 + $0x4] sm:$0xf]
      %v1693 = vld [vmem:[%s1489 + $0x8] sm:$0x1]
      %v1694 = vld [vmem:[%s1489 + $0x10] sm:$0xf]
      %v1695 = vld [vmem:[%s1489 + $0x14] sm:$0x1]
      %v1696 = vld [vmem:[%s1489 + $0x1c] sm:$0xf]
      %v1697 = vld [vmem:[%s1489 + $0x20] sm:$0x1]
      %v1698 = vld [vmem:[%s1489 + $0x28] sm:$0xf]
      %v1699 = vld [vmem:[%s1489 + $0x2c] sm:$0x1]
      %v1700 = vld [vmem:[%s1489 + $0x34] sm:$0xf]
      %v1701 = vld [vmem:[%s1489 + $0x38] sm:$0x1]
      %v1702 = vld [vmem:[%s1489 + $0x40] sm:$0xf]
      %v1703 = vld [vmem:[%s1489 + $0x44] sm:$0x1]
      %v1704 = vld [vmem:[%s1489 + $0x4c] sm:$0xf]
      %v1705 = vld [vmem:[%s1489 + $0x50] sm:$0x1]
      %v1706 = vld [vmem:[%s1489 + $0x58] sm:$0xf]
      %v1707 = vld [vmem:[%s1489 + $0x5c] sm:$0x1]
      %v1709 = vshrl.u32 %v1692, 16
      %v1711 = vrot.slane %v1709, 4
      %v1712 = vshll.u32 %v1692, 16
      %v1714 = vrot.slane %v1712, 5
      %v1715 = vor.u32 %v1711, %v1714
      %v1716 = vrot.slane %v1715, 4
      %v1718 = vshll.u32 %v1693, 16
      %v1720 = vrot.slane %v1718, 5
      %v1721 = vsel %vm980, %v1716, %v1720
      %v1723 = vshrl.u32 %v1694, 16
      %v1725 = vrot.slane %v1723, 4
      %v1726 = vshll.u32 %v1694, 16
      %v1728 = vrot.slane %v1726, 5
      %v1729 = vor.u32 %v1725, %v1728
      %v1730 = vrot.slane %v1729, 4
      %v1732 = vshll.u32 %v1695, 16
      %v1734 = vrot.slane %v1732, 5
      %v1735 = vsel %vm980, %v1730, %v1734
      %v1737 = vshrl.u32 %v1696, 16
      %v1739 = vrot.slane %v1737, 4
      %v1740 = vshll.u32 %v1696, 16
      %v1742 = vrot.slane %v1740, 5
      %v1743 = vor.u32 %v1739, %v1742
      %v1744 = vrot.slane %v1743, 4
      %v1746 = vshll.u32 %v1697, 16
      %v1748 = vrot.slane %v1746, 5
      %v1749 = vsel %vm980, %v1744, %v1748
      %v1751 = vshrl.u32 %v1698, 16
      %v1753 = vrot.slane %v1751, 4
      %v1754 = vshll.u32 %v1698, 16
      %v1756 = vrot.slane %v1754, 5
      %v1757 = vor.u32 %v1753, %v1756
      %v1758 = vrot.slane %v1757, 4
      %v1760 = vshll.u32 %v1699, 16
      %v1762 = vrot.slane %v1760, 5
      %v1763 = vsel %vm980, %v1758, %v1762
      %v1765 = vshrl.u32 %v1700, 16
      %v1767 = vrot.slane %v1765, 4
      %v1768 = vshll.u32 %v1700, 16
      %v1770 = vrot.slane %v1768, 5
      %v1771 = vor.u32 %v1767, %v1770
      %v1772 = vrot.slane %v1771, 4
      %v1774 = vshll.u32 %v1701, 16
      %v1776 = vrot.slane %v1774, 5
      %v1777 = vsel %vm980, %v1772, %v1776
      %v1779 = vshrl.u32 %v1702, 16
      %v1781 = vrot.slane %v1779, 4
      %v1782 = vshll.u32 %v1702, 16
      %v1784 = vrot.slane %v1782, 5
      %v1785 = vor.u32 %v1781, %v1784
      %v1786 = vrot.slane %v1785, 4
      %v1788 = vshll.u32 %v1703, 16
      %v1790 = vrot.slane %v1788, 5
      %v1791 = vsel %vm980, %v1786, %v1790
      %v1793 = vshrl.u32 %v1704, 16
      %v1795 = vrot.slane %v1793, 4
      %v1796 = vshll.u32 %v1704, 16
      %v1798 = vrot.slane %v1796, 5
      %v1799 = vor.u32 %v1795, %v1798
      %v1800 = vrot.slane %v1799, 4
      %v1802 = vshll.u32 %v1705, 16
      %v1804 = vrot.slane %v1802, 5
      %v1805 = vsel %vm980, %v1800, %v1804
      %v1807 = vshrl.u32 %v1706, 16
      %v1809 = vrot.slane %v1807, 4
      %v1810 = vshll.u32 %v1706, 16
      %v1812 = vrot.slane %v1810, 5
      %v1813 = vor.u32 %v1809, %v1812
      %v1814 = vrot.slane %v1813, 4
      %v1816 = vshll.u32 %v1707, 16
      %v1818 = vrot.slane %v1816, 5
      %v1819 = vsel %vm980, %v1814, %v1818
      %1820 = vrot.lane.b32.xlu0 %v1721, 32
      %v1821 = vpop.permute.xlu0 %1820
      %1822 = vrot.lane.b32.xlu0 %v1735, 32
      %v1823 = vpop.permute.xlu0 %1822
      %1824 = vrot.lane.b32.xlu0 %v1749, 32
      %v1825 = vpop.permute.xlu0 %1824
      %1826 = vrot.lane.b32.xlu0 %v1763, 32
      %v1827 = vpop.permute.xlu0 %1826
      %1828 = vrot.lane.b32.xlu0 %v1777, 32
      %v1829 = vpop.permute.xlu0 %1828
      %1830 = vrot.lane.b32.xlu0 %v1791, 32
      %v1831 = vpop.permute.xlu0 %1830
      %1832 = vrot.lane.b32.xlu0 %v1805, 32
      %v1833 = vpop.permute.xlu0 %1832
      %1834 = vrot.lane.b32.xlu0 %v1819, 32
      %v1835 = vpop.permute.xlu0 %1834
      %vm1844 = vcmask 290048
      %1845 = vst.msk [vmem:[#allocation4] sm:$0xf] %vm1844, %v1821
      %1846 = vst.msk [vmem:[#allocation4 + $0x4] sm:$0xf] %vm1844, %v1823
      %1847 = vst.msk [vmem:[#allocation4 + $0x8] sm:$0xf] %vm1844, %v1825
      %1848 = vst.msk [vmem:[#allocation4 + $0xc] sm:$0xf] %vm1844, %v1827
      %1849 = vst.msk [vmem:[#allocation4 + $0x10] sm:$0xf] %vm1844, %v1829
      %1850 = vst.msk [vmem:[#allocation4 + $0x14] sm:$0xf] %vm1844, %v1831
      %1851 = vst.msk [vmem:[#allocation4 + $0x18] sm:$0xf] %vm1844, %v1833
      %1852 = vst.msk [vmem:[#allocation4 + $0x1c] sm:$0xf] %vm1844, %v1835
      %v1853 = vld [vmem:[#allocation4] sm:$0xf]
      %v1854 = vld [vmem:[#allocation4 + $0x4] sm:$0xf]
      %v1855 = vld [vmem:[#allocation4 + $0x8] sm:$0xf]
      %v1856 = vld [vmem:[#allocation4 + $0xc] sm:$0xf]
      %v1857 = vld [vmem:[#allocation4 + $0x10] sm:$0xf]
      %v1858 = vld [vmem:[#allocation4 + $0x14] sm:$0xf]
      %v1859 = vld [vmem:[#allocation4 + $0x18] sm:$0xf]
      %v1860 = vld [vmem:[#allocation4 + $0x1c] sm:$0xf]
      %v1861 = vld [vmem:[%s1] sm:$0xf]
      %v1862 = vld [vmem:[%s1 + $0x4] sm:$0xf]
      %v1863 = vld [vmem:[%s1 + $0x8] sm:$0xf]
      %v1864 = vld [vmem:[%s1 + $0xc] sm:$0xf]
      %v1865 = vld [vmem:[%s1 + $0x10] sm:$0x3]
      %v1874 = vunpack.c.l.b16 %v1853
      %v1875 = vunpack.c.l.b16 %v1854
      %v1876 = vunpack.c.l.b16 %v1855
      %v1877 = vunpack.c.l.b16 %v1856
      %v1878 = vunpack.c.l.b16 %v1857
      %v1879 = vunpack.c.l.b16 %v1858
      %v1880 = vunpack.c.l.b16 %v1859
      %v1881 = vunpack.c.l.b16 %v1860
      %v1882 = vpack.c.b16 %v1875, %v1874
      %v1883 = vpack.c.b16 %v1877, %v1876
      %v1884 = vpack.c.b16 %v1879, %v1878
      %v1885 = vpack.c.b16 %v1881, %v1880
      %v1891 = vunpack.c.l.b16 %v1861
      %v1892 = vunpack.c.l.b16 %v1862
      %v1893 = vunpack.c.l.b16 %v1863
      %v1894 = vunpack.c.l.b16 %v1864
      %v1895 = vunpack.c.l.b16 %v1865
      %v1896 = vpack.c.b16 %v1892, %v1891
      %v1897 = vpack.c.b16 %v1894, %v1893
      %v1898 = vpack.c.b16 %v1895, %v1895
      %vm1901 = vcmask 293888
      %v1903 = vsel %vm1901, %v1882, 0
      %v1906 = vsel %vm1901, %v1883, 0
      %v1909 = vsel %vm1901, %v1884, 0
      %v1912 = vsel %vm1901, %v1885, 0
      %vm1914 = vcmask 1041408
      %v1916 = vsel %vm1914, %v1898, 0
      %1918 = vmatpush.bf16.msra.mxu0 0
      %1919 = vmatpush.bf16.msra.mxu0 0
      %1920 = vmatpush.bf16.msra.mxu0 0
      %1921 = vmatpush.bf16.msra.mxu0 0
      %1922 = vmatpush.bf16.msra.mxu0 0
      %1923 = vmatpush.bf16.msra.mxu0 %v1916
      %1924 = vmatpush.bf16.msra.mxu0 %v1897
      %1925 = vmatpush.bf16.msra.mxu0 %v1896
      %1926 = vmatmul.bf16.gmra.mxu0 %v1903
      %v1927 = vpop.f32.mrf.mxu0
      %v1928 = vadd.f32 0.0, %v1927
      %v1929 = vpop.f32.mrf.mxu0
      %v1930 = vadd.f32 0.0, %v1929
      %1931 = vmatmul.bf16.gmra.mxu0 %v1906
      %v1932 = vpop.f32.mrf.mxu0
      %v1933 = vadd.f32 0.0, %v1932
      %v1934 = vpop.f32.mrf.mxu0
      %v1935 = vadd.f32 0.0, %v1934
      %1936 = vmatmul.bf16.gmra.mxu0 %v1909
      %v1937 = vpop.f32.mrf.mxu0
      %v1938 = vadd.f32 0.0, %v1937
      %v1939 = vpop.f32.mrf.mxu0
      %v1940 = vadd.f32 0.0, %v1939
      %1941 = vmatmul.bf16.gmra.mxu0 %v1912
      %v1942 = vpop.f32.mrf.mxu0
      %v1943 = vadd.f32 0.0, %v1942
      %v1944 = vpop.f32.mrf.mxu0
      %v1945 = vadd.f32 0.0, %v1944
      %1946 = vdwg.mxu0
      %vm1947 = vcmask 31744
      %v1948 = vsel %vm1947, %v1928, 0.0
      %v1949 = vsel %vm1947, %v1930, 0.0
      %v1950 = vadd.f32 %v1948, %v1949
      %v1951 = vsel %vm1947, %v1933, 0.0
      %v1952 = vadd.f32 %v1950, %v1951
      %v1953 = vsel %vm1947, %v1935, 0.0
      %v1954 = vadd.f32 %v1952, %v1953
      %v1955 = vsel %vm1947, %v1938, 0.0
      %v1956 = vadd.f32 %v1954, %v1955
      %v1957 = vsel %vm1947, %v1940, 0.0
      %v1958 = vadd.f32 %v1956, %v1957
      %v1959 = vsel %vm1947, %v1943, 0.0
      %v1960 = vadd.f32 %v1958, %v1959
      %v1961 = vsel %vm1947, %v1945, 0.0
      %v1962 = vadd.f32 %v1960, %v1961
      %1963 = vadd.xlane.f32.xlu0 %v1962
      %v1964 = vpop.xlane.xlu0 %1963
      %v1965 = vrot.slane %v1964, 4
      %v1966 = vadd.f32 %v1964, %v1965
      %v1967 = vrot.slane %v1966, 2
      %v1968 = vadd.f32 %v1966, %v1967
      %v1969 = vrot.slane %v1968, 1
      %v1970 = vadd.f32 %v1968, %v1969
      %v1971 = vrcp.pop 256.0
      %v1972 = vmul.f32 256.0, %v1971
      %v1973 = vsub.f32 1.0, %v1972
      %v1974 = vmul.f32 %v1971, %v1973
      %v1975 = vadd.f32 %v1971, %v1974
      %vm1976 = vweird.f32 %v1971
      %v1977 = vsel %vm1976, %v1971, %v1975
      %v1978 = vmul.f32 %v1970, %v1977
      %v1979 = vsub.f32 %v1928, %v1978
      %v1980 = vsub.f32 %v1930, %v1978
      %v1981 = vsub.f32 %v1933, %v1978
      %v1982 = vsub.f32 %v1935, %v1978
      %v1983 = vsub.f32 %v1938, %v1978
      %v1984 = vsub.f32 %v1940, %v1978
      %v1985 = vsub.f32 %v1943, %v1978
      %v1986 = vsub.f32 %v1945, %v1978
      %v1987 = vmul.f32 %v1979, %v1979
      %v1988 = vmul.f32 %v1980, %v1980
      %v1989 = vmul.f32 %v1981, %v1981
      %v1990 = vmul.f32 %v1982, %v1982
      %v1991 = vmul.f32 %v1983, %v1983
      %v1992 = vmul.f32 %v1984, %v1984
      %v1993 = vmul.f32 %v1985, %v1985
      %v1994 = vmul.f32 %v1986, %v1986
      %v1995 = vsel %vm1947, %v1987, 0.0
      %v1996 = vsel %vm1947, %v1988, 0.0
      %v1997 = vadd.f32 %v1995, %v1996
      %v1998 = vsel %vm1947, %v1989, 0.0
      %v1999 = vadd.f32 %v1997, %v1998
      %v2000 = vsel %vm1947, %v1990, 0.0
      %v2001 = vadd.f32 %v1999, %v2000
      %v2002 = vsel %vm1947, %v1991, 0.0
      %v2003 = vadd.f32 %v2001, %v2002
      %v2004 = vsel %vm1947, %v1992, 0.0
      %v2005 = vadd.f32 %v2003, %v2004
      %v2006 = vsel %vm1947, %v1993, 0.0
      %v2007 = vadd.f32 %v2005, %v2006
      %v2008 = vsel %vm1947, %v1994, 0.0
      %v2009 = vadd.f32 %v2007, %v2008
      %2010 = vadd.xlane.f32.xlu0 %v2009
      %v2011 = vpop.xlane.xlu0 %2010
      %v2012 = vrot.slane %v2011, 4
      %v2013 = vadd.f32 %v2011, %v2012
      %v2014 = vrot.slane %v2013, 2
      %v2015 = vadd.f32 %v2013, %v2014
      %v2016 = vrot.slane %v2015, 1
      %v2017 = vadd.f32 %v2015, %v2016
      %v2018 = vmul.f32 %v2017, %v1977
      %v2019 = vadd.f32 %v2018, 1e-05
      %v2020 = vrsqrt.pop %v2019
      %v2021 = vmul.f32 %v2020, %v2019
      %v2022 = vmul.f32 %v2021, %v2020
      %v2023 = vmul.f32 0.5, %v2022
      %v2024 = vsub.f32 1.5, %v2023
      %v2025 = vmul.f32 %v2020, %v2024
      %vm2026 = vweird.f32 %v2019
      %vm2027 = vweird.f32 %v2020
      %vm2028 = vmor %vm2026, %vm2027
      %v2029 = vsel %vm2028, %v2020, %v2025
      %v2030 = vmul.f32 %v1979, %v2029
      %v2031 = vmul.f32 %v1980, %v2029
      %v2032 = vmul.f32 %v1981, %v2029
      %v2033 = vmul.f32 %v1982, %v2029
      %v2034 = vmul.f32 %v1983, %v2029
      %v2035 = vmul.f32 %v1984, %v2029
      %v2036 = vmul.f32 %v1985, %v2029
      %v2037 = vmul.f32 %v1986, %v2029
      %v2038 = vld [vmem:[%s2] sm:$0x1]
      %v2040 = vperm.slane %v2038, 0
      %v2042 = vmul.f32 %v2030, %v2040
      %v2043 = vmul.f32 %v2031, %v2040
      %v2044 = vmul.f32 %v2032, %v2040
      %v2045 = vmul.f32 %v2033, %v2040
      %v2046 = vmul.f32 %v2034, %v2040
      %v2047 = vmul.f32 %v2035, %v2040
      %v2048 = vmul.f32 %v2036, %v2040
      %v2049 = vmul.f32 %v2037, %v2040
      %v2050 = vld [vmem:[%s3] sm:$0x1]
      %v2052 = vperm.slane %v2050, 0
      %v2054 = vadd.f32 %v2042, %v2052
      %v2055 = vadd.f32 %v2043, %v2052
      %v2056 = vadd.f32 %v2044, %v2052
      %v2057 = vadd.f32 %v2045, %v2052
      %v2058 = vadd.f32 %v2046, %v2052
      %v2059 = vadd.f32 %v2047, %v2052
      %v2060 = vadd.f32 %v2048, %v2052
      %v2061 = vadd.f32 %v2049, %v2052
      %v2062 = vmul.f32 %v2054, 0.5
      %v2063 = vmul.f32 %v2055, 0.5
      %v2064 = vmul.f32 %v2056, 0.5
      %v2065 = vmul.f32 %v2057, 0.5
      %v2066 = vmul.f32 %v2058, 0.5
      %v2067 = vmul.f32 %v2059, 0.5
      %v2068 = vmul.f32 %v2060, 0.5
      %v2069 = vmul.f32 %v2061, 0.5
      %v2070 = vmul.f32 %v2054, 0.70710677
      %v2071 = vmul.f32 %v2055, 0.70710677
      %v2072 = vmul.f32 %v2056, 0.70710677
      %v2073 = vmul.f32 %v2057, 0.70710677
      %v2074 = vmul.f32 %v2058, 0.70710677
      %v2075 = vmul.f32 %v2059, 0.70710677
      %v2076 = vmul.f32 %v2060, 0.70710677
      %v2077 = vmul.f32 %v2061, 0.70710677
      %vm2078 = vcmp.ge.f32.partialorder %v2070, 0.0
      %vm2079 = vcmp.ge.f32.partialorder %v2071, 0.0
      %vm2080 = vcmp.ge.f32.partialorder %v2072, 0.0
      %vm2081 = vcmp.ge.f32.partialorder %v2073, 0.0
      %vm2082 = vcmp.ge.f32.partialorder %v2074, 0.0
      %vm2083 = vcmp.ge.f32.partialorder %v2075, 0.0
      %vm2084 = vcmp.ge.f32.partialorder %v2076, 0.0
      %vm2085 = vcmp.ge.f32.partialorder %v2077, 0.0
      %v2086 = vsub.f32 0.0, %v2070
      %v2087 = vsub.f32 0.0, %v2071
      %v2088 = vsub.f32 0.0, %v2072
      %v2089 = vsub.f32 0.0, %v2073
      %v2090 = vsub.f32 0.0, %v2074
      %v2091 = vsub.f32 0.0, %v2075
      %v2092 = vsub.f32 0.0, %v2076
      %v2093 = vsub.f32 0.0, %v2077
      %v2094 = vsel %vm2078, %v2070, %v2086
      %v2095 = vsel %vm2079, %v2071, %v2087
      %v2096 = vsel %vm2080, %v2072, %v2088
      %v2097 = vsel %vm2081, %v2073, %v2089
      %v2098 = vsel %vm2082, %v2074, %v2090
      %v2099 = vsel %vm2083, %v2075, %v2091
      %v2100 = vsel %vm2084, %v2076, %v2092
      %v2101 = vsel %vm2085, %v2077, %v2093
      %v2102 = vmul.f32 %v2094, 0.3275911
      %v2103 = vmul.f32 %v2095, 0.3275911
      %v2104 = vmul.f32 %v2096, 0.3275911
      %v2105 = vmul.f32 %v2097, 0.3275911
      %v2106 = vmul.f32 %v2098, 0.3275911
      %v2107 = vmul.f32 %v2099, 0.3275911
      %v2108 = vmul.f32 %v2100, 0.3275911
      %v2109 = vmul.f32 %v2101, 0.3275911
      %v2110 = vadd.f32 %v2102, 1.0
      %v2111 = vadd.f32 %v2103, 1.0
      %v2112 = vadd.f32 %v2104, 1.0
      %v2113 = vadd.f32 %v2105, 1.0
      %v2114 = vadd.f32 %v2106, 1.0
      %v2115 = vadd.f32 %v2107, 1.0
      %v2116 = vadd.f32 %v2108, 1.0
      %v2117 = vadd.f32 %v2109, 1.0
      %v2118 = vrcp.pop %v2110
      %v2119 = vmul.f32 %v2110, %v2118
      %v2120 = vsub.f32 1.0, %v2119
      %v2121 = vmul.f32 %v2118, %v2120
      %v2122 = vadd.f32 %v2118, %v2121
      %vm2123 = vweird.f32 %v2110
      %vm2124 = vweird.f32 %v2118
      %vm2125 = vmor %vm2123, %vm2124
      %v2126 = vsel %vm2125, %v2118, %v2122
      %v2127 = vand.u32 2147483647, %v2110
      %vm2128 = vcmp.eq.f32.partialorder %v2127, 8.507059e+37
      %v2129 = vand.u32 %v2110, 2147483648
      %v2130 = vor.u32 1.1754944e-38, %v2129
      %v2131 = vsel %vm2128, %v2130, %v2126
      %v2132 = vmul.f32 1.0, %v2131
      %v2133 = vrcp.pop %v2111
      %v2134 = vmul.f32 %v2111, %v2133
      %v2135 = vsub.f32 1.0, %v2134
      %v2136 = vmul.f32 %v2133, %v2135
      %v2137 = vadd.f32 %v2133, %v2136
      %vm2138 = vweird.f32 %v2111
      %vm2139 = vweird.f32 %v2133
      %vm2140 = vmor %vm2138, %vm2139
      %v2141 = vsel %vm2140, %v2133, %v2137
      %v2142 = vand.u32 2147483647, %v2111
      %vm2143 = vcmp.eq.f32.partialorder %v2142, 8.507059e+37
      %v2144 = vand.u32 %v2111, 2147483648
      %v2145 = vor.u32 1.1754944e-38, %v2144
      %v2146 = vsel %vm2143, %v2145, %v2141
      %v2147 = vmul.f32 1.0, %v2146
      %v2148 = vrcp.pop %v2112
      %v2149 = vmul.f32 %v2112, %v2148
      %v2150 = vsub.f32 1.0, %v2149
      %v2151 = vmul.f32 %v2148, %v2150
      %v2152 = vadd.f32 %v2148, %v2151
      %vm2153 = vweird.f32 %v2112
      %vm2154 = vweird.f32 %v2148
      %vm2155 = vmor %vm2153, %vm2154
      %v2156 = vsel %vm2155, %v2148, %v2152
      %v2157 = vand.u32 2147483647, %v2112
      %vm2158 = vcmp.eq.f32.partialorder %v2157, 8.507059e+37
      %v2159 = vand.u32 %v2112, 2147483648
      %v2160 = vor.u32 1.1754944e-38, %v2159
      %v2161 = vsel %vm2158, %v2160, %v2156
      %v2162 = vmul.f32 1.0, %v2161
      %v2163 = vrcp.pop %v2113
      %v2164 = vmul.f32 %v2113, %v2163
      %v2165 = vsub.f32 1.0, %v2164
      %v2166 = vmul.f32 %v2163, %v2165
      %v2167 = vadd.f32 %v2163, %v2166
      %vm2168 = vweird.f32 %v2113
      %vm2169 = vweird.f32 %v2163
      %vm2170 = vmor %vm2168, %vm2169
      %v2171 = vsel %vm2170, %v2163, %v2167
      %v2172 = vand.u32 2147483647, %v2113
      %vm2173 = vcmp.eq.f32.partialorder %v2172, 8.507059e+37
      %v2174 = vand.u32 %v2113, 2147483648
      %v2175 = vor.u32 1.1754944e-38, %v2174
      %v2176 = vsel %vm2173, %v2175, %v2171
      %v2177 = vmul.f32 1.0, %v2176
      %v2178 = vrcp.pop %v2114
      %v2179 = vmul.f32 %v2114, %v2178
      %v2180 = vsub.f32 1.0, %v2179
      %v2181 = vmul.f32 %v2178, %v2180
      %v2182 = vadd.f32 %v2178, %v2181
      %vm2183 = vweird.f32 %v2114
      %vm2184 = vweird.f32 %v2178
      %vm2185 = vmor %vm2183, %vm2184
      %v2186 = vsel %vm2185, %v2178, %v2182
      %v2187 = vand.u32 2147483647, %v2114
      %vm2188 = vcmp.eq.f32.partialorder %v2187, 8.507059e+37
      %v2189 = vand.u32 %v2114, 2147483648
      %v2190 = vor.u32 1.1754944e-38, %v2189
      %v2191 = vsel %vm2188, %v2190, %v2186
      %v2192 = vmul.f32 1.0, %v2191
      %v2193 = vrcp.pop %v2115
      %v2194 = vmul.f32 %v2115, %v2193
      %v2195 = vsub.f32 1.0, %v2194
      %v2196 = vmul.f32 %v2193, %v2195
      %v2197 = vadd.f32 %v2193, %v2196
      %vm2198 = vweird.f32 %v2115
      %vm2199 = vweird.f32 %v2193
      %vm2200 = vmor %vm2198, %vm2199
      %v2201 = vsel %vm2200, %v2193, %v2197
      %v2202 = vand.u32 2147483647, %v2115
      %vm2203 = vcmp.eq.f32.partialorder %v2202, 8.507059e+37
      %v2204 = vand.u32 %v2115, 2147483648
      %v2205 = vor.u32 1.1754944e-38, %v2204
      %v2206 = vsel %vm2203, %v2205, %v2201
      %v2207 = vmul.f32 1.0, %v2206
      %v2208 = vrcp.pop %v2116
      %v2209 = vmul.f32 %v2116, %v2208
      %v2210 = vsub.f32 1.0, %v2209
      %v2211 = vmul.f32 %v2208, %v2210
      %v2212 = vadd.f32 %v2208, %v2211
      %vm2213 = vweird.f32 %v2116
      %vm2214 = vweird.f32 %v2208
      %vm2215 = vmor %vm2213, %vm2214
      %v2216 = vsel %vm2215, %v2208, %v2212
      %v2217 = vand.u32 2147483647, %v2116
      %vm2218 = vcmp.eq.f32.partialorder %v2217, 8.507059e+37
      %v2219 = vand.u32 %v2116, 2147483648
      %v2220 = vor.u32 1.1754944e-38, %v2219
      %v2221 = vsel %vm2218, %v2220, %v2216
      %v2222 = vmul.f32 1.0, %v2221
      %v2223 = vrcp.pop %v2117
      %v2224 = vmul.f32 %v2117, %v2223
      %v2225 = vsub.f32 1.0, %v2224
      %v2226 = vmul.f32 %v2223, %v2225
      %v2227 = vadd.f32 %v2223, %v2226
      %vm2228 = vweird.f32 %v2117
      %vm2229 = vweird.f32 %v2223
      %vm2230 = vmor %vm2228, %vm2229
      %v2231 = vsel %vm2230, %v2223, %v2227
      %v2232 = vand.u32 2147483647, %v2117
      %vm2233 = vcmp.eq.f32.partialorder %v2232, 8.507059e+37
      %v2234 = vand.u32 %v2117, 2147483648
      %v2235 = vor.u32 1.1754944e-38, %v2234
      %v2236 = vsel %vm2233, %v2235, %v2231
      %v2237 = vmul.f32 1.0, %v2236
      %v2238 = vmul.f32 %v2132, 1.0614054
      %v2239 = vmul.f32 %v2147, 1.0614054
      %v2240 = vmul.f32 %v2162, 1.0614054
      %v2241 = vmul.f32 %v2177, 1.0614054
      %v2242 = vmul.f32 %v2192, 1.0614054
      %v2243 = vmul.f32 %v2207, 1.0614054
      %v2244 = vmul.f32 %v2222, 1.0614054
      %v2245 = vmul.f32 %v2237, 1.0614054
      %v2246 = vadd.f32 %v2238, -1.4531521
      %v2247 = vadd.f32 %v2239, -1.4531521
      %v2248 = vadd.f32 %v2240, -1.4531521
      %v2249 = vadd.f32 %v2241, -1.4531521
      %v2250 = vadd.f32 %v2242, -1.4531521
      %v2251 = vadd.f32 %v2243, -1.4531521
      %v2252 = vadd.f32 %v2244, -1.4531521
      %v2253 = vadd.f32 %v2245, -1.4531521
      %v2254 = vmul.f32 %v2246, %v2132
      %v2255 = vmul.f32 %v2247, %v2147
      %v2256 = vmul.f32 %v2248, %v2162
      %v2257 = vmul.f32 %v2249, %v2177
      %v2258 = vmul.f32 %v2250, %v2192
      %v2259 = vmul.f32 %v2251, %v2207
      %v2260 = vmul.f32 %v2252, %v2222
      %v2261 = vmul.f32 %v2253, %v2237
      %v2262 = vadd.f32 %v2254, 1.4214138
      %v2263 = vadd.f32 %v2255, 1.4214138
      %v2264 = vadd.f32 %v2256, 1.4214138
      %v2265 = vadd.f32 %v2257, 1.4214138
      %v2266 = vadd.f32 %v2258, 1.4214138
      %v2267 = vadd.f32 %v2259, 1.4214138
      %v2268 = vadd.f32 %v2260, 1.4214138
      %v2269 = vadd.f32 %v2261, 1.4214138
      %v2270 = vmul.f32 %v2262, %v2132
      %v2271 = vmul.f32 %v2263, %v2147
      %v2272 = vmul.f32 %v2264, %v2162
      %v2273 = vmul.f32 %v2265, %v2177
      %v2274 = vmul.f32 %v2266, %v2192
      %v2275 = vmul.f32 %v2267, %v2207
      %v2276 = vmul.f32 %v2268, %v2222
      %v2277 = vmul.f32 %v2269, %v2237
      %v2278 = vadd.f32 %v2270, -0.28449672
      %v2279 = vadd.f32 %v2271, -0.28449672
      %v2280 = vadd.f32 %v2272, -0.28449672
      %v2281 = vadd.f32 %v2273, -0.28449672
      %v2282 = vadd.f32 %v2274, -0.28449672
      %v2283 = vadd.f32 %v2275, -0.28449672
      %v2284 = vadd.f32 %v2276, -0.28449672
      %v2285 = vadd.f32 %v2277, -0.28449672
      %v2286 = vmul.f32 %v2278, %v2132
      %v2287 = vmul.f32 %v2279, %v2147
      %v2288 = vmul.f32 %v2280, %v2162
      %v2289 = vmul.f32 %v2281, %v2177
      %v2290 = vmul.f32 %v2282, %v2192
      %v2291 = vmul.f32 %v2283, %v2207
      %v2292 = vmul.f32 %v2284, %v2222
      %v2293 = vmul.f32 %v2285, %v2237
      %v2294 = vadd.f32 %v2286, 0.2548296
      %v2295 = vadd.f32 %v2287, 0.2548296
      %v2296 = vadd.f32 %v2288, 0.2548296
      %v2297 = vadd.f32 %v2289, 0.2548296
      %v2298 = vadd.f32 %v2290, 0.2548296
      %v2299 = vadd.f32 %v2291, 0.2548296
      %v2300 = vadd.f32 %v2292, 0.2548296
      %v2301 = vadd.f32 %v2293, 0.2548296
      %v2302 = vmul.f32 %v2294, %v2132
      %v2303 = vmul.f32 %v2295, %v2147
      %v2304 = vmul.f32 %v2296, %v2162
      %v2305 = vmul.f32 %v2297, %v2177
      %v2306 = vmul.f32 %v2298, %v2192
      %v2307 = vmul.f32 %v2299, %v2207
      %v2308 = vmul.f32 %v2300, %v2222
      %v2309 = vmul.f32 %v2301, %v2237
      %v2310 = vsub.f32 0.0, %v2094
      %v2311 = vsub.f32 0.0, %v2095
      %v2312 = vsub.f32 0.0, %v2096
      %v2313 = vsub.f32 0.0, %v2097
      %v2314 = vsub.f32 0.0, %v2098
      %v2315 = vsub.f32 0.0, %v2099
      %v2316 = vsub.f32 0.0, %v2100
      %v2317 = vsub.f32 0.0, %v2101
      %v2318 = vmul.f32 %v2310, %v2094
      %v2319 = vmul.f32 %v2311, %v2095
      %v2320 = vmul.f32 %v2312, %v2096
      %v2321 = vmul.f32 %v2313, %v2097
      %v2322 = vmul.f32 %v2314, %v2098
      %v2323 = vmul.f32 %v2315, %v2099
      %v2324 = vmul.f32 %v2316, %v2100
      %v2325 = vmul.f32 %v2317, %v2101
      %v2326 = vmul.f32 %v2318, 1.442695
      %v2327 = vpow.pop %v2326
      %v2328 = vmul.f32 %v2319, 1.442695
      %v2329 = vpow.pop %v2328
      %v2330 = vmul.f32 %v2320, 1.442695
      %v2331 = vpow.pop %v2330
      %v2332 = vmul.f32 %v2321, 1.442695
      %v2333 = vpow.pop %v2332
      %v2334 = vmul.f32 %v2322, 1.442695
      %v2335 = vpow.pop %v2334
      %v2336 = vmul.f32 %v2323, 1.442695
      %v2337 = vpow.pop %v2336
      %v2338 = vmul.f32 %v2324, 1.442695
      %v2339 = vpow.pop %v2338
      %v2340 = vmul.f32 %v2325, 1.442695
      %v2341 = vpow.pop %v2340
      %v2342 = vmul.f32 %v2302, %v2327
      %v2343 = vmul.f32 %v2303, %v2329
      %v2344 = vmul.f32 %v2304, %v2331
      %v2345 = vmul.f32 %v2305, %v2333
      %v2346 = vmul.f32 %v2306, %v2335
      %v2347 = vmul.f32 %v2307, %v2337
      %v2348 = vmul.f32 %v2308, %v2339
      %v2349 = vmul.f32 %v2309, %v2341
      %v2350 = vsub.f32 1.0, %v2342
      %v2351 = vsub.f32 1.0, %v2343
      %v2352 = vsub.f32 1.0, %v2344
      %v2353 = vsub.f32 1.0, %v2345
      %v2354 = vsub.f32 1.0, %v2346
      %v2355 = vsub.f32 1.0, %v2347
      %v2356 = vsub.f32 1.0, %v2348
      %v2357 = vsub.f32 1.0, %v2349
      %v2358 = vsub.f32 0.0, %v2350
      %v2359 = vsub.f32 0.0, %v2351
      %v2360 = vsub.f32 0.0, %v2352
      %v2361 = vsub.f32 0.0, %v2353
      %v2362 = vsub.f32 0.0, %v2354
      %v2363 = vsub.f32 0.0, %v2355
      %v2364 = vsub.f32 0.0, %v2356
      %v2365 = vsub.f32 0.0, %v2357
      %v2366 = vsel %vm2078, %v2350, %v2358
      %v2367 = vsel %vm2079, %v2351, %v2359
      %v2368 = vsel %vm2080, %v2352, %v2360
      %v2369 = vsel %vm2081, %v2353, %v2361
      %v2370 = vsel %vm2082, %v2354, %v2362
      %v2371 = vsel %vm2083, %v2355, %v2363
      %v2372 = vsel %vm2084, %v2356, %v2364
      %v2373 = vsel %vm2085, %v2357, %v2365
      %v2374 = vadd.f32 %v2366, 1.0
      %v2375 = vadd.f32 %v2367, 1.0
      %v2376 = vadd.f32 %v2368, 1.0
      %v2377 = vadd.f32 %v2369, 1.0
      %v2378 = vadd.f32 %v2370, 1.0
      %v2379 = vadd.f32 %v2371, 1.0
      %v2380 = vadd.f32 %v2372, 1.0
      %v2381 = vadd.f32 %v2373, 1.0
      %v2382 = vmul.f32 %v2062, %v2374
      %v2383 = vmul.f32 %v2063, %v2375
      %v2384 = vmul.f32 %v2064, %v2376
      %v2385 = vmul.f32 %v2065, %v2377
      %v2386 = vmul.f32 %v2066, %v2378
      %v2387 = vmul.f32 %v2067, %v2379
      %v2388 = vmul.f32 %v2068, %v2380
      %v2389 = vmul.f32 %v2069, %v2381
      %v2390 = vpack.c.bf16 %v2382, %v2382
      %v2391 = vpack.c.bf16 %v2383, %v2383
      %v2392 = vpack.c.bf16 %v2384, %v2384
      %v2393 = vpack.c.bf16 %v2385, %v2385
      %v2394 = vpack.c.bf16 %v2386, %v2386
      %v2395 = vpack.c.bf16 %v2387, %v2387
      %v2396 = vpack.c.bf16 %v2388, %v2388
      %v2397 = vpack.c.bf16 %v2389, %v2389
      %2398 = vst.msk [vmem:[%s766 + $0x4] sm:$0xf] %vm543, %v2390
      %2399 = vst.msk [vmem:[%s766 + $0x10] sm:$0xf] %vm543, %v2391
      %2400 = vst.msk [vmem:[%s766 + $0x1c] sm:$0xf] %vm543, %v2392
      %2401 = vst.msk [vmem:[%s766 + $0x28] sm:$0xf] %vm543, %v2393
      %2402 = vst.msk [vmem:[%s766 + $0x34] sm:$0xf] %vm543, %v2394
      %2403 = vst.msk [vmem:[%s766 + $0x40] sm:$0xf] %vm543, %v2395
      %2404 = vst.msk [vmem:[%s766 + $0x4c] sm:$0xf] %vm543, %v2396
      %2405 = vst.msk [vmem:[%s766 + $0x58] sm:$0xf] %vm543, %v2397
      %v2406 = vld [vmem:[#allocation2] sm:$0x8]
      %v2407 = vld [vmem:[#allocation2 + $0x4] sm:$0xf]
      %v2408 = vld [vmem:[#allocation2 + $0xc] sm:$0x8]
      %v2409 = vld [vmem:[#allocation2 + $0x10] sm:$0xf]
      %v2410 = vld [vmem:[#allocation2 + $0x18] sm:$0x8]
      %v2411 = vld [vmem:[#allocation2 + $0x1c] sm:$0xf]
      %v2412 = vld [vmem:[#allocation2 + $0x24] sm:$0x8]
      %v2413 = vld [vmem:[#allocation2 + $0x28] sm:$0xf]
      %v2414 = vld [vmem:[#allocation2 + $0x30] sm:$0x8]
      %v2415 = vld [vmem:[#allocation2 + $0x34] sm:$0xf]
      %v2416 = vld [vmem:[#allocation2 + $0x3c] sm:$0x8]
      %v2417 = vld [vmem:[#allocation2 + $0x40] sm:$0xf]
      %v2418 = vld [vmem:[#allocation2 + $0x48] sm:$0x8]
      %v2419 = vld [vmem:[#allocation2 + $0x4c] sm:$0xf]
      %v2420 = vld [vmem:[#allocation2 + $0x54] sm:$0x8]
      %v2421 = vld [vmem:[#allocation2 + $0x58] sm:$0xf]
      %v2423 = vshrl.u32 %v2406, 16
      %v2425 = vrot.slane %v2423, 7
      %v2426 = vrot.slane %v2425, 4
      %v2428 = vshrl.u32 %v2407, 16
      %v2430 = vrot.slane %v2428, 7
      %v2431 = vshll.u32 %v2407, 16
      %v2433 = vor.u32 %v2430, %v2431
      %v2434 = vsel %vm792, %v2426, %v2433
      %v2436 = vshrl.u32 %v2408, 16
      %v2438 = vrot.slane %v2436, 7
      %v2439 = vrot.slane %v2438, 4
      %v2441 = vshrl.u32 %v2409, 16
      %v2443 = vrot.slane %v2441, 7
      %v2444 = vshll.u32 %v2409, 16
      %v2446 = vor.u32 %v2443, %v2444
      %v2447 = vsel %vm792, %v2439, %v2446
      %v2449 = vshrl.u32 %v2410, 16
      %v2451 = vrot.slane %v2449, 7
      %v2452 = vrot.slane %v2451, 4
      %v2454 = vshrl.u32 %v2411, 16
      %v2456 = vrot.slane %v2454, 7
      %v2457 = vshll.u32 %v2411, 16
      %v2459 = vor.u32 %v2456, %v2457
      %v2460 = vsel %vm792, %v2452, %v2459
      %v2462 = vshrl.u32 %v2412, 16
      %v2464 = vrot.slane %v2462, 7
      %v2465 = vrot.slane %v2464, 4
      %v2467 = vshrl.u32 %v2413, 16
      %v2469 = vrot.slane %v2467, 7
      %v2470 = vshll.u32 %v2413, 16
      %v2472 = vor.u32 %v2469, %v2470
      %v2473 = vsel %vm792, %v2465, %v2472
      %v2475 = vshrl.u32 %v2414, 16
      %v2477 = vrot.slane %v2475, 7
      %v2478 = vrot.slane %v2477, 4
      %v2480 = vshrl.u32 %v2415, 16
      %v2482 = vrot.slane %v2480, 7
      %v2483 = vshll.u32 %v2415, 16
      %v2485 = vor.u32 %v2482, %v2483
      %v2486 = vsel %vm792, %v2478, %v2485
      %v2488 = vshrl.u32 %v2416, 16
      %v2490 = vrot.slane %v2488, 7
      %v2491 = vrot.slane %v2490, 4
      %v2493 = vshrl.u32 %v2417, 16
      %v2495 = vrot.slane %v2493, 7
      %v2496 = vshll.u32 %v2417, 16
      %v2498 = vor.u32 %v2495, %v2496
      %v2499 = vsel %vm792, %v2491, %v2498
      %v2501 = vshrl.u32 %v2418, 16
      %v2503 = vrot.slane %v2501, 7
      %v2504 = vrot.slane %v2503, 4
      %v2506 = vshrl.u32 %v2419, 16
      %v2508 = vrot.slane %v2506, 7
      %v2509 = vshll.u32 %v2419, 16
      %v2511 = vor.u32 %v2508, %v2509
      %v2512 = vsel %vm792, %v2504, %v2511
      %v2514 = vshrl.u32 %v2420, 16
      %v2516 = vrot.slane %v2514, 7
      %v2517 = vrot.slane %v2516, 4
      %v2519 = vshrl.u32 %v2421, 16
      %v2521 = vrot.slane %v2519, 7
      %v2522 = vshll.u32 %v2421, 16
      %v2524 = vor.u32 %v2521, %v2522
      %v2525 = vsel %vm792, %v2517, %v2524
      %2534 = vst.msk [vmem:[#allocation4] sm:$0xf] %vm543, %v2434
      %2535 = vst.msk [vmem:[#allocation4 + $0x4] sm:$0xf] %vm543, %v2447
      %2536 = vst.msk [vmem:[#allocation4 + $0x8] sm:$0xf] %vm543, %v2460
      %2537 = vst.msk [vmem:[#allocation4 + $0xc] sm:$0xf] %vm543, %v2473
      %2538 = vst.msk [vmem:[#allocation4 + $0x10] sm:$0xf] %vm543, %v2486
      %2539 = vst.msk [vmem:[#allocation4 + $0x14] sm:$0xf] %vm543, %v2499
      %2540 = vst.msk [vmem:[#allocation4 + $0x18] sm:$0xf] %vm543, %v2512
      %2541 = vst.msk [vmem:[#allocation4 + $0x1c] sm:$0xf] %vm543, %v2525
      %v2542 = vld [vmem:[#allocation2 + $0x4] sm:$0xf]
      %v2543 = vld [vmem:[#allocation2 + $0x10] sm:$0xf]
      %v2544 = vld [vmem:[#allocation2 + $0x1c] sm:$0xf]
      %v2545 = vld [vmem:[#allocation2 + $0x28] sm:$0xf]
      %v2546 = vld [vmem:[#allocation2 + $0x34] sm:$0xf]
      %v2547 = vld [vmem:[#allocation2 + $0x40] sm:$0xf]
      %v2548 = vld [vmem:[#allocation2 + $0x4c] sm:$0xf]
      %v2549 = vld [vmem:[#allocation2 + $0x58] sm:$0xf]
      %2558 = vrot.lane.b32.xlu0 %v2542, 4
      %v2559 = vpop.permute.xlu0 %2558
      %2560 = vrot.lane.b32.xlu0 %v2543, 4
      %v2561 = vpop.permute.xlu0 %2560
      %2562 = vrot.lane.b32.xlu0 %v2544, 4
      %v2563 = vpop.permute.xlu0 %2562
      %2564 = vrot.lane.b32.xlu0 %v2545, 4
      %v2565 = vpop.permute.xlu0 %2564
      %2566 = vrot.lane.b32.xlu0 %v2546, 4
      %v2567 = vpop.permute.xlu0 %2566
      %2568 = vrot.lane.b32.xlu0 %v2547, 4
      %v2569 = vpop.permute.xlu0 %2568
      %2570 = vrot.lane.b32.xlu0 %v2548, 4
      %v2571 = vpop.permute.xlu0 %2570
      %2572 = vrot.lane.b32.xlu0 %v2549, 4
      %v2573 = vpop.permute.xlu0 %2572
      %2582 = vst.msk [vmem:[#allocation4] sm:$0xf] %vm953, %v2559
      %2583 = vst.msk [vmem:[#allocation4 + $0x4] sm:$0xf] %vm953, %v2561
      %2584 = vst.msk [vmem:[#allocation4 + $0x8] sm:$0xf] %vm953, %v2563
      %2585 = vst.msk [vmem:[#allocation4 + $0xc] sm:$0xf] %vm953, %v2565
      %2586 = vst.msk [vmem:[#allocation4 + $0x10] sm:$0xf] %vm953, %v2567
      %2587 = vst.msk [vmem:[#allocation4 + $0x14] sm:$0xf] %vm953, %v2569
      %2588 = vst.msk [vmem:[#allocation4 + $0x18] sm:$0xf] %vm953, %v2571
      %2589 = vst.msk [vmem:[#allocation4 + $0x1c] sm:$0xf] %vm953, %v2573
      %v2590 = vld [vmem:[#allocation2 + $0x4] sm:$0xf]
      %v2591 = vld [vmem:[#allocation2 + $0x8] sm:$0x1]
      %v2592 = vld [vmem:[#allocation2 + $0x10] sm:$0xf]
      %v2593 = vld [vmem:[#allocation2 + $0x14] sm:$0x1]
      %v2594 = vld [vmem:[#allocation2 + $0x1c] sm:$0xf]
      %v2595 = vld [vmem:[#allocation2 + $0x20] sm:$0x1]
      %v2596 = vld [vmem:[#allocation2 + $0x28] sm:$0xf]
      %v2597 = vld [vmem:[#allocation2 + $0x2c] sm:$0x1]
      %v2598 = vld [vmem:[#allocation2 + $0x34] sm:$0xf]
      %v2599 = vld [vmem:[#allocation2 + $0x38] sm:$0x1]
      %v2600 = vld [vmem:[#allocation2 + $0x40] sm:$0xf]
      %v2601 = vld [vmem:[#allocation2 + $0x44] sm:$0x1]
      %v2602 = vld [vmem:[#allocation2 + $0x4c] sm:$0xf]
      %v2603 = vld [vmem:[#allocation2 + $0x50] sm:$0x1]
      %v2604 = vld [vmem:[#allocation2 + $0x58] sm:$0xf]
      %v2605 = vld [vmem:[#allocation2 + $0x5c] sm:$0x1]
      %v2607 = vshrl.u32 %v2590, 16
      %v2609 = vrot.slane %v2607, 4
      %v2610 = vshll.u32 %v2590, 16
      %v2612 = vrot.slane %v2610, 5
      %v2613 = vor.u32 %v2609, %v2612
      %v2614 = vrot.slane %v2613, 4
      %v2616 = vshll.u32 %v2591, 16
      %v2618 = vrot.slane %v2616, 5
      %v2619 = vsel %vm980, %v2614, %v2618
      %v2621 = vshrl.u32 %v2592, 16
      %v2623 = vrot.slane %v2621, 4
      %v2624 = vshll.u32 %v2592, 16
      %v2626 = vrot.slane %v2624, 5
      %v2627 = vor.u32 %v2623, %v2626
      %v2628 = vrot.slane %v2627, 4
      %v2630 = vshll.u32 %v2593, 16
      %v2632 = vrot.slane %v2630, 5
      %v2633 = vsel %vm980, %v2628, %v2632
      %v2635 = vshrl.u32 %v2594, 16
      %v2637 = vrot.slane %v2635, 4
      %v2638 = vshll.u32 %v2594, 16
      %v2640 = vrot.slane %v2638, 5
      %v2641 = vor.u32 %v2637, %v2640
      %v2642 = vrot.slane %v2641, 4
      %v2644 = vshll.u32 %v2595, 16
      %v2646 = vrot.slane %v2644, 5
      %v2647 = vsel %vm980, %v2642, %v2646
      %v2649 = vshrl.u32 %v2596, 16
      %v2651 = vrot.slane %v2649, 4
      %v2652 = vshll.u32 %v2596, 16
      %v2654 = vrot.slane %v2652, 5
      %v2655 = vor.u32 %v2651, %v2654
      %v2656 = vrot.slane %v2655, 4
      %v2658 = vshll.u32 %v2597, 16
      %v2660 = vrot.slane %v2658, 5
      %v2661 = vsel %vm980, %v2656, %v2660
      %v2663 = vshrl.u32 %v2598, 16
      %v2665 = vrot.slane %v2663, 4
      %v2666 = vshll.u32 %v2598, 16
      %v2668 = vrot.slane %v2666, 5
      %v2669 = vor.u32 %v2665, %v2668
      %v2670 = vrot.slane %v2669, 4
      %v2672 = vshll.u32 %v2599, 16
      %v2674 = vrot.slane %v2672, 5
      %v2675 = vsel %vm980, %v2670, %v2674
      %v2677 = vshrl.u32 %v2600, 16
      %v2679 = vrot.slane %v2677, 4
      %v2680 = vshll.u32 %v2600, 16
      %v2682 = vrot.slane %v2680, 5
      %v2683 = vor.u32 %v2679, %v2682
      %v2684 = vrot.slane %v2683, 4
      %v2686 = vshll.u32 %v2601, 16
      %v2688 = vrot.slane %v2686, 5
      %v2689 = vsel %vm980, %v2684, %v2688
      %v2691 = vshrl.u32 %v2602, 16
      %v2693 = vrot.slane %v2691, 4
      %v2694 = vshll.u32 %v2602, 16
      %v2696 = vrot.slane %v2694, 5
      %v2697 = vor.u32 %v2693, %v2696
      %v2698 = vrot.slane %v2697, 4
      %v2700 = vshll.u32 %v2603, 16
      %v2702 = vrot.slane %v2700, 5
      %v2703 = vsel %vm980, %v2698, %v2702
      %v2705 = vshrl.u32 %v2604, 16
      %v2707 = vrot.slane %v2705, 4
      %v2708 = vshll.u32 %v2604, 16
      %v2710 = vrot.slane %v2708, 5
      %v2711 = vor.u32 %v2707, %v2710
      %v2712 = vrot.slane %v2711, 4
      %v2714 = vshll.u32 %v2605, 16
      %v2716 = vrot.slane %v2714, 5
      %v2717 = vsel %vm980, %v2712, %v2716
      %2718 = vrot.lane.b32.xlu0 %v2619, 8
      %v2719 = vpop.permute.xlu0 %2718
      %2720 = vrot.lane.b32.xlu0 %v2633, 8
      %v2721 = vpop.permute.xlu0 %2720
      %2722 = vrot.lane.b32.xlu0 %v2647, 8
      %v2723 = vpop.permute.xlu0 %2722
      %2724 = vrot.lane.b32.xlu0 %v2661, 8
      %v2725 = vpop.permute.xlu0 %2724
      %2726 = vrot.lane.b32.xlu0 %v2675, 8
      %v2727 = vpop.permute.xlu0 %2726
      %2728 = vrot.lane.b32.xlu0 %v2689, 8
      %v2729 = vpop.permute.xlu0 %2728
      %2730 = vrot.lane.b32.xlu0 %v2703, 8
      %v2731 = vpop.permute.xlu0 %2730
      %2732 = vrot.lane.b32.xlu0 %v2717, 8
      %v2733 = vpop.permute.xlu0 %2732
      %2742 = vst.msk [vmem:[#allocation4] sm:$0xf] %vm1117, %v2719
      %2743 = vst.msk [vmem:[#allocation4 + $0x4] sm:$0xf] %vm1117, %v2721
      %2744 = vst.msk [vmem:[#allocation4 + $0x8] sm:$0xf] %vm1117, %v2723
      %2745 = vst.msk [vmem:[#allocation4 + $0xc] sm:$0xf] %vm1117, %v2725
      %2746 = vst.msk [vmem:[#allocation4 + $0x10] sm:$0xf] %vm1117, %v2727
      %2747 = vst.msk [vmem:[#allocation4 + $0x14] sm:$0xf] %vm1117, %v2729
      %2748 = vst.msk [vmem:[#allocation4 + $0x18] sm:$0xf] %vm1117, %v2731
      %2749 = vst.msk [vmem:[#allocation4 + $0x1c] sm:$0xf] %vm1117, %v2733
      %v2750 = vld [vmem:[%s766] sm:$0x8]
      %v2751 = vld [vmem:[%s766 + $0x4] sm:$0xf]
      %v2752 = vld [vmem:[%s766 + $0xc] sm:$0x8]
      %v2753 = vld [vmem:[%s766 + $0x10] sm:$0xf]
      %v2754 = vld [vmem:[%s766 + $0x18] sm:$0x8]
      %v2755 = vld [vmem:[%s766 + $0x1c] sm:$0xf]
      %v2756 = vld [vmem:[%s766 + $0x24] sm:$0x8]
      %v2757 = vld [vmem:[%s766 + $0x28] sm:$0xf]
      %v2758 = vld [vmem:[%s766 + $0x30] sm:$0x8]
      %v2759 = vld [vmem:[%s766 + $0x34] sm:$0xf]
      %v2760 = vld [vmem:[%s766 + $0x3c] sm:$0x8]
      %v2761 = vld [vmem:[%s766 + $0x40] sm:$0xf]
      %v2762 = vld [vmem:[%s766 + $0x48] sm:$0x8]
      %v2763 = vld [vmem:[%s766 + $0x4c] sm:$0xf]
      %v2764 = vld [vmem:[%s766 + $0x54] sm:$0x8]
      %v2765 = vld [vmem:[%s766 + $0x58] sm:$0xf]
      %v2767 = vshrl.u32 %v2750, 16
      %v2769 = vrot.slane %v2767, 7
      %v2770 = vrot.slane %v2769, 4
      %v2772 = vshrl.u32 %v2751, 16
      %v2774 = vrot.slane %v2772, 7
      %v2775 = vshll.u32 %v2751, 16
      %v2777 = vor.u32 %v2774, %v2775
      %v2778 = vsel %vm792, %v2770, %v2777
      %v2780 = vshrl.u32 %v2752, 16
      %v2782 = vrot.slane %v2780, 7
      %v2783 = vrot.slane %v2782, 4
      %v2785 = vshrl.u32 %v2753, 16
      %v2787 = vrot.slane %v2785, 7
      %v2788 = vshll.u32 %v2753, 16
      %v2790 = vor.u32 %v2787, %v2788
      %v2791 = vsel %vm792, %v2783, %v2790
      %v2793 = vshrl.u32 %v2754, 16
      %v2795 = vrot.slane %v2793, 7
      %v2796 = vrot.slane %v2795, 4
      %v2798 = vshrl.u32 %v2755, 16
      %v2800 = vrot.slane %v2798, 7
      %v2801 = vshll.u32 %v2755, 16
      %v2803 = vor.u32 %v2800, %v2801
      %v2804 = vsel %vm792, %v2796, %v2803
      %v2806 = vshrl.u32 %v2756, 16
      %v2808 = vrot.slane %v2806, 7
      %v2809 = vrot.slane %v2808, 4
      %v2811 = vshrl.u32 %v2757, 16
      %v2813 = vrot.slane %v2811, 7
      %v2814 = vshll.u32 %v2757, 16
      %v2816 = vor.u32 %v2813, %v2814
      %v2817 = vsel %vm792, %v2809, %v2816
      %v2819 = vshrl.u32 %v2758, 16
      %v2821 = vrot.slane %v2819, 7
      %v2822 = vrot.slane %v2821, 4
      %v2824 = vshrl.u32 %v2759, 16
      %v2826 = vrot.slane %v2824, 7
      %v2827 = vshll.u32 %v2759, 16
      %v2829 = vor.u32 %v2826, %v2827
      %v2830 = vsel %vm792, %v2822, %v2829
      %v2832 = vshrl.u32 %v2760, 16
      %v2834 = vrot.slane %v2832, 7
      %v2835 = vrot.slane %v2834, 4
      %v2837 = vshrl.u32 %v2761, 16
      %v2839 = vrot.slane %v2837, 7
      %v2840 = vshll.u32 %v2761, 16
      %v2842 = vor.u32 %v2839, %v2840
      %v2843 = vsel %vm792, %v2835, %v2842
      %v2845 = vshrl.u32 %v2762, 16
      %v2847 = vrot.slane %v2845, 7
      %v2848 = vrot.slane %v2847, 4
      %v2850 = vshrl.u32 %v2763, 16
      %v2852 = vrot.slane %v2850, 7
      %v2853 = vshll.u32 %v2763, 16
      %v2855 = vor.u32 %v2852, %v2853
      %v2856 = vsel %vm792, %v2848, %v2855
      %v2858 = vshrl.u32 %v2764, 16
      %v2860 = vrot.slane %v2858, 7
      %v2861 = vrot.slane %v2860, 4
      %v2863 = vshrl.u32 %v2765, 16
      %v2865 = vrot.slane %v2863, 7
      %v2866 = vshll.u32 %v2765, 16
      %v2868 = vor.u32 %v2865, %v2866
      %v2869 = vsel %vm792, %v2861, %v2868
      %2870 = vrot.lane.b32.xlu0 %v2778, 12
      %v2871 = vpop.permute.xlu0 %2870
      %2872 = vrot.lane.b32.xlu0 %v2791, 12
      %v2873 = vpop.permute.xlu0 %2872
      %2874 = vrot.lane.b32.xlu0 %v2804, 12
      %v2875 = vpop.permute.xlu0 %2874
      %2876 = vrot.lane.b32.xlu0 %v2817, 12
      %v2877 = vpop.permute.xlu0 %2876
      %2878 = vrot.lane.b32.xlu0 %v2830, 12
      %v2879 = vpop.permute.xlu0 %2878
      %2880 = vrot.lane.b32.xlu0 %v2843, 12
      %v2881 = vpop.permute.xlu0 %2880
      %2882 = vrot.lane.b32.xlu0 %v2856, 12
      %v2883 = vpop.permute.xlu0 %2882
      %2884 = vrot.lane.b32.xlu0 %v2869, 12
      %v2885 = vpop.permute.xlu0 %2884
      %2894 = vst.msk [vmem:[#allocation4] sm:$0xf] %vm1270, %v2871
      %2895 = vst.msk [vmem:[#allocation4 + $0x4] sm:$0xf] %vm1270, %v2873
      %2896 = vst.msk [vmem:[#allocation4 + $0x8] sm:$0xf] %vm1270, %v2875
      %2897 = vst.msk [vmem:[#allocation4 + $0xc] sm:$0xf] %vm1270, %v2877
      %2898 = vst.msk [vmem:[#allocation4 + $0x10] sm:$0xf] %vm1270, %v2879
      %2899 = vst.msk [vmem:[#allocation4 + $0x14] sm:$0xf] %vm1270, %v2881
      %2900 = vst.msk [vmem:[#allocation4 + $0x18] sm:$0xf] %vm1270, %v2883
      %2901 = vst.msk [vmem:[#allocation4 + $0x1c] sm:$0xf] %vm1270, %v2885
      %v2902 = vld [vmem:[%s766 + $0x4] sm:$0xf]
      %v2903 = vld [vmem:[%s766 + $0x10] sm:$0xf]
      %v2904 = vld [vmem:[%s766 + $0x1c] sm:$0xf]
      %v2905 = vld [vmem:[%s766 + $0x28] sm:$0xf]
      %v2906 = vld [vmem:[%s766 + $0x34] sm:$0xf]
      %v2907 = vld [vmem:[%s766 + $0x40] sm:$0xf]
      %v2908 = vld [vmem:[%s766 + $0x4c] sm:$0xf]
      %v2909 = vld [vmem:[%s766 + $0x58] sm:$0xf]
      %2918 = vrot.lane.b32.xlu0 %v2902, 16
      %v2919 = vpop.permute.xlu0 %2918
      %2920 = vrot.lane.b32.xlu0 %v2903, 16
      %v2921 = vpop.permute.xlu0 %2920
      %2922 = vrot.lane.b32.xlu0 %v2904, 16
      %v2923 = vpop.permute.xlu0 %2922
      %2924 = vrot.lane.b32.xlu0 %v2905, 16
      %v2925 = vpop.permute.xlu0 %2924
      %2926 = vrot.lane.b32.xlu0 %v2906, 16
      %v2927 = vpop.permute.xlu0 %2926
      %2928 = vrot.lane.b32.xlu0 %v2907, 16
      %v2929 = vpop.permute.xlu0 %2928
      %2930 = vrot.lane.b32.xlu0 %v2908, 16
      %v2931 = vpop.permute.xlu0 %2930
      %2932 = vrot.lane.b32.xlu0 %v2909, 16
      %v2933 = vpop.permute.xlu0 %2932
      %2942 = vst.msk [vmem:[#allocation4] sm:$0xf] %vm1319, %v2919
      %2943 = vst.msk [vmem:[#allocation4 + $0x4] sm:$0xf] %vm1319, %v2921
      %2944 = vst.msk [vmem:[#allocation4 + $0x8] sm:$0xf] %vm1319, %v2923
      %2945 = vst.msk [vmem:[#allocation4 + $0xc] sm:$0xf] %vm1319, %v2925
      %2946 = vst.msk [vmem:[#allocation4 + $0x10] sm:$0xf] %vm1319, %v2927
      %2947 = vst.msk [vmem:[#allocation4 + $0x14] sm:$0xf] %vm1319, %v2929
      %2948 = vst.msk [vmem:[#allocation4 + $0x18] sm:$0xf] %vm1319, %v2931
      %2949 = vst.msk [vmem:[#allocation4 + $0x1c] sm:$0xf] %vm1319, %v2933
      %v2950 = vld [vmem:[%s766 + $0x4] sm:$0xf]
      %v2951 = vld [vmem:[%s766 + $0x8] sm:$0x1]
      %v2952 = vld [vmem:[%s766 + $0x10] sm:$0xf]
      %v2953 = vld [vmem:[%s766 + $0x14] sm:$0x1]
      %v2954 = vld [vmem:[%s766 + $0x1c] sm:$0xf]
      %v2955 = vld [vmem:[%s766 + $0x20] sm:$0x1]
      %v2956 = vld [vmem:[%s766 + $0x28] sm:$0xf]
      %v2957 = vld [vmem:[%s766 + $0x2c] sm:$0x1]
      %v2958 = vld [vmem:[%s766 + $0x34] sm:$0xf]
      %v2959 = vld [vmem:[%s766 + $0x38] sm:$0x1]
      %v2960 = vld [vmem:[%s766 + $0x40] sm:$0xf]
      %v2961 = vld [vmem:[%s766 + $0x44] sm:$0x1]
      %v2962 = vld [vmem:[%s766 + $0x4c] sm:$0xf]
      %v2963 = vld [vmem:[%s766 + $0x50] sm:$0x1]
      %v2964 = vld [vmem:[%s766 + $0x58] sm:$0xf]
      %v2965 = vld [vmem:[%s766 + $0x5c] sm:$0x1]
      %v2967 = vshrl.u32 %v2950, 16
      %v2969 = vrot.slane %v2967, 4
      %v2970 = vshll.u32 %v2950, 16
      %v2972 = vrot.slane %v2970, 5
      %v2973 = vor.u32 %v2969, %v2972
      %v2974 = vrot.slane %v2973, 4
      %v2976 = vshll.u32 %v2951, 16
      %v2978 = vrot.slane %v2976, 5
      %v2979 = vsel %vm980, %v2974, %v2978
      %v2981 = vshrl.u32 %v2952, 16
      %v2983 = vrot.slane %v2981, 4
      %v2984 = vshll.u32 %v2952, 16
      %v2986 = vrot.slane %v2984, 5
      %v2987 = vor.u32 %v2983, %v2986
      %v2988 = vrot.slane %v2987, 4
      %v2990 = vshll.u32 %v2953, 16
      %v2992 = vrot.slane %v2990, 5
      %v2993 = vsel %vm980, %v2988, %v2992
      %v2995 = vshrl.u32 %v2954, 16
      %v2997 = vrot.slane %v2995, 4
      %v2998 = vshll.u32 %v2954, 16
      %v3000 = vrot.slane %v2998, 5
      %v3001 = vor.u32 %v2997, %v3000
      %v3002 = vrot.slane %v3001, 4
      %v3004 = vshll.u32 %v2955, 16
      %v3006 = vrot.slane %v3004, 5
      %v3007 = vsel %vm980, %v3002, %v3006
      %v3009 = vshrl.u32 %v2956, 16
      %v3011 = vrot.slane %v3009, 4
      %v3012 = vshll.u32 %v2956, 16
      %v3014 = vrot.slane %v3012, 5
      %v3015 = vor.u32 %v3011, %v3014
      %v3016 = vrot.slane %v3015, 4
      %v3018 = vshll.u32 %v2957, 16
      %v3020 = vrot.slane %v3018, 5
      %v3021 = vsel %vm980, %v3016, %v3020
      %v3023 = vshrl.u32 %v2958, 16
      %v3025 = vrot.slane %v3023, 4
      %v3026 = vshll.u32 %v2958, 16
      %v3028 = vrot.slane %v3026, 5
      %v3029 = vor.u32 %v3025, %v3028
      %v3030 = vrot.slane %v3029, 4
      %v3032 = vshll.u32 %v2959, 16
      %v3034 = vrot.slane %v3032, 5
      %v3035 = vsel %vm980, %v3030, %v3034
      %v3037 = vshrl.u32 %v2960, 16
      %v3039 = vrot.slane %v3037, 4
      %v3040 = vshll.u32 %v2960, 16
      %v3042 = vrot.slane %v3040, 5
      %v3043 = vor.u32 %v3039, %v3042
      %v3044 = vrot.slane %v3043, 4
      %v3046 = vshll.u32 %v2961, 16
      %v3048 = vrot.slane %v3046, 5
      %v3049 = vsel %vm980, %v3044, %v3048
      %v3051 = vshrl.u32 %v2962, 16
      %v3053 = vrot.slane %v3051, 4
      %v3054 = vshll.u32 %v2962, 16
      %v3056 = vrot.slane %v3054, 5
      %v3057 = vor.u32 %v3053, %v3056
      %v3058 = vrot.slane %v3057, 4
      %v3060 = vshll.u32 %v2963, 16
      %v3062 = vrot.slane %v3060, 5
      %v3063 = vsel %vm980, %v3058, %v3062
      %v3065 = vshrl.u32 %v2964, 16
      %v3067 = vrot.slane %v3065, 4
      %v3068 = vshll.u32 %v2964, 16
      %v3070 = vrot.slane %v3068, 5
      %v3071 = vor.u32 %v3067, %v3070
      %v3072 = vrot.slane %v3071, 4
      %v3074 = vshll.u32 %v2965, 16
      %v3076 = vrot.slane %v3074, 5
      %v3077 = vsel %vm980, %v3072, %v3076
      %3078 = vrot.lane.b32.xlu0 %v2979, 20
      %v3079 = vpop.permute.xlu0 %3078
      %3080 = vrot.lane.b32.xlu0 %v2993, 20
      %v3081 = vpop.permute.xlu0 %3080
      %3082 = vrot.lane.b32.xlu0 %v3007, 20
      %v3083 = vpop.permute.xlu0 %3082
      %3084 = vrot.lane.b32.xlu0 %v3021, 20
      %v3085 = vpop.permute.xlu0 %3084
      %3086 = vrot.lane.b32.xlu0 %v3035, 20
      %v3087 = vpop.permute.xlu0 %3086
      %3088 = vrot.lane.b32.xlu0 %v3049, 20
      %v3089 = vpop.permute.xlu0 %3088
      %3090 = vrot.lane.b32.xlu0 %v3063, 20
      %v3091 = vpop.permute.xlu0 %3090
      %3092 = vrot.lane.b32.xlu0 %v3077, 20
      %v3093 = vpop.permute.xlu0 %3092
      %3102 = vst.msk [vmem:[#allocation4] sm:$0xf] %vm1480, %v3079
      %3103 = vst.msk [vmem:[#allocation4 + $0x4] sm:$0xf] %vm1480, %v3081
      %3104 = vst.msk [vmem:[#allocation4 + $0x8] sm:$0xf] %vm1480, %v3083
      %3105 = vst.msk [vmem:[#allocation4 + $0xc] sm:$0xf] %vm1480, %v3085
      %3106 = vst.msk [vmem:[#allocation4 + $0x10] sm:$0xf] %vm1480, %v3087
      %3107 = vst.msk [vmem:[#allocation4 + $0x14] sm:$0xf] %vm1480, %v3089
      %3108 = vst.msk [vmem:[#allocation4 + $0x18] sm:$0xf] %vm1480, %v3091
      %3109 = vst.msk [vmem:[#allocation4 + $0x1c] sm:$0xf] %vm1480, %v3093
      %v3110 = vld [vmem:[%s1489] sm:$0x8]
      %v3111 = vld [vmem:[%s1489 + $0x4] sm:$0xf]
      %v3112 = vld [vmem:[%s1489 + $0xc] sm:$0x8]
      %v3113 = vld [vmem:[%s1489 + $0x10] sm:$0xf]
      %v3114 = vld [vmem:[%s1489 + $0x18] sm:$0x8]
      %v3115 = vld [vmem:[%s1489 + $0x1c] sm:$0xf]
      %v3116 = vld [vmem:[%s1489 + $0x24] sm:$0x8]
      %v3117 = vld [vmem:[%s1489 + $0x28] sm:$0xf]
      %v3118 = vld [vmem:[%s1489 + $0x30] sm:$0x8]
      %v3119 = vld [vmem:[%s1489 + $0x34] sm:$0xf]
      %v3120 = vld [vmem:[%s1489 + $0x3c] sm:$0x8]
      %v3121 = vld [vmem:[%s1489 + $0x40] sm:$0xf]
      %v3122 = vld [vmem:[%s1489 + $0x48] sm:$0x8]
      %v3123 = vld [vmem:[%s1489 + $0x4c] sm:$0xf]
      %v3124 = vld [vmem:[%s1489 + $0x54] sm:$0x8]
      %v3125 = vld [vmem:[%s1489 + $0x58] sm:$0xf]
      %v3127 = vshrl.u32 %v3110, 16
      %v3129 = vrot.slane %v3127, 7
      %v3130 = vrot.slane %v3129, 4
      %v3132 = vshrl.u32 %v3111, 16
      %v3134 = vrot.slane %v3132, 7
      %v3135 = vshll.u32 %v3111, 16
      %v3137 = vor.u32 %v3134, %v3135
      %v3138 = vsel %vm792, %v3130, %v3137
      %v3140 = vshrl.u32 %v3112, 16
      %v3142 = vrot.slane %v3140, 7
      %v3143 = vrot.slane %v3142, 4
      %v3145 = vshrl.u32 %v3113, 16
      %v3147 = vrot.slane %v3145, 7
      %v3148 = vshll.u32 %v3113, 16
      %v3150 = vor.u32 %v3147, %v3148
      %v3151 = vsel %vm792, %v3143, %v3150
      %v3153 = vshrl.u32 %v3114, 16
      %v3155 = vrot.slane %v3153, 7
      %v3156 = vrot.slane %v3155, 4
      %v3158 = vshrl.u32 %v3115, 16
      %v3160 = vrot.slane %v3158, 7
      %v3161 = vshll.u32 %v3115, 16
      %v3163 = vor.u32 %v3160, %v3161
      %v3164 = vsel %vm792, %v3156, %v3163
      %v3166 = vshrl.u32 %v3116, 16
      %v3168 = vrot.slane %v3166, 7
      %v3169 = vrot.slane %v3168, 4
      %v3171 = vshrl.u32 %v3117, 16
      %v3173 = vrot.slane %v3171, 7
      %v3174 = vshll.u32 %v3117, 16
      %v3176 = vor.u32 %v3173, %v3174
      %v3177 = vsel %vm792, %v3169, %v3176
      %v3179 = vshrl.u32 %v3118, 16
      %v3181 = vrot.slane %v3179, 7
      %v3182 = vrot.slane %v3181, 4
      %v3184 = vshrl.u32 %v3119, 16
      %v3186 = vrot.slane %v3184, 7
      %v3187 = vshll.u32 %v3119, 16
      %v3189 = vor.u32 %v3186, %v3187
      %v3190 = vsel %vm792, %v3182, %v3189
      %v3192 = vshrl.u32 %v3120, 16
      %v3194 = vrot.slane %v3192, 7
      %v3195 = vrot.slane %v3194, 4
      %v3197 = vshrl.u32 %v3121, 16
      %v3199 = vrot.slane %v3197, 7
      %v3200 = vshll.u32 %v3121, 16
      %v3202 = vor.u32 %v3199, %v3200
      %v3203 = vsel %vm792, %v3195, %v3202
      %v3205 = vshrl.u32 %v3122, 16
      %v3207 = vrot.slane %v3205, 7
      %v3208 = vrot.slane %v3207, 4
      %v3210 = vshrl.u32 %v3123, 16
      %v3212 = vrot.slane %v3210, 7
      %v3213 = vshll.u32 %v3123, 16
      %v3215 = vor.u32 %v3212, %v3213
      %v3216 = vsel %vm792, %v3208, %v3215
      %v3218 = vshrl.u32 %v3124, 16
      %v3220 = vrot.slane %v3218, 7
      %v3221 = vrot.slane %v3220, 4
      %v3223 = vshrl.u32 %v3125, 16
      %v3225 = vrot.slane %v3223, 7
      %v3226 = vshll.u32 %v3125, 16
      %v3228 = vor.u32 %v3225, %v3226
      %v3229 = vsel %vm792, %v3221, %v3228
      %3230 = vrot.lane.b32.xlu0 %v3138, 24
      %v3231 = vpop.permute.xlu0 %3230
      %3232 = vrot.lane.b32.xlu0 %v3151, 24
      %v3233 = vpop.permute.xlu0 %3232
      %3234 = vrot.lane.b32.xlu0 %v3164, 24
      %v3235 = vpop.permute.xlu0 %3234
      %3236 = vrot.lane.b32.xlu0 %v3177, 24
      %v3237 = vpop.permute.xlu0 %3236
      %3238 = vrot.lane.b32.xlu0 %v3190, 24
      %v3239 = vpop.permute.xlu0 %3238
      %3240 = vrot.lane.b32.xlu0 %v3203, 24
      %v3241 = vpop.permute.xlu0 %3240
      %3242 = vrot.lane.b32.xlu0 %v3216, 24
      %v3243 = vpop.permute.xlu0 %3242
      %3244 = vrot.lane.b32.xlu0 %v3229, 24
      %v3245 = vpop.permute.xlu0 %3244
      %3254 = vst.msk [vmem:[#allocation4] sm:$0xf] %vm1634, %v3231
      %3255 = vst.msk [vmem:[#allocation4 + $0x4] sm:$0xf] %vm1634, %v3233
      %3256 = vst.msk [vmem:[#allocation4 + $0x8] sm:$0xf] %vm1634, %v3235
      %3257 = vst.msk [vmem:[#allocation4 + $0xc] sm:$0xf] %vm1634, %v3237
      %3258 = vst.msk [vmem:[#allocation4 + $0x10] sm:$0xf] %vm1634, %v3239
      %3259 = vst.msk [vmem:[#allocation4 + $0x14] sm:$0xf] %vm1634, %v3241
      %3260 = vst.msk [vmem:[#allocation4 + $0x18] sm:$0xf] %vm1634, %v3243
      %3261 = vst.msk [vmem:[#allocation4 + $0x1c] sm:$0xf] %vm1634, %v3245
      %v3262 = vld [vmem:[%s1489 + $0x4] sm:$0xf]
      %v3263 = vld [vmem:[%s1489 + $0x10] sm:$0xf]
      %v3264 = vld [vmem:[%s1489 + $0x1c] sm:$0xf]
      %v3265 = vld [vmem:[%s1489 + $0x28] sm:$0xf]
      %v3266 = vld [vmem:[%s1489 + $0x34] sm:$0xf]
      %v3267 = vld [vmem:[%s1489 + $0x40] sm:$0xf]
      %v3268 = vld [vmem:[%s1489 + $0x4c] sm:$0xf]
      %v3269 = vld [vmem:[%s1489 + $0x58] sm:$0xf]
      %3278 = vrot.lane.b32.xlu0 %v3262, 28
      %v3279 = vpop.permute.xlu0 %3278
      %3280 = vrot.lane.b32.xlu0 %v3263, 28
      %v3281 = vpop.permute.xlu0 %3280
      %3282 = vrot.lane.b32.xlu0 %v3264, 28
      %v3283 = vpop.permute.xlu0 %3282
      %3284 = vrot.lane.b32.xlu0 %v3265, 28
      %v3285 = vpop.permute.xlu0 %3284
      %3286 = vrot.lane.b32.xlu0 %v3266, 28
      %v3287 = vpop.permute.xlu0 %3286
      %3288 = vrot.lane.b32.xlu0 %v3267, 28
      %v3289 = vpop.permute.xlu0 %3288
      %3290 = vrot.lane.b32.xlu0 %v3268, 28
      %v3291 = vpop.permute.xlu0 %3290
      %3292 = vrot.lane.b32.xlu0 %v3269, 28
      %v3293 = vpop.permute.xlu0 %3292
      %3302 = vst.msk [vmem:[#allocation4] sm:$0xf] %vm1683, %v3279
      %3303 = vst.msk [vmem:[#allocation4 + $0x4] sm:$0xf] %vm1683, %v3281
      %3304 = vst.msk [vmem:[#allocation4 + $0x8] sm:$0xf] %vm1683, %v3283
      %3305 = vst.msk [vmem:[#allocation4 + $0xc] sm:$0xf] %vm1683, %v3285
      %3306 = vst.msk [vmem:[#allocation4 + $0x10] sm:$0xf] %vm1683, %v3287
      %3307 = vst.msk [vmem:[#allocation4 + $0x14] sm:$0xf] %vm1683, %v3289
      %3308 = vst.msk [vmem:[#allocation4 + $0x18] sm:$0xf] %vm1683, %v3291
      %3309 = vst.msk [vmem:[#allocation4 + $0x1c] sm:$0xf] %vm1683, %v3293
      %v3310 = vld [vmem:[%s1489 + $0x4] sm:$0xf]
      %v3311 = vld [vmem:[%s1489 + $0x8] sm:$0x1]
      %v3312 = vld [vmem:[%s1489 + $0x10] sm:$0xf]
      %v3313 = vld [vmem:[%s1489 + $0x14] sm:$0x1]
      %v3314 = vld [vmem:[%s1489 + $0x1c] sm:$0xf]
      %v3315 = vld [vmem:[%s1489 + $0x20] sm:$0x1]
      %v3316 = vld [vmem:[%s1489 + $0x28] sm:$0xf]
      %v3317 = vld [vmem:[%s1489 + $0x2c] sm:$0x1]
      %v3318 = vld [vmem:[%s1489 + $0x34] sm:$0xf]
      %v3319 = vld [vmem:[%s1489 + $0x38] sm:$0x1]
      %v3320 = vld [vmem:[%s1489 + $0x40] sm:$0xf]
      %v3321 = vld [vmem:[%s1489 + $0x44] sm:$0x1]
      %v3322 = vld [vmem:[%s1489 + $0x4c] sm:$0xf]
      %v3323 = vld [vmem:[%s1489 + $0x50] sm:$0x1]
      %v3324 = vld [vmem:[%s1489 + $0x58] sm:$0xf]
      %v3325 = vld [vmem:[%s1489 + $0x5c] sm:$0x1]
      %v3327 = vshrl.u32 %v3310, 16
      %v3329 = vrot.slane %v3327, 4
      %v3330 = vshll.u32 %v3310, 16
      %v3332 = vrot.slane %v3330, 5
      %v3333 = vor.u32 %v3329, %v3332
      %v3334 = vrot.slane %v3333, 4
      %v3336 = vshll.u32 %v3311, 16
      %v3338 = vrot.slane %v3336, 5
      %v3339 = vsel %vm980, %v3334, %v3338
      %v3341 = vshrl.u32 %v3312, 16
      %v3343 = vrot.slane %v3341, 4
      %v3344 = vshll.u32 %v3312, 16
      %v3346 = vrot.slane %v3344, 5
      %v3347 = vor.u32 %v3343, %v3346
      %v3348 = vrot.slane %v3347, 4
      %v3350 = vshll.u32 %v3313, 16
      %v3352 = vrot.slane %v3350, 5
      %v3353 = vsel %vm980, %v3348, %v3352
      %v3355 = vshrl.u32 %v3314, 16
      %v3357 = vrot.slane %v3355, 4
      %v3358 = vshll.u32 %v3314, 16
      %v3360 = vrot.slane %v3358, 5
      %v3361 = vor.u32 %v3357, %v3360
      %v3362 = vrot.slane %v3361, 4
      %v3364 = vshll.u32 %v3315, 16
      %v3366 = vrot.slane %v3364, 5
      %v3367 = vsel %vm980, %v3362, %v3366
      %v3369 = vshrl.u32 %v3316, 16
      %v3371 = vrot.slane %v3369, 4
      %v3372 = vshll.u32 %v3316, 16
      %v3374 = vrot.slane %v3372, 5
      %v3375 = vor.u32 %v3371, %v3374
      %v3376 = vrot.slane %v3375, 4
      %v3378 = vshll.u32 %v3317, 16
      %v3380 = vrot.slane %v3378, 5
      %v3381 = vsel %vm980, %v3376, %v3380
      %v3383 = vshrl.u32 %v3318, 16
      %v3385 = vrot.slane %v3383, 4
      %v3386 = vshll.u32 %v3318, 16
      %v3388 = vrot.slane %v3386, 5
      %v3389 = vor.u32 %v3385, %v3388
      %v3390 = vrot.slane %v3389, 4
      %v3392 = vshll.u32 %v3319, 16
      %v3394 = vrot.slane %v3392, 5
      %v3395 = vsel %vm980, %v3390, %v3394
      %v3397 = vshrl.u32 %v3320, 16
      %v3399 = vrot.slane %v3397, 4
      %v3400 = vshll.u32 %v3320, 16
      %v3402 = vrot.slane %v3400, 5
      %v3403 = vor.u32 %v3399, %v3402
      %v3404 = vrot.slane %v3403, 4
      %v3406 = vshll.u32 %v3321, 16
      %v3408 = vrot.slane %v3406, 5
      %v3409 = vsel %vm980, %v3404, %v3408
      %v3411 = vshrl.u32 %v3322, 16
      %v3413 = vrot.slane %v3411, 4
      %v3414 = vshll.u32 %v3322, 16
      %v3416 = vrot.slane %v3414, 5
      %v3417 = vor.u32 %v3413, %v3416
      %v3418 = vrot.slane %v3417, 4
      %v3420 = vshll.u32 %v3323, 16
      %v3422 = vrot.slane %v3420, 5
      %v3423 = vsel %vm980, %v3418, %v3422
      %v3425 = vshrl.u32 %v3324, 16
      %v3427 = vrot.slane %v3425, 4
      %v3428 = vshll.u32 %v3324, 16
      %v3430 = vrot.slane %v3428, 5
      %v3431 = vor.u32 %v3427, %v3430
      %v3432 = vrot.slane %v3431, 4
      %v3434 = vshll.u32 %v3325, 16
      %v3436 = vrot.slane %v3434, 5
      %v3437 = vsel %vm980, %v3432, %v3436
      %3438 = vrot.lane.b32.xlu0 %v3339, 32
      %v3439 = vpop.permute.xlu0 %3438
      %3440 = vrot.lane.b32.xlu0 %v3353, 32
      %v3441 = vpop.permute.xlu0 %3440
      %3442 = vrot.lane.b32.xlu0 %v3367, 32
      %v3443 = vpop.permute.xlu0 %3442
      %3444 = vrot.lane.b32.xlu0 %v3381, 32
      %v3445 = vpop.permute.xlu0 %3444
      %3446 = vrot.lane.b32.xlu0 %v3395, 32
      %v3447 = vpop.permute.xlu0 %3446
      %3448 = vrot.lane.b32.xlu0 %v3409, 32
      %v3449 = vpop.permute.xlu0 %3448
      %3450 = vrot.lane.b32.xlu0 %v3423, 32
      %v3451 = vpop.permute.xlu0 %3450
      %3452 = vrot.lane.b32.xlu0 %v3437, 32
      %v3453 = vpop.permute.xlu0 %3452
      %3462 = vst.msk [vmem:[#allocation4] sm:$0xf] %vm1844, %v3439
      %3463 = vst.msk [vmem:[#allocation4 + $0x4] sm:$0xf] %vm1844, %v3441
      %3464 = vst.msk [vmem:[#allocation4 + $0x8] sm:$0xf] %vm1844, %v3443
      %3465 = vst.msk [vmem:[#allocation4 + $0xc] sm:$0xf] %vm1844, %v3445
      %3466 = vst.msk [vmem:[#allocation4 + $0x10] sm:$0xf] %vm1844, %v3447
      %3467 = vst.msk [vmem:[#allocation4 + $0x14] sm:$0xf] %vm1844, %v3449
      %3468 = vst.msk [vmem:[#allocation4 + $0x18] sm:$0xf] %vm1844, %v3451
      %3469 = vst.msk [vmem:[#allocation4 + $0x1c] sm:$0xf] %vm1844, %v3453
      %v3470 = vld [vmem:[#allocation4] sm:$0xf]
      %v3471 = vld [vmem:[#allocation4 + $0x4] sm:$0xf]
      %v3472 = vld [vmem:[#allocation4 + $0x8] sm:$0xf]
      %v3473 = vld [vmem:[#allocation4 + $0xc] sm:$0xf]
      %v3474 = vld [vmem:[#allocation4 + $0x10] sm:$0xf]
      %v3475 = vld [vmem:[#allocation4 + $0x14] sm:$0xf]
      %v3476 = vld [vmem:[#allocation4 + $0x18] sm:$0xf]
      %v3477 = vld [vmem:[#allocation4 + $0x1c] sm:$0xf]
      %v3478 = vld [vmem:[%s4] sm:$0xf]
      %v3479 = vld [vmem:[%s4 + $0x4] sm:$0xf]
      %v3480 = vld [vmem:[%s4 + $0x8] sm:$0xf]
      %v3481 = vld [vmem:[%s4 + $0xc] sm:$0xf]
      %v3482 = vld [vmem:[%s4 + $0x10] sm:$0x3]
      %v3491 = vunpack.c.l.b16 %v3470
      %v3492 = vunpack.c.l.b16 %v3471
      %v3493 = vunpack.c.l.b16 %v3472
      %v3494 = vunpack.c.l.b16 %v3473
      %v3495 = vunpack.c.l.b16 %v3474
      %v3496 = vunpack.c.l.b16 %v3475
      %v3497 = vunpack.c.l.b16 %v3476
      %v3498 = vunpack.c.l.b16 %v3477
      %v3499 = vpack.c.b16 %v3492, %v3491
      %v3500 = vpack.c.b16 %v3494, %v3493
      %v3501 = vpack.c.b16 %v3496, %v3495
      %v3502 = vpack.c.b16 %v3498, %v3497
      %v3508 = vunpack.c.l.b16 %v3478
      %v3509 = vunpack.c.l.b16 %v3479
      %v3510 = vunpack.c.l.b16 %v3480
      %v3511 = vunpack.c.l.b16 %v3481
      %v3512 = vunpack.c.l.b16 %v3482
      %v3513 = vpack.c.b16 %v3509, %v3508
      %v3514 = vpack.c.b16 %v3511, %v3510
      %v3515 = vpack.c.b16 %v3512, %v3512
      %v3519 = vsel %vm1901, %v3499, 0
      %v3522 = vsel %vm1901, %v3500, 0
      %v3525 = vsel %vm1901, %v3501, 0
      %v3528 = vsel %vm1901, %v3502, 0
      %v3531 = vsel %vm1914, %v3515, 0
      %3533 = vmatpush.bf16.msra.mxu0 0
      %3534 = vmatpush.bf16.msra.mxu0 0
      %3535 = vmatpush.bf16.msra.mxu0 0
      %3536 = vmatpush.bf16.msra.mxu0 0
      %3537 = vmatpush.bf16.msra.mxu0 0
      %3538 = vmatpush.bf16.msra.mxu0 %v3531
      %3539 = vmatpush.bf16.msra.mxu0 %v3514
      %3540 = vmatpush.bf16.msra.mxu0 %v3513
      %3541 = vmatmul.bf16.gmra.mxu0 %v3519
      %v3542 = vpop.f32.mrf.mxu0
      %v3543 = vadd.f32 0.0, %v3542
      %v3544 = vpop.f32.mrf.mxu0
      %v3545 = vadd.f32 0.0, %v3544
      %3546 = vmatmul.bf16.gmra.mxu0 %v3522
      %v3547 = vpop.f32.mrf.mxu0
      %v3548 = vadd.f32 0.0, %v3547
      %v3549 = vpop.f32.mrf.mxu0
      %v3550 = vadd.f32 0.0, %v3549
      %3551 = vmatmul.bf16.gmra.mxu0 %v3525
      %v3552 = vpop.f32.mrf.mxu0
      %v3553 = vadd.f32 0.0, %v3552
      %v3554 = vpop.f32.mrf.mxu0
      %v3555 = vadd.f32 0.0, %v3554
      %3556 = vmatmul.bf16.gmra.mxu0 %v3528
      %v3557 = vpop.f32.mrf.mxu0
      %v3558 = vadd.f32 0.0, %v3557
      %v3559 = vpop.f32.mrf.mxu0
      %v3560 = vadd.f32 0.0, %v3559
      %3561 = vdwg.mxu0
      %v3562 = vsel %vm1947, %v3543, 0.0
      %v3563 = vsel %vm1947, %v3545, 0.0
      %v3564 = vadd.f32 %v3562, %v3563
      %v3565 = vsel %vm1947, %v3548, 0.0
      %v3566 = vadd.f32 %v3564, %v3565
      %v3567 = vsel %vm1947, %v3550, 0.0
      %v3568 = vadd.f32 %v3566, %v3567
      %v3569 = vsel %vm1947, %v3553, 0.0
      %v3570 = vadd.f32 %v3568, %v3569
      %v3571 = vsel %vm1947, %v3555, 0.0
      %v3572 = vadd.f32 %v3570, %v3571
      %v3573 = vsel %vm1947, %v3558, 0.0
      %v3574 = vadd.f32 %v3572, %v3573
      %v3575 = vsel %vm1947, %v3560, 0.0
      %v3576 = vadd.f32 %v3574, %v3575
      %3577 = vadd.xlane.f32.xlu0 %v3576
      %v3578 = vpop.xlane.xlu0 %3577
      %v3579 = vrot.slane %v3578, 4
      %v3580 = vadd.f32 %v3578, %v3579
      %v3581 = vrot.slane %v3580, 2
      %v3582 = vadd.f32 %v3580, %v3581
      %v3583 = vrot.slane %v3582, 1
      %v3584 = vadd.f32 %v3582, %v3583
      %v3585 = vmul.f32 %v3584, %v1977
      %v3586 = vsub.f32 %v3543, %v3585
      %v3587 = vsub.f32 %v3545, %v3585
      %v3588 = vsub.f32 %v3548, %v3585
      %v3589 = vsub.f32 %v3550, %v3585
      %v3590 = vsub.f32 %v3553, %v3585
      %v3591 = vsub.f32 %v3555, %v3585
      %v3592 = vsub.f32 %v3558, %v3585
      %v3593 = vsub.f32 %v3560, %v3585
      %v3594 = vmul.f32 %v3586, %v3586
      %v3595 = vmul.f32 %v3587, %v3587
      %v3596 = vmul.f32 %v3588, %v3588
      %v3597 = vmul.f32 %v3589, %v3589
      %v3598 = vmul.f32 %v3590, %v3590
      %v3599 = vmul.f32 %v3591, %v3591
      %v3600 = vmul.f32 %v3592, %v3592
      %v3601 = vmul.f32 %v3593, %v3593
      %v3602 = vsel %vm1947, %v3594, 0.0
      %v3603 = vsel %vm1947, %v3595, 0.0
      %v3604 = vadd.f32 %v3602, %v3603
      %v3605 = vsel %vm1947, %v3596, 0.0
      %v3606 = vadd.f32 %v3604, %v3605
      %v3607 = vsel %vm1947, %v3597, 0.0
      %v3608 = vadd.f32 %v3606, %v3607
      %v3609 = vsel %vm1947, %v3598, 0.0
      %v3610 = vadd.f32 %v3608, %v3609
      %v3611 = vsel %vm1947, %v3599, 0.0
      %v3612 = vadd.f32 %v3610, %v3611
      %v3613 = vsel %vm1947, %v3600, 0.0
      %v3614 = vadd.f32 %v3612, %v3613
      %v3615 = vsel %vm1947, %v3601, 0.0
      %v3616 = vadd.f32 %v3614, %v3615
      %3617 = vadd.xlane.f32.xlu0 %v3616
      %v3618 = vpop.xlane.xlu0 %3617
      %v3619 = vrot.slane %v3618, 4
      %v3620 = vadd.f32 %v3618, %v3619
      %v3621 = vrot.slane %v3620, 2
      %v3622 = vadd.f32 %v3620, %v3621
      %v3623 = vrot.slane %v3622, 1
      %v3624 = vadd.f32 %v3622, %v3623
      %v3625 = vmul.f32 %v3624, %v1977
      %v3626 = vadd.f32 %v3625, 1e-05
      %v3627 = vrsqrt.pop %v3626
      %v3628 = vmul.f32 %v3627, %v3626
      %v3629 = vmul.f32 %v3628, %v3627
      %v3630 = vmul.f32 0.5, %v3629
      %v3631 = vsub.f32 1.5, %v3630
      %v3632 = vmul.f32 %v3627, %v3631
      %vm3633 = vweird.f32 %v3626
      %vm3634 = vweird.f32 %v3627
      %vm3635 = vmor %vm3633, %vm3634
      %v3636 = vsel %vm3635, %v3627, %v3632
      %v3637 = vmul.f32 %v3586, %v3636
      %v3638 = vmul.f32 %v3587, %v3636
      %v3639 = vmul.f32 %v3588, %v3636
      %v3640 = vmul.f32 %v3589, %v3636
      %v3641 = vmul.f32 %v3590, %v3636
      %v3642 = vmul.f32 %v3591, %v3636
      %v3643 = vmul.f32 %v3592, %v3636
      %v3644 = vmul.f32 %v3593, %v3636
      %v3645 = vld [vmem:[%s5] sm:$0x1]
      %v3647 = vperm.slane %v3645, 0
      %v3649 = vmul.f32 %v3637, %v3647
      %v3650 = vmul.f32 %v3638, %v3647
      %v3651 = vmul.f32 %v3639, %v3647
      %v3652 = vmul.f32 %v3640, %v3647
      %v3653 = vmul.f32 %v3641, %v3647
      %v3654 = vmul.f32 %v3642, %v3647
      %v3655 = vmul.f32 %v3643, %v3647
      %v3656 = vmul.f32 %v3644, %v3647
      %v3657 = vld [vmem:[%s6] sm:$0x1]
      %v3659 = vperm.slane %v3657, 0
      %v3661 = vadd.f32 %v3649, %v3659
      %v3662 = vadd.f32 %v3650, %v3659
      %v3663 = vadd.f32 %v3651, %v3659
      %v3664 = vadd.f32 %v3652, %v3659
      %v3665 = vadd.f32 %v3653, %v3659
      %v3666 = vadd.f32 %v3654, %v3659
      %v3667 = vadd.f32 %v3655, %v3659
      %v3668 = vadd.f32 %v3656, %v3659
      %v3669 = vadd.f32 %v750, %v3661
      %v3670 = vadd.f32 %v751, %v3662
      %v3671 = vadd.f32 %v752, %v3663
      %v3672 = vadd.f32 %v753, %v3664
      %v3673 = vadd.f32 %v754, %v3665
      %v3674 = vadd.f32 %v755, %v3666
      %v3675 = vadd.f32 %v756, %v3667
      %v3676 = vadd.f32 %v757, %v3668
      %v3677 = vmul.f32 %v3669, 0.5
      %v3678 = vmul.f32 %v3670, 0.5
      %v3679 = vmul.f32 %v3671, 0.5
      %v3680 = vmul.f32 %v3672, 0.5
      %v3681 = vmul.f32 %v3673, 0.5
      %v3682 = vmul.f32 %v3674, 0.5
      %v3683 = vmul.f32 %v3675, 0.5
      %v3684 = vmul.f32 %v3676, 0.5
      %v3685 = vmul.f32 %v3669, 0.70710677
      %v3686 = vmul.f32 %v3670, 0.70710677
      %v3687 = vmul.f32 %v3671, 0.70710677
      %v3688 = vmul.f32 %v3672, 0.70710677
      %v3689 = vmul.f32 %v3673, 0.70710677
      %v3690 = vmul.f32 %v3674, 0.70710677
      %v3691 = vmul.f32 %v3675, 0.70710677
      %v3692 = vmul.f32 %v3676, 0.70710677
      %vm3693 = vcmp.ge.f32.partialorder %v3685, 0.0
      %vm3694 = vcmp.ge.f32.partialorder %v3686, 0.0
      %vm3695 = vcmp.ge.f32.partialorder %v3687, 0.0
      %vm3696 = vcmp.ge.f32.partialorder %v3688, 0.0
      %vm3697 = vcmp.ge.f32.partialorder %v3689, 0.0
      %vm3698 = vcmp.ge.f32.partialorder %v3690, 0.0
      %vm3699 = vcmp.ge.f32.partialorder %v3691, 0.0
      %vm3700 = vcmp.ge.f32.partialorder %v3692, 0.0
      %v3701 = vsub.f32 0.0, %v3685
      %v3702 = vsub.f32 0.0, %v3686
      %v3703 = vsub.f32 0.0, %v3687
      %v3704 = vsub.f32 0.0, %v3688
      %v3705 = vsub.f32 0.0, %v3689
      %v3706 = vsub.f32 0.0, %v3690
      %v3707 = vsub.f32 0.0, %v3691
      %v3708 = vsub.f32 0.0, %v3692
      %v3709 = vsel %vm3693, %v3685, %v3701
      %v3710 = vsel %vm3694, %v3686, %v3702
      %v3711 = vsel %vm3695, %v3687, %v3703
      %v3712 = vsel %vm3696, %v3688, %v3704
      %v3713 = vsel %vm3697, %v3689, %v3705
      %v3714 = vsel %vm3698, %v3690, %v3706
      %v3715 = vsel %vm3699, %v3691, %v3707
      %v3716 = vsel %vm3700, %v3692, %v3708
      %v3717 = vmul.f32 %v3709, 0.3275911
      %v3718 = vmul.f32 %v3710, 0.3275911
      %v3719 = vmul.f32 %v3711, 0.3275911
      %v3720 = vmul.f32 %v3712, 0.3275911
      %v3721 = vmul.f32 %v3713, 0.3275911
      %v3722 = vmul.f32 %v3714, 0.3275911
      %v3723 = vmul.f32 %v3715, 0.3275911
      %v3724 = vmul.f32 %v3716, 0.3275911
      %v3725 = vadd.f32 %v3717, 1.0
      %v3726 = vadd.f32 %v3718, 1.0
      %v3727 = vadd.f32 %v3719, 1.0
      %v3728 = vadd.f32 %v3720, 1.0
      %v3729 = vadd.f32 %v3721, 1.0
      %v3730 = vadd.f32 %v3722, 1.0
      %v3731 = vadd.f32 %v3723, 1.0
      %v3732 = vadd.f32 %v3724, 1.0
      %v3733 = vrcp.pop %v3725
      %v3734 = vmul.f32 %v3725, %v3733
      %v3735 = vsub.f32 1.0, %v3734
      %v3736 = vmul.f32 %v3733, %v3735
      %v3737 = vadd.f32 %v3733, %v3736
      %vm3738 = vweird.f32 %v3725
      %vm3739 = vweird.f32 %v3733
      %vm3740 = vmor %vm3738, %vm3739
      %v3741 = vsel %vm3740, %v3733, %v3737
      %v3742 = vand.u32 2147483647, %v3725
      %vm3743 = vcmp.eq.f32.partialorder %v3742, 8.507059e+37
      %v3744 = vand.u32 %v3725, 2147483648
      %v3745 = vor.u32 1.1754944e-38, %v3744
      %v3746 = vsel %vm3743, %v3745, %v3741
      %v3747 = vmul.f32 1.0, %v3746
      %v3748 = vrcp.pop %v3726
      %v3749 = vmul.f32 %v3726, %v3748
      %v3750 = vsub.f32 1.0, %v3749
      %v3751 = vmul.f32 %v3748, %v3750
      %v3752 = vadd.f32 %v3748, %v3751
      %vm3753 = vweird.f32 %v3726
      %vm3754 = vweird.f32 %v3748
      %vm3755 = vmor %vm3753, %vm3754
      %v3756 = vsel %vm3755, %v3748, %v3752
      %v3757 = vand.u32 2147483647, %v3726
      %vm3758 = vcmp.eq.f32.partialorder %v3757, 8.507059e+37
      %v3759 = vand.u32 %v3726, 2147483648
      %v3760 = vor.u32 1.1754944e-38, %v3759
      %v3761 = vsel %vm3758, %v3760, %v3756
      %v3762 = vmul.f32 1.0, %v3761
      %v3763 = vrcp.pop %v3727
      %v3764 = vmul.f32 %v3727, %v3763
      %v3765 = vsub.f32 1.0, %v3764
      %v3766 = vmul.f32 %v3763, %v3765
      %v3767 = vadd.f32 %v3763, %v3766
      %vm3768 = vweird.f32 %v3727
      %vm3769 = vweird.f32 %v3763
      %vm3770 = vmor %vm3768, %vm3769
      %v3771 = vsel %vm3770, %v3763, %v3767
      %v3772 = vand.u32 2147483647, %v3727
      %vm3773 = vcmp.eq.f32.partialorder %v3772, 8.507059e+37
      %v3774 = vand.u32 %v3727, 2147483648
      %v3775 = vor.u32 1.1754944e-38, %v3774
      %v3776 = vsel %vm3773, %v3775, %v3771
      %v3777 = vmul.f32 1.0, %v3776
      %v3778 = vrcp.pop %v3728
      %v3779 = vmul.f32 %v3728, %v3778
      %v3780 = vsub.f32 1.0, %v3779
      %v3781 = vmul.f32 %v3778, %v3780
      %v3782 = vadd.f32 %v3778, %v3781
      %vm3783 = vweird.f32 %v3728
      %vm3784 = vweird.f32 %v3778
      %vm3785 = vmor %vm3783, %vm3784
      %v3786 = vsel %vm3785, %v3778, %v3782
      %v3787 = vand.u32 2147483647, %v3728
      %vm3788 = vcmp.eq.f32.partialorder %v3787, 8.507059e+37
      %v3789 = vand.u32 %v3728, 2147483648
      %v3790 = vor.u32 1.1754944e-38, %v3789
      %v3791 = vsel %vm3788, %v3790, %v3786
      %v3792 = vmul.f32 1.0, %v3791
      %v3793 = vrcp.pop %v3729
      %v3794 = vmul.f32 %v3729, %v3793
      %v3795 = vsub.f32 1.0, %v3794
      %v3796 = vmul.f32 %v3793, %v3795
      %v3797 = vadd.f32 %v3793, %v3796
      %vm3798 = vweird.f32 %v3729
      %vm3799 = vweird.f32 %v3793
      %vm3800 = vmor %vm3798, %vm3799
      %v3801 = vsel %vm3800, %v3793, %v3797
      %v3802 = vand.u32 2147483647, %v3729
      %vm3803 = vcmp.eq.f32.partialorder %v3802, 8.507059e+37
      %v3804 = vand.u32 %v3729, 2147483648
      %v3805 = vor.u32 1.1754944e-38, %v3804
      %v3806 = vsel %vm3803, %v3805, %v3801
      %v3807 = vmul.f32 1.0, %v3806
      %v3808 = vrcp.pop %v3730
      %v3809 = vmul.f32 %v3730, %v3808
      %v3810 = vsub.f32 1.0, %v3809
      %v3811 = vmul.f32 %v3808, %v3810
      %v3812 = vadd.f32 %v3808, %v3811
      %vm3813 = vweird.f32 %v3730
      %vm3814 = vweird.f32 %v3808
      %vm3815 = vmor %vm3813, %vm3814
      %v3816 = vsel %vm3815, %v3808, %v3812
      %v3817 = vand.u32 2147483647, %v3730
      %vm3818 = vcmp.eq.f32.partialorder %v3817, 8.507059e+37
      %v3819 = vand.u32 %v3730, 2147483648
      %v3820 = vor.u32 1.1754944e-38, %v3819
      %v3821 = vsel %vm3818, %v3820, %v3816
      %v3822 = vmul.f32 1.0, %v3821
      %v3823 = vrcp.pop %v3731
      %v3824 = vmul.f32 %v3731, %v3823
      %v3825 = vsub.f32 1.0, %v3824
      %v3826 = vmul.f32 %v3823, %v3825
      %v3827 = vadd.f32 %v3823, %v3826
      %vm3828 = vweird.f32 %v3731
      %vm3829 = vweird.f32 %v3823
      %vm3830 = vmor %vm3828, %vm3829
      %v3831 = vsel %vm3830, %v3823, %v3827
      %v3832 = vand.u32 2147483647, %v3731
      %vm3833 = vcmp.eq.f32.partialorder %v3832, 8.507059e+37
      %v3834 = vand.u32 %v3731, 2147483648
      %v3835 = vor.u32 1.1754944e-38, %v3834
      %v3836 = vsel %vm3833, %v3835, %v3831
      %v3837 = vmul.f32 1.0, %v3836
      %v3838 = vrcp.pop %v3732
      %v3839 = vmul.f32 %v3732, %v3838
      %v3840 = vsub.f32 1.0, %v3839
      %v3841 = vmul.f32 %v3838, %v3840
      %v3842 = vadd.f32 %v3838, %v3841
      %vm3843 = vweird.f32 %v3732
      %vm3844 = vweird.f32 %v3838
      %vm3845 = vmor %vm3843, %vm3844
      %v3846 = vsel %vm3845, %v3838, %v3842
      %v3847 = vand.u32 2147483647, %v3732
      %vm3848 = vcmp.eq.f32.partialorder %v3847, 8.507059e+37
      %v3849 = vand.u32 %v3732, 2147483648
      %v3850 = vor.u32 1.1754944e-38, %v3849
      %v3851 = vsel %vm3848, %v3850, %v3846
      %v3852 = vmul.f32 1.0, %v3851
      %v3853 = vmul.f32 %v3747, 1.0614054
      %v3854 = vmul.f32 %v3762, 1.0614054
      %v3855 = vmul.f32 %v3777, 1.0614054
      %v3856 = vmul.f32 %v3792, 1.0614054
      %v3857 = vmul.f32 %v3807, 1.0614054
      %v3858 = vmul.f32 %v3822, 1.0614054
      %v3859 = vmul.f32 %v3837, 1.0614054
      %v3860 = vmul.f32 %v3852, 1.0614054
      %v3861 = vadd.f32 %v3853, -1.4531521
      %v3862 = vadd.f32 %v3854, -1.4531521
      %v3863 = vadd.f32 %v3855, -1.4531521
      %v3864 = vadd.f32 %v3856, -1.4531521
      %v3865 = vadd.f32 %v3857, -1.4531521
      %v3866 = vadd.f32 %v3858, -1.4531521
      %v3867 = vadd.f32 %v3859, -1.4531521
      %v3868 = vadd.f32 %v3860, -1.4531521
      %v3869 = vmul.f32 %v3861, %v3747
      %v3870 = vmul.f32 %v3862, %v3762
      %v3871 = vmul.f32 %v3863, %v3777
      %v3872 = vmul.f32 %v3864, %v3792
      %v3873 = vmul.f32 %v3865, %v3807
      %v3874 = vmul.f32 %v3866, %v3822
      %v3875 = vmul.f32 %v3867, %v3837
      %v3876 = vmul.f32 %v3868, %v3852
      %v3877 = vadd.f32 %v3869, 1.4214138
      %v3878 = vadd.f32 %v3870, 1.4214138
      %v3879 = vadd.f32 %v3871, 1.4214138
      %v3880 = vadd.f32 %v3872, 1.4214138
      %v3881 = vadd.f32 %v3873, 1.4214138
      %v3882 = vadd.f32 %v3874, 1.4214138
      %v3883 = vadd.f32 %v3875, 1.4214138
      %v3884 = vadd.f32 %v3876, 1.4214138
      %v3885 = vmul.f32 %v3877, %v3747
      %v3886 = vmul.f32 %v3878, %v3762
      %v3887 = vmul.f32 %v3879, %v3777
      %v3888 = vmul.f32 %v3880, %v3792
      %v3889 = vmul.f32 %v3881, %v3807
      %v3890 = vmul.f32 %v3882, %v3822
      %v3891 = vmul.f32 %v3883, %v3837
      %v3892 = vmul.f32 %v3884, %v3852
      %v3893 = vadd.f32 %v3885, -0.28449672
      %v3894 = vadd.f32 %v3886, -0.28449672
      %v3895 = vadd.f32 %v3887, -0.28449672
      %v3896 = vadd.f32 %v3888, -0.28449672
      %v3897 = vadd.f32 %v3889, -0.28449672
      %v3898 = vadd.f32 %v3890, -0.28449672
      %v3899 = vadd.f32 %v3891, -0.28449672
      %v3900 = vadd.f32 %v3892, -0.28449672
      %v3901 = vmul.f32 %v3893, %v3747
      %v3902 = vmul.f32 %v3894, %v3762
      %v3903 = vmul.f32 %v3895, %v3777
      %v3904 = vmul.f32 %v3896, %v3792
      %v3905 = vmul.f32 %v3897, %v3807
      %v3906 = vmul.f32 %v3898, %v3822
      %v3907 = vmul.f32 %v3899, %v3837
      %v3908 = vmul.f32 %v3900, %v3852
      %v3909 = vadd.f32 %v3901, 0.2548296
      %v3910 = vadd.f32 %v3902, 0.2548296
      %v3911 = vadd.f32 %v3903, 0.2548296
      %v3912 = vadd.f32 %v3904, 0.2548296
      %v3913 = vadd.f32 %v3905, 0.2548296
      %v3914 = vadd.f32 %v3906, 0.2548296
      %v3915 = vadd.f32 %v3907, 0.2548296
      %v3916 = vadd.f32 %v3908, 0.2548296
      %v3917 = vmul.f32 %v3909, %v3747
      %v3918 = vmul.f32 %v3910, %v3762
      %v3919 = vmul.f32 %v3911, %v3777
      %v3920 = vmul.f32 %v3912, %v3792
      %v3921 = vmul.f32 %v3913, %v3807
      %v3922 = vmul.f32 %v3914, %v3822
      %v3923 = vmul.f32 %v3915, %v3837
      %v3924 = vmul.f32 %v3916, %v3852
      %v3925 = vsub.f32 0.0, %v3709
      %v3926 = vsub.f32 0.0, %v3710
      %v3927 = vsub.f32 0.0, %v3711
      %v3928 = vsub.f32 0.0, %v3712
      %v3929 = vsub.f32 0.0, %v3713
      %v3930 = vsub.f32 0.0, %v3714
      %v3931 = vsub.f32 0.0, %v3715
      %v3932 = vsub.f32 0.0, %v3716
      %v3933 = vmul.f32 %v3925, %v3709
      %v3934 = vmul.f32 %v3926, %v3710
      %v3935 = vmul.f32 %v3927, %v3711
      %v3936 = vmul.f32 %v3928, %v3712
      %v3937 = vmul.f32 %v3929, %v3713
      %v3938 = vmul.f32 %v3930, %v3714
      %v3939 = vmul.f32 %v3931, %v3715
      %v3940 = vmul.f32 %v3932, %v3716
      %v3941 = vmul.f32 %v3933, 1.442695
      %v3942 = vpow.pop %v3941
      %v3943 = vmul.f32 %v3934, 1.442695
      %v3944 = vpow.pop %v3943
      %v3945 = vmul.f32 %v3935, 1.442695
      %v3946 = vpow.pop %v3945
      %v3947 = vmul.f32 %v3936, 1.442695
      %v3948 = vpow.pop %v3947
      %v3949 = vmul.f32 %v3937, 1.442695
      %v3950 = vpow.pop %v3949
      %v3951 = vmul.f32 %v3938, 1.442695
      %v3952 = vpow.pop %v3951
      %v3953 = vmul.f32 %v3939, 1.442695
      %v3954 = vpow.pop %v3953
      %v3955 = vmul.f32 %v3940, 1.442695
      %v3956 = vpow.pop %v3955
      %v3957 = vmul.f32 %v3917, %v3942
      %v3958 = vmul.f32 %v3918, %v3944
      %v3959 = vmul.f32 %v3919, %v3946
      %v3960 = vmul.f32 %v3920, %v3948
      %v3961 = vmul.f32 %v3921, %v3950
      %v3962 = vmul.f32 %v3922, %v3952
      %v3963 = vmul.f32 %v3923, %v3954
      %v3964 = vmul.f32 %v3924, %v3956
      %v3965 = vsub.f32 1.0, %v3957
      %v3966 = vsub.f32 1.0, %v3958
      %v3967 = vsub.f32 1.0, %v3959
      %v3968 = vsub.f32 1.0, %v3960
      %v3969 = vsub.f32 1.0, %v3961
      %v3970 = vsub.f32 1.0, %v3962
      %v3971 = vsub.f32 1.0, %v3963
      %v3972 = vsub.f32 1.0, %v3964
      %v3973 = vsub.f32 0.0, %v3965
      %v3974 = vsub.f32 0.0, %v3966
      %v3975 = vsub.f32 0.0, %v3967
      %v3976 = vsub.f32 0.0, %v3968
      %v3977 = vsub.f32 0.0, %v3969
      %v3978 = vsub.f32 0.0, %v3970
      %v3979 = vsub.f32 0.0, %v3971
      %v3980 = vsub.f32 0.0, %v3972
      %v3981 = vsel %vm3693, %v3965, %v3973
      %v3982 = vsel %vm3694, %v3966, %v3974
      %v3983 = vsel %vm3695, %v3967, %v3975
      %v3984 = vsel %vm3696, %v3968, %v3976
      %v3985 = vsel %vm3697, %v3969, %v3977
      %v3986 = vsel %vm3698, %v3970, %v3978
      %v3987 = vsel %vm3699, %v3971, %v3979
      %v3988 = vsel %vm3700, %v3972, %v3980
      %v3989 = vadd.f32 %v3981, 1.0
      %v3990 = vadd.f32 %v3982, 1.0
      %v3991 = vadd.f32 %v3983, 1.0
      %v3992 = vadd.f32 %v3984, 1.0
      %v3993 = vadd.f32 %v3985, 1.0
      %v3994 = vadd.f32 %v3986, 1.0
      %v3995 = vadd.f32 %v3987, 1.0
      %v3996 = vadd.f32 %v3988, 1.0
      %v3997 = vmul.f32 %v3677, %v3989
      %v3998 = vmul.f32 %v3678, %v3990
      %v3999 = vmul.f32 %v3679, %v3991
      %v4000 = vmul.f32 %v3680, %v3992
      %v4001 = vmul.f32 %v3681, %v3993
      %v4002 = vmul.f32 %v3682, %v3994
      %v4003 = vmul.f32 %v3683, %v3995
      %v4004 = vmul.f32 %v3684, %v3996
      %v4005 = vpack.c.bf16 %v3997, %v3997
      %v4006 = vpack.c.bf16 %v3998, %v3998
      %v4007 = vpack.c.bf16 %v3999, %v3999
      %v4008 = vpack.c.bf16 %v4000, %v4000
      %v4009 = vpack.c.bf16 %v4001, %v4001
      %v4010 = vpack.c.bf16 %v4002, %v4002
      %v4011 = vpack.c.bf16 %v4003, %v4003
      %v4012 = vpack.c.bf16 %v4004, %v4004
      %4013 = vst.msk [vmem:[%s766 + $0x4] sm:$0xf] %vm543, %v4005
      %4014 = vst.msk [vmem:[%s766 + $0x10] sm:$0xf] %vm543, %v4006
      %4015 = vst.msk [vmem:[%s766 + $0x1c] sm:$0xf] %vm543, %v4007
      %4016 = vst.msk [vmem:[%s766 + $0x28] sm:$0xf] %vm543, %v4008
      %4017 = vst.msk [vmem:[%s766 + $0x34] sm:$0xf] %vm543, %v4009
      %4018 = vst.msk [vmem:[%s766 + $0x40] sm:$0xf] %vm543, %v4010
      %4019 = vst.msk [vmem:[%s766 + $0x4c] sm:$0xf] %vm543, %v4011
      %4020 = vst.msk [vmem:[%s766 + $0x58] sm:$0xf] %vm543, %v4012
      %v4021 = vld [vmem:[#allocation2] sm:$0x8]
      %v4022 = vld [vmem:[#allocation2 + $0x4] sm:$0xf]
      %v4023 = vld [vmem:[#allocation2 + $0xc] sm:$0x8]
      %v4024 = vld [vmem:[#allocation2 + $0x10] sm:$0xf]
      %v4025 = vld [vmem:[#allocation2 + $0x18] sm:$0x8]
      %v4026 = vld [vmem:[#allocation2 + $0x1c] sm:$0xf]
      %v4027 = vld [vmem:[#allocation2 + $0x24] sm:$0x8]
      %v4028 = vld [vmem:[#allocation2 + $0x28] sm:$0xf]
      %v4029 = vld [vmem:[#allocation2 + $0x30] sm:$0x8]
      %v4030 = vld [vmem:[#allocation2 + $0x34] sm:$0xf]
      %v4031 = vld [vmem:[#allocation2 + $0x3c] sm:$0x8]
      %v4032 = vld [vmem:[#allocation2 + $0x40] sm:$0xf]
      %v4033 = vld [vmem:[#allocation2 + $0x48] sm:$0x8]
      %v4034 = vld [vmem:[#allocation2 + $0x4c] sm:$0xf]
      %v4035 = vld [vmem:[#allocation2 + $0x54] sm:$0x8]
      %v4036 = vld [vmem:[#allocation2 + $0x58] sm:$0xf]
      %v4038 = vshrl.u32 %v4021, 16
      %v4040 = vrot.slane %v4038, 7
      %v4041 = vrot.slane %v4040, 4
      %v4043 = vshrl.u32 %v4022, 16
      %v4045 = vrot.slane %v4043, 7
      %v4046 = vshll.u32 %v4022, 16
      %v4048 = vor.u32 %v4045, %v4046
      %v4049 = vsel %vm792, %v4041, %v4048
      %v4051 = vshrl.u32 %v4023, 16
      %v4053 = vrot.slane %v4051, 7
      %v4054 = vrot.slane %v4053, 4
      %v4056 = vshrl.u32 %v4024, 16
      %v4058 = vrot.slane %v4056, 7
      %v4059 = vshll.u32 %v4024, 16
      %v4061 = vor.u32 %v4058, %v4059
      %v4062 = vsel %vm792, %v4054, %v4061
      %v4064 = vshrl.u32 %v4025, 16
      %v4066 = vrot.slane %v4064, 7
      %v4067 = vrot.slane %v4066, 4
      %v4069 = vshrl.u32 %v4026, 16
      %v4071 = vrot.slane %v4069, 7
      %v4072 = vshll.u32 %v4026, 16
      %v4074 = vor.u32 %v4071, %v4072
      %v4075 = vsel %vm792, %v4067, %v4074
      %v4077 = vshrl.u32 %v4027, 16
      %v4079 = vrot.slane %v4077, 7
      %v4080 = vrot.slane %v4079, 4
      %v4082 = vshrl.u32 %v4028, 16
      %v4084 = vrot.slane %v4082, 7
      %v4085 = vshll.u32 %v4028, 16
      %v4087 = vor.u32 %v4084, %v4085
      %v4088 = vsel %vm792, %v4080, %v4087
      %v4090 = vshrl.u32 %v4029, 16
      %v4092 = vrot.slane %v4090, 7
      %v4093 = vrot.slane %v4092, 4
      %v4095 = vshrl.u32 %v4030, 16
      %v4097 = vrot.slane %v4095, 7
      %v4098 = vshll.u32 %v4030, 16
      %v4100 = vor.u32 %v4097, %v4098
      %v4101 = vsel %vm792, %v4093, %v4100
      %v4103 = vshrl.u32 %v4031, 16
      %v4105 = vrot.slane %v4103, 7
      %v4106 = vrot.slane %v4105, 4
      %v4108 = vshrl.u32 %v4032, 16
      %v4110 = vrot.slane %v4108, 7
      %v4111 = vshll.u32 %v4032, 16
      %v4113 = vor.u32 %v4110, %v4111
      %v4114 = vsel %vm792, %v4106, %v4113
      %v4116 = vshrl.u32 %v4033, 16
      %v4118 = vrot.slane %v4116, 7
      %v4119 = vrot.slane %v4118, 4
      %v4121 = vshrl.u32 %v4034, 16
      %v4123 = vrot.slane %v4121, 7
      %v4124 = vshll.u32 %v4034, 16
      %v4126 = vor.u32 %v4123, %v4124
      %v4127 = vsel %vm792, %v4119, %v4126
      %v4129 = vshrl.u32 %v4035, 16
      %v4131 = vrot.slane %v4129, 7
      %v4132 = vrot.slane %v4131, 4
      %v4134 = vshrl.u32 %v4036, 16
      %v4136 = vrot.slane %v4134, 7
      %v4137 = vshll.u32 %v4036, 16
      %v4139 = vor.u32 %v4136, %v4137
      %v4140 = vsel %vm792, %v4132, %v4139
      %4149 = vst.msk [vmem:[#allocation4] sm:$0xf] %vm543, %v4049
      %4150 = vst.msk [vmem:[#allocation4 + $0x4] sm:$0xf] %vm543, %v4062
      %4151 = vst.msk [vmem:[#allocation4 + $0x8] sm:$0xf] %vm543, %v4075
      %4152 = vst.msk [vmem:[#allocation4 + $0xc] sm:$0xf] %vm543, %v4088
      %4153 = vst.msk [vmem:[#allocation4 + $0x10] sm:$0xf] %vm543, %v4101
      %4154 = vst.msk [vmem:[#allocation4 + $0x14] sm:$0xf] %vm543, %v4114
      %4155 = vst.msk [vmem:[#allocation4 + $0x18] sm:$0xf] %vm543, %v4127
      %4156 = vst.msk [vmem:[#allocation4 + $0x1c] sm:$0xf] %vm543, %v4140
      %v4157 = vld [vmem:[#allocation2 + $0x4] sm:$0xf]
      %v4158 = vld [vmem:[#allocation2 + $0x10] sm:$0xf]
      %v4159 = vld [vmem:[#allocation2 + $0x1c] sm:$0xf]
      %v4160 = vld [vmem:[#allocation2 + $0x28] sm:$0xf]
      %v4161 = vld [vmem:[#allocation2 + $0x34] sm:$0xf]
      %v4162 = vld [vmem:[#allocation2 + $0x40] sm:$0xf]
      %v4163 = vld [vmem:[#allocation2 + $0x4c] sm:$0xf]
      %v4164 = vld [vmem:[#allocation2 + $0x58] sm:$0xf]
      %4173 = vrot.lane.b32.xlu0 %v4157, 4
      %v4174 = vpop.permute.xlu0 %4173
      %4175 = vrot.lane.b32.xlu0 %v4158, 4
      %v4176 = vpop.permute.xlu0 %4175
      %4177 = vrot.lane.b32.xlu0 %v4159, 4
      %v4178 = vpop.permute.xlu0 %4177
      %4179 = vrot.lane.b32.xlu0 %v4160, 4
      %v4180 = vpop.permute.xlu0 %4179
      %4181 = vrot.lane.b32.xlu0 %v4161, 4
      %v4182 = vpop.permute.xlu0 %4181
      %4183 = vrot.lane.b32.xlu0 %v4162, 4
      %v4184 = vpop.permute.xlu0 %4183
      %4185 = vrot.lane.b32.xlu0 %v4163, 4
      %v4186 = vpop.permute.xlu0 %4185
      %4187 = vrot.lane.b32.xlu0 %v4164, 4
      %v4188 = vpop.permute.xlu0 %4187
      %4197 = vst.msk [vmem:[#allocation4] sm:$0xf] %vm953, %v4174
      %4198 = vst.msk [vmem:[#allocation4 + $0x4] sm:$0xf] %vm953, %v4176
      %4199 = vst.msk [vmem:[#allocation4 + $0x8] sm:$0xf] %vm953, %v4178
      %4200 = vst.msk [vmem:[#allocation4 + $0xc] sm:$0xf] %vm953, %v4180
      %4201 = vst.msk [vmem:[#allocation4 + $0x10] sm:$0xf] %vm953, %v4182
      %4202 = vst.msk [vmem:[#allocation4 + $0x14] sm:$0xf] %vm953, %v4184
      %4203 = vst.msk [vmem:[#allocation4 + $0x18] sm:$0xf] %vm953, %v4186
      %4204 = vst.msk [vmem:[#allocation4 + $0x1c] sm:$0xf] %vm953, %v4188
      %v4205 = vld [vmem:[#allocation2 + $0x4] sm:$0xf]
      %v4206 = vld [vmem:[#allocation2 + $0x8] sm:$0x1]
      %v4207 = vld [vmem:[#allocation2 + $0x10] sm:$0xf]
      %v4208 = vld [vmem:[#allocation2 + $0x14] sm:$0x1]
      %v4209 = vld [vmem:[#allocation2 + $0x1c] sm:$0xf]
      %v4210 = vld [vmem:[#allocation2 + $0x20] sm:$0x1]
      %v4211 = vld [vmem:[#allocation2 + $0x28] sm:$0xf]
      %v4212 = vld [vmem:[#allocation2 + $0x2c] sm:$0x1]
      %v4213 = vld [vmem:[#allocation2 + $0x34] sm:$0xf]
      %v4214 = vld [vmem:[#allocation2 + $0x38] sm:$0x1]
      %v4215 = vld [vmem:[#allocation2 + $0x40] sm:$0xf]
      %v4216 = vld [vmem:[#allocation2 + $0x44] sm:$0x1]
      %v4217 = vld [vmem:[#allocation2 + $0x4c] sm:$0xf]
      %v4218 = vld [vmem:[#allocation2 + $0x50] sm:$0x1]
      %v4219 = vld [vmem:[#allocation2 + $0x58] sm:$0xf]
      %v4220 = vld [vmem:[#allocation2 + $0x5c] sm:$0x1]
      %v4222 = vshrl.u32 %v4205, 16
      %v4224 = vrot.slane %v4222, 4
      %v4225 = vshll.u32 %v4205, 16
      %v4227 = vrot.slane %v4225, 5
      %v4228 = vor.u32 %v4224, %v4227
      %v4229 = vrot.slane %v4228, 4
      %v4231 = vshll.u32 %v4206, 16
      %v4233 = vrot.slane %v4231, 5
      %v4234 = vsel %vm980, %v4229, %v4233
      %v4236 = vshrl.u32 %v4207, 16
      %v4238 = vrot.slane %v4236, 4
      %v4239 = vshll.u32 %v4207, 16
      %v4241 = vrot.slane %v4239, 5
      %v4242 = vor.u32 %v4238, %v4241
      %v4243 = vrot.slane %v4242, 4
      %v4245 = vshll.u32 %v4208, 16
      %v4247 = vrot.slane %v4245, 5
      %v4248 = vsel %vm980, %v4243, %v4247
      %v4250 = vshrl.u32 %v4209, 16
      %v4252 = vrot.slane %v4250, 4
      %v4253 = vshll.u32 %v4209, 16
      %v4255 = vrot.slane %v4253, 5
      %v4256 = vor.u32 %v4252, %v4255
      %v4257 = vrot.slane %v4256, 4
      %v4259 = vshll.u32 %v4210, 16
      %v4261 = vrot.slane %v4259, 5
      %v4262 = vsel %vm980, %v4257, %v4261
      %v4264 = vshrl.u32 %v4211, 16
      %v4266 = vrot.slane %v4264, 4
      %v4267 = vshll.u32 %v4211, 16
      %v4269 = vrot.slane %v4267, 5
      %v4270 = vor.u32 %v4266, %v4269
      %v4271 = vrot.slane %v4270, 4
      %v4273 = vshll.u32 %v4212, 16
      %v4275 = vrot.slane %v4273, 5
      %v4276 = vsel %vm980, %v4271, %v4275
      %v4278 = vshrl.u32 %v4213, 16
      %v4280 = vrot.slane %v4278, 4
      %v4281 = vshll.u32 %v4213, 16
      %v4283 = vrot.slane %v4281, 5
      %v4284 = vor.u32 %v4280, %v4283
      %v4285 = vrot.slane %v4284, 4
      %v4287 = vshll.u32 %v4214, 16
      %v4289 = vrot.slane %v4287, 5
      %v4290 = vsel %vm980, %v4285, %v4289
      %v4292 = vshrl.u32 %v4215, 16
      %v4294 = vrot.slane %v4292, 4
      %v4295 = vshll.u32 %v4215, 16
      %v4297 = vrot.slane %v4295, 5
      %v4298 = vor.u32 %v4294, %v4297
      %v4299 = vrot.slane %v4298, 4
      %v4301 = vshll.u32 %v4216, 16
      %v4303 = vrot.slane %v4301, 5
      %v4304 = vsel %vm980, %v4299, %v4303
      %v4306 = vshrl.u32 %v4217, 16
      %v4308 = vrot.slane %v4306, 4
      %v4309 = vshll.u32 %v4217, 16
      %v4311 = vrot.slane %v4309, 5
      %v4312 = vor.u32 %v4308, %v4311
      %v4313 = vrot.slane %v4312, 4
      %v4315 = vshll.u32 %v4218, 16
      %v4317 = vrot.slane %v4315, 5
      %v4318 = vsel %vm980, %v4313, %v4317
      %v4320 = vshrl.u32 %v4219, 16
      %v4322 = vrot.slane %v4320, 4
      %v4323 = vshll.u32 %v4219, 16
      %v4325 = vrot.slane %v4323, 5
      %v4326 = vor.u32 %v4322, %v4325
      %v4327 = vrot.slane %v4326, 4
      %v4329 = vshll.u32 %v4220, 16
      %v4331 = vrot.slane %v4329, 5
      %v4332 = vsel %vm980, %v4327, %v4331
      %4333 = vrot.lane.b32.xlu0 %v4234, 8
      %v4334 = vpop.permute.xlu0 %4333
      %4335 = vrot.lane.b32.xlu0 %v4248, 8
      %v4336 = vpop.permute.xlu0 %4335
      %4337 = vrot.lane.b32.xlu0 %v4262, 8
      %v4338 = vpop.permute.xlu0 %4337
      %4339 = vrot.lane.b32.xlu0 %v4276, 8
      %v4340 = vpop.permute.xlu0 %4339
      %4341 = vrot.lane.b32.xlu0 %v4290, 8
      %v4342 = vpop.permute.xlu0 %4341
      %4343 = vrot.lane.b32.xlu0 %v4304, 8
      %v4344 = vpop.permute.xlu0 %4343
      %4345 = vrot.lane.b32.xlu0 %v4318, 8
      %v4346 = vpop.permute.xlu0 %4345
      %4347 = vrot.lane.b32.xlu0 %v4332, 8
      %v4348 = vpop.permute.xlu0 %4347
      %4357 = vst.msk [vmem:[#allocation4] sm:$0xf] %vm1117, %v4334
      %4358 = vst.msk [vmem:[#allocation4 + $0x4] sm:$0xf] %vm1117, %v4336
      %4359 = vst.msk [vmem:[#allocation4 + $0x8] sm:$0xf] %vm1117, %v4338
      %4360 = vst.msk [vmem:[#allocation4 + $0xc] sm:$0xf] %vm1117, %v4340
      %4361 = vst.msk [vmem:[#allocation4 + $0x10] sm:$0xf] %vm1117, %v4342
      %4362 = vst.msk [vmem:[#allocation4 + $0x14] sm:$0xf] %vm1117, %v4344
      %4363 = vst.msk [vmem:[#allocation4 + $0x18] sm:$0xf] %vm1117, %v4346
      %4364 = vst.msk [vmem:[#allocation4 + $0x1c] sm:$0xf] %vm1117, %v4348
      %v4365 = vld [vmem:[%s766] sm:$0x8]
      %v4366 = vld [vmem:[%s766 + $0x4] sm:$0xf]
      %v4367 = vld [vmem:[%s766 + $0xc] sm:$0x8]
      %v4368 = vld [vmem:[%s766 + $0x10] sm:$0xf]
      %v4369 = vld [vmem:[%s766 + $0x18] sm:$0x8]
      %v4370 = vld [vmem:[%s766 + $0x1c] sm:$0xf]
      %v4371 = vld [vmem:[%s766 + $0x24] sm:$0x8]
      %v4372 = vld [vmem:[%s766 + $0x28] sm:$0xf]
      %v4373 = vld [vmem:[%s766 + $0x30] sm:$0x8]
      %v4374 = vld [vmem:[%s766 + $0x34] sm:$0xf]
      %v4375 = vld [vmem:[%s766 + $0x3c] sm:$0x8]
      %v4376 = vld [vmem:[%s766 + $0x40] sm:$0xf]
      %v4377 = vld [vmem:[%s766 + $0x48] sm:$0x8]
      %v4378 = vld [vmem:[%s766 + $0x4c] sm:$0xf]
      %v4379 = vld [vmem:[%s766 + $0x54] sm:$0x8]
      %v4380 = vld [vmem:[%s766 + $0x58] sm:$0xf]
      %v4382 = vshrl.u32 %v4365, 16
      %v4384 = vrot.slane %v4382, 7
      %v4385 = vrot.slane %v4384, 4
      %v4387 = vshrl.u32 %v4366, 16
      %v4389 = vrot.slane %v4387, 7
      %v4390 = vshll.u32 %v4366, 16
      %v4392 = vor.u32 %v4389, %v4390
      %v4393 = vsel %vm792, %v4385, %v4392
      %v4395 = vshrl.u32 %v4367, 16
      %v4397 = vrot.slane %v4395, 7
      %v4398 = vrot.slane %v4397, 4
      %v4400 = vshrl.u32 %v4368, 16
      %v4402 = vrot.slane %v4400, 7
      %v4403 = vshll.u32 %v4368, 16
      %v4405 = vor.u32 %v4402, %v4403
      %v4406 = vsel %vm792, %v4398, %v4405
      %v4408 = vshrl.u32 %v4369, 16
      %v4410 = vrot.slane %v4408, 7
      %v4411 = vrot.slane %v4410, 4
      %v4413 = vshrl.u32 %v4370, 16
      %v4415 = vrot.slane %v4413, 7
      %v4416 = vshll.u32 %v4370, 16
      %v4418 = vor.u32 %v4415, %v4416
      %v4419 = vsel %vm792, %v4411, %v4418
      %v4421 = vshrl.u32 %v4371, 16
      %v4423 = vrot.slane %v4421, 7
      %v4424 = vrot.slane %v4423, 4
      %v4426 = vshrl.u32 %v4372, 16
      %v4428 = vrot.slane %v4426, 7
      %v4429 = vshll.u32 %v4372, 16
      %v4431 = vor.u32 %v4428, %v4429
      %v4432 = vsel %vm792, %v4424, %v4431
      %v4434 = vshrl.u32 %v4373, 16
      %v4436 = vrot.slane %v4434, 7
      %v4437 = vrot.slane %v4436, 4
      %v4439 = vshrl.u32 %v4374, 16
      %v4441 = vrot.slane %v4439, 7
      %v4442 = vshll.u32 %v4374, 16
      %v4444 = vor.u32 %v4441, %v4442
      %v4445 = vsel %vm792, %v4437, %v4444
      %v4447 = vshrl.u32 %v4375, 16
      %v4449 = vrot.slane %v4447, 7
      %v4450 = vrot.slane %v4449, 4
      %v4452 = vshrl.u32 %v4376, 16
      %v4454 = vrot.slane %v4452, 7
      %v4455 = vshll.u32 %v4376, 16
      %v4457 = vor.u32 %v4454, %v4455
      %v4458 = vsel %vm792, %v4450, %v4457
      %v4460 = vshrl.u32 %v4377, 16
      %v4462 = vrot.slane %v4460, 7
      %v4463 = vrot.slane %v4462, 4
      %v4465 = vshrl.u32 %v4378, 16
      %v4467 = vrot.slane %v4465, 7
      %v4468 = vshll.u32 %v4378, 16
      %v4470 = vor.u32 %v4467, %v4468
      %v4471 = vsel %vm792, %v4463, %v4470
      %v4473 = vshrl.u32 %v4379, 16
      %v4475 = vrot.slane %v4473, 7
      %v4476 = vrot.slane %v4475, 4
      %v4478 = vshrl.u32 %v4380, 16
      %v4480 = vrot.slane %v4478, 7
      %v4481 = vshll.u32 %v4380, 16
      %v4483 = vor.u32 %v4480, %v4481
      %v4484 = vsel %vm792, %v4476, %v4483
      %4485 = vrot.lane.b32.xlu0 %v4393, 12
      %v4486 = vpop.permute.xlu0 %4485
      %4487 = vrot.lane.b32.xlu0 %v4406, 12
      %v4488 = vpop.permute.xlu0 %4487
      %4489 = vrot.lane.b32.xlu0 %v4419, 12
      %v4490 = vpop.permute.xlu0 %4489
      %4491 = vrot.lane.b32.xlu0 %v4432, 12
      %v4492 = vpop.permute.xlu0 %4491
      %4493 = vrot.lane.b32.xlu0 %v4445, 12
      %v4494 = vpop.permute.xlu0 %4493
      %4495 = vrot.lane.b32.xlu0 %v4458, 12
      %v4496 = vpop.permute.xlu0 %4495
      %4497 = vrot.lane.b32.xlu0 %v4471, 12
      %v4498 = vpop.permute.xlu0 %4497
      %4499 = vrot.lane.b32.xlu0 %v4484, 12
      %v4500 = vpop.permute.xlu0 %4499
      %4509 = vst.msk [vmem:[#allocation4] sm:$0xf] %vm1270, %v4486
      %4510 = vst.msk [vmem:[#allocation4 + $0x4] sm:$0xf] %vm1270, %v4488
      %4511 = vst.msk [vmem:[#allocation4 + $0x8] sm:$0xf] %vm1270, %v4490
      %4512 = vst.msk [vmem:[#allocation4 + $0xc] sm:$0xf] %vm1270, %v4492
      %4513 = vst.msk [vmem:[#allocation4 + $0x10] sm:$0xf] %vm1270, %v4494
      %4514 = vst.msk [vmem:[#allocation4 + $0x14] sm:$0xf] %vm1270, %v4496
      %4515 = vst.msk [vmem:[#allocation4 + $0x18] sm:$0xf] %vm1270, %v4498
      %4516 = vst.msk [vmem:[#allocation4 + $0x1c] sm:$0xf] %vm1270, %v4500
      %v4517 = vld [vmem:[%s766 + $0x4] sm:$0xf]
      %v4518 = vld [vmem:[%s766 + $0x10] sm:$0xf]
      %v4519 = vld [vmem:[%s766 + $0x1c] sm:$0xf]
      %v4520 = vld [vmem:[%s766 + $0x28] sm:$0xf]
      %v4521 = vld [vmem:[%s766 + $0x34] sm:$0xf]
      %v4522 = vld [vmem:[%s766 + $0x40] sm:$0xf]
      %v4523 = vld [vmem:[%s766 + $0x4c] sm:$0xf]
      %v4524 = vld [vmem:[%s766 + $0x58] sm:$0xf]
      %4533 = vrot.lane.b32.xlu0 %v4517, 16
      %v4534 = vpop.permute.xlu0 %4533
      %4535 = vrot.lane.b32.xlu0 %v4518, 16
      %v4536 = vpop.permute.xlu0 %4535
      %4537 = vrot.lane.b32.xlu0 %v4519, 16
      %v4538 = vpop.permute.xlu0 %4537
      %4539 = vrot.lane.b32.xlu0 %v4520, 16
      %v4540 = vpop.permute.xlu0 %4539
      %4541 = vrot.lane.b32.xlu0 %v4521, 16
      %v4542 = vpop.permute.xlu0 %4541
      %4543 = vrot.lane.b32.xlu0 %v4522, 16
      %v4544 = vpop.permute.xlu0 %4543
      %4545 = vrot.lane.b32.xlu0 %v4523, 16
      %v4546 = vpop.permute.xlu0 %4545
      %4547 = vrot.lane.b32.xlu0 %v4524, 16
      %v4548 = vpop.permute.xlu0 %4547
      %4557 = vst.msk [vmem:[#allocation4] sm:$0xf] %vm1319, %v4534
      %4558 = vst.msk [vmem:[#allocation4 + $0x4] sm:$0xf] %vm1319, %v4536
      %4559 = vst.msk [vmem:[#allocation4 + $0x8] sm:$0xf] %vm1319, %v4538
      %4560 = vst.msk [vmem:[#allocation4 + $0xc] sm:$0xf] %vm1319, %v4540
      %4561 = vst.msk [vmem:[#allocation4 + $0x10] sm:$0xf] %vm1319, %v4542
      %4562 = vst.msk [vmem:[#allocation4 + $0x14] sm:$0xf] %vm1319, %v4544
      %4563 = vst.msk [vmem:[#allocation4 + $0x18] sm:$0xf] %vm1319, %v4546
      %4564 = vst.msk [vmem:[#allocation4 + $0x1c] sm:$0xf] %vm1319, %v4548
      %v4565 = vld [vmem:[%s766 + $0x4] sm:$0xf]
      %v4566 = vld [vmem:[%s766 + $0x8] sm:$0x1]
      %v4567 = vld [vmem:[%s766 + $0x10] sm:$0xf]
      %v4568 = vld [vmem:[%s766 + $0x14] sm:$0x1]
      %v4569 = vld [vmem:[%s766 + $0x1c] sm:$0xf]
      %v4570 = vld [vmem:[%s766 + $0x20] sm:$0x1]
      %v4571 = vld [vmem:[%s766 + $0x28] sm:$0xf]
      %v4572 = vld [vmem:[%s766 + $0x2c] sm:$0x1]
      %v4573 = vld [vmem:[%s766 + $0x34] sm:$0xf]
      %v4574 = vld [vmem:[%s766 + $0x38] sm:$0x1]
      %v4575 = vld [vmem:[%s766 + $0x40] sm:$0xf]
      %v4576 = vld [vmem:[%s766 + $0x44] sm:$0x1]
      %v4577 = vld [vmem:[%s766 + $0x4c] sm:$0xf]
      %v4578 = vld [vmem:[%s766 + $0x50] sm:$0x1]
      %v4579 = vld [vmem:[%s766 + $0x58] sm:$0xf]
      %v4580 = vld [vmem:[%s766 + $0x5c] sm:$0x1]
      %v4582 = vshrl.u32 %v4565, 16
      %v4584 = vrot.slane %v4582, 4
      %v4585 = vshll.u32 %v4565, 16
      %v4587 = vrot.slane %v4585, 5
      %v4588 = vor.u32 %v4584, %v4587
      %v4589 = vrot.slane %v4588, 4
      %v4591 = vshll.u32 %v4566, 16
      %v4593 = vrot.slane %v4591, 5
      %v4594 = vsel %vm980, %v4589, %v4593
      %v4596 = vshrl.u32 %v4567, 16
      %v4598 = vrot.slane %v4596, 4
      %v4599 = vshll.u32 %v4567, 16
      %v4601 = vrot.slane %v4599, 5
      %v4602 = vor.u32 %v4598, %v4601
      %v4603 = vrot.slane %v4602, 4
      %v4605 = vshll.u32 %v4568, 16
      %v4607 = vrot.slane %v4605, 5
      %v4608 = vsel %vm980, %v4603, %v4607
      %v4610 = vshrl.u32 %v4569, 16
      %v4612 = vrot.slane %v4610, 4
      %v4613 = vshll.u32 %v4569, 16
      %v4615 = vrot.slane %v4613, 5
      %v4616 = vor.u32 %v4612, %v4615
      %v4617 = vrot.slane %v4616, 4
      %v4619 = vshll.u32 %v4570, 16
      %v4621 = vrot.slane %v4619, 5
      %v4622 = vsel %vm980, %v4617, %v4621
      %v4624 = vshrl.u32 %v4571, 16
      %v4626 = vrot.slane %v4624, 4
      %v4627 = vshll.u32 %v4571, 16
      %v4629 = vrot.slane %v4627, 5
      %v4630 = vor.u32 %v4626, %v4629
      %v4631 = vrot.slane %v4630, 4
      %v4633 = vshll.u32 %v4572, 16
      %v4635 = vrot.slane %v4633, 5
      %v4636 = vsel %vm980, %v4631, %v4635
      %v4638 = vshrl.u32 %v4573, 16
      %v4640 = vrot.slane %v4638, 4
      %v4641 = vshll.u32 %v4573, 16
      %v4643 = vrot.slane %v4641, 5
      %v4644 = vor.u32 %v4640, %v4643
      %v4645 = vrot.slane %v4644, 4
      %v4647 = vshll.u32 %v4574, 16
      %v4649 = vrot.slane %v4647, 5
      %v4650 = vsel %vm980, %v4645, %v4649
      %v4652 = vshrl.u32 %v4575, 16
      %v4654 = vrot.slane %v4652, 4
      %v4655 = vshll.u32 %v4575, 16
      %v4657 = vrot.slane %v4655, 5
      %v4658 = vor.u32 %v4654, %v4657
      %v4659 = vrot.slane %v4658, 4
      %v4661 = vshll.u32 %v4576, 16
      %v4663 = vrot.slane %v4661, 5
      %v4664 = vsel %vm980, %v4659, %v4663
      %v4666 = vshrl.u32 %v4577, 16
      %v4668 = vrot.slane %v4666, 4
      %v4669 = vshll.u32 %v4577, 16
      %v4671 = vrot.slane %v4669, 5
      %v4672 = vor.u32 %v4668, %v4671
      %v4673 = vrot.slane %v4672, 4
      %v4675 = vshll.u32 %v4578, 16
      %v4677 = vrot.slane %v4675, 5
      %v4678 = vsel %vm980, %v4673, %v4677
      %v4680 = vshrl.u32 %v4579, 16
      %v4682 = vrot.slane %v4680, 4
      %v4683 = vshll.u32 %v4579, 16
      %v4685 = vrot.slane %v4683, 5
      %v4686 = vor.u32 %v4682, %v4685
      %v4687 = vrot.slane %v4686, 4
      %v4689 = vshll.u32 %v4580, 16
      %v4691 = vrot.slane %v4689, 5
      %v4692 = vsel %vm980, %v4687, %v4691
      %4693 = vrot.lane.b32.xlu0 %v4594, 20
      %v4694 = vpop.permute.xlu0 %4693
      %4695 = vrot.lane.b32.xlu0 %v4608, 20
      %v4696 = vpop.permute.xlu0 %4695
      %4697 = vrot.lane.b32.xlu0 %v4622, 20
      %v4698 = vpop.permute.xlu0 %4697
      %4699 = vrot.lane.b32.xlu0 %v4636, 20
      %v4700 = vpop.permute.xlu0 %4699
      %4701 = vrot.lane.b32.xlu0 %v4650, 20
      %v4702 = vpop.permute.xlu0 %4701
      %4703 = vrot.lane.b32.xlu0 %v4664, 20
      %v4704 = vpop.permute.xlu0 %4703
      %4705 = vrot.lane.b32.xlu0 %v4678, 20
      %v4706 = vpop.permute.xlu0 %4705
      %4707 = vrot.lane.b32.xlu0 %v4692, 20
      %v4708 = vpop.permute.xlu0 %4707
      %4717 = vst.msk [vmem:[#allocation4] sm:$0xf] %vm1480, %v4694
      %4718 = vst.msk [vmem:[#allocation4 + $0x4] sm:$0xf] %vm1480, %v4696
      %4719 = vst.msk [vmem:[#allocation4 + $0x8] sm:$0xf] %vm1480, %v4698
      %4720 = vst.msk [vmem:[#allocation4 + $0xc] sm:$0xf] %vm1480, %v4700
      %4721 = vst.msk [vmem:[#allocation4 + $0x10] sm:$0xf] %vm1480, %v4702
      %4722 = vst.msk [vmem:[#allocation4 + $0x14] sm:$0xf] %vm1480, %v4704
      %4723 = vst.msk [vmem:[#allocation4 + $0x18] sm:$0xf] %vm1480, %v4706
      %4724 = vst.msk [vmem:[#allocation4 + $0x1c] sm:$0xf] %vm1480, %v4708
      %v4725 = vld [vmem:[%s1489] sm:$0x8]
      %v4726 = vld [vmem:[%s1489 + $0x4] sm:$0xf]
      %v4727 = vld [vmem:[%s1489 + $0xc] sm:$0x8]
      %v4728 = vld [vmem:[%s1489 + $0x10] sm:$0xf]
      %v4729 = vld [vmem:[%s1489 + $0x18] sm:$0x8]
      %v4730 = vld [vmem:[%s1489 + $0x1c] sm:$0xf]
      %v4731 = vld [vmem:[%s1489 + $0x24] sm:$0x8]
      %v4732 = vld [vmem:[%s1489 + $0x28] sm:$0xf]
      %v4733 = vld [vmem:[%s1489 + $0x30] sm:$0x8]
      %v4734 = vld [vmem:[%s1489 + $0x34] sm:$0xf]
      %v4735 = vld [vmem:[%s1489 + $0x3c] sm:$0x8]
      %v4736 = vld [vmem:[%s1489 + $0x40] sm:$0xf]
      %v4737 = vld [vmem:[%s1489 + $0x48] sm:$0x8]
      %v4738 = vld [vmem:[%s1489 + $0x4c] sm:$0xf]
      %v4739 = vld [vmem:[%s1489 + $0x54] sm:$0x8]
      %v4740 = vld [vmem:[%s1489 + $0x58] sm:$0xf]
      %v4742 = vshrl.u32 %v4725, 16
      %v4744 = vrot.slane %v4742, 7
      %v4745 = vrot.slane %v4744, 4
      %v4747 = vshrl.u32 %v4726, 16
      %v4749 = vrot.slane %v4747, 7
      %v4750 = vshll.u32 %v4726, 16
      %v4752 = vor.u32 %v4749, %v4750
      %v4753 = vsel %vm792, %v4745, %v4752
      %v4755 = vshrl.u32 %v4727, 16
      %v4757 = vrot.slane %v4755, 7
      %v4758 = vrot.slane %v4757, 4
      %v4760 = vshrl.u32 %v4728, 16
      %v4762 = vrot.slane %v4760, 7
      %v4763 = vshll.u32 %v4728, 16
      %v4765 = vor.u32 %v4762, %v4763
      %v4766 = vsel %vm792, %v4758, %v4765
      %v4768 = vshrl.u32 %v4729, 16
      %v4770 = vrot.slane %v4768, 7
      %v4771 = vrot.slane %v4770, 4
      %v4773 = vshrl.u32 %v4730, 16
      %v4775 = vrot.slane %v4773, 7
      %v4776 = vshll.u32 %v4730, 16
      %v4778 = vor.u32 %v4775, %v4776
      %v4779 = vsel %vm792, %v4771, %v4778
      %v4781 = vshrl.u32 %v4731, 16
      %v4783 = vrot.slane %v4781, 7
      %v4784 = vrot.slane %v4783, 4
      %v4786 = vshrl.u32 %v4732, 16
      %v4788 = vrot.slane %v4786, 7
      %v4789 = vshll.u32 %v4732, 16
      %v4791 = vor.u32 %v4788, %v4789
      %v4792 = vsel %vm792, %v4784, %v4791
      %v4794 = vshrl.u32 %v4733, 16
      %v4796 = vrot.slane %v4794, 7
      %v4797 = vrot.slane %v4796, 4
      %v4799 = vshrl.u32 %v4734, 16
      %v4801 = vrot.slane %v4799, 7
      %v4802 = vshll.u32 %v4734, 16
      %v4804 = vor.u32 %v4801, %v4802
      %v4805 = vsel %vm792, %v4797, %v4804
      %v4807 = vshrl.u32 %v4735, 16
      %v4809 = vrot.slane %v4807, 7
      %v4810 = vrot.slane %v4809, 4
      %v4812 = vshrl.u32 %v4736, 16
      %v4814 = vrot.slane %v4812, 7
      %v4815 = vshll.u32 %v4736, 16
      %v4817 = vor.u32 %v4814, %v4815
      %v4818 = vsel %vm792, %v4810, %v4817
      %v4820 = vshrl.u32 %v4737, 16
      %v4822 = vrot.slane %v4820, 7
      %v4823 = vrot.slane %v4822, 4
      %v4825 = vshrl.u32 %v4738, 16
      %v4827 = vrot.slane %v4825, 7
      %v4828 = vshll.u32 %v4738, 16
      %v4830 = vor.u32 %v4827, %v4828
      %v4831 = vsel %vm792, %v4823, %v4830
      %v4833 = vshrl.u32 %v4739, 16
      %v4835 = vrot.slane %v4833, 7
      %v4836 = vrot.slane %v4835, 4
      %v4838 = vshrl.u32 %v4740, 16
      %v4840 = vrot.slane %v4838, 7
      %v4841 = vshll.u32 %v4740, 16
      %v4843 = vor.u32 %v4840, %v4841
      %v4844 = vsel %vm792, %v4836, %v4843
      %4845 = vrot.lane.b32.xlu0 %v4753, 24
      %v4846 = vpop.permute.xlu0 %4845
      %4847 = vrot.lane.b32.xlu0 %v4766, 24
      %v4848 = vpop.permute.xlu0 %4847
      %4849 = vrot.lane.b32.xlu0 %v4779, 24
      %v4850 = vpop.permute.xlu0 %4849
      %4851 = vrot.lane.b32.xlu0 %v4792, 24
      %v4852 = vpop.permute.xlu0 %4851
      %4853 = vrot.lane.b32.xlu0 %v4805, 24
      %v4854 = vpop.permute.xlu0 %4853
      %4855 = vrot.lane.b32.xlu0 %v4818, 24
      %v4856 = vpop.permute.xlu0 %4855
      %4857 = vrot.lane.b32.xlu0 %v4831, 24
      %v4858 = vpop.permute.xlu0 %4857
      %4859 = vrot.lane.b32.xlu0 %v4844, 24
      %v4860 = vpop.permute.xlu0 %4859
      %4869 = vst.msk [vmem:[#allocation4] sm:$0xf] %vm1634, %v4846
      %4870 = vst.msk [vmem:[#allocation4 + $0x4] sm:$0xf] %vm1634, %v4848
      %4871 = vst.msk [vmem:[#allocation4 + $0x8] sm:$0xf] %vm1634, %v4850
      %4872 = vst.msk [vmem:[#allocation4 + $0xc] sm:$0xf] %vm1634, %v4852
      %4873 = vst.msk [vmem:[#allocation4 + $0x10] sm:$0xf] %vm1634, %v4854
      %4874 = vst.msk [vmem:[#allocation4 + $0x14] sm:$0xf] %vm1634, %v4856
      %4875 = vst.msk [vmem:[#allocation4 + $0x18] sm:$0xf] %vm1634, %v4858
      %4876 = vst.msk [vmem:[#allocation4 + $0x1c] sm:$0xf] %vm1634, %v4860
      %v4877 = vld [vmem:[%s1489 + $0x4] sm:$0xf]
      %v4878 = vld [vmem:[%s1489 + $0x10] sm:$0xf]
      %v4879 = vld [vmem:[%s1489 + $0x1c] sm:$0xf]
      %v4880 = vld [vmem:[%s1489 + $0x28] sm:$0xf]
      %v4881 = vld [vmem:[%s1489 + $0x34] sm:$0xf]
      %v4882 = vld [vmem:[%s1489 + $0x40] sm:$0xf]
      %v4883 = vld [vmem:[%s1489 + $0x4c] sm:$0xf]
      %v4884 = vld [vmem:[%s1489 + $0x58] sm:$0xf]
      %4893 = vrot.lane.b32.xlu0 %v4877, 28
      %v4894 = vpop.permute.xlu0 %4893
      %4895 = vrot.lane.b32.xlu0 %v4878, 28
      %v4896 = vpop.permute.xlu0 %4895
      %4897 = vrot.lane.b32.xlu0 %v4879, 28
      %v4898 = vpop.permute.xlu0 %4897
      %4899 = vrot.lane.b32.xlu0 %v4880, 28
      %v4900 = vpop.permute.xlu0 %4899
      %4901 = vrot.lane.b32.xlu0 %v4881, 28
      %v4902 = vpop.permute.xlu0 %4901
      %4903 = vrot.lane.b32.xlu0 %v4882, 28
      %v4904 = vpop.permute.xlu0 %4903
      %4905 = vrot.lane.b32.xlu0 %v4883, 28
      %v4906 = vpop.permute.xlu0 %4905
      %4907 = vrot.lane.b32.xlu0 %v4884, 28
      %v4908 = vpop.permute.xlu0 %4907
      %4917 = vst.msk [vmem:[#allocation4] sm:$0xf] %vm1683, %v4894
      %4918 = vst.msk [vmem:[#allocation4 + $0x4] sm:$0xf] %vm1683, %v4896
      %4919 = vst.msk [vmem:[#allocation4 + $0x8] sm:$0xf] %vm1683, %v4898
      %4920 = vst.msk [vmem:[#allocation4 + $0xc] sm:$0xf] %vm1683, %v4900
      %4921 = vst.msk [vmem:[#allocation4 + $0x10] sm:$0xf] %vm1683, %v4902
      %4922 = vst.msk [vmem:[#allocation4 + $0x14] sm:$0xf] %vm1683, %v4904
      %4923 = vst.msk [vmem:[#allocation4 + $0x18] sm:$0xf] %vm1683, %v4906
      %4924 = vst.msk [vmem:[#allocation4 + $0x1c] sm:$0xf] %vm1683, %v4908
      %v4925 = vld [vmem:[%s1489 + $0x4] sm:$0xf]
      %v4926 = vld [vmem:[%s1489 + $0x8] sm:$0x1]
      %v4927 = vld [vmem:[%s1489 + $0x10] sm:$0xf]
      %v4928 = vld [vmem:[%s1489 + $0x14] sm:$0x1]
      %v4929 = vld [vmem:[%s1489 + $0x1c] sm:$0xf]
      %v4930 = vld [vmem:[%s1489 + $0x20] sm:$0x1]
      %v4931 = vld [vmem:[%s1489 + $0x28] sm:$0xf]
      %v4932 = vld [vmem:[%s1489 + $0x2c] sm:$0x1]
      %v4933 = vld [vmem:[%s1489 + $0x34] sm:$0xf]
      %v4934 = vld [vmem:[%s1489 + $0x38] sm:$0x1]
      %v4935 = vld [vmem:[%s1489 + $0x40] sm:$0xf]
      %v4936 = vld [vmem:[%s1489 + $0x44] sm:$0x1]
      %v4937 = vld [vmem:[%s1489 + $0x4c] sm:$0xf]
      %v4938 = vld [vmem:[%s1489 + $0x50] sm:$0x1]
      %v4939 = vld [vmem:[%s1489 + $0x58] sm:$0xf]
      %v4940 = vld [vmem:[%s1489 + $0x5c] sm:$0x1]
      %v4942 = vshrl.u32 %v4925, 16
      %v4944 = vrot.slane %v4942, 4
      %v4945 = vshll.u32 %v4925, 16
      %v4947 = vrot.slane %v4945, 5
      %v4948 = vor.u32 %v4944, %v4947
      %v4949 = vrot.slane %v4948, 4
      %v4951 = vshll.u32 %v4926, 16
      %v4953 = vrot.slane %v4951, 5
      %v4954 = vsel %vm980, %v4949, %v4953
      %v4956 = vshrl.u32 %v4927, 16
      %v4958 = vrot.slane %v4956, 4
      %v4959 = vshll.u32 %v4927, 16
      %v4961 = vrot.slane %v4959, 5
      %v4962 = vor.u32 %v4958, %v4961
      %v4963 = vrot.slane %v4962, 4
      %v4965 = vshll.u32 %v4928, 16
      %v4967 = vrot.slane %v4965, 5
      %v4968 = vsel %vm980, %v4963, %v4967
      %v4970 = vshrl.u32 %v4929, 16
      %v4972 = vrot.slane %v4970, 4
      %v4973 = vshll.u32 %v4929, 16
      %v4975 = vrot.slane %v4973, 5
      %v4976 = vor.u32 %v4972, %v4975
      %v4977 = vrot.slane %v4976, 4
      %v4979 = vshll.u32 %v4930, 16
      %v4981 = vrot.slane %v4979, 5
      %v4982 = vsel %vm980, %v4977, %v4981
      %v4984 = vshrl.u32 %v4931, 16
      %v4986 = vrot.slane %v4984, 4
      %v4987 = vshll.u32 %v4931, 16
      %v4989 = vrot.slane %v4987, 5
      %v4990 = vor.u32 %v4986, %v4989
      %v4991 = vrot.slane %v4990, 4
      %v4993 = vshll.u32 %v4932, 16
      %v4995 = vrot.slane %v4993, 5
      %v4996 = vsel %vm980, %v4991, %v4995
      %v4998 = vshrl.u32 %v4933, 16
      %v5000 = vrot.slane %v4998, 4
      %v5001 = vshll.u32 %v4933, 16
      %v5003 = vrot.slane %v5001, 5
      %v5004 = vor.u32 %v5000, %v5003
      %v5005 = vrot.slane %v5004, 4
      %v5007 = vshll.u32 %v4934, 16
      %v5009 = vrot.slane %v5007, 5
      %v5010 = vsel %vm980, %v5005, %v5009
      %v5012 = vshrl.u32 %v4935, 16
      %v5014 = vrot.slane %v5012, 4
      %v5015 = vshll.u32 %v4935, 16
      %v5017 = vrot.slane %v5015, 5
      %v5018 = vor.u32 %v5014, %v5017
      %v5019 = vrot.slane %v5018, 4
      %v5021 = vshll.u32 %v4936, 16
      %v5023 = vrot.slane %v5021, 5
      %v5024 = vsel %vm980, %v5019, %v5023
      %v5026 = vshrl.u32 %v4937, 16
      %v5028 = vrot.slane %v5026, 4
      %v5029 = vshll.u32 %v4937, 16
      %v5031 = vrot.slane %v5029, 5
      %v5032 = vor.u32 %v5028, %v5031
      %v5033 = vrot.slane %v5032, 4
      %v5035 = vshll.u32 %v4938, 16
      %v5037 = vrot.slane %v5035, 5
      %v5038 = vsel %vm980, %v5033, %v5037
      %v5040 = vshrl.u32 %v4939, 16
      %v5042 = vrot.slane %v5040, 4
      %v5043 = vshll.u32 %v4939, 16
      %v5045 = vrot.slane %v5043, 5
      %v5046 = vor.u32 %v5042, %v5045
      %v5047 = vrot.slane %v5046, 4
      %v5049 = vshll.u32 %v4940, 16
      %v5051 = vrot.slane %v5049, 5
      %v5052 = vsel %vm980, %v5047, %v5051
      %5053 = vrot.lane.b32.xlu0 %v4954, 32
      %v5054 = vpop.permute.xlu0 %5053
      %5055 = vrot.lane.b32.xlu0 %v4968, 32
      %v5056 = vpop.permute.xlu0 %5055
      %5057 = vrot.lane.b32.xlu0 %v4982, 32
      %v5058 = vpop.permute.xlu0 %5057
      %5059 = vrot.lane.b32.xlu0 %v4996, 32
      %v5060 = vpop.permute.xlu0 %5059
      %5061 = vrot.lane.b32.xlu0 %v5010, 32
      %v5062 = vpop.permute.xlu0 %5061
      %5063 = vrot.lane.b32.xlu0 %v5024, 32
      %v5064 = vpop.permute.xlu0 %5063
      %5065 = vrot.lane.b32.xlu0 %v5038, 32
      %v5066 = vpop.permute.xlu0 %5065
      %5067 = vrot.lane.b32.xlu0 %v5052, 32
      %v5068 = vpop.permute.xlu0 %5067
      %5077 = vst.msk [vmem:[#allocation4] sm:$0xf] %vm1844, %v5054
      %5078 = vst.msk [vmem:[#allocation4 + $0x4] sm:$0xf] %vm1844, %v5056
      %5079 = vst.msk [vmem:[#allocation4 + $0x8] sm:$0xf] %vm1844, %v5058
      %5080 = vst.msk [vmem:[#allocation4 + $0xc] sm:$0xf] %vm1844, %v5060
      %5081 = vst.msk [vmem:[#allocation4 + $0x10] sm:$0xf] %vm1844, %v5062
      %5082 = vst.msk [vmem:[#allocation4 + $0x14] sm:$0xf] %vm1844, %v5064
      %5083 = vst.msk [vmem:[#allocation4 + $0x18] sm:$0xf] %vm1844, %v5066
      %5084 = vst.msk [vmem:[#allocation4 + $0x1c] sm:$0xf] %vm1844, %v5068
      %v5085 = vld [vmem:[#allocation4] sm:$0xf]
      %v5086 = vld [vmem:[#allocation4 + $0x4] sm:$0xf]
      %v5087 = vld [vmem:[#allocation4 + $0x8] sm:$0xf]
      %v5088 = vld [vmem:[#allocation4 + $0xc] sm:$0xf]
      %v5089 = vld [vmem:[#allocation4 + $0x10] sm:$0xf]
      %v5090 = vld [vmem:[#allocation4 + $0x14] sm:$0xf]
      %v5091 = vld [vmem:[#allocation4 + $0x18] sm:$0xf]
      %v5092 = vld [vmem:[#allocation4 + $0x1c] sm:$0xf]
      %v5093 = vld [vmem:[%s7] sm:$0xf]
      %v5094 = vld [vmem:[%s7 + $0x4] sm:$0xf]
      %v5095 = vld [vmem:[%s7 + $0x8] sm:$0xf]
      %v5096 = vld [vmem:[%s7 + $0xc] sm:$0xf]
      %v5097 = vld [vmem:[%s7 + $0x10] sm:$0x3]
      %v5106 = vunpack.c.l.b16 %v5085
      %v5107 = vunpack.c.l.b16 %v5086
      %v5108 = vunpack.c.l.b16 %v5087
      %v5109 = vunpack.c.l.b16 %v5088
      %v5110 = vunpack.c.l.b16 %v5089
      %v5111 = vunpack.c.l.b16 %v5090
      %v5112 = vunpack.c.l.b16 %v5091
      %v5113 = vunpack.c.l.b16 %v5092
      %v5114 = vpack.c.b16 %v5107, %v5106
      %v5115 = vpack.c.b16 %v5109, %v5108
      %v5116 = vpack.c.b16 %v5111, %v5110
      %v5117 = vpack.c.b16 %v5113, %v5112
      %v5123 = vunpack.c.l.b16 %v5093
      %v5124 = vunpack.c.l.b16 %v5094
      %v5125 = vunpack.c.l.b16 %v5095
      %v5126 = vunpack.c.l.b16 %v5096
      %v5127 = vunpack.c.l.b16 %v5097
      %v5128 = vpack.c.b16 %v5124, %v5123
      %v5129 = vpack.c.b16 %v5126, %v5125
      %v5130 = vpack.c.b16 %v5127, %v5127
      %v5134 = vsel %vm1901, %v5114, 0
      %v5137 = vsel %vm1901, %v5115, 0
      %v5140 = vsel %vm1901, %v5116, 0
      %v5143 = vsel %vm1901, %v5117, 0
      %v5146 = vsel %vm1914, %v5130, 0
      %5148 = vmatpush.bf16.msra.mxu0 0
      %5149 = vmatpush.bf16.msra.mxu0 0
      %5150 = vmatpush.bf16.msra.mxu0 0
      %5151 = vmatpush.bf16.msra.mxu0 0
      %5152 = vmatpush.bf16.msra.mxu0 0
      %5153 = vmatpush.bf16.msra.mxu0 %v5146
      %5154 = vmatpush.bf16.msra.mxu0 %v5129
      %5155 = vmatpush.bf16.msra.mxu0 %v5128
      %5156 = vmatmul.bf16.gmra.mxu0 %v5134
      %v5157 = vpop.f32.mrf.mxu0
      %v5158 = vadd.f32 0.0, %v5157
      %v5159 = vpop.f32.mrf.mxu0
      %v5160 = vadd.f32 0.0, %v5159
      %5161 = vmatmul.bf16.gmra.mxu0 %v5137
      %v5162 = vpop.f32.mrf.mxu0
      %v5163 = vadd.f32 0.0, %v5162
      %v5164 = vpop.f32.mrf.mxu0
      %v5165 = vadd.f32 0.0, %v5164
      %5166 = vmatmul.bf16.gmra.mxu0 %v5140
      %v5167 = vpop.f32.mrf.mxu0
      %v5168 = vadd.f32 0.0, %v5167
      %v5169 = vpop.f32.mrf.mxu0
      %v5170 = vadd.f32 0.0, %v5169
      %5171 = vmatmul.bf16.gmra.mxu0 %v5143
      %v5172 = vpop.f32.mrf.mxu0
      %v5173 = vadd.f32 0.0, %v5172
      %v5174 = vpop.f32.mrf.mxu0
      %v5175 = vadd.f32 0.0, %v5174
      %5176 = vdwg.mxu0
      %vm5177 = vcmask 64512
      %v5178 = vsel %vm5177, %v5158, 0.0
      %v5179 = vsel %vm5177, %v5160, 0.0
      %v5180 = vadd.f32 %v5178, %v5179
      %v5181 = vsel %vm5177, %v5163, 0.0
      %v5182 = vadd.f32 %v5180, %v5181
      %v5183 = vsel %vm5177, %v5165, 0.0
      %v5184 = vadd.f32 %v5182, %v5183
      %v5185 = vsel %vm5177, %v5168, 0.0
      %v5186 = vadd.f32 %v5184, %v5185
      %v5187 = vsel %vm5177, %v5170, 0.0
      %v5188 = vadd.f32 %v5186, %v5187
      %v5189 = vsel %vm5177, %v5173, 0.0
      %v5190 = vadd.f32 %v5188, %v5189
      %v5191 = vsel %vm5177, %v5175, 0.0
      %v5192 = vadd.f32 %v5190, %v5191
      %5193 = vadd.xlane.f32.xlu0 %v5192
      %v5194 = vpop.xlane.xlu0 %5193
      %v5195 = vrot.slane %v5194, 4
      %v5196 = vadd.f32 %v5194, %v5195
      %v5197 = vrot.slane %v5196, 2
      %v5198 = vadd.f32 %v5196, %v5197
      %v5199 = vrot.slane %v5198, 1
      %v5200 = vadd.f32 %v5198, %v5199
      %v5201 = vrcp.pop 512.0
      %v5202 = vmul.f32 512.0, %v5201
      %v5203 = vsub.f32 1.0, %v5202
      %v5204 = vmul.f32 %v5201, %v5203
      %v5205 = vadd.f32 %v5201, %v5204
      %vm5206 = vweird.f32 %v5201
      %v5207 = vsel %vm5206, %v5201, %v5205
      %v5208 = vmul.f32 %v5200, %v5207
      %v5209 = vsub.f32 %v5158, %v5208
      %v5210 = vsub.f32 %v5160, %v5208
      %v5211 = vsub.f32 %v5163, %v5208
      %v5212 = vsub.f32 %v5165, %v5208
      %v5213 = vsub.f32 %v5168, %v5208
      %v5214 = vsub.f32 %v5170, %v5208
      %v5215 = vsub.f32 %v5173, %v5208
      %v5216 = vsub.f32 %v5175, %v5208
      %v5217 = vmul.f32 %v5209, %v5209
      %v5218 = vmul.f32 %v5210, %v5210
      %v5219 = vmul.f32 %v5211, %v5211
      %v5220 = vmul.f32 %v5212, %v5212
      %v5221 = vmul.f32 %v5213, %v5213
      %v5222 = vmul.f32 %v5214, %v5214
      %v5223 = vmul.f32 %v5215, %v5215
      %v5224 = vmul.f32 %v5216, %v5216
      %v5225 = vsel %vm5177, %v5217, 0.0
      %v5226 = vsel %vm5177, %v5218, 0.0
      %v5227 = vadd.f32 %v5225, %v5226
      %v5228 = vsel %vm5177, %v5219, 0.0
      %v5229 = vadd.f32 %v5227, %v5228
      %v5230 = vsel %vm5177, %v5220, 0.0
      %v5231 = vadd.f32 %v5229, %v5230
      %v5232 = vsel %vm5177, %v5221, 0.0
      %v5233 = vadd.f32 %v5231, %v5232
      %v5234 = vsel %vm5177, %v5222, 0.0
      %v5235 = vadd.f32 %v5233, %v5234
      %v5236 = vsel %vm5177, %v5223, 0.0
      %v5237 = vadd.f32 %v5235, %v5236
      %v5238 = vsel %vm5177, %v5224, 0.0
      %v5239 = vadd.f32 %v5237, %v5238
      %5240 = vadd.xlane.f32.xlu0 %v5239
      %v5241 = vpop.xlane.xlu0 %5240
      %v5242 = vrot.slane %v5241, 4
      %v5243 = vadd.f32 %v5241, %v5242
      %v5244 = vrot.slane %v5243, 2
      %v5245 = vadd.f32 %v5243, %v5244
      %v5246 = vrot.slane %v5245, 1
      %v5247 = vadd.f32 %v5245, %v5246
      %v5248 = vmul.f32 %v5247, %v5207
      %v5249 = vadd.f32 %v5248, 1e-05
      %v5250 = vrsqrt.pop %v5249
      %v5251 = vmul.f32 %v5250, %v5249
      %v5252 = vmul.f32 %v5251, %v5250
      %v5253 = vmul.f32 0.5, %v5252
      %v5254 = vsub.f32 1.5, %v5253
      %v5255 = vmul.f32 %v5250, %v5254
      %vm5256 = vweird.f32 %v5249
      %vm5257 = vweird.f32 %v5250
      %vm5258 = vmor %vm5256, %vm5257
      %v5259 = vsel %vm5258, %v5250, %v5255
      %v5260 = vmul.f32 %v5209, %v5259
      %v5261 = vmul.f32 %v5210, %v5259
      %v5262 = vmul.f32 %v5211, %v5259
      %v5263 = vmul.f32 %v5212, %v5259
      %v5264 = vmul.f32 %v5213, %v5259
      %v5265 = vmul.f32 %v5214, %v5259
      %v5266 = vmul.f32 %v5215, %v5259
      %v5267 = vmul.f32 %v5216, %v5259
      %v5268 = vld [vmem:[%s8] sm:$0x1]
      %v5270 = vperm.slane %v5268, 0
      %v5272 = vmul.f32 %v5260, %v5270
      %v5273 = vmul.f32 %v5261, %v5270
      %v5274 = vmul.f32 %v5262, %v5270
      %v5275 = vmul.f32 %v5263, %v5270
      %v5276 = vmul.f32 %v5264, %v5270
      %v5277 = vmul.f32 %v5265, %v5270
      %v5278 = vmul.f32 %v5266, %v5270
      %v5279 = vmul.f32 %v5267, %v5270
      %v5280 = vld [vmem:[%s9] sm:$0x1]
      %v5282 = vperm.slane %v5280, 0
      %v5284 = vadd.f32 %v5272, %v5282
      %v5285 = vadd.f32 %v5273, %v5282
      %v5286 = vadd.f32 %v5274, %v5282
      %v5287 = vadd.f32 %v5275, %v5282
      %v5288 = vadd.f32 %v5276, %v5282
      %v5289 = vadd.f32 %v5277, %v5282
      %v5290 = vadd.f32 %v5278, %v5282
      %v5291 = vadd.f32 %v5279, %v5282
      %v5292 = vmul.f32 %v5284, 0.5
      %v5293 = vmul.f32 %v5285, 0.5
      %v5294 = vmul.f32 %v5286, 0.5
      %v5295 = vmul.f32 %v5287, 0.5
      %v5296 = vmul.f32 %v5288, 0.5
      %v5297 = vmul.f32 %v5289, 0.5
      %v5298 = vmul.f32 %v5290, 0.5
      %v5299 = vmul.f32 %v5291, 0.5
      %v5300 = vmul.f32 %v5284, 0.70710677
      %v5301 = vmul.f32 %v5285, 0.70710677
      %v5302 = vmul.f32 %v5286, 0.70710677
      %v5303 = vmul.f32 %v5287, 0.70710677
      %v5304 = vmul.f32 %v5288, 0.70710677
      %v5305 = vmul.f32 %v5289, 0.70710677
      %v5306 = vmul.f32 %v5290, 0.70710677
      %v5307 = vmul.f32 %v5291, 0.70710677
      %vm5308 = vcmp.ge.f32.partialorder %v5300, 0.0
      %vm5309 = vcmp.ge.f32.partialorder %v5301, 0.0
      %vm5310 = vcmp.ge.f32.partialorder %v5302, 0.0
      %vm5311 = vcmp.ge.f32.partialorder %v5303, 0.0
      %vm5312 = vcmp.ge.f32.partialorder %v5304, 0.0
      %vm5313 = vcmp.ge.f32.partialorder %v5305, 0.0
      %vm5314 = vcmp.ge.f32.partialorder %v5306, 0.0
      %vm5315 = vcmp.ge.f32.partialorder %v5307, 0.0
      %v5316 = vsub.f32 0.0, %v5300
      %v5317 = vsub.f32 0.0, %v5301
      %v5318 = vsub.f32 0.0, %v5302
      %v5319 = vsub.f32 0.0, %v5303
      %v5320 = vsub.f32 0.0, %v5304
      %v5321 = vsub.f32 0.0, %v5305
      %v5322 = vsub.f32 0.0, %v5306
      %v5323 = vsub.f32 0.0, %v5307
      %v5324 = vsel %vm5308, %v5300, %v5316
      %v5325 = vsel %vm5309, %v5301, %v5317
      %v5326 = vsel %vm5310, %v5302, %v5318
      %v5327 = vsel %vm5311, %v5303, %v5319
      %v5328 = vsel %vm5312, %v5304, %v5320
      %v5329 = vsel %vm5313, %v5305, %v5321
      %v5330 = vsel %vm5314, %v5306, %v5322
      %v5331 = vsel %vm5315, %v5307, %v5323
      %v5332 = vmul.f32 %v5324, 0.3275911
      %v5333 = vmul.f32 %v5325, 0.3275911
      %v5334 = vmul.f32 %v5326, 0.3275911
      %v5335 = vmul.f32 %v5327, 0.3275911
      %v5336 = vmul.f32 %v5328, 0.3275911
      %v5337 = vmul.f32 %v5329, 0.3275911
      %v5338 = vmul.f32 %v5330, 0.3275911
      %v5339 = vmul.f32 %v5331, 0.3275911
      %v5340 = vadd.f32 %v5332, 1.0
      %v5341 = vadd.f32 %v5333, 1.0
      %v5342 = vadd.f32 %v5334, 1.0
      %v5343 = vadd.f32 %v5335, 1.0
      %v5344 = vadd.f32 %v5336, 1.0
      %v5345 = vadd.f32 %v5337, 1.0
      %v5346 = vadd.f32 %v5338, 1.0
      %v5347 = vadd.f32 %v5339, 1.0
      %v5348 = vrcp.pop %v5340
      %v5349 = vmul.f32 %v5340, %v5348
      %v5350 = vsub.f32 1.0, %v5349
      %v5351 = vmul.f32 %v5348, %v5350
      %v5352 = vadd.f32 %v5348, %v5351
      %vm5353 = vweird.f32 %v5340
      %vm5354 = vweird.f32 %v5348
      %vm5355 = vmor %vm5353, %vm5354
      %v5356 = vsel %vm5355, %v5348, %v5352
      %v5357 = vand.u32 2147483647, %v5340
      %vm5358 = vcmp.eq.f32.partialorder %v5357, 8.507059e+37
      %v5359 = vand.u32 %v5340, 2147483648
      %v5360 = vor.u32 1.1754944e-38, %v5359
      %v5361 = vsel %vm5358, %v5360, %v5356
      %v5362 = vmul.f32 1.0, %v5361
      %v5363 = vrcp.pop %v5341
      %v5364 = vmul.f32 %v5341, %v5363
      %v5365 = vsub.f32 1.0, %v5364
      %v5366 = vmul.f32 %v5363, %v5365
      %v5367 = vadd.f32 %v5363, %v5366
      %vm5368 = vweird.f32 %v5341
      %vm5369 = vweird.f32 %v5363
      %vm5370 = vmor %vm5368, %vm5369
      %v5371 = vsel %vm5370, %v5363, %v5367
      %v5372 = vand.u32 2147483647, %v5341
      %vm5373 = vcmp.eq.f32.partialorder %v5372, 8.507059e+37
      %v5374 = vand.u32 %v5341, 2147483648
      %v5375 = vor.u32 1.1754944e-38, %v5374
      %v5376 = vsel %vm5373, %v5375, %v5371
      %v5377 = vmul.f32 1.0, %v5376
      %v5378 = vrcp.pop %v5342
      %v5379 = vmul.f32 %v5342, %v5378
      %v5380 = vsub.f32 1.0, %v5379
      %v5381 = vmul.f32 %v5378, %v5380
      %v5382 = vadd.f32 %v5378, %v5381
      %vm5383 = vweird.f32 %v5342
      %vm5384 = vweird.f32 %v5378
      %vm5385 = vmor %vm5383, %vm5384
      %v5386 = vsel %vm5385, %v5378, %v5382
      %v5387 = vand.u32 2147483647, %v5342
      %vm5388 = vcmp.eq.f32.partialorder %v5387, 8.507059e+37
      %v5389 = vand.u32 %v5342, 2147483648
      %v5390 = vor.u32 1.1754944e-38, %v5389
      %v5391 = vsel %vm5388, %v5390, %v5386
      %v5392 = vmul.f32 1.0, %v5391
      %v5393 = vrcp.pop %v5343
      %v5394 = vmul.f32 %v5343, %v5393
      %v5395 = vsub.f32 1.0, %v5394
      %v5396 = vmul.f32 %v5393, %v5395
      %v5397 = vadd.f32 %v5393, %v5396
      %vm5398 = vweird.f32 %v5343
      %vm5399 = vweird.f32 %v5393
      %vm5400 = vmor %vm5398, %vm5399
      %v5401 = vsel %vm5400, %v5393, %v5397
      %v5402 = vand.u32 2147483647, %v5343
      %vm5403 = vcmp.eq.f32.partialorder %v5402, 8.507059e+37
      %v5404 = vand.u32 %v5343, 2147483648
      %v5405 = vor.u32 1.1754944e-38, %v5404
      %v5406 = vsel %vm5403, %v5405, %v5401
      %v5407 = vmul.f32 1.0, %v5406
      %v5408 = vrcp.pop %v5344
      %v5409 = vmul.f32 %v5344, %v5408
      %v5410 = vsub.f32 1.0, %v5409
      %v5411 = vmul.f32 %v5408, %v5410
      %v5412 = vadd.f32 %v5408, %v5411
      %vm5413 = vweird.f32 %v5344
      %vm5414 = vweird.f32 %v5408
      %vm5415 = vmor %vm5413, %vm5414
      %v5416 = vsel %vm5415, %v5408, %v5412
      %v5417 = vand.u32 2147483647, %v5344
      %vm5418 = vcmp.eq.f32.partialorder %v5417, 8.507059e+37
      %v5419 = vand.u32 %v5344, 2147483648
      %v5420 = vor.u32 1.1754944e-38, %v5419
      %v5421 = vsel %vm5418, %v5420, %v5416
      %v5422 = vmul.f32 1.0, %v5421
      %v5423 = vrcp.pop %v5345
      %v5424 = vmul.f32 %v5345, %v5423
      %v5425 = vsub.f32 1.0, %v5424
      %v5426 = vmul.f32 %v5423, %v5425
      %v5427 = vadd.f32 %v5423, %v5426
      %vm5428 = vweird.f32 %v5345
      %vm5429 = vweird.f32 %v5423
      %vm5430 = vmor %vm5428, %vm5429
      %v5431 = vsel %vm5430, %v5423, %v5427
      %v5432 = vand.u32 2147483647, %v5345
      %vm5433 = vcmp.eq.f32.partialorder %v5432, 8.507059e+37
      %v5434 = vand.u32 %v5345, 2147483648
      %v5435 = vor.u32 1.1754944e-38, %v5434
      %v5436 = vsel %vm5433, %v5435, %v5431
      %v5437 = vmul.f32 1.0, %v5436
      %v5438 = vrcp.pop %v5346
      %v5439 = vmul.f32 %v5346, %v5438
      %v5440 = vsub.f32 1.0, %v5439
      %v5441 = vmul.f32 %v5438, %v5440
      %v5442 = vadd.f32 %v5438, %v5441
      %vm5443 = vweird.f32 %v5346
      %vm5444 = vweird.f32 %v5438
      %vm5445 = vmor %vm5443, %vm5444
      %v5446 = vsel %vm5445, %v5438, %v5442
      %v5447 = vand.u32 2147483647, %v5346
      %vm5448 = vcmp.eq.f32.partialorder %v5447, 8.507059e+37
      %v5449 = vand.u32 %v5346, 2147483648
      %v5450 = vor.u32 1.1754944e-38, %v5449
      %v5451 = vsel %vm5448, %v5450, %v5446
      %v5452 = vmul.f32 1.0, %v5451
      %v5453 = vrcp.pop %v5347
      %v5454 = vmul.f32 %v5347, %v5453
      %v5455 = vsub.f32 1.0, %v5454
      %v5456 = vmul.f32 %v5453, %v5455
      %v5457 = vadd.f32 %v5453, %v5456
      %vm5458 = vweird.f32 %v5347
      %vm5459 = vweird.f32 %v5453
      %vm5460 = vmor %vm5458, %vm5459
      %v5461 = vsel %vm5460, %v5453, %v5457
      %v5462 = vand.u32 2147483647, %v5347
      %vm5463 = vcmp.eq.f32.partialorder %v5462, 8.507059e+37
      %v5464 = vand.u32 %v5347, 2147483648
      %v5465 = vor.u32 1.1754944e-38, %v5464
      %v5466 = vsel %vm5463, %v5465, %v5461
      %v5467 = vmul.f32 1.0, %v5466
      %v5468 = vmul.f32 %v5362, 1.0614054
      %v5469 = vmul.f32 %v5377, 1.0614054
      %v5470 = vmul.f32 %v5392, 1.0614054
      %v5471 = vmul.f32 %v5407, 1.0614054
      %v5472 = vmul.f32 %v5422, 1.0614054
      %v5473 = vmul.f32 %v5437, 1.0614054
      %v5474 = vmul.f32 %v5452, 1.0614054
      %v5475 = vmul.f32 %v5467, 1.0614054
      %v5476 = vadd.f32 %v5468, -1.4531521
      %v5477 = vadd.f32 %v5469, -1.4531521
      %v5478 = vadd.f32 %v5470, -1.4531521
      %v5479 = vadd.f32 %v5471, -1.4531521
      %v5480 = vadd.f32 %v5472, -1.4531521
      %v5481 = vadd.f32 %v5473, -1.4531521
      %v5482 = vadd.f32 %v5474, -1.4531521
      %v5483 = vadd.f32 %v5475, -1.4531521
      %v5484 = vmul.f32 %v5476, %v5362
      %v5485 = vmul.f32 %v5477, %v5377
      %v5486 = vmul.f32 %v5478, %v5392
      %v5487 = vmul.f32 %v5479, %v5407
      %v5488 = vmul.f32 %v5480, %v5422
      %v5489 = vmul.f32 %v5481, %v5437
      %v5490 = vmul.f32 %v5482, %v5452
      %v5491 = vmul.f32 %v5483, %v5467
      %v5492 = vadd.f32 %v5484, 1.4214138
      %v5493 = vadd.f32 %v5485, 1.4214138
      %v5494 = vadd.f32 %v5486, 1.4214138
      %v5495 = vadd.f32 %v5487, 1.4214138
      %v5496 = vadd.f32 %v5488, 1.4214138
      %v5497 = vadd.f32 %v5489, 1.4214138
      %v5498 = vadd.f32 %v5490, 1.4214138
      %v5499 = vadd.f32 %v5491, 1.4214138
      %v5500 = vmul.f32 %v5492, %v5362
      %v5501 = vmul.f32 %v5493, %v5377
      %v5502 = vmul.f32 %v5494, %v5392
      %v5503 = vmul.f32 %v5495, %v5407
      %v5504 = vmul.f32 %v5496, %v5422
      %v5505 = vmul.f32 %v5497, %v5437
      %v5506 = vmul.f32 %v5498, %v5452
      %v5507 = vmul.f32 %v5499, %v5467
      %v5508 = vadd.f32 %v5500, -0.28449672
      %v5509 = vadd.f32 %v5501, -0.28449672
      %v5510 = vadd.f32 %v5502, -0.28449672
      %v5511 = vadd.f32 %v5503, -0.28449672
      %v5512 = vadd.f32 %v5504, -0.28449672
      %v5513 = vadd.f32 %v5505, -0.28449672
      %v5514 = vadd.f32 %v5506, -0.28449672
      %v5515 = vadd.f32 %v5507, -0.28449672
      %v5516 = vmul.f32 %v5508, %v5362
      %v5517 = vmul.f32 %v5509, %v5377
      %v5518 = vmul.f32 %v5510, %v5392
      %v5519 = vmul.f32 %v5511, %v5407
      %v5520 = vmul.f32 %v5512, %v5422
      %v5521 = vmul.f32 %v5513, %v5437
      %v5522 = vmul.f32 %v5514, %v5452
      %v5523 = vmul.f32 %v5515, %v5467
      %v5524 = vadd.f32 %v5516, 0.2548296
      %v5525 = vadd.f32 %v5517, 0.2548296
      %v5526 = vadd.f32 %v5518, 0.2548296
      %v5527 = vadd.f32 %v5519, 0.2548296
      %v5528 = vadd.f32 %v5520, 0.2548296
      %v5529 = vadd.f32 %v5521, 0.2548296
      %v5530 = vadd.f32 %v5522, 0.2548296
      %v5531 = vadd.f32 %v5523, 0.2548296
      %v5532 = vmul.f32 %v5524, %v5362
      %v5533 = vmul.f32 %v5525, %v5377
      %v5534 = vmul.f32 %v5526, %v5392
      %v5535 = vmul.f32 %v5527, %v5407
      %v5536 = vmul.f32 %v5528, %v5422
      %v5537 = vmul.f32 %v5529, %v5437
      %v5538 = vmul.f32 %v5530, %v5452
      %v5539 = vmul.f32 %v5531, %v5467
      %v5540 = vsub.f32 0.0, %v5324
      %v5541 = vsub.f32 0.0, %v5325
      %v5542 = vsub.f32 0.0, %v5326
      %v5543 = vsub.f32 0.0, %v5327
      %v5544 = vsub.f32 0.0, %v5328
      %v5545 = vsub.f32 0.0, %v5329
      %v5546 = vsub.f32 0.0, %v5330
      %v5547 = vsub.f32 0.0, %v5331
      %v5548 = vmul.f32 %v5540, %v5324
      %v5549 = vmul.f32 %v5541, %v5325
      %v5550 = vmul.f32 %v5542, %v5326
      %v5551 = vmul.f32 %v5543, %v5327
      %v5552 = vmul.f32 %v5544, %v5328
      %v5553 = vmul.f32 %v5545, %v5329
      %v5554 = vmul.f32 %v5546, %v5330
      %v5555 = vmul.f32 %v5547, %v5331
      %v5556 = vmul.f32 %v5548, 1.442695
      %v5557 = vpow.pop %v5556
      %v5558 = vmul.f32 %v5549, 1.442695
      %v5559 = vpow.pop %v5558
      %v5560 = vmul.f32 %v5550, 1.442695
      %v5561 = vpow.pop %v5560
      %v5562 = vmul.f32 %v5551, 1.442695
      %v5563 = vpow.pop %v5562
      %v5564 = vmul.f32 %v5552, 1.442695
      %v5565 = vpow.pop %v5564
      %v5566 = vmul.f32 %v5553, 1.442695
      %v5567 = vpow.pop %v5566
      %v5568 = vmul.f32 %v5554, 1.442695
      %v5569 = vpow.pop %v5568
      %v5570 = vmul.f32 %v5555, 1.442695
      %v5571 = vpow.pop %v5570
      %v5572 = vmul.f32 %v5532, %v5557
      %v5573 = vmul.f32 %v5533, %v5559
      %v5574 = vmul.f32 %v5534, %v5561
      %v5575 = vmul.f32 %v5535, %v5563
      %v5576 = vmul.f32 %v5536, %v5565
      %v5577 = vmul.f32 %v5537, %v5567
      %v5578 = vmul.f32 %v5538, %v5569
      %v5579 = vmul.f32 %v5539, %v5571
      %v5580 = vsub.f32 1.0, %v5572
      %v5581 = vsub.f32 1.0, %v5573
      %v5582 = vsub.f32 1.0, %v5574
      %v5583 = vsub.f32 1.0, %v5575
      %v5584 = vsub.f32 1.0, %v5576
      %v5585 = vsub.f32 1.0, %v5577
      %v5586 = vsub.f32 1.0, %v5578
      %v5587 = vsub.f32 1.0, %v5579
      %v5588 = vsub.f32 0.0, %v5580
      %v5589 = vsub.f32 0.0, %v5581
      %v5590 = vsub.f32 0.0, %v5582
      %v5591 = vsub.f32 0.0, %v5583
      %v5592 = vsub.f32 0.0, %v5584
      %v5593 = vsub.f32 0.0, %v5585
      %v5594 = vsub.f32 0.0, %v5586
      %v5595 = vsub.f32 0.0, %v5587
      %v5596 = vsel %vm5308, %v5580, %v5588
      %v5597 = vsel %vm5309, %v5581, %v5589
      %v5598 = vsel %vm5310, %v5582, %v5590
      %v5599 = vsel %vm5311, %v5583, %v5591
      %v5600 = vsel %vm5312, %v5584, %v5592
      %v5601 = vsel %vm5313, %v5585, %v5593
      %v5602 = vsel %vm5314, %v5586, %v5594
      %v5603 = vsel %vm5315, %v5587, %v5595
      %v5604 = vadd.f32 %v5596, 1.0
      %v5605 = vadd.f32 %v5597, 1.0
      %v5606 = vadd.f32 %v5598, 1.0
      %v5607 = vadd.f32 %v5599, 1.0
      %v5608 = vadd.f32 %v5600, 1.0
      %v5609 = vadd.f32 %v5601, 1.0
      %v5610 = vadd.f32 %v5602, 1.0
      %v5611 = vadd.f32 %v5603, 1.0
      %v5612 = vmul.f32 %v5292, %v5604
      %v5613 = vmul.f32 %v5293, %v5605
      %v5614 = vmul.f32 %v5294, %v5606
      %v5615 = vmul.f32 %v5295, %v5607
      %v5616 = vmul.f32 %v5296, %v5608
      %v5617 = vmul.f32 %v5297, %v5609
      %v5618 = vmul.f32 %v5298, %v5610
      %v5619 = vmul.f32 %v5299, %v5611
      %v5620 = vpack.c.bf16 %v5612, %v5612
      %v5621 = vpack.c.bf16 %v5613, %v5613
      %v5622 = vpack.c.bf16 %v5614, %v5614
      %v5623 = vpack.c.bf16 %v5615, %v5615
      %v5624 = vpack.c.bf16 %v5616, %v5616
      %v5625 = vpack.c.bf16 %v5617, %v5617
      %v5626 = vpack.c.bf16 %v5618, %v5618
      %v5627 = vpack.c.bf16 %v5619, %v5619
      %s5628 = scalar_lea.vmem [#allocation3], 12
      %5629 = vst.msk [vmem:[%s5628 + $0x4] sm:$0xf] %vm624, %v5620
      %5630 = vst.msk [vmem:[%s5628 + $0x10] sm:$0xf] %vm624, %v5621
      %5631 = vst.msk [vmem:[%s5628 + $0x1c] sm:$0xf] %vm624, %v5622
      %5632 = vst.msk [vmem:[%s5628 + $0x28] sm:$0xf] %vm624, %v5623
      %5633 = vst.msk [vmem:[%s5628 + $0x34] sm:$0xf] %vm624, %v5624
      %5634 = vst.msk [vmem:[%s5628 + $0x40] sm:$0xf] %vm624, %v5625
      %5635 = vst.msk [vmem:[%s5628 + $0x4c] sm:$0xf] %vm624, %v5626
      %5636 = vst.msk [vmem:[%s5628 + $0x58] sm:$0xf] %vm624, %v5627
      %v5637 = vld [vmem:[#allocation3] sm:$0x8]
      %v5638 = vld [vmem:[#allocation3 + $0x4] sm:$0xf]
      %v5639 = vld [vmem:[#allocation3 + $0xc] sm:$0x8]
      %v5640 = vld [vmem:[#allocation3 + $0x10] sm:$0xf]
      %v5641 = vld [vmem:[#allocation3 + $0x18] sm:$0x8]
      %v5642 = vld [vmem:[#allocation3 + $0x1c] sm:$0xf]
      %v5643 = vld [vmem:[#allocation3 + $0x24] sm:$0x8]
      %v5644 = vld [vmem:[#allocation3 + $0x28] sm:$0xf]
      %v5645 = vld [vmem:[#allocation3 + $0x30] sm:$0x8]
      %v5646 = vld [vmem:[#allocation3 + $0x34] sm:$0xf]
      %v5647 = vld [vmem:[#allocation3 + $0x3c] sm:$0x8]
      %v5648 = vld [vmem:[#allocation3 + $0x40] sm:$0xf]
      %v5649 = vld [vmem:[#allocation3 + $0x48] sm:$0x8]
      %v5650 = vld [vmem:[#allocation3 + $0x4c] sm:$0xf]
      %v5651 = vld [vmem:[#allocation3 + $0x54] sm:$0x8]
      %v5652 = vld [vmem:[#allocation3 + $0x58] sm:$0xf]
      %v5654 = vshrl.u32 %v5637, 16
      %v5656 = vrot.slane %v5654, 7
      %v5657 = vrot.slane %v5656, 4
      %v5659 = vshrl.u32 %v5638, 16
      %v5661 = vrot.slane %v5659, 7
      %v5662 = vshll.u32 %v5638, 16
      %v5664 = vor.u32 %v5661, %v5662
      %v5665 = vsel %vm792, %v5657, %v5664
      %v5667 = vshrl.u32 %v5639, 16
      %v5669 = vrot.slane %v5667, 7
      %v5670 = vrot.slane %v5669, 4
      %v5672 = vshrl.u32 %v5640, 16
      %v5674 = vrot.slane %v5672, 7
      %v5675 = vshll.u32 %v5640, 16
      %v5677 = vor.u32 %v5674, %v5675
      %v5678 = vsel %vm792, %v5670, %v5677
      %v5680 = vshrl.u32 %v5641, 16
      %v5682 = vrot.slane %v5680, 7
      %v5683 = vrot.slane %v5682, 4
      %v5685 = vshrl.u32 %v5642, 16
      %v5687 = vrot.slane %v5685, 7
      %v5688 = vshll.u32 %v5642, 16
      %v5690 = vor.u32 %v5687, %v5688
      %v5691 = vsel %vm792, %v5683, %v5690
      %v5693 = vshrl.u32 %v5643, 16
      %v5695 = vrot.slane %v5693, 7
      %v5696 = vrot.slane %v5695, 4
      %v5698 = vshrl.u32 %v5644, 16
      %v5700 = vrot.slane %v5698, 7
      %v5701 = vshll.u32 %v5644, 16
      %v5703 = vor.u32 %v5700, %v5701
      %v5704 = vsel %vm792, %v5696, %v5703
      %v5706 = vshrl.u32 %v5645, 16
      %v5708 = vrot.slane %v5706, 7
      %v5709 = vrot.slane %v5708, 4
      %v5711 = vshrl.u32 %v5646, 16
      %v5713 = vrot.slane %v5711, 7
      %v5714 = vshll.u32 %v5646, 16
      %v5716 = vor.u32 %v5713, %v5714
      %v5717 = vsel %vm792, %v5709, %v5716
      %v5719 = vshrl.u32 %v5647, 16
      %v5721 = vrot.slane %v5719, 7
      %v5722 = vrot.slane %v5721, 4
      %v5724 = vshrl.u32 %v5648, 16
      %v5726 = vrot.slane %v5724, 7
      %v5727 = vshll.u32 %v5648, 16
      %v5729 = vor.u32 %v5726, %v5727
      %v5730 = vsel %vm792, %v5722, %v5729
      %v5732 = vshrl.u32 %v5649, 16
      %v5734 = vrot.slane %v5732, 7
      %v5735 = vrot.slane %v5734, 4
      %v5737 = vshrl.u32 %v5650, 16
      %v5739 = vrot.slane %v5737, 7
      %v5740 = vshll.u32 %v5650, 16
      %v5742 = vor.u32 %v5739, %v5740
      %v5743 = vsel %vm792, %v5735, %v5742
      %v5745 = vshrl.u32 %v5651, 16
      %v5747 = vrot.slane %v5745, 7
      %v5748 = vrot.slane %v5747, 4
      %v5750 = vshrl.u32 %v5652, 16
      %v5752 = vrot.slane %v5750, 7
      %v5753 = vshll.u32 %v5652, 16
      %v5755 = vor.u32 %v5752, %v5753
      %v5756 = vsel %vm792, %v5748, %v5755
      %5765 = vst.msk [vmem:[#allocation5] sm:$0xf] %vm624, %v5665
      %5766 = vst.msk [vmem:[#allocation5 + $0x4] sm:$0xf] %vm624, %v5678
      %5767 = vst.msk [vmem:[#allocation5 + $0x8] sm:$0xf] %vm624, %v5691
      %5768 = vst.msk [vmem:[#allocation5 + $0xc] sm:$0xf] %vm624, %v5704
      %5769 = vst.msk [vmem:[#allocation5 + $0x10] sm:$0xf] %vm624, %v5717
      %5770 = vst.msk [vmem:[#allocation5 + $0x14] sm:$0xf] %vm624, %v5730
      %5771 = vst.msk [vmem:[#allocation5 + $0x18] sm:$0xf] %vm624, %v5743
      %5772 = vst.msk [vmem:[#allocation5 + $0x1c] sm:$0xf] %vm624, %v5756
      %v5773 = vld [vmem:[#allocation3 + $0x4] sm:$0xf]
      %v5774 = vld [vmem:[#allocation3 + $0x10] sm:$0xf]
      %v5775 = vld [vmem:[#allocation3 + $0x1c] sm:$0xf]
      %v5776 = vld [vmem:[#allocation3 + $0x28] sm:$0xf]
      %v5777 = vld [vmem:[#allocation3 + $0x34] sm:$0xf]
      %v5778 = vld [vmem:[#allocation3 + $0x40] sm:$0xf]
      %v5779 = vld [vmem:[#allocation3 + $0x4c] sm:$0xf]
      %v5780 = vld [vmem:[#allocation3 + $0x58] sm:$0xf]
      %5789 = vrot.lane.b32.xlu0 %v5773, 8
      %v5790 = vpop.permute.xlu0 %5789
      %5791 = vrot.lane.b32.xlu0 %v5774, 8
      %v5792 = vpop.permute.xlu0 %5791
      %5793 = vrot.lane.b32.xlu0 %v5775, 8
      %v5794 = vpop.permute.xlu0 %5793
      %5795 = vrot.lane.b32.xlu0 %v5776, 8
      %v5796 = vpop.permute.xlu0 %5795
      %5797 = vrot.lane.b32.xlu0 %v5777, 8
      %v5798 = vpop.permute.xlu0 %5797
      %5799 = vrot.lane.b32.xlu0 %v5778, 8
      %v5800 = vpop.permute.xlu0 %5799
      %5801 = vrot.lane.b32.xlu0 %v5779, 8
      %v5802 = vpop.permute.xlu0 %5801
      %5803 = vrot.lane.b32.xlu0 %v5780, 8
      %v5804 = vpop.permute.xlu0 %5803
      %vm5813 = vcmask 126016
      %5814 = vst.msk [vmem:[#allocation5] sm:$0xf] %vm5813, %v5790
      %5815 = vst.msk [vmem:[#allocation5 + $0x4] sm:$0xf] %vm5813, %v5792
      %5816 = vst.msk [vmem:[#allocation5 + $0x8] sm:$0xf] %vm5813, %v5794
      %5817 = vst.msk [vmem:[#allocation5 + $0xc] sm:$0xf] %vm5813, %v5796
      %5818 = vst.msk [vmem:[#allocation5 + $0x10] sm:$0xf] %vm5813, %v5798
      %5819 = vst.msk [vmem:[#allocation5 + $0x14] sm:$0xf] %vm5813, %v5800
      %5820 = vst.msk [vmem:[#allocation5 + $0x18] sm:$0xf] %vm5813, %v5802
      %5821 = vst.msk [vmem:[#allocation5 + $0x1c] sm:$0xf] %vm5813, %v5804
      %v5822 = vld [vmem:[#allocation3 + $0x4] sm:$0xf]
      %v5823 = vld [vmem:[#allocation3 + $0x8] sm:$0x1]
      %v5824 = vld [vmem:[#allocation3 + $0x10] sm:$0xf]
      %v5825 = vld [vmem:[#allocation3 + $0x14] sm:$0x1]
      %v5826 = vld [vmem:[#allocation3 + $0x1c] sm:$0xf]
      %v5827 = vld [vmem:[#allocation3 + $0x20] sm:$0x1]
      %v5828 = vld [vmem:[#allocation3 + $0x28] sm:$0xf]
      %v5829 = vld [vmem:[#allocation3 + $0x2c] sm:$0x1]
      %v5830 = vld [vmem:[#allocation3 + $0x34] sm:$0xf]
      %v5831 = vld [vmem:[#allocation3 + $0x38] sm:$0x1]
      %v5832 = vld [vmem:[#allocation3 + $0x40] sm:$0xf]
      %v5833 = vld [vmem:[#allocation3 + $0x44] sm:$0x1]
      %v5834 = vld [vmem:[#allocation3 + $0x4c] sm:$0xf]
      %v5835 = vld [vmem:[#allocation3 + $0x50] sm:$0x1]
      %v5836 = vld [vmem:[#allocation3 + $0x58] sm:$0xf]
      %v5837 = vld [vmem:[#allocation3 + $0x5c] sm:$0x1]
      %v5839 = vshrl.u32 %v5822, 16
      %v5841 = vrot.slane %v5839, 4
      %v5842 = vshll.u32 %v5822, 16
      %v5844 = vrot.slane %v5842, 5
      %v5845 = vor.u32 %v5841, %v5844
      %v5846 = vrot.slane %v5845, 4
      %v5848 = vshll.u32 %v5823, 16
      %v5850 = vrot.slane %v5848, 5
      %v5851 = vsel %vm980, %v5846, %v5850
      %v5853 = vshrl.u32 %v5824, 16
      %v5855 = vrot.slane %v5853, 4
      %v5856 = vshll.u32 %v5824, 16
      %v5858 = vrot.slane %v5856, 5
      %v5859 = vor.u32 %v5855, %v5858
      %v5860 = vrot.slane %v5859, 4
      %v5862 = vshll.u32 %v5825, 16
      %v5864 = vrot.slane %v5862, 5
      %v5865 = vsel %vm980, %v5860, %v5864
      %v5867 = vshrl.u32 %v5826, 16
      %v5869 = vrot.slane %v5867, 4
      %v5870 = vshll.u32 %v5826, 16
      %v5872 = vrot.slane %v5870, 5
      %v5873 = vor.u32 %v5869, %v5872
      %v5874 = vrot.slane %v5873, 4
      %v5876 = vshll.u32 %v5827, 16
      %v5878 = vrot.slane %v5876, 5
      %v5879 = vsel %vm980, %v5874, %v5878
      %v5881 = vshrl.u32 %v5828, 16
      %v5883 = vrot.slane %v5881, 4
      %v5884 = vshll.u32 %v5828, 16
      %v5886 = vrot.slane %v5884, 5
      %v5887 = vor.u32 %v5883, %v5886
      %v5888 = vrot.slane %v5887, 4
      %v5890 = vshll.u32 %v5829, 16
      %v5892 = vrot.slane %v5890, 5
      %v5893 = vsel %vm980, %v5888, %v5892
      %v5895 = vshrl.u32 %v5830, 16
      %v5897 = vrot.slane %v5895, 4
      %v5898 = vshll.u32 %v5830, 16
      %v5900 = vrot.slane %v5898, 5
      %v5901 = vor.u32 %v5897, %v5900
      %v5902 = vrot.slane %v5901, 4
      %v5904 = vshll.u32 %v5831, 16
      %v5906 = vrot.slane %v5904, 5
      %v5907 = vsel %vm980, %v5902, %v5906
      %v5909 = vshrl.u32 %v5832, 16
      %v5911 = vrot.slane %v5909, 4
      %v5912 = vshll.u32 %v5832, 16
      %v5914 = vrot.slane %v5912, 5
      %v5915 = vor.u32 %v5911, %v5914
      %v5916 = vrot.slane %v5915, 4
      %v5918 = vshll.u32 %v5833, 16
      %v5920 = vrot.slane %v5918, 5
      %v5921 = vsel %vm980, %v5916, %v5920
      %v5923 = vshrl.u32 %v5834, 16
      %v5925 = vrot.slane %v5923, 4
      %v5926 = vshll.u32 %v5834, 16
      %v5928 = vrot.slane %v5926, 5
      %v5929 = vor.u32 %v5925, %v5928
      %v5930 = vrot.slane %v5929, 4
      %v5932 = vshll.u32 %v5835, 16
      %v5934 = vrot.slane %v5932, 5
      %v5935 = vsel %vm980, %v5930, %v5934
      %v5937 = vshrl.u32 %v5836, 16
      %v5939 = vrot.slane %v5937, 4
      %v5940 = vshll.u32 %v5836, 16
      %v5942 = vrot.slane %v5940, 5
      %v5943 = vor.u32 %v5939, %v5942
      %v5944 = vrot.slane %v5943, 4
      %v5946 = vshll.u32 %v5837, 16
      %v5948 = vrot.slane %v5946, 5
      %v5949 = vsel %vm980, %v5944, %v5948
      %5950 = vrot.lane.b32.xlu0 %v5851, 16
      %v5951 = vpop.permute.xlu0 %5950
      %5952 = vrot.lane.b32.xlu0 %v5865, 16
      %v5953 = vpop.permute.xlu0 %5952
      %5954 = vrot.lane.b32.xlu0 %v5879, 16
      %v5955 = vpop.permute.xlu0 %5954
      %5956 = vrot.lane.b32.xlu0 %v5893, 16
      %v5957 = vpop.permute.xlu0 %5956
      %5958 = vrot.lane.b32.xlu0 %v5907, 16
      %v5959 = vpop.permute.xlu0 %5958
      %5960 = vrot.lane.b32.xlu0 %v5921, 16
      %v5961 = vpop.permute.xlu0 %5960
      %5962 = vrot.lane.b32.xlu0 %v5935, 16
      %v5963 = vpop.permute.xlu0 %5962
      %5964 = vrot.lane.b32.xlu0 %v5949, 16
      %v5965 = vpop.permute.xlu0 %5964
      %vm5974 = vcmask 191616
      %5975 = vst.msk [vmem:[#allocation5] sm:$0xf] %vm5974, %v5951
      %5976 = vst.msk [vmem:[#allocation5 + $0x4] sm:$0xf] %vm5974, %v5953
      %5977 = vst.msk [vmem:[#allocation5 + $0x8] sm:$0xf] %vm5974, %v5955
      %5978 = vst.msk [vmem:[#allocation5 + $0xc] sm:$0xf] %vm5974, %v5957
      %5979 = vst.msk [vmem:[#allocation5 + $0x10] sm:$0xf] %vm5974, %v5959
      %5980 = vst.msk [vmem:[#allocation5 + $0x14] sm:$0xf] %vm5974, %v5961
      %5981 = vst.msk [vmem:[#allocation5 + $0x18] sm:$0xf] %vm5974, %v5963
      %5982 = vst.msk [vmem:[#allocation5 + $0x1c] sm:$0xf] %vm5974, %v5965
      %v5983 = vld [vmem:[%s5628] sm:$0x8]
      %v5984 = vld [vmem:[%s5628 + $0x4] sm:$0xf]
      %v5985 = vld [vmem:[%s5628 + $0xc] sm:$0x8]
      %v5986 = vld [vmem:[%s5628 + $0x10] sm:$0xf]
      %v5987 = vld [vmem:[%s5628 + $0x18] sm:$0x8]
      %v5988 = vld [vmem:[%s5628 + $0x1c] sm:$0xf]
      %v5989 = vld [vmem:[%s5628 + $0x24] sm:$0x8]
      %v5990 = vld [vmem:[%s5628 + $0x28] sm:$0xf]
      %v5991 = vld [vmem:[%s5628 + $0x30] sm:$0x8]
      %v5992 = vld [vmem:[%s5628 + $0x34] sm:$0xf]
      %v5993 = vld [vmem:[%s5628 + $0x3c] sm:$0x8]
      %v5994 = vld [vmem:[%s5628 + $0x40] sm:$0xf]
      %v5995 = vld [vmem:[%s5628 + $0x48] sm:$0x8]
      %v5996 = vld [vmem:[%s5628 + $0x4c] sm:$0xf]
      %v5997 = vld [vmem:[%s5628 + $0x54] sm:$0x8]
      %v5998 = vld [vmem:[%s5628 + $0x58] sm:$0xf]
      %v6000 = vshrl.u32 %v5983, 16
      %v6002 = vrot.slane %v6000, 7
      %v6003 = vrot.slane %v6002, 4
      %v6005 = vshrl.u32 %v5984, 16
      %v6007 = vrot.slane %v6005, 7
      %v6008 = vshll.u32 %v5984, 16
      %v6010 = vor.u32 %v6007, %v6008
      %v6011 = vsel %vm792, %v6003, %v6010
      %v6013 = vshrl.u32 %v5985, 16
      %v6015 = vrot.slane %v6013, 7
      %v6016 = vrot.slane %v6015, 4
      %v6018 = vshrl.u32 %v5986, 16
      %v6020 = vrot.slane %v6018, 7
      %v6021 = vshll.u32 %v5986, 16
      %v6023 = vor.u32 %v6020, %v6021
      %v6024 = vsel %vm792, %v6016, %v6023
      %v6026 = vshrl.u32 %v5987, 16
      %v6028 = vrot.slane %v6026, 7
      %v6029 = vrot.slane %v6028, 4
      %v6031 = vshrl.u32 %v5988, 16
      %v6033 = vrot.slane %v6031, 7
      %v6034 = vshll.u32 %v5988, 16
      %v6036 = vor.u32 %v6033, %v6034
      %v6037 = vsel %vm792, %v6029, %v6036
      %v6039 = vshrl.u32 %v5989, 16
      %v6041 = vrot.slane %v6039, 7
      %v6042 = vrot.slane %v6041, 4
      %v6044 = vshrl.u32 %v5990, 16
      %v6046 = vrot.slane %v6044, 7
      %v6047 = vshll.u32 %v5990, 16
      %v6049 = vor.u32 %v6046, %v6047
      %v6050 = vsel %vm792, %v6042, %v6049
      %v6052 = vshrl.u32 %v5991, 16
      %v6054 = vrot.slane %v6052, 7
      %v6055 = vrot.slane %v6054, 4
      %v6057 = vshrl.u32 %v5992, 16
      %v6059 = vrot.slane %v6057, 7
      %v6060 = vshll.u32 %v5992, 16
      %v6062 = vor.u32 %v6059, %v6060
      %v6063 = vsel %vm792, %v6055, %v6062
      %v6065 = vshrl.u32 %v5993, 16
      %v6067 = vrot.slane %v6065, 7
      %v6068 = vrot.slane %v6067, 4
      %v6070 = vshrl.u32 %v5994, 16
      %v6072 = vrot.slane %v6070, 7
      %v6073 = vshll.u32 %v5994, 16
      %v6075 = vor.u32 %v6072, %v6073
      %v6076 = vsel %vm792, %v6068, %v6075
      %v6078 = vshrl.u32 %v5995, 16
      %v6080 = vrot.slane %v6078, 7
      %v6081 = vrot.slane %v6080, 4
      %v6083 = vshrl.u32 %v5996, 16
      %v6085 = vrot.slane %v6083, 7
      %v6086 = vshll.u32 %v5996, 16
      %v6088 = vor.u32 %v6085, %v6086
      %v6089 = vsel %vm792, %v6081, %v6088
      %v6091 = vshrl.u32 %v5997, 16
      %v6093 = vrot.slane %v6091, 7
      %v6094 = vrot.slane %v6093, 4
      %v6096 = vshrl.u32 %v5998, 16
      %v6098 = vrot.slane %v6096, 7
      %v6099 = vshll.u32 %v5998, 16
      %v6101 = vor.u32 %v6098, %v6099
      %v6102 = vsel %vm792, %v6094, %v6101
      %6103 = vrot.lane.b32.xlu0 %v6011, 24
      %v6104 = vpop.permute.xlu0 %6103
      %6105 = vrot.lane.b32.xlu0 %v6024, 24
      %v6106 = vpop.permute.xlu0 %6105
      %6107 = vrot.lane.b32.xlu0 %v6037, 24
      %v6108 = vpop.permute.xlu0 %6107
      %6109 = vrot.lane.b32.xlu0 %v6050, 24
      %v6110 = vpop.permute.xlu0 %6109
      %6111 = vrot.lane.b32.xlu0 %v6063, 24
      %v6112 = vpop.permute.xlu0 %6111
      %6113 = vrot.lane.b32.xlu0 %v6076, 24
      %v6114 = vpop.permute.xlu0 %6113
      %6115 = vrot.lane.b32.xlu0 %v6089, 24
      %v6116 = vpop.permute.xlu0 %6115
      %6117 = vrot.lane.b32.xlu0 %v6102, 24
      %v6118 = vpop.permute.xlu0 %6117
      %vm6127 = vcmask 257216
      %6128 = vst.msk [vmem:[#allocation5] sm:$0xf] %vm6127, %v6104
      %6129 = vst.msk [vmem:[#allocation5 + $0x4] sm:$0xf] %vm6127, %v6106
      %6130 = vst.msk [vmem:[#allocation5 + $0x8] sm:$0xf] %vm6127, %v6108
      %6131 = vst.msk [vmem:[#allocation5 + $0xc] sm:$0xf] %vm6127, %v6110
      %6132 = vst.msk [vmem:[#allocation5 + $0x10] sm:$0xf] %vm6127, %v6112
      %6133 = vst.msk [vmem:[#allocation5 + $0x14] sm:$0xf] %vm6127, %v6114
      %6134 = vst.msk [vmem:[#allocation5 + $0x18] sm:$0xf] %vm6127, %v6116
      %6135 = vst.msk [vmem:[#allocation5 + $0x1c] sm:$0xf] %vm6127, %v6118
      %v6136 = vld [vmem:[%s5628 + $0x4] sm:$0xf]
      %v6137 = vld [vmem:[%s5628 + $0x10] sm:$0xf]
      %v6138 = vld [vmem:[%s5628 + $0x1c] sm:$0xf]
      %v6139 = vld [vmem:[%s5628 + $0x28] sm:$0xf]
      %v6140 = vld [vmem:[%s5628 + $0x34] sm:$0xf]
      %v6141 = vld [vmem:[%s5628 + $0x40] sm:$0xf]
      %v6142 = vld [vmem:[%s5628 + $0x4c] sm:$0xf]
      %v6143 = vld [vmem:[%s5628 + $0x58] sm:$0xf]
      %6152 = vrot.lane.b32.xlu0 %v6136, 32
      %v6153 = vpop.permute.xlu0 %6152
      %6154 = vrot.lane.b32.xlu0 %v6137, 32
      %v6155 = vpop.permute.xlu0 %6154
      %6156 = vrot.lane.b32.xlu0 %v6138, 32
      %v6157 = vpop.permute.xlu0 %6156
      %6158 = vrot.lane.b32.xlu0 %v6139, 32
      %v6159 = vpop.permute.xlu0 %6158
      %6160 = vrot.lane.b32.xlu0 %v6140, 32
      %v6161 = vpop.permute.xlu0 %6160
      %6162 = vrot.lane.b32.xlu0 %v6141, 32
      %v6163 = vpop.permute.xlu0 %6162
      %6164 = vrot.lane.b32.xlu0 %v6142, 32
      %v6165 = vpop.permute.xlu0 %6164
      %6166 = vrot.lane.b32.xlu0 %v6143, 32
      %v6167 = vpop.permute.xlu0 %6166
      %vm6176 = vcmask 322816
      %6177 = vst.msk [vmem:[#allocation5] sm:$0xf] %vm6176, %v6153
      %6178 = vst.msk [vmem:[#allocation5 + $0x4] sm:$0xf] %vm6176, %v6155
      %6179 = vst.msk [vmem:[#allocation5 + $0x8] sm:$0xf] %vm6176, %v6157
      %6180 = vst.msk [vmem:[#allocation5 + $0xc] sm:$0xf] %vm6176, %v6159
      %6181 = vst.msk [vmem:[#allocation5 + $0x10] sm:$0xf] %vm6176, %v6161
      %6182 = vst.msk [vmem:[#allocation5 + $0x14] sm:$0xf] %vm6176, %v6163
      %6183 = vst.msk [vmem:[#allocation5 + $0x18] sm:$0xf] %vm6176, %v6165
      %6184 = vst.msk [vmem:[#allocation5 + $0x1c] sm:$0xf] %vm6176, %v6167
      %v6185 = vld [vmem:[%s5628 + $0x4] sm:$0xf]
      %v6186 = vld [vmem:[%s5628 + $0x8] sm:$0x1]
      %v6187 = vld [vmem:[%s5628 + $0x10] sm:$0xf]
      %v6188 = vld [vmem:[%s5628 + $0x14] sm:$0x1]
      %v6189 = vld [vmem:[%s5628 + $0x1c] sm:$0xf]
      %v6190 = vld [vmem:[%s5628 + $0x20] sm:$0x1]
      %v6191 = vld [vmem:[%s5628 + $0x28] sm:$0xf]
      %v6192 = vld [vmem:[%s5628 + $0x2c] sm:$0x1]
      %v6193 = vld [vmem:[%s5628 + $0x34] sm:$0xf]
      %v6194 = vld [vmem:[%s5628 + $0x38] sm:$0x1]
      %v6195 = vld [vmem:[%s5628 + $0x40] sm:$0xf]
      %v6196 = vld [vmem:[%s5628 + $0x44] sm:$0x1]
      %v6197 = vld [vmem:[%s5628 + $0x4c] sm:$0xf]
      %v6198 = vld [vmem:[%s5628 + $0x50] sm:$0x1]
      %v6199 = vld [vmem:[%s5628 + $0x58] sm:$0xf]
      %v6200 = vld [vmem:[%s5628 + $0x5c] sm:$0x1]
      %v6202 = vshrl.u32 %v6185, 16
      %v6204 = vrot.slane %v6202, 4
      %v6205 = vshll.u32 %v6185, 16
      %v6207 = vrot.slane %v6205, 5
      %v6208 = vor.u32 %v6204, %v6207
      %v6209 = vrot.slane %v6208, 4
      %v6211 = vshll.u32 %v6186, 16
      %v6213 = vrot.slane %v6211, 5
      %v6214 = vsel %vm980, %v6209, %v6213
      %v6216 = vshrl.u32 %v6187, 16
      %v6218 = vrot.slane %v6216, 4
      %v6219 = vshll.u32 %v6187, 16
      %v6221 = vrot.slane %v6219, 5
      %v6222 = vor.u32 %v6218, %v6221
      %v6223 = vrot.slane %v6222, 4
      %v6225 = vshll.u32 %v6188, 16
      %v6227 = vrot.slane %v6225, 5
      %v6228 = vsel %vm980, %v6223, %v6227
      %v6230 = vshrl.u32 %v6189, 16
      %v6232 = vrot.slane %v6230, 4
      %v6233 = vshll.u32 %v6189, 16
      %v6235 = vrot.slane %v6233, 5
      %v6236 = vor.u32 %v6232, %v6235
      %v6237 = vrot.slane %v6236, 4
      %v6239 = vshll.u32 %v6190, 16
      %v6241 = vrot.slane %v6239, 5
      %v6242 = vsel %vm980, %v6237, %v6241
      %v6244 = vshrl.u32 %v6191, 16
      %v6246 = vrot.slane %v6244, 4
      %v6247 = vshll.u32 %v6191, 16
      %v6249 = vrot.slane %v6247, 5
      %v6250 = vor.u32 %v6246, %v6249
      %v6251 = vrot.slane %v6250, 4
      %v6253 = vshll.u32 %v6192, 16
      %v6255 = vrot.slane %v6253, 5
      %v6256 = vsel %vm980, %v6251, %v6255
      %v6258 = vshrl.u32 %v6193, 16
      %v6260 = vrot.slane %v6258, 4
      %v6261 = vshll.u32 %v6193, 16
      %v6263 = vrot.slane %v6261, 5
      %v6264 = vor.u32 %v6260, %v6263
      %v6265 = vrot.slane %v6264, 4
      %v6267 = vshll.u32 %v6194, 16
      %v6269 = vrot.slane %v6267, 5
      %v6270 = vsel %vm980, %v6265, %v6269
      %v6272 = vshrl.u32 %v6195, 16
      %v6274 = vrot.slane %v6272, 4
      %v6275 = vshll.u32 %v6195, 16
      %v6277 = vrot.slane %v6275, 5
      %v6278 = vor.u32 %v6274, %v6277
      %v6279 = vrot.slane %v6278, 4
      %v6281 = vshll.u32 %v6196, 16
      %v6283 = vrot.slane %v6281, 5
      %v6284 = vsel %vm980, %v6279, %v6283
      %v6286 = vshrl.u32 %v6197, 16
      %v6288 = vrot.slane %v6286, 4
      %v6289 = vshll.u32 %v6197, 16
      %v6291 = vrot.slane %v6289, 5
      %v6292 = vor.u32 %v6288, %v6291
      %v6293 = vrot.slane %v6292, 4
      %v6295 = vshll.u32 %v6198, 16
      %v6297 = vrot.slane %v6295, 5
      %v6298 = vsel %vm980, %v6293, %v6297
      %v6300 = vshrl.u32 %v6199, 16
      %v6302 = vrot.slane %v6300, 4
      %v6303 = vshll.u32 %v6199, 16
      %v6305 = vrot.slane %v6303, 5
      %v6306 = vor.u32 %v6302, %v6305
      %v6307 = vrot.slane %v6306, 4
      %v6309 = vshll.u32 %v6200, 16
      %v6311 = vrot.slane %v6309, 5
      %v6312 = vsel %vm980, %v6307, %v6311
      %6313 = vrot.lane.b32.xlu0 %v6214, 40
      %v6314 = vpop.permute.xlu0 %6313
      %6315 = vrot.lane.b32.xlu0 %v6228, 40
      %v6316 = vpop.permute.xlu0 %6315
      %6317 = vrot.lane.b32.xlu0 %v6242, 40
      %v6318 = vpop.permute.xlu0 %6317
      %6319 = vrot.lane.b32.xlu0 %v6256, 40
      %v6320 = vpop.permute.xlu0 %6319
      %6321 = vrot.lane.b32.xlu0 %v6270, 40
      %v6322 = vpop.permute.xlu0 %6321
      %6323 = vrot.lane.b32.xlu0 %v6284, 40
      %v6324 = vpop.permute.xlu0 %6323
      %6325 = vrot.lane.b32.xlu0 %v6298, 40
      %v6326 = vpop.permute.xlu0 %6325
      %6327 = vrot.lane.b32.xlu0 %v6312, 40
      %v6328 = vpop.permute.xlu0 %6327
      %vm6337 = vcmask 388416
      %6338 = vst.msk [vmem:[#allocation5] sm:$0xf] %vm6337, %v6314
      %6339 = vst.msk [vmem:[#allocation5 + $0x4] sm:$0xf] %vm6337, %v6316
      %6340 = vst.msk [vmem:[#allocation5 + $0x8] sm:$0xf] %vm6337, %v6318
      %6341 = vst.msk [vmem:[#allocation5 + $0xc] sm:$0xf] %vm6337, %v6320
      %6342 = vst.msk [vmem:[#allocation5 + $0x10] sm:$0xf] %vm6337, %v6322
      %6343 = vst.msk [vmem:[#allocation5 + $0x14] sm:$0xf] %vm6337, %v6324
      %6344 = vst.msk [vmem:[#allocation5 + $0x18] sm:$0xf] %vm6337, %v6326
      %6345 = vst.msk [vmem:[#allocation5 + $0x1c] sm:$0xf] %vm6337, %v6328
      %s6346 = scalar_lea.vmem [#allocation3], 24
      %v6347 = vld [vmem:[%s6346] sm:$0x8]
      %v6348 = vld [vmem:[%s6346 + $0x4] sm:$0xf]
      %v6349 = vld [vmem:[%s6346 + $0xc] sm:$0x8]
      %v6350 = vld [vmem:[%s6346 + $0x10] sm:$0xf]
      %v6351 = vld [vmem:[%s6346 + $0x18] sm:$0x8]
      %v6352 = vld [vmem:[%s6346 + $0x1c] sm:$0xf]
      %v6353 = vld [vmem:[%s6346 + $0x24] sm:$0x8]
      %v6354 = vld [vmem:[%s6346 + $0x28] sm:$0xf]
      %v6355 = vld [vmem:[%s6346 + $0x30] sm:$0x8]
      %v6356 = vld [vmem:[%s6346 + $0x34] sm:$0xf]
      %v6357 = vld [vmem:[%s6346 + $0x3c] sm:$0x8]
      %v6358 = vld [vmem:[%s6346 + $0x40] sm:$0xf]
      %v6359 = vld [vmem:[%s6346 + $0x48] sm:$0x8]
      %v6360 = vld [vmem:[%s6346 + $0x4c] sm:$0xf]
      %v6361 = vld [vmem:[%s6346 + $0x54] sm:$0x8]
      %v6362 = vld [vmem:[%s6346 + $0x58] sm:$0xf]
      %v6364 = vshrl.u32 %v6347, 16
      %v6366 = vrot.slane %v6364, 7
      %v6367 = vrot.slane %v6366, 4
      %v6369 = vshrl.u32 %v6348, 16
      %v6371 = vrot.slane %v6369, 7
      %v6372 = vshll.u32 %v6348, 16
      %v6374 = vor.u32 %v6371, %v6372
      %v6375 = vsel %vm792, %v6367, %v6374
      %v6377 = vshrl.u32 %v6349, 16
      %v6379 = vrot.slane %v6377, 7
      %v6380 = vrot.slane %v6379, 4
      %v6382 = vshrl.u32 %v6350, 16
      %v6384 = vrot.slane %v6382, 7
      %v6385 = vshll.u32 %v6350, 16
      %v6387 = vor.u32 %v6384, %v6385
      %v6388 = vsel %vm792, %v6380, %v6387
      %v6390 = vshrl.u32 %v6351, 16
      %v6392 = vrot.slane %v6390, 7
      %v6393 = vrot.slane %v6392, 4
      %v6395 = vshrl.u32 %v6352, 16
      %v6397 = vrot.slane %v6395, 7
      %v6398 = vshll.u32 %v6352, 16
      %v6400 = vor.u32 %v6397, %v6398
      %v6401 = vsel %vm792, %v6393, %v6400
      %v6403 = vshrl.u32 %v6353, 16
      %v6405 = vrot.slane %v6403, 7
      %v6406 = vrot.slane %v6405, 4
      %v6408 = vshrl.u32 %v6354, 16
      %v6410 = vrot.slane %v6408, 7
      %v6411 = vshll.u32 %v6354, 16
      %v6413 = vor.u32 %v6410, %v6411
      %v6414 = vsel %vm792, %v6406, %v6413
      %v6416 = vshrl.u32 %v6355, 16
      %v6418 = vrot.slane %v6416, 7
      %v6419 = vrot.slane %v6418, 4
      %v6421 = vshrl.u32 %v6356, 16
      %v6423 = vrot.slane %v6421, 7
      %v6424 = vshll.u32 %v6356, 16
      %v6426 = vor.u32 %v6423, %v6424
      %v6427 = vsel %vm792, %v6419, %v6426
      %v6429 = vshrl.u32 %v6357, 16
      %v6431 = vrot.slane %v6429, 7
      %v6432 = vrot.slane %v6431, 4
      %v6434 = vshrl.u32 %v6358, 16
      %v6436 = vrot.slane %v6434, 7
      %v6437 = vshll.u32 %v6358, 16
      %v6439 = vor.u32 %v6436, %v6437
      %v6440 = vsel %vm792, %v6432, %v6439
      %v6442 = vshrl.u32 %v6359, 16
      %v6444 = vrot.slane %v6442, 7
      %v6445 = vrot.slane %v6444, 4
      %v6447 = vshrl.u32 %v6360, 16
      %v6449 = vrot.slane %v6447, 7
      %v6450 = vshll.u32 %v6360, 16
      %v6452 = vor.u32 %v6449, %v6450
      %v6453 = vsel %vm792, %v6445, %v6452
      %v6455 = vshrl.u32 %v6361, 16
      %v6457 = vrot.slane %v6455, 7
      %v6458 = vrot.slane %v6457, 4
      %v6460 = vshrl.u32 %v6362, 16
      %v6462 = vrot.slane %v6460, 7
      %v6463 = vshll.u32 %v6362, 16
      %v6465 = vor.u32 %v6462, %v6463
      %v6466 = vsel %vm792, %v6458, %v6465
      %6467 = vrot.lane.b32.xlu0 %v6375, 48
      %v6468 = vpop.permute.xlu0 %6467
      %6469 = vrot.lane.b32.xlu0 %v6388, 48
      %v6470 = vpop.permute.xlu0 %6469
      %6471 = vrot.lane.b32.xlu0 %v6401, 48
      %v6472 = vpop.permute.xlu0 %6471
      %6473 = vrot.lane.b32.xlu0 %v6414, 48
      %v6474 = vpop.permute.xlu0 %6473
      %6475 = vrot.lane.b32.xlu0 %v6427, 48
      %v6476 = vpop.permute.xlu0 %6475
      %6477 = vrot.lane.b32.xlu0 %v6440, 48
      %v6478 = vpop.permute.xlu0 %6477
      %6479 = vrot.lane.b32.xlu0 %v6453, 48
      %v6480 = vpop.permute.xlu0 %6479
      %6481 = vrot.lane.b32.xlu0 %v6466, 48
      %v6482 = vpop.permute.xlu0 %6481
      %vm6491 = vcmask 454016
      %6492 = vst.msk [vmem:[#allocation5] sm:$0xf] %vm6491, %v6468
      %6493 = vst.msk [vmem:[#allocation5 + $0x4] sm:$0xf] %vm6491, %v6470
      %6494 = vst.msk [vmem:[#allocation5 + $0x8] sm:$0xf] %vm6491, %v6472
      %6495 = vst.msk [vmem:[#allocation5 + $0xc] sm:$0xf] %vm6491, %v6474
      %6496 = vst.msk [vmem:[#allocation5 + $0x10] sm:$0xf] %vm6491, %v6476
      %6497 = vst.msk [vmem:[#allocation5 + $0x14] sm:$0xf] %vm6491, %v6478
      %6498 = vst.msk [vmem:[#allocation5 + $0x18] sm:$0xf] %vm6491, %v6480
      %6499 = vst.msk [vmem:[#allocation5 + $0x1c] sm:$0xf] %vm6491, %v6482
      %v6500 = vld [vmem:[%s6346 + $0x4] sm:$0xf]
      %v6501 = vld [vmem:[%s6346 + $0x10] sm:$0xf]
      %v6502 = vld [vmem:[%s6346 + $0x1c] sm:$0xf]
      %v6503 = vld [vmem:[%s6346 + $0x28] sm:$0xf]
      %v6504 = vld [vmem:[%s6346 + $0x34] sm:$0xf]
      %v6505 = vld [vmem:[%s6346 + $0x40] sm:$0xf]
      %v6506 = vld [vmem:[%s6346 + $0x4c] sm:$0xf]
      %v6507 = vld [vmem:[%s6346 + $0x58] sm:$0xf]
      %6516 = vrot.lane.b32.xlu0 %v6500, 56
      %v6517 = vpop.permute.xlu0 %6516
      %6518 = vrot.lane.b32.xlu0 %v6501, 56
      %v6519 = vpop.permute.xlu0 %6518
      %6520 = vrot.lane.b32.xlu0 %v6502, 56
      %v6521 = vpop.permute.xlu0 %6520
      %6522 = vrot.lane.b32.xlu0 %v6503, 56
      %v6523 = vpop.permute.xlu0 %6522
      %6524 = vrot.lane.b32.xlu0 %v6504, 56
      %v6525 = vpop.permute.xlu0 %6524
      %6526 = vrot.lane.b32.xlu0 %v6505, 56
      %v6527 = vpop.permute.xlu0 %6526
      %6528 = vrot.lane.b32.xlu0 %v6506, 56
      %v6529 = vpop.permute.xlu0 %6528
      %6530 = vrot.lane.b32.xlu0 %v6507, 56
      %v6531 = vpop.permute.xlu0 %6530
      %vm6540 = vcmask 519616
      %6541 = vst.msk [vmem:[#allocation5] sm:$0xf] %vm6540, %v6517
      %6542 = vst.msk [vmem:[#allocation5 + $0x4] sm:$0xf] %vm6540, %v6519
      %6543 = vst.msk [vmem:[#allocation5 + $0x8] sm:$0xf] %vm6540, %v6521
      %6544 = vst.msk [vmem:[#allocation5 + $0xc] sm:$0xf] %vm6540, %v6523
      %6545 = vst.msk [vmem:[#allocation5 + $0x10] sm:$0xf] %vm6540, %v6525
      %6546 = vst.msk [vmem:[#allocation5 + $0x14] sm:$0xf] %vm6540, %v6527
      %6547 = vst.msk [vmem:[#allocation5 + $0x18] sm:$0xf] %vm6540, %v6529
      %6548 = vst.msk [vmem:[#allocation5 + $0x1c] sm:$0xf] %vm6540, %v6531
      %v6549 = vld [vmem:[%s6346 + $0x4] sm:$0xf]
      %v6550 = vld [vmem:[%s6346 + $0x8] sm:$0x1]
      %v6551 = vld [vmem:[%s6346 + $0x10] sm:$0xf]
      %v6552 = vld [vmem:[%s6346 + $0x14] sm:$0x1]
      %v6553 = vld [vmem:[%s6346 + $0x1c] sm:$0xf]
      %v6554 = vld [vmem:[%s6346 + $0x20] sm:$0x1]
      %v6555 = vld [vmem:[%s6346 + $0x28] sm:$0xf]
      %v6556 = vld [vmem:[%s6346 + $0x2c] sm:$0x1]
      %v6557 = vld [vmem:[%s6346 + $0x34] sm:$0xf]
      %v6558 = vld [vmem:[%s6346 + $0x38] sm:$0x1]
      %v6559 = vld [vmem:[%s6346 + $0x40] sm:$0xf]
      %v6560 = vld [vmem:[%s6346 + $0x44] sm:$0x1]
      %v6561 = vld [vmem:[%s6346 + $0x4c] sm:$0xf]
      %v6562 = vld [vmem:[%s6346 + $0x50] sm:$0x1]
      %v6563 = vld [vmem:[%s6346 + $0x58] sm:$0xf]
      %v6564 = vld [vmem:[%s6346 + $0x5c] sm:$0x1]
      %v6566 = vshrl.u32 %v6549, 16
      %v6568 = vrot.slane %v6566, 4
      %v6569 = vshll.u32 %v6549, 16
      %v6571 = vrot.slane %v6569, 5
      %v6572 = vor.u32 %v6568, %v6571
      %v6573 = vrot.slane %v6572, 4
      %v6575 = vshll.u32 %v6550, 16
      %v6577 = vrot.slane %v6575, 5
      %v6578 = vsel %vm980, %v6573, %v6577
      %v6580 = vshrl.u32 %v6551, 16
      %v6582 = vrot.slane %v6580, 4
      %v6583 = vshll.u32 %v6551, 16
      %v6585 = vrot.slane %v6583, 5
      %v6586 = vor.u32 %v6582, %v6585
      %v6587 = vrot.slane %v6586, 4
      %v6589 = vshll.u32 %v6552, 16
      %v6591 = vrot.slane %v6589, 5
      %v6592 = vsel %vm980, %v6587, %v6591
      %v6594 = vshrl.u32 %v6553, 16
      %v6596 = vrot.slane %v6594, 4
      %v6597 = vshll.u32 %v6553, 16
      %v6599 = vrot.slane %v6597, 5
      %v6600 = vor.u32 %v6596, %v6599
      %v6601 = vrot.slane %v6600, 4
      %v6603 = vshll.u32 %v6554, 16
      %v6605 = vrot.slane %v6603, 5
      %v6606 = vsel %vm980, %v6601, %v6605
      %v6608 = vshrl.u32 %v6555, 16
      %v6610 = vrot.slane %v6608, 4
      %v6611 = vshll.u32 %v6555, 16
      %v6613 = vrot.slane %v6611, 5
      %v6614 = vor.u32 %v6610, %v6613
      %v6615 = vrot.slane %v6614, 4
      %v6617 = vshll.u32 %v6556, 16
      %v6619 = vrot.slane %v6617, 5
      %v6620 = vsel %vm980, %v6615, %v6619
      %v6622 = vshrl.u32 %v6557, 16
      %v6624 = vrot.slane %v6622, 4
      %v6625 = vshll.u32 %v6557, 16
      %v6627 = vrot.slane %v6625, 5
      %v6628 = vor.u32 %v6624, %v6627
      %v6629 = vrot.slane %v6628, 4
      %v6631 = vshll.u32 %v6558, 16
      %v6633 = vrot.slane %v6631, 5
      %v6634 = vsel %vm980, %v6629, %v6633
      %v6636 = vshrl.u32 %v6559, 16
      %v6638 = vrot.slane %v6636, 4
      %v6639 = vshll.u32 %v6559, 16
      %v6641 = vrot.slane %v6639, 5
      %v6642 = vor.u32 %v6638, %v6641
      %v6643 = vrot.slane %v6642, 4
      %v6645 = vshll.u32 %v6560, 16
      %v6647 = vrot.slane %v6645, 5
      %v6648 = vsel %vm980, %v6643, %v6647
      %v6650 = vshrl.u32 %v6561, 16
      %v6652 = vrot.slane %v6650, 4
      %v6653 = vshll.u32 %v6561, 16
      %v6655 = vrot.slane %v6653, 5
      %v6656 = vor.u32 %v6652, %v6655
      %v6657 = vrot.slane %v6656, 4
      %v6659 = vshll.u32 %v6562, 16
      %v6661 = vrot.slane %v6659, 5
      %v6662 = vsel %vm980, %v6657, %v6661
      %v6664 = vshrl.u32 %v6563, 16
      %v6666 = vrot.slane %v6664, 4
      %v6667 = vshll.u32 %v6563, 16
      %v6669 = vrot.slane %v6667, 5
      %v6670 = vor.u32 %v6666, %v6669
      %v6671 = vrot.slane %v6670, 4
      %v6673 = vshll.u32 %v6564, 16
      %v6675 = vrot.slane %v6673, 5
      %v6676 = vsel %vm980, %v6671, %v6675
      %6677 = vrot.lane.b32.xlu0 %v6578, 64
      %v6678 = vpop.permute.xlu0 %6677
      %6679 = vrot.lane.b32.xlu0 %v6592, 64
      %v6680 = vpop.permute.xlu0 %6679
      %6681 = vrot.lane.b32.xlu0 %v6606, 64
      %v6682 = vpop.permute.xlu0 %6681
      %6683 = vrot.lane.b32.xlu0 %v6620, 64
      %v6684 = vpop.permute.xlu0 %6683
      %6685 = vrot.lane.b32.xlu0 %v6634, 64
      %v6686 = vpop.permute.xlu0 %6685
      %6687 = vrot.lane.b32.xlu0 %v6648, 64
      %v6688 = vpop.permute.xlu0 %6687
      %6689 = vrot.lane.b32.xlu0 %v6662, 64
      %v6690 = vpop.permute.xlu0 %6689
      %6691 = vrot.lane.b32.xlu0 %v6676, 64
      %v6692 = vpop.permute.xlu0 %6691
      %vm6701 = vcmask 585216
      %6702 = vst.msk [vmem:[#allocation5] sm:$0xf] %vm6701, %v6678
      %6703 = vst.msk [vmem:[#allocation5 + $0x4] sm:$0xf] %vm6701, %v6680
      %6704 = vst.msk [vmem:[#allocation5 + $0x8] sm:$0xf] %vm6701, %v6682
      %6705 = vst.msk [vmem:[#allocation5 + $0xc] sm:$0xf] %vm6701, %v6684
      %6706 = vst.msk [vmem:[#allocation5 + $0x10] sm:$0xf] %vm6701, %v6686
      %6707 = vst.msk [vmem:[#allocation5 + $0x14] sm:$0xf] %vm6701, %v6688
      %6708 = vst.msk [vmem:[#allocation5 + $0x18] sm:$0xf] %vm6701, %v6690
      %6709 = vst.msk [vmem:[#allocation5 + $0x1c] sm:$0xf] %vm6701, %v6692
      %v6710 = vld [vmem:[#allocation5] sm:$0xf]
      %v6711 = vld [vmem:[#allocation5 + $0x4] sm:$0xf]
      %v6712 = vld [vmem:[#allocation5 + $0x8] sm:$0xf]
      %v6713 = vld [vmem:[#allocation5 + $0xc] sm:$0xf]
      %v6714 = vld [vmem:[#allocation5 + $0x10] sm:$0xf]
      %v6715 = vld [vmem:[#allocation5 + $0x14] sm:$0xf]
      %v6716 = vld [vmem:[#allocation5 + $0x18] sm:$0xf]
      %v6717 = vld [vmem:[#allocation5 + $0x1c] sm:$0xf]
      %v6718 = vld [vmem:[%s10] sm:$0xf]
      %v6719 = vld [vmem:[%s10 + $0x4] sm:$0xf]
      %v6720 = vld [vmem:[%s10 + $0x8] sm:$0xf]
      %v6721 = vld [vmem:[%s10 + $0xc] sm:$0xf]
      %v6722 = vld [vmem:[%s10 + $0x10] sm:$0xf]
      %v6723 = vld [vmem:[%s10 + $0x14] sm:$0xf]
      %v6724 = vld [vmem:[%s10 + $0x18] sm:$0xf]
      %v6725 = vld [vmem:[%s10 + $0x1c] sm:$0xf]
      %v6726 = vld [vmem:[%s10 + $0x20] sm:$0xf]
      %v6735 = vunpack.c.l.b16 %v6710
      %v6736 = vunpack.c.l.b16 %v6711
      %v6737 = vunpack.c.l.b16 %v6712
      %v6738 = vunpack.c.l.b16 %v6713
      %v6739 = vunpack.c.l.b16 %v6714
      %v6740 = vunpack.c.l.b16 %v6715
      %v6741 = vunpack.c.l.b16 %v6716
      %v6742 = vunpack.c.l.b16 %v6717
      %v6743 = vpack.c.b16 %v6736, %v6735
      %v6744 = vpack.c.b16 %v6738, %v6737
      %v6745 = vpack.c.b16 %v6740, %v6739
      %v6746 = vpack.c.b16 %v6742, %v6741
      %v6756 = vunpack.c.l.b16 %v6718
      %v6757 = vunpack.c.l.b16 %v6719
      %v6758 = vunpack.c.l.b16 %v6720
      %v6759 = vunpack.c.l.b16 %v6721
      %v6760 = vunpack.c.l.b16 %v6722
      %v6761 = vunpack.c.l.b16 %v6723
      %v6762 = vunpack.c.l.b16 %v6724
      %v6763 = vunpack.c.l.b16 %v6725
      %v6764 = vunpack.c.l.b16 %v6726
      %v6765 = vpack.c.b16 %v6757, %v6756
      %v6766 = vpack.c.b16 %v6759, %v6758
      %v6767 = vpack.c.b16 %v6761, %v6760
      %v6768 = vpack.c.b16 %v6763, %v6762
      %v6769 = vpack.c.b16 %v6764, %v6764
      %vm6774 = vcmask 588800
      %v6776 = vsel %vm6774, %v6743, 0
      %v6779 = vsel %vm6774, %v6744, 0
      %v6782 = vsel %vm6774, %v6745, 0
      %v6785 = vsel %vm6774, %v6746, 0
      %vm6787 = vcmask 1043456
      %v6789 = vsel %vm6787, %v6769, 0
      %6791 = vmatpush.bf16.msra.mxu0 0
      %6792 = vmatpush.bf16.msra.mxu0 0
      %6793 = vmatpush.bf16.msra.mxu0 0
      %6794 = vmatpush.bf16.msra.mxu0 %v6789
      %6795 = vmatpush.bf16.msra.mxu0 %v6768
      %6796 = vmatpush.bf16.msra.mxu0 %v6767
      %6797 = vmatpush.bf16.msra.mxu0 %v6766
      %6798 = vmatpush.bf16.msra.mxu0 %v6765
      %6799 = vmatmul.bf16.gmra.mxu0 %v6776
      %v6800 = vpop.f32.mrf.mxu0
      %v6801 = vadd.f32 0.0, %v6800
      %v6802 = vpop.f32.mrf.mxu0
      %v6803 = vadd.f32 0.0, %v6802
      %6804 = vmatmul.bf16.gmra.mxu0 %v6779
      %v6805 = vpop.f32.mrf.mxu0
      %v6806 = vadd.f32 0.0, %v6805
      %v6807 = vpop.f32.mrf.mxu0
      %v6808 = vadd.f32 0.0, %v6807
      %6809 = vmatmul.bf16.gmra.mxu0 %v6782
      %v6810 = vpop.f32.mrf.mxu0
      %v6811 = vadd.f32 0.0, %v6810
      %v6812 = vpop.f32.mrf.mxu0
      %v6813 = vadd.f32 0.0, %v6812
      %6814 = vmatmul.bf16.gmra.mxu0 %v6785
      %v6815 = vpop.f32.mrf.mxu0
      %v6816 = vadd.f32 0.0, %v6815
      %v6817 = vpop.f32.mrf.mxu0
      %v6818 = vadd.f32 0.0, %v6817
      %6819 = vdwg.mxu0
      %v6820 = vsel %vm5177, %v6801, 0.0
      %v6821 = vsel %vm5177, %v6803, 0.0
      %v6822 = vadd.f32 %v6820, %v6821
      %v6823 = vsel %vm5177, %v6806, 0.0
      %v6824 = vadd.f32 %v6822, %v6823
      %v6825 = vsel %vm5177, %v6808, 0.0
      %v6826 = vadd.f32 %v6824, %v6825
      %v6827 = vsel %vm5177, %v6811, 0.0
      %v6828 = vadd.f32 %v6826, %v6827
      %v6829 = vsel %vm5177, %v6813, 0.0
      %v6830 = vadd.f32 %v6828, %v6829
      %v6831 = vsel %vm5177, %v6816, 0.0
      %v6832 = vadd.f32 %v6830, %v6831
      %v6833 = vsel %vm5177, %v6818, 0.0
      %v6834 = vadd.f32 %v6832, %v6833
      %6835 = vadd.xlane.f32.xlu0 %v6834
      %v6836 = vpop.xlane.xlu0 %6835
      %v6837 = vrot.slane %v6836, 4
      %v6838 = vadd.f32 %v6836, %v6837
      %v6839 = vrot.slane %v6838, 2
      %v6840 = vadd.f32 %v6838, %v6839
      %v6841 = vrot.slane %v6840, 1
      %v6842 = vadd.f32 %v6840, %v6841
      %v6843 = vmul.f32 %v6842, %v5207
      %v6844 = vsub.f32 %v6801, %v6843
      %v6845 = vsub.f32 %v6803, %v6843
      %v6846 = vsub.f32 %v6806, %v6843
      %v6847 = vsub.f32 %v6808, %v6843
      %v6848 = vsub.f32 %v6811, %v6843
      %v6849 = vsub.f32 %v6813, %v6843
      %v6850 = vsub.f32 %v6816, %v6843
      %v6851 = vsub.f32 %v6818, %v6843
      %v6852 = vmul.f32 %v6844, %v6844
      %v6853 = vmul.f32 %v6845, %v6845
      %v6854 = vmul.f32 %v6846, %v6846
      %v6855 = vmul.f32 %v6847, %v6847
      %v6856 = vmul.f32 %v6848, %v6848
      %v6857 = vmul.f32 %v6849, %v6849
      %v6858 = vmul.f32 %v6850, %v6850
      %v6859 = vmul.f32 %v6851, %v6851
      %v6860 = vsel %vm5177, %v6852, 0.0
      %v6861 = vsel %vm5177, %v6853, 0.0
      %v6862 = vadd.f32 %v6860, %v6861
      %v6863 = vsel %vm5177, %v6854, 0.0
      %v6864 = vadd.f32 %v6862, %v6863
      %v6865 = vsel %vm5177, %v6855, 0.0
      %v6866 = vadd.f32 %v6864, %v6865
      %v6867 = vsel %vm5177, %v6856, 0.0
      %v6868 = vadd.f32 %v6866, %v6867
      %v6869 = vsel %vm5177, %v6857, 0.0
      %v6870 = vadd.f32 %v6868, %v6869
      %v6871 = vsel %vm5177, %v6858, 0.0
      %v6872 = vadd.f32 %v6870, %v6871
      %v6873 = vsel %vm5177, %v6859, 0.0
      %v6874 = vadd.f32 %v6872, %v6873
      %6875 = vadd.xlane.f32.xlu0 %v6874
      %v6876 = vpop.xlane.xlu0 %6875
      %v6877 = vrot.slane %v6876, 4
      %v6878 = vadd.f32 %v6876, %v6877
      %v6879 = vrot.slane %v6878, 2
      %v6880 = vadd.f32 %v6878, %v6879
      %v6881 = vrot.slane %v6880, 1
      %v6882 = vadd.f32 %v6880, %v6881
      %v6883 = vmul.f32 %v6882, %v5207
      %v6884 = vadd.f32 %v6883, 1e-05
      %v6885 = vrsqrt.pop %v6884
      %v6886 = vmul.f32 %v6885, %v6884
      %v6887 = vmul.f32 %v6886, %v6885
      %v6888 = vmul.f32 0.5, %v6887
      %v6889 = vsub.f32 1.5, %v6888
      %v6890 = vmul.f32 %v6885, %v6889
      %vm6891 = vweird.f32 %v6884
      %vm6892 = vweird.f32 %v6885
      %vm6893 = vmor %vm6891, %vm6892
      %v6894 = vsel %vm6893, %v6885, %v6890
      %v6895 = vmul.f32 %v6844, %v6894
      %v6896 = vmul.f32 %v6845, %v6894
      %v6897 = vmul.f32 %v6846, %v6894
      %v6898 = vmul.f32 %v6847, %v6894
      %v6899 = vmul.f32 %v6848, %v6894
      %v6900 = vmul.f32 %v6849, %v6894
      %v6901 = vmul.f32 %v6850, %v6894
      %v6902 = vmul.f32 %v6851, %v6894
      %v6903 = vld [vmem:[%s11] sm:$0x1]
      %v6905 = vperm.slane %v6903, 0
      %v6907 = vmul.f32 %v6895, %v6905
      %v6908 = vmul.f32 %v6896, %v6905
      %v6909 = vmul.f32 %v6897, %v6905
      %v6910 = vmul.f32 %v6898, %v6905
      %v6911 = vmul.f32 %v6899, %v6905
      %v6912 = vmul.f32 %v6900, %v6905
      %v6913 = vmul.f32 %v6901, %v6905
      %v6914 = vmul.f32 %v6902, %v6905
      %v6915 = vld [vmem:[%s12] sm:$0x1]
      %v6917 = vperm.slane %v6915, 0
      %v6919 = vadd.f32 %v6907, %v6917
      %v6920 = vadd.f32 %v6908, %v6917
      %v6921 = vadd.f32 %v6909, %v6917
      %v6922 = vadd.f32 %v6910, %v6917
      %v6923 = vadd.f32 %v6911, %v6917
      %v6924 = vadd.f32 %v6912, %v6917
      %v6925 = vadd.f32 %v6913, %v6917
      %v6926 = vadd.f32 %v6914, %v6917
      %v6927 = vld [vmem:[%s530] sm:$0x1]
      %v6928 = vsub.f32 0.0, %v6927
      %v6929 = vmul.f32 %v6928, 1.442695
      %v6930 = vpow.pop %v6929
      %v6931 = vadd.f32 %v6930, 1.0
      %v6932 = vrcp.pop %v6931
      %v6933 = vmul.f32 %v6931, %v6932
      %v6934 = vsub.f32 1.0, %v6933
      %v6935 = vmul.f32 %v6932, %v6934
      %v6936 = vadd.f32 %v6932, %v6935
      %vm6937 = vweird.f32 %v6931
      %vm6938 = vweird.f32 %v6932
      %vm6939 = vmor %vm6937, %vm6938
      %v6940 = vsel %vm6939, %v6932, %v6936
      %v6941 = vand.u32 2147483647, %v6931
      %vm6942 = vcmp.eq.f32.partialorder %v6941, 8.507059e+37
      %v6943 = vand.u32 %v6931, 2147483648
      %v6944 = vor.u32 1.1754944e-38, %v6943
      %v6945 = vsel %vm6942, %v6944, %v6940
      %v6946 = vmul.f32 1.0, %v6945
      %v6947 = vmul.f32 %v6927, %v6946
      %v6948 = vld [vmem:[%s14] sm:$0xff]
      %v6949 = vld [vmem:[%s14 + $0x8] sm:$0xff]
      %v6950 = vld [vmem:[%s14 + $0x10] sm:$0xff]
      %v6951 = vld [vmem:[%s14 + $0x18] sm:$0xff]
      %v6952 = vld [vmem:[%s15] sm:$0x1]
      %vm6953 = vcmask 261120
      %v6955 = vsel %vm6953, %v6947, 0
      %6957 = vmatpush.msra.mxu0 0.0
      %6958 = vmatpush.msra.mxu0 0.0
      %6959 = vmatpush.msra.mxu0 0.0
      %6960 = vmatpush.msra.mxu0 0.0
      %6961 = vmatpush.msra.mxu0 0.0
      %6962 = vmatpush.msra.mxu0 0.0
      %6963 = vmatpush.msra.mxu0 0.0
      %6964 = vmatpush.msra.mxu0 0.0
      %6965 = vmatpush.msra.mxu0 0.0
      %6966 = vmatpush.msra.mxu0 0.0
      %6967 = vmatpush.msra.mxu0 0.0
      %6968 = vmatpush.msra.mxu0 0.0
      %6969 = vmatpush.msra.mxu0 %v6951
      %6970 = vmatpush.msra.mxu0 %v6950
      %6971 = vmatpush.msra.mxu0 %v6949
      %6972 = vmatpush.msra.mxu0 %v6948
      %6973 = vmatmul.f32.gmra.mxu0 %v6955
      %v6974 = vpop.f32.mrf.mxu0
      %v6975 = vadd.f32 %v6952, %v6974
      %6976 = vdwg.mxu0
      %v6977 = vperm.slane %v6975, 0
      %v6978 = vadd.f32 %v6919, %v6977
      %v6979 = vadd.f32 %v6920, %v6977
      %v6980 = vadd.f32 %v6921, %v6977
      %v6981 = vadd.f32 %v6922, %v6977
      %v6982 = vadd.f32 %v6923, %v6977
      %v6983 = vadd.f32 %v6924, %v6977
      %v6984 = vadd.f32 %v6925, %v6977
      %v6985 = vadd.f32 %v6926, %v6977
      %6986 = vst.msk [vmem:[%s535] sm:$0xff] %vm5177, %v6978
      %6987 = vst.msk [vmem:[%s535 + $0x8] sm:$0xff] %vm5177, %v6979
      %6988 = vst.msk [vmem:[%s535 + $0x10] sm:$0xff] %vm5177, %v6980
      %6989 = vst.msk [vmem:[%s535 + $0x18] sm:$0xff] %vm5177, %v6981
      %6990 = vst.msk [vmem:[%s535 + $0x20] sm:$0xff] %vm5177, %v6982
      %6991 = vst.msk [vmem:[%s535 + $0x28] sm:$0xff] %vm5177, %v6983
      %6992 = vst.msk [vmem:[%s535 + $0x30] sm:$0xff] %vm5177, %v6984
      %6993 = vst.msk [vmem:[%s535 + $0x38] sm:$0xff] %vm5177, %v6985
      %p6994 = scmp.lt.s32.totalorder %s27, 1
      %s6995 = scalar_select %p6994, %s27, 1
      %s6996 = smul.addr %s6995, 8
      %s6997 = smul.addr %s6996, 8
      %s6998 = scalar_lea.vmem %s16, %s6997
      // Predicated region
      $region85: #{_lambda_.1} parent=83 // pred_check
        %p6999 = pneg %p391
      $region86: #{_lambda_.1} parent=83 // pred_check_branch
        %7001 = sbr.rel (%p6999) target = $region88
      $region87: #{_lambda_.1} parent=83 // pred_region
        _
      $region88: #{_lambda_.1} parent=83 // pred_fallthru
        _
    $region84: #{_lambda_.1} parent=5 // pred_fallthru
      _
    %p7002 = scmp.le.s32.totalorder 2, %s22
    // Predicated region
    $region89: #{_lambda_.1} parent=5 // pred_check
      %p7003 = pneg %p7002
    $region90: #{_lambda_.1} parent=5 // pred_check_branch
      %7005 = sbr.rel (%p7003) target = $region92
    $region91: #{_lambda_.1} parent=5 // pred_region
      %s7006 = ssub.s32 %s22, 2
      // Predicated region
      $region93: #{_lambda_.1} parent=91 // pred_check
        %p7007 = pneg %p397
      $region94: #{_lambda_.1} parent=91 // pred_check_branch
        %7009 = sbr.rel (%p7007) target = $region96
      $region95: #{_lambda_.1} parent=91 // pred_region
        %p7010 = scmp.lt.s32.totalorder %s28, 1
        %s7011 = scalar_select %p7010, %s28, 1
        %s7012 = smul.addr %s7011, 8
        %s7013 = smul.addr %s7012, 8
        %s7014 = scalar_lea.vmem %s16, %s7013
      $region96: #{_lambda_.1} parent=91 // pred_fallthru
        _
    $region92: #{_lambda_.1} parent=5 // pred_fallthru
      _
  $region6: #{_lambda_.1} parent=0 // loop_footer
    %s26 = sadd.s32 1, %s22
  $region7: #{_lambda_.1} parent=0 // loop_footer_branch
    %21 = sbr.rel target = $region3
  $region8: #{_lambda_.1} parent=0 // loop_exit
    _

</llo_original>
